<compile_context>
chip_gen: v5e
topology: v5e:2x2
jax: 0.10.0
libtpu: 0.0.40
codegen_flags: <defaults>
</compile_context>

<pallas_src>
import functools
import math

import jax
import jax.numpy as jnp
from jax.experimental import pallas as pl
from jax.experimental.pallas import tpu as pltpu

VMEM = pltpu.MemorySpace.VMEM
SMEM = pltpu.MemorySpace.SMEM

CHUNK_T = 8   # LSTM timesteps per inner chunk (T must be divisible by this)


def _vspecs(n):
    return [pl.BlockSpec(memory_space=VMEM) for _ in range(n)]


# ----------------------------------------------------------------------------
# Kernel 1: encoder front end  (conv+BN+ReLU, conv+BN+ReLU, Linear+ReLU) fused.
# ----------------------------------------------------------------------------
def _enc_front_kernel(x_ref, wc1_ref, bc1_ref, g1_ref, be1_ref,
                      wc2_ref, bc2_ref, g2_ref, be2_ref,
                      wa_ref, ba_ref, o_ref, *, K):
    B = x_ref.shape[0]

    def conv_bn_relu(xs, w, bias, gamma, beta):
        # xs: per-sample (Lin, Cin) position-major slabs; w: (K*Cin, Cout) im2col-packed.
        Lout = xs[0].shape[0] - K + 1
        ys = []
        for xb in xs:
            xcol = jnp.concatenate([xb[k:k + Lout, :] for k in range(K)], axis=1)
            ys.append(jnp.dot(xcol, w, preferred_element_type=jnp.float32) + bias)
        # BatchNorm1d in training mode: per-channel stats over (batch, length).
        n = float(len(ys) * Lout)
        mean = sum(jnp.sum(y, axis=0, keepdims=True) for y in ys) / n
        var = sum(jnp.sum((y - mean) * (y - mean), axis=0, keepdims=True)
                  for y in ys) / n
        scale = jax.lax.rsqrt(var + 1e-5) * gamma
        return [jnp.maximum((y - mean) * scale + beta, 0.0) for y in ys]

    xs = [x_ref[b] for b in range(B)]
    xs = conv_bn_relu(xs, wc1_ref[...], bc1_ref[...], g1_ref[...], be1_ref[...])
    xs = conv_bn_relu(xs, wc2_ref[...], bc2_ref[...], g2_ref[...], be2_ref[...])
    wa = wa_ref[...]
    ba = ba_ref[...]
    for b in range(B):
        o_ref[b] = jnp.maximum(
            jnp.dot(xs[b], wa, preferred_element_type=jnp.float32) + ba, 0.0)


def encoder_front(xT, KP, K=5):
    B, Lin, _ = xT.shape
    T = Lin - 2 * (K - 1)
    H = KP['e_attn_w'].shape[1]
    return pl.pallas_call(
        functools.partial(_enc_front_kernel, K=K),
        out_shape=jax.ShapeDtypeStruct((B, T, H), jnp.float32),
        in_specs=_vspecs(11),
        out_specs=pl.BlockSpec(memory_space=VMEM),
    )(xT, KP['e_conv1_w'], KP['e_conv1_b'], KP['e_bn1_g'], KP['e_bn1_b'],
      KP['e_conv2_w'], KP['e_conv2_b'], KP['e_bn2_g'], KP['e_bn2_b'],
      KP['e_attn_w'], KP['e_attn_b'])


# ----------------------------------------------------------------------------
# Kernel 2: 120-layer LSTM stack (whole batch, all weights VMEM-resident).
#   x is pre-chunked to (T/CHUNK_T, CHUNK_T*B, H) so both the chunked input
#   projection and the per-step accesses only ever index the leading dim.
# ----------------------------------------------------------------------------
def _lstm_stack_kernel(x_ref, w_ref, b_ref, hid_ref, seq_ref):
    NC, CB, H = x_ref.shape          # chunks, CHUNK_T*B, hidden
    L = w_ref.shape[0]
    B = hid_ref.shape[1]
    S = CB // B                      # timesteps per chunk
    H3 = 3 * H

    seq_ref[...] = x_ref[...]        # layer l overwrites seq with its own outputs

    def layer_body(l, carry):
        w = w_ref[l]                 # (2H, 4H): rows [0:H]=W_ih^T, [H:2H]=W_hh^T
        wih = w[0:H, :]
        whh = w[H:2 * H, :]
        bias = b_ref[l]              # (1, 4H), gate order (i, f, o, g)

        def chunk_body(tc, hc):
            h, c = hc
            # Hoisted input projection for CHUNK_T steps at once (off the serial chain).
            gx = jnp.dot(seq_ref[tc], wih,
                         preferred_element_type=jnp.float32) + bias     # (CB, 4H)
            for j in range(S):                                          # static unroll
                g = gx[j * B:(j + 1) * B, :] + jnp.dot(
                    h, whh, preferred_element_type=jnp.float32)         # (B, 4H)
                sig = 1.0 / (1.0 + jnp.exp(-g[:, 0:H3]))                # fused i,f,o
                gi = sig[:, 0:H]
                gf = sig[:, H:2 * H]
                go = sig[:, 2 * H:H3]
                gg = jnp.tanh(g[:, H3:])
                c = gf * c + gi * gg
                h = go * jnp.tanh(c)
                seq_ref[tc, j * B:(j + 1) * B, :] = h                   # next layer input
            return (h, c)

        zero = jnp.zeros((B, H), jnp.float32)
        h_fin, _ = jax.lax.fori_loop(0, NC, chunk_body, (zero, zero))
        hid_ref[l] = h_fin           # PyTorch h_n for layer l
        return carry

    jax.lax.fori_loop(0, L, layer_body, 0)


def lstm_stack(x_chunked, w_packed, b_packed, batch):
    NC, CB, H = x_chunked.shape
    L = w_packed.shape[0]
    return pl.pallas_call(
        _lstm_stack_kernel,
        out_shape=jax.ShapeDtypeStruct((L, batch, H), jnp.float32),
        in_specs=_vspecs(3),
        out_specs=pl.BlockSpec(memory_space=VMEM),
        scratch_shapes=[pltpu.VMEM((NC, CB, H), jnp.float32)],
    )(x_chunked, w_packed, b_packed)


def to_chunked(x_bth):
    # (B, T, H) batch-first -> (T/CHUNK_T, CHUNK_T*B, H); row within chunk = j*B + b.
    B, T, H = x_bth.shape
    assert T % CHUNK_T == 0, "sequence length must be divisible by CHUNK_T"
    return jnp.transpose(x_bth, (1, 0, 2)).reshape(T // CHUNK_T, CHUNK_T * B, H)


# ----------------------------------------------------------------------------
# Kernel 3: encoder tail + reparameterize + decoder head, fully fused.
# ----------------------------------------------------------------------------
def _mid_kernel(h_ref, eps_ref, we1_ref, be1_ref, we2_ref, be2_ref,
                wml_ref, bml_ref, wd1_ref, bd1_ref, wd2_ref, bd2_ref,
                lat_ref, mu_ref, lv_ref, z_ref, dec_ref):
    H = mu_ref.shape[1]
    x = h_ref[...]
    h1 = jnp.maximum(jnp.dot(x, we1_ref[...],
                             preferred_element_type=jnp.float32) + be1_ref[...], 0.0)
    lat = jnp.maximum(jnp.dot(h1, we2_ref[...],
                              preferred_element_type=jnp.float32) + be2_ref[...], 0.0)
    ml = jnp.dot(lat, wml_ref[...], preferred_element_type=jnp.float32) + bml_ref[...]
    # TODO(synk): mu_act / sigm_act undefined in the PyTorch source; treated as identity.
    mu = ml[:, 0:H]
    lv = ml[:, H:2 * H]
    z = mu + jnp.exp(lv * 0.5) * eps_ref[...]
    d = jnp.maximum(jnp.dot(z, wd1_ref[...],
                            preferred_element_type=jnp.float32) + bd1_ref[...], 0.0)
    d = jnp.maximum(jnp.dot(d, wd2_ref[...],
                            preferred_element_type=jnp.float32) + bd2_ref[...], 0.0)
    lat_ref[...] = lat
    mu_ref[...] = mu
    lv_ref[...] = lv
    z_ref[...] = z
    dec_ref[...] = d


def mid_block(hid2d, eps, KP):
    M, H = hid2d.shape
    shp = jax.ShapeDtypeStruct((M, H), jnp.float32)
    return pl.pallas_call(
        _mid_kernel,
        out_shape=(shp, shp, shp, shp, shp),
        in_specs=_vspecs(12),
        out_specs=tuple(pl.BlockSpec(memory_space=VMEM) for _ in range(5)),
    )(hid2d, eps,
      KP['e_lin1_w'], KP['e_lin1_b'], KP['e_lin2_w'], KP['e_lin2_b'],
      KP['e_mulv_w'], KP['e_mulv_b'],
      KP['d_lin1_w'], KP['d_lin1_b'], KP['d_lin2_w'], KP['d_lin2_b'])


# ----------------------------------------------------------------------------
# Kernel 4: decoder tail (attn, outAng, deconv+BN+ReLU x2, outAcc) + likelihood.
# ----------------------------------------------------------------------------
def _dec_tail_kernel(h_ref, x_ref, wa_ref, ba_ref, wo_ref, bo_ref,
                     wdc1_ref, bdc1_ref, g1_ref, be1_ref,
                     wdc2_ref, bdc2_ref, g2_ref, be2_ref,
                     wacc_ref, bacc_ref, ls_ref, out_ref, ll_ref, *, K):
    B, Lin, Cin = x_ref.shape
    L = h_ref.shape[0] // B

    dh = jnp.maximum(jnp.dot(h_ref[...], wa_ref[...],
                             preferred_element_type=jnp.float32) + ba_ref[...], 0.0)
    s6 = jnp.maximum(jnp.dot(dh, wo_ref[...],
                             preferred_element_type=jnp.float32) + bo_ref[...], 0.0)

    def deconv_bn_relu(xs, w, bias, gamma, beta):
        # ConvTranspose1d(stride=1, pad=0) == full correlation; weights already flipped,
        # channel-swapped and im2col-packed at init.  Pad K-1 zeros both sides.
        C = xs[0].shape[1]
        Lout = xs[0].shape[0] + K - 1
        pad = jnp.zeros((K - 1, C), jnp.float32)
        ys = []
        for xb in xs:
            xp = jnp.concatenate([pad, xb, pad], axis=0)
            xcol = jnp.concatenate([xp[k:k + Lout, :] for k in range(K)], axis=1)
            ys.append(jnp.dot(xcol, w, preferred_element_type=jnp.float32) + bias)
        n = float(len(ys) * Lout)
        mean = sum(jnp.sum(y, axis=0, keepdims=True) for y in ys) / n
        var = sum(jnp.sum((y - mean) * (y - mean), axis=0, keepdims=True)
                  for y in ys) / n
        scale = jax.lax.rsqrt(var + 1e-5) * gamma
        return [jnp.maximum((y - mean) * scale + beta, 0.0) for y in ys]

    xs = [s6[b * L:(b + 1) * L, :] for b in range(B)]
    xs = deconv_bn_relu(xs, wdc1_ref[...], bdc1_ref[...], g1_ref[...], be1_ref[...])
    xs = deconv_bn_relu(xs, wdc2_ref[...], bdc2_ref[...], g2_ref[...], be2_ref[...])

    # final Linear(6->6), then Gaussian log-likelihood of x under N(recon, exp(logScale))
    log_scale = ls_ref[0]
    inv_2var = 0.5 * jnp.exp(-2.0 * log_scale)
    const = log_scale + 0.5 * math.log(2.0 * math.pi)
    wacc = wacc_ref[...]
    bacc = bacc_ref[...]
    for b in range(B):
        recon = jnp.dot(xs[b], wacc, preferred_element_type=jnp.float32) + bacc
        out_ref[b] = recon                                   # (Lin, Cin) position-major
        diff = x_ref[b] - recon
        logp = -(diff * diff) * inv_2var - const
        ll_ref[b:b + 1, :] = jnp.sum(jnp.sum(logp, axis=1, keepdims=True),
                                     axis=0, keepdims=True)


def decoder_tail(dhid2d, xT, KP, K=5):
    B, Lin, Cin = xT.shape
    return pl.pallas_call(
        functools.partial(_dec_tail_kernel, K=K),
        out_shape=(jax.ShapeDtypeStruct((B, Lin, Cin), jnp.float32),
                   jax.ShapeDtypeStruct((B, 1), jnp.float32)),
        in_specs=_vspecs(16) + [pl.BlockSpec(memory_space=SMEM)],
        out_specs=(pl.BlockSpec(memory_space=VMEM),
                   pl.BlockSpec(memory_space=VMEM)),
    )(dhid2d, xT,
      KP['d_attn_w'], KP['d_attn_b'], KP['d_outAng_w'], KP['d_outAng_b'],
      KP['d_deconv1_w'], KP['d_deconv1_b'], KP['d_bn1_g'], KP['d_bn1_b'],
      KP['d_deconv2_w'], KP['d_deconv2_b'], KP['d_bn2_g'], KP['d_bn2_b'],
      KP['d_outAcc_w'], KP['d_outAcc_b'], KP['logScale'])


# ----------------------------------------------------------------------------
# Parameters: synthetic PyTorch-layout init + one-time kernel-layout packing.
# ----------------------------------------------------------------------------
def init_params(key):
    keys = iter(jax.random.split(key, 48))

    def nrm(shape, scale):
        return (scale * jax.random.normal(next(keys), shape)).astype(jnp.float32)

    NL, H = 120, 12          # LSTM num_layers / hidden_size
    P = {}
    # --- encoder ---
    P['e_convAcc_w'] = nrm((6, 6, 5), 0.25);  P['e_convAcc_b'] = nrm((6,), 0.05)
    P['e_convAng_w'] = nrm((6, 6, 5), 0.25);  P['e_convAng_b'] = nrm((6,), 0.05)
    P['e_bn1_g'] = jnp.ones((6,), jnp.float32);  P['e_bn1_b'] = jnp.zeros((6,), jnp.float32)
    P['e_bn2_g'] = jnp.ones((6,), jnp.float32);  P['e_bn2_b'] = jnp.zeros((6,), jnp.float32)
    P['e_attn_w'] = nrm((12, 6), 0.35);  P['e_attn_b'] = nrm((12,), 0.05)
    P['e_lin1_w'] = nrm((12, 12), 0.25); P['e_lin1_b'] = nrm((12,), 0.05)
    P['e_lin2_w'] = nrm((12, 12), 0.25); P['e_lin2_b'] = nrm((12,), 0.05)
    P['e_mu_w'] = nrm((12, 12), 0.25);   P['e_mu_b'] = nrm((12,), 0.05)
    P['e_lv_w'] = nrm((12, 12), 0.25);   P['e_lv_b'] = nrm((12,), 0.05)
    P['e_lstm_wih'] = nrm((NL, 4 * H, H), 0.25)
    P['e_lstm_whh'] = nrm((NL, 4 * H, H), 0.25)
    P['e_lstm_b'] = nrm((NL, 4 * H), 0.05)          # b_ih + b_hh combined
    # --- decoder ---
    P['d_lin1_w'] = nrm((12, 12), 0.25); P['d_lin1_b'] = nrm((12,), 0.05)
    P['d_lin2_w'] = nrm((12, 12), 0.25); P['d_lin2_b'] = nrm((12,), 0.05)
    P['d_lstm_wih'] = nrm((NL, 4 * H, H), 0.25)
    P['d_lstm_whh'] = nrm((NL, 4 * H, H), 0.25)
    P['d_lstm_b'] = nrm((NL, 4 * H), 0.05)
    P['d_attn_w'] = nrm((12, 12), 0.25); P['d_attn_b'] = nrm((12,), 0.05)
    P['d_outAng_w'] = nrm((6, 12), 0.35); P['d_outAng_b'] = nrm((6,), 0.05)
    P['d_deconvAcc_w'] = nrm((6, 6, 5), 0.25); P['d_deconvAcc_b'] = nrm((6,), 0.05)
    P['d_deconvAng_w'] = nrm((6, 6, 5), 0.25); P['d_deconvAng_b'] = nrm((6,), 0.05)
    P['d_bn1_g'] = jnp.ones((6,), jnp.float32); P['d_bn1_b'] = jnp.zeros((6,), jnp.float32)
    P['d_bn2_g'] = jnp.ones((6,), jnp.float32); P['d_bn2_b'] = jnp.zeros((6,), jnp.float32)
    P['d_outAcc_w'] = nrm((6, 6), 0.4);  P['d_outAcc_b'] = nrm((6,), 0.05)
    P['logScale'] = jnp.zeros((1,), jnp.float32)
    return P


def prepare_params(P):
    """One-time repack of PyTorch-layout params into kernel-friendly layouts."""
    H = 12
    KP = {}

    def lin_w(w):                    # (out, in) -> (in, out)
        return jnp.transpose(w)

    def row(b):
        return b.reshape(1, -1)

    def conv_pack(w):                # Conv1d (Cout, Cin, K) -> (K*Cin, Cout) im2col
        return jnp.transpose(w, (2, 1, 0)).reshape(-1, w.shape[0])

    def deconv_pack(w):              # ConvTranspose1d (Cin, Cout, K) -> equiv. conv packed
        w_eff = jnp.transpose(jnp.flip(w, axis=2), (1, 0, 2))     # (Cout, Cin, K)
        return conv_pack(w_eff)

    def lstm_pack(wih, whh, b):
        # PyTorch gate order (i, f, g, o) -> (i, f, o, g); transpose to (H, 4H);
        # stack W_ih^T over W_hh^T into one (L, 2H, 4H).  b = b_ih + b_hh (combined).
        def reorder(a, axis):
            gi, gf, gg, go = jnp.split(a, 4, axis=axis)
            return jnp.concatenate([gi, gf, go, gg], axis=axis)
        wih_t = jnp.transpose(reorder(wih, 1), (0, 2, 1))
        whh_t = jnp.transpose(reorder(whh, 1), (0, 2, 1))
        w = jnp.concatenate([wih_t, whh_t], axis=1)               # (L, 2H, 4H)
        return w, reorder(b, 1).reshape(b.shape[0], 1, 4 * H)

    KP['e_conv1_w'] = conv_pack(P['e_convAcc_w']); KP['e_conv1_b'] = row(P['e_convAcc_b'])
    KP['e_bn1_g'] = row(P['e_bn1_g']); KP['e_bn1_b'] = row(P['e_bn1_b'])
    KP['e_conv2_w'] = conv_pack(P['e_convAng_w']); KP['e_conv2_b'] = row(P['e_convAng_b'])
    KP['e_bn2_g'] = row(P['e_bn2_g']); KP['e_bn2_b'] = row(P['e_bn2_b'])
    KP['e_attn_w'] = lin_w(P['e_attn_w']); KP['e_attn_b'] = row(P['e_attn_b'])
    KP['e_lstm_w'], KP['e_lstm_b'] = lstm_pack(P['e_lstm_wih'], P['e_lstm_whh'],
                                               P['e_lstm_b'])
    KP['e_lin1_w'] = lin_w(P['e_lin1_w']); KP['e_lin1_b'] = row(P['e_lin1_b'])
    KP['e_lin2_w'] = lin_w(P['e_lin2_w']); KP['e_lin2_b'] = row(P['e_lin2_b'])
    KP['e_mulv_w'] = jnp.concatenate([lin_w(P['e_mu_w']), lin_w(P['e_lv_w'])], axis=1)
    KP['e_mulv_b'] = jnp.concatenate([row(P['e_mu_b']), row(P['e_lv_b'])], axis=1)
    KP['d_lin1_w'] = lin_w(P['d_lin1_w']); KP['d_lin1_b'] = row(P['d_lin1_b'])
    KP['d_lin2_w'] = lin_w(P['d_lin2_w']); KP['d_lin2_b'] = row(P['d_lin2_b'])
    KP['d_lstm_w'], KP['d_lstm_b'] = lstm_pack(P['d_lstm_wih'], P['d_lstm_whh'],
                                               P['d_lstm_b'])
    KP['d_attn_w'] = lin_w(P['d_attn_w']); KP['d_attn_b'] = row(P['d_attn_b'])
    KP['d_outAng_w'] = lin_w(P['d_outAng_w']); KP['d_outAng_b'] = row(P['d_outAng_b'])
    KP['d_deconv1_w'] = deconv_pack(P['d_deconvAcc_w'])
    KP['d_deconv1_b'] = row(P['d_deconvAcc_b'])
    KP['d_bn1_g'] = row(P['d_bn1_g']); KP['d_bn1_b'] = row(P['d_bn1_b'])
    KP['d_deconv2_w'] = deconv_pack(P['d_deconvAng_w'])
    KP['d_deconv2_b'] = row(P['d_deconvAng_b'])
    KP['d_bn2_g'] = row(P['d_bn2_g']); KP['d_bn2_b'] = row(P['d_bn2_b'])
    KP['d_outAcc_w'] = lin_w(P['d_outAcc_w']); KP['d_outAcc_b'] = row(P['d_outAcc_b'])
    KP['logScale'] = P['logScale']
    return KP


# ----------------------------------------------------------------------------
# Forward pass (glue = cheap activation transposes/reshapes; compute = 5 kernels)
# ----------------------------------------------------------------------------
def vae_forward(KP, x, key):
    B = x.shape[0]
    H = KP['e_attn_w'].shape[1]          # 12
    L = KP['e_lstm_w'].shape[0]          # 120 (LSTM layers == latent sequence length)

    xT = jnp.transpose(x, (0, 2, 1))                                 # (B, 128, 6)

    # ---------------- encoder ----------------
    enc_seq = encoder_front(xT, KP)                                  # (B, 120, 12)
    enc_hid = lstm_stack(to_chunked(enc_seq),
                         KP['e_lstm_w'], KP['e_lstm_b'], B)          # (120, B, 12)
    hid2d = jnp.transpose(enc_hid, (1, 0, 2)).reshape(B * L, H)

    # ------ encoder tail + reparameterize + decoder head (single fused kernel) ------
    eps = jax.random.normal(key, (B * L, H), jnp.float32)
    latent2d, mu2d, lv2d, z2d, dec_in2d = mid_block(hid2d, eps, KP)

    # ---------------- decoder ----------------
    dec_hid = lstm_stack(to_chunked(dec_in2d.reshape(B, L, H)),
                         KP['d_lstm_w'], KP['d_lstm_b'], B)          # (120, B, 12)
    dhid2d = jnp.transpose(dec_hid, (1, 0, 2)).reshape(B * L, H)
    recon_T, ll = decoder_tail(dhid2d, xT, KP)                       # (B,128,6), (B,1)

    output = jnp.transpose(recon_T, (0, 2, 1))                       # (B, 6, 128)
    return (output,
            z2d.reshape(B, L, H),
            latent2d.reshape(B, L, H),
            mu2d.reshape(B, L, H),
            lv2d.reshape(B, L, H),
            ll.reshape(B))


# ----------------------------------------------------------------------------
if __name__ == "__main__":
    key = jax.random.PRNGKey(0)
    pkey, xkey, ekey = jax.random.split(key, 3)
    params = init_params(pkey)
    kparams = prepare_params(params)     # one-time weight packing (nothing per-step)

    B = 2
    # input length 128 so the reconstruction (B,6,128) matches x for the likelihood
    x = jax.random.normal(xkey, (B, 6, 128), jnp.float32)

    fwd = jax.jit(vae_forward)
    outs = fwd(kparams, x, ekey)
    jax.block_until_ready(outs)

    output, z, latent, mu, log_var, recon_ll = outs
    assert output.shape == (B, 6, 128)
    assert z.shape == (B, 120, 12) and mu.shape == (B, 120, 12)
    assert latent.shape == (B, 120, 12) and log_var.shape == (B, 120, 12)
    assert recon_ll.shape == (B,)
    assert bool(jnp.all(jnp.isfinite(output)))
    assert bool(jnp.all(jnp.isfinite(recon_ll)))
    print("KERNEL_OK")
</pallas_src>

<mosaic_0001>
module attributes {stable_mosaic.version = 11 : i64} {
  func.func @_enc_front_kernel(%arg0: memref<2x128x6xf32, #tpu.memory_space<vmem>>, %arg1: memref<30x6xf32, #tpu.memory_space<vmem>>, %arg2: memref<1x6xf32, #tpu.memory_space<vmem>>, %arg3: memref<1x6xf32, #tpu.memory_space<vmem>>, %arg4: memref<1x6xf32, #tpu.memory_space<vmem>>, %arg5: memref<30x6xf32, #tpu.memory_space<vmem>>, %arg6: memref<1x6xf32, #tpu.memory_space<vmem>>, %arg7: memref<1x6xf32, #tpu.memory_space<vmem>>, %arg8: memref<1x6xf32, #tpu.memory_space<vmem>>, %arg9: memref<6x12xf32, #tpu.memory_space<vmem>>, %arg10: memref<1x12xf32, #tpu.memory_space<vmem>>, %arg11: memref<2x120x12xf32, #tpu.memory_space<vmem>>) attributes {dimension_semantics = [], scalar_prefetch = 0 : i64, scratch_operands = 0 : i64, tpu.core_type = #tpu.core_type<tc>} {
    %c0 = arith.constant 0 : index
    %c0_0 = arith.constant 0 : index
    %c0_1 = arith.constant 0 : index
    %0 = vector.load %arg0[%c0, %c0_0, %c0_1] : memref<2x128x6xf32, #tpu.memory_space<vmem>>, vector<1x128x6xf32>
    %1 = vector.shape_cast %0 : vector<1x128x6xf32> to vector<128x6xf32>
    %c1 = arith.constant 1 : index
    %c0_2 = arith.constant 0 : index
    %c0_3 = arith.constant 0 : index
    %2 = vector.load %arg0[%c1, %c0_2, %c0_3] : memref<2x128x6xf32, #tpu.memory_space<vmem>>, vector<1x128x6xf32>
    %3 = vector.shape_cast %2 : vector<1x128x6xf32> to vector<128x6xf32>
    %c0_4 = arith.constant 0 : index
    %c0_5 = arith.constant 0 : index
    %4 = vector.load %arg1[%c0_4, %c0_5] : memref<30x6xf32, #tpu.memory_space<vmem>>, vector<30x6xf32>
    %c0_6 = arith.constant 0 : index
    %c0_7 = arith.constant 0 : index
    %5 = vector.load %arg2[%c0_6, %c0_7] : memref<1x6xf32, #tpu.memory_space<vmem>>, vector<1x6xf32>
    %c0_8 = arith.constant 0 : index
    %c0_9 = arith.constant 0 : index
    %6 = vector.load %arg3[%c0_8, %c0_9] : memref<1x6xf32, #tpu.memory_space<vmem>>, vector<1x6xf32>
    %c0_10 = arith.constant 0 : index
    %c0_11 = arith.constant 0 : index
    %7 = vector.load %arg4[%c0_10, %c0_11] : memref<1x6xf32, #tpu.memory_space<vmem>>, vector<1x6xf32>
    %8 = vector.extract_strided_slice %1 {offsets = [0, 0], sizes = [124, 6], strides = [1, 1]} : vector<128x6xf32> to vector<124x6xf32>
    %9 = vector.extract_strided_slice %1 {offsets = [1, 0], sizes = [124, 6], strides = [1, 1]} : vector<128x6xf32> to vector<124x6xf32>
    %10 = vector.extract_strided_slice %1 {offsets = [2, 0], sizes = [124, 6], strides = [1, 1]} : vector<128x6xf32> to vector<124x6xf32>
    %11 = vector.extract_strided_slice %1 {offsets = [3, 0], sizes = [124, 6], strides = [1, 1]} : vector<128x6xf32> to vector<124x6xf32>
    %12 = vector.extract_strided_slice %1 {offsets = [4, 0], sizes = [124, 6], strides = [1, 1]} : vector<128x6xf32> to vector<124x6xf32>
    %13 = tpu.concatenate %8, %9, %10, %11, %12 in 1 : vector<124x6xf32>, vector<124x6xf32>, vector<124x6xf32>, vector<124x6xf32>, vector<124x6xf32> -> vector<124x30xf32>
    %cst = arith.constant dense<0.000000e+00> : vector<124x6xf32>
    %14 = tpu.matmul %13, %4, %cst {dimension_numbers = #tpu.dot_dimension_numbers<[1], [0], [0], [1], [0, 0, 1, 1], [], []>} : vector<124x30xf32>, vector<30x6xf32>, vector<124x6xf32> -> vector<124x6xf32>
    %15 = vector.broadcast %5 : vector<1x6xf32> to vector<124x6xf32>
    %16 = arith.addf %14, %15 : vector<124x6xf32>
    %17 = vector.extract_strided_slice %3 {offsets = [0, 0], sizes = [124, 6], strides = [1, 1]} : vector<128x6xf32> to vector<124x6xf32>
    %18 = vector.extract_strided_slice %3 {offsets = [1, 0], sizes = [124, 6], strides = [1, 1]} : vector<128x6xf32> to vector<124x6xf32>
    %19 = vector.extract_strided_slice %3 {offsets = [2, 0], sizes = [124, 6], strides = [1, 1]} : vector<128x6xf32> to vector<124x6xf32>
    %20 = vector.extract_strided_slice %3 {offsets = [3, 0], sizes = [124, 6], strides = [1, 1]} : vector<128x6xf32> to vector<124x6xf32>
    %21 = vector.extract_strided_slice %3 {offsets = [4, 0], sizes = [124, 6], strides = [1, 1]} : vector<128x6xf32> to vector<124x6xf32>
    %22 = tpu.concatenate %17, %18, %19, %20, %21 in 1 : vector<124x6xf32>, vector<124x6xf32>, vector<124x6xf32>, vector<124x6xf32>, vector<124x6xf32> -> vector<124x30xf32>
    %cst_12 = arith.constant dense<0.000000e+00> : vector<124x6xf32>
    %23 = tpu.matmul %22, %4, %cst_12 {dimension_numbers = #tpu.dot_dimension_numbers<[1], [0], [0], [1], [0, 0, 1, 1], [], []>} : vector<124x30xf32>, vector<30x6xf32>, vector<124x6xf32> -> vector<124x6xf32>
    %24 = vector.broadcast %5 : vector<1x6xf32> to vector<124x6xf32>
    %25 = arith.addf %23, %24 : vector<124x6xf32>
    %cst_13 = arith.constant dense<0.000000e+00> : vector<6xf32>
    %26 = vector.multi_reduction <add>, %16, %cst_13 [0] : vector<124x6xf32> to vector<6xf32>
    %27 = vector.shape_cast %26 : vector<6xf32> to vector<1x6xf32>
    %cst_14 = arith.constant 0.000000e+00 : f32
    %28 = vector.broadcast %cst_14 : f32 to vector<1x6xf32>
    %29 = arith.addf %28, %27 : vector<1x6xf32>
    %cst_15 = arith.constant dense<0.000000e+00> : vector<6xf32>
    %30 = vector.multi_reduction <add>, %25, %cst_15 [0] : vector<124x6xf32> to vector<6xf32>
    %31 = vector.shape_cast %30 : vector<6xf32> to vector<1x6xf32>
    %32 = arith.addf %29, %31 : vector<1x6xf32>
    %cst_16 = arith.constant 2.480000e+02 : f32
    %33 = vector.broadcast %cst_16 : f32 to vector<1x6xf32>
    %34 = arith.divf %32, %33 : vector<1x6xf32>
    %35 = vector.broadcast %34 : vector<1x6xf32> to vector<124x6xf32>
    %36 = arith.subf %16, %35 : vector<124x6xf32>
    %37 = vector.broadcast %34 : vector<1x6xf32> to vector<124x6xf32>
    %38 = arith.subf %16, %37 : vector<124x6xf32>
    %39 = arith.mulf %36, %38 : vector<124x6xf32>
    %cst_17 = arith.constant dense<0.000000e+00> : vector<6xf32>
    %40 = vector.multi_reduction <add>, %39, %cst_17 [0] : vector<124x6xf32> to vector<6xf32>
    %41 = vector.shape_cast %40 : vector<6xf32> to vector<1x6xf32>
    %cst_18 = arith.constant 0.000000e+00 : f32
    %42 = vector.broadcast %cst_18 : f32 to vector<1x6xf32>
    %43 = arith.addf %42, %41 : vector<1x6xf32>
    %44 = vector.broadcast %34 : vector<1x6xf32> to vector<124x6xf32>
    %45 = arith.subf %25, %44 : vector<124x6xf32>
    %46 = vector.broadcast %34 : vector<1x6xf32> to vector<124x6xf32>
    %47 = arith.subf %25, %46 : vector<124x6xf32>
    %48 = arith.mulf %45, %47 : vector<124x6xf32>
    %cst_19 = arith.constant dense<0.000000e+00> : vector<6xf32>
    %49 = vector.multi_reduction <add>, %48, %cst_19 [0] : vector<124x6xf32> to vector<6xf32>
    %50 = vector.shape_cast %49 : vector<6xf32> to vector<1x6xf32>
    %51 = arith.addf %43, %50 : vector<1x6xf32>
    %cst_20 = arith.constant 2.480000e+02 : f32
    %52 = vector.broadcast %cst_20 : f32 to vector<1x6xf32>
    %53 = arith.divf %51, %52 : vector<1x6xf32>
    %cst_21 = arith.constant 9.99999974E-6 : f32
    %54 = vector.broadcast %cst_21 : f32 to vector<1x6xf32>
    %55 = arith.addf %53, %54 : vector<1x6xf32>
    %56 = math.rsqrt %55 : vector<1x6xf32>
    %57 = arith.mulf %56, %6 : vector<1x6xf32>
    %58 = vector.broadcast %34 : vector<1x6xf32> to vector<124x6xf32>
    %59 = arith.subf %16, %58 : vector<124x6xf32>
    %60 = vector.broadcast %57 : vector<1x6xf32> to vector<124x6xf32>
    %61 = arith.mulf %59, %60 : vector<124x6xf32>
    %62 = vector.broadcast %7 : vector<1x6xf32> to vector<124x6xf32>
    %63 = arith.addf %61, %62 : vector<124x6xf32>
    %cst_22 = arith.constant 0.000000e+00 : f32
    %64 = vector.broadcast %cst_22 : f32 to vector<124x6xf32>
    %65 = arith.maximumf %63, %64 : vector<124x6xf32>
    %66 = vector.broadcast %34 : vector<1x6xf32> to vector<124x6xf32>
    %67 = arith.subf %25, %66 : vector<124x6xf32>
    %68 = vector.broadcast %57 : vector<1x6xf32> to vector<124x6xf32>
    %69 = arith.mulf %67, %68 : vector<124x6xf32>
    %70 = vector.broadcast %7 : vector<1x6xf32> to vector<124x6xf32>
    %71 = arith.addf %69, %70 : vector<124x6xf32>
    %cst_23 = arith.constant 0.000000e+00 : f32
    %72 = vector.broadcast %cst_23 : f32 to vector<124x6xf32>
    %73 = arith.maximumf %71, %72 : vector<124x6xf32>
    %c0_24 = arith.constant 0 : index
    %c0_25 = arith.constant 0 : index
    %74 = vector.load %arg5[%c0_24, %c0_25] : memref<30x6xf32, #tpu.memory_space<vmem>>, vector<30x6xf32>
    %c0_26 = arith.constant 0 : index
    %c0_27 = arith.constant 0 : index
    %75 = vector.load %arg6[%c0_26, %c0_27] : memref<1x6xf32, #tpu.memory_space<vmem>>, vector<1x6xf32>
    %c0_28 = arith.constant 0 : index
    %c0_29 = arith.constant 0 : index
    %76 = vector.load %arg7[%c0_28, %c0_29] : memref<1x6xf32, #tpu.memory_space<vmem>>, vector<1x6xf32>
    %c0_30 = arith.constant 0 : index
    %c0_31 = arith.constant 0 : index
    %77 = vector.load %arg8[%c0_30, %c0_31] : memref<1x6xf32, #tpu.memory_space<vmem>>, vector<1x6xf32>
    %78 = vector.extract_strided_slice %65 {offsets = [0, 0], sizes = [120, 6], strides = [1, 1]} : vector<124x6xf32> to vector<120x6xf32>
    %79 = vector.extract_strided_slice %65 {offsets = [1, 0], sizes = [120, 6], strides = [1, 1]} : vector<124x6xf32> to vector<120x6xf32>
    %80 = vector.extract_strided_slice %65 {offsets = [2, 0], sizes = [120, 6], strides = [1, 1]} : vector<124x6xf32> to vector<120x6xf32>
    %81 = vector.extract_strided_slice %65 {offsets = [3, 0], sizes = [120, 6], strides = [1, 1]} : vector<124x6xf32> to vector<120x6xf32>
    %82 = vector.extract_strided_slice %65 {offsets = [4, 0], sizes = [120, 6], strides = [1, 1]} : vector<124x6xf32> to vector<120x6xf32>
    %83 = tpu.concatenate %78, %79, %80, %81, %82 in 1 : vector<120x6xf32>, vector<120x6xf32>, vector<120x6xf32>, vector<120x6xf32>, vector<120x6xf32> -> vector<120x30xf32>
    %cst_32 = arith.constant dense<0.000000e+00> : vector<120x6xf32>
    %84 = tpu.matmul %83, %74, %cst_32 {dimension_numbers = #tpu.dot_dimension_numbers<[1], [0], [0], [1], [0, 0, 1, 1], [], []>} : vector<120x30xf32>, vector<30x6xf32>, vector<120x6xf32> -> vector<120x6xf32>
    %85 = vector.broadcast %75 : vector<1x6xf32> to vector<120x6xf32>
    %86 = arith.addf %84, %85 : vector<120x6xf32>
    %87 = vector.extract_strided_slice %73 {offsets = [0, 0], sizes = [120, 6], strides = [1, 1]} : vector<124x6xf32> to vector<120x6xf32>
    %88 = vector.extract_strided_slice %73 {offsets = [1, 0], sizes = [120, 6], strides = [1, 1]} : vector<124x6xf32> to vector<120x6xf32>
    %89 = vector.extract_strided_slice %73 {offsets = [2, 0], sizes = [120, 6], strides = [1, 1]} : vector<124x6xf32> to vector<120x6xf32>
    %90 = vector.extract_strided_slice %73 {offsets = [3, 0], sizes = [120, 6], strides = [1, 1]} : vector<124x6xf32> to vector<120x6xf32>
    %91 = vector.extract_strided_slice %73 {offsets = [4, 0], sizes = [120, 6], strides = [1, 1]} : vector<124x6xf32> to vector<120x6xf32>
    %92 = tpu.concatenate %87, %88, %89, %90, %91 in 1 : vector<120x6xf32>, vector<120x6xf32>, vector<120x6xf32>, vector<120x6xf32>, vector<120x6xf32> -> vector<120x30xf32>
    %cst_33 = arith.constant dense<0.000000e+00> : vector<120x6xf32>
    %93 = tpu.matmul %92, %74, %cst_33 {dimension_numbers = #tpu.dot_dimension_numbers<[1], [0], [0], [1], [0, 0, 1, 1], [], []>} : vector<120x30xf32>, vector<30x6xf32>, vector<120x6xf32> -> vector<120x6xf32>
    %94 = vector.broadcast %75 : vector<1x6xf32> to vector<120x6xf32>
    %95 = arith.addf %93, %94 : vector<120x6xf32>
    %cst_34 = arith.constant dense<0.000000e+00> : vector<6xf32>
    %96 = vector.multi_reduction <add>, %86, %cst_34 [0] : vector<120x6xf32> to vector<6xf32>
    %97 = vector.shape_cast %96 : vector<6xf32> to vector<1x6xf32>
    %cst_35 = arith.constant 0.000000e+00 : f32
    %98 = vector.broadcast %cst_35 : f32 to vector<1x6xf32>
    %99 = arith.addf %98, %97 : vector<1x6xf32>
    %cst_36 = arith.constant dense<0.000000e+00> : vector<6xf32>
    %100 = vector.multi_reduction <add>, %95, %cst_36 [0] : vector<120x6xf32> to vector<6xf32>
    %101 = vector.shape_cast %100 : vector<6xf32> to vector<1x6xf32>
    %102 = arith.addf %99, %101 : vector<1x6xf32>
    %cst_37 = arith.constant 2.400000e+02 : f32
    %103 = vector.broadcast %cst_37 : f32 to vector<1x6xf32>
    %104 = arith.divf %102, %103 : vector<1x6xf32>
    %105 = vector.broadcast %104 : vector<1x6xf32> to vector<120x6xf32>
    %106 = arith.subf %86, %105 : vector<120x6xf32>
    %107 = vector.broadcast %104 : vector<1x6xf32> to vector<120x6xf32>
    %108 = arith.subf %86, %107 : vector<120x6xf32>
    %109 = arith.mulf %106, %108 : vector<120x6xf32>
    %cst_38 = arith.constant dense<0.000000e+00> : vector<6xf32>
    %110 = vector.multi_reduction <add>, %109, %cst_38 [0] : vector<120x6xf32> to vector<6xf32>
    %111 = vector.shape_cast %110 : vector<6xf32> to vector<1x6xf32>
    %cst_39 = arith.constant 0.000000e+00 : f32
    %112 = vector.broadcast %cst_39 : f32 to vector<1x6xf32>
    %113 = arith.addf %112, %111 : vector<1x6xf32>
    %114 = vector.broadcast %104 : vector<1x6xf32> to vector<120x6xf32>
    %115 = arith.subf %95, %114 : vector<120x6xf32>
    %116 = vector.broadcast %104 : vector<1x6xf32> to vector<120x6xf32>
    %117 = arith.subf %95, %116 : vector<120x6xf32>
    %118 = arith.mulf %115, %117 : vector<120x6xf32>
    %cst_40 = arith.constant dense<0.000000e+00> : vector<6xf32>
    %119 = vector.multi_reduction <add>, %118, %cst_40 [0] : vector<120x6xf32> to vector<6xf32>
    %120 = vector.shape_cast %119 : vector<6xf32> to vector<1x6xf32>
    %121 = arith.addf %113, %120 : vector<1x6xf32>
    %cst_41 = arith.constant 2.400000e+02 : f32
    %122 = vector.broadcast %cst_41 : f32 to vector<1x6xf32>
    %123 = arith.divf %121, %122 : vector<1x6xf32>
    %cst_42 = arith.constant 9.99999974E-6 : f32
    %124 = vector.broadcast %cst_42 : f32 to vector<1x6xf32>
    %125 = arith.addf %123, %124 : vector<1x6xf32>
    %126 = math.rsqrt %125 : vector<1x6xf32>
    %127 = arith.mulf %126, %76 : vector<1x6xf32>
    %128 = vector.broadcast %104 : vector<1x6xf32> to vector<120x6xf32>
    %129 = arith.subf %86, %128 : vector<120x6xf32>
    %130 = vector.broadcast %127 : vector<1x6xf32> to vector<120x6xf32>
    %131 = arith.mulf %129, %130 : vector<120x6xf32>
    %132 = vector.broadcast %77 : vector<1x6xf32> to vector<120x6xf32>
    %133 = arith.addf %131, %132 : vector<120x6xf32>
    %cst_43 = arith.constant 0.000000e+00 : f32
    %134 = vector.broadcast %cst_43 : f32 to vector<120x6xf32>
    %135 = arith.maximumf %133, %134 : vector<120x6xf32>
    %136 = vector.broadcast %104 : vector<1x6xf32> to vector<120x6xf32>
    %137 = arith.subf %95, %136 : vector<120x6xf32>
    %138 = vector.broadcast %127 : vector<1x6xf32> to vector<120x6xf32>
    %139 = arith.mulf %137, %138 : vector<120x6xf32>
    %140 = vector.broadcast %77 : vector<1x6xf32> to vector<120x6xf32>
    %141 = arith.addf %139, %140 : vector<120x6xf32>
    %cst_44 = arith.constant 0.000000e+00 : f32
    %142 = vector.broadcast %cst_44 : f32 to vector<120x6xf32>
    %143 = arith.maximumf %141, %142 : vector<120x6xf32>
    %c0_45 = arith.constant 0 : index
    %c0_46 = arith.constant 0 : index
    %144 = vector.load %arg9[%c0_45, %c0_46] : memref<6x12xf32, #tpu.memory_space<vmem>>, vector<6x12xf32>
    %c0_47 = arith.constant 0 : index
    %c0_48 = arith.constant 0 : index
    %145 = vector.load %arg10[%c0_47, %c0_48] : memref<1x12xf32, #tpu.memory_space<vmem>>, vector<1x12xf32>
    %cst_49 = arith.constant dense<0.000000e+00> : vector<120x12xf32>
    %146 = tpu.matmul %135, %144, %cst_49 {dimension_numbers = #tpu.dot_dimension_numbers<[1], [0], [0], [1], [0, 0, 1, 1], [], []>} : vector<120x6xf32>, vector<6x12xf32>, vector<120x12xf32> -> vector<120x12xf32>
    %147 = vector.broadcast %145 : vector<1x12xf32> to vector<120x12xf32>
    %148 = arith.addf %146, %147 : vector<120x12xf32>
    %cst_50 = arith.constant 0.000000e+00 : f32
    %149 = vector.broadcast %cst_50 : f32 to vector<120x12xf32>
    %150 = arith.maximumf %148, %149 : vector<120x12xf32>
    %c0_51 = arith.constant 0 : index
    %c0_52 = arith.constant 0 : index
    %c0_53 = arith.constant 0 : index
    %151 = vector.load %arg11[%c0_51, %c0_52, %c0_53] : memref<2x120x12xf32, #tpu.memory_space<vmem>>, vector<1x120x12xf32>
    %152 = vector.shape_cast %151 : vector<1x120x12xf32> to vector<120x12xf32>
    %153 = vector.shape_cast %150 : vector<120x12xf32> to vector<1x120x12xf32>
    tpu.vector_store %arg11[%c0_51, %c0_52, %c0_53], %153 {strides = array<i32>} : memref<2x120x12xf32, #tpu.memory_space<vmem>>, vector<1x120x12xf32>,
    %cst_54 = arith.constant dense<0.000000e+00> : vector<120x12xf32>
    %154 = tpu.matmul %143, %144, %cst_54 {dimension_numbers = #tpu.dot_dimension_numbers<[1], [0], [0], [1], [0, 0, 1, 1], [], []>} : vector<120x6xf32>, vector<6x12xf32>, vector<120x12xf32> -> vector<120x12xf32>
    %155 = vector.broadcast %145 : vector<1x12xf32> to vector<120x12xf32>
    %156 = arith.addf %154, %155 : vector<120x12xf32>
    %cst_55 = arith.constant 0.000000e+00 : f32
    %157 = vector.broadcast %cst_55 : f32 to vector<120x12xf32>
    %158 = arith.maximumf %156, %157 : vector<120x12xf32>
    %c1_56 = arith.constant 1 : index
    %c0_57 = arith.constant 0 : index
    %c0_58 = arith.constant 0 : index
    %159 = vector.load %arg11[%c1_56, %c0_57, %c0_58] : memref<2x120x12xf32, #tpu.memory_space<vmem>>, vector<1x120x12xf32>
    %160 = vector.shape_cast %159 : vector<1x120x12xf32> to vector<120x12xf32>
    %161 = vector.shape_cast %158 : vector<120x12xf32> to vector<1x120x12xf32>
    tpu.vector_store %arg11[%c1_56, %c0_57, %c0_58], %161 {strides = array<i32>} : memref<2x120x12xf32, #tpu.memory_space<vmem>>, vector<1x120x12xf32>,
    return
  }
}

module attributes {stable_mosaic.version = 11 : i64} {
  func.func @_lstm_stack_kernel(%arg0: memref<15x16x12xf32, #tpu.memory_space<vmem>>, %arg1: memref<120x24x48xf32, #tpu.memory_space<vmem>>, %arg2: memref<120x1x48xf32, #tpu.memory_space<vmem>>, %arg3: memref<120x2x12xf32, #tpu.memory_space<vmem>>, %arg4: memref<15x16x12xf32, #tpu.memory_space<vmem>>) attributes {dimension_semantics = [], scalar_prefetch = 0 : i64, scratch_operands = 1 : i64, tpu.core_type = #tpu.core_type<tc>} {
    %c0 = arith.constant 0 : index
    %c0_0 = arith.constant 0 : index
    %c0_1 = arith.constant 0 : index
    %0 = vector.load %arg0[%c0, %c0_0, %c0_1] : memref<15x16x12xf32, #tpu.memory_space<vmem>>, vector<15x16x12xf32>
    %c0_2 = arith.constant 0 : index
    %c0_3 = arith.constant 0 : index
    %c0_4 = arith.constant 0 : index
    %1 = vector.load %arg4[%c0_2, %c0_3, %c0_4] : memref<15x16x12xf32, #tpu.memory_space<vmem>>, vector<15x16x12xf32>
    tpu.vector_store %arg4[%c0_2, %c0_3, %c0_4], %0 {strides = array<i32>} : memref<15x16x12xf32, #tpu.memory_space<vmem>>, vector<15x16x12xf32>,
    %c0_i32 = arith.constant 0 : i32
    %c120_i32 = arith.constant 120 : i32
    %2 = arith.addi %c0_i32, %c120_i32 : i32
    %c1_i32 = arith.constant 1 : i32
    scf.for %arg5 = %c0_i32 to %2 step %c1_i32  : i32 {
      %3 = arith.index_cast %arg5 : i32 to index
      %c0_6 = arith.constant 0 : index
      %c0_7 = arith.constant 0 : index
      %4 = vector.load %arg1[%3, %c0_6, %c0_7] : memref<120x24x48xf32, #tpu.memory_space<vmem>>, vector<1x24x48xf32>
      %5 = vector.shape_cast %4 : vector<1x24x48xf32> to vector<24x48xf32>
      %6 = vector.extract_strided_slice %5 {offsets = [0, 0], sizes = [12, 48], strides = [1, 1]} : vector<24x48xf32> to vector<12x48xf32>
      %7 = vector.extract_strided_slice %5 {offsets = [12, 0], sizes = [12, 48], strides = [1, 1]} : vector<24x48xf32> to vector<12x48xf32>
      %8 = arith.index_cast %arg5 : i32 to index
      %c0_8 = arith.constant 0 : index
      %c0_9 = arith.constant 0 : index
      %9 = vector.load %arg2[%8, %c0_8, %c0_9] : memref<120x1x48xf32, #tpu.memory_space<vmem>>, vector<1x1x48xf32>
      %10 = vector.shape_cast %9 : vector<1x1x48xf32> to vector<1x48xf32>
      %cst = arith.constant 0.000000e+00 : f32
      %11 = vector.broadcast %cst : f32 to vector<2x12xf32>
      %c0_i32_10 = arith.constant 0 : i32
      %c15_i32 = arith.constant 15 : i32
      %12 = arith.addi %c0_i32_10, %c15_i32 : i32
      %c1_i32_11 = arith.constant 1 : i32
      %13:2 = scf.for %arg6 = %c0_i32_10 to %12 step %c1_i32_11 iter_args(%arg7 = %11, %arg8 = %11) -> (vector<2x12xf32>, vector<2x12xf32>)  : i32 {
        %18 = arith.index_cast %arg6 : i32 to index
        %c0_15 = arith.constant 0 : index
        %c0_16 = arith.constant 0 : index
        %19 = vector.load %arg4[%18, %c0_15, %c0_16] : memref<15x16x12xf32, #tpu.memory_space<vmem>>, vector<1x16x12xf32>
        %20 = vector.shape_cast %19 : vector<1x16x12xf32> to vector<16x12xf32>
        %cst_17 = arith.constant dense<0.000000e+00> : vector<16x48xf32>
        %21 = tpu.matmul %20, %6, %cst_17 {dimension_numbers = #tpu.dot_dimension_numbers<[1], [0], [0], [1], [0, 0, 1, 1], [], []>} : vector<16x12xf32>, vector<12x48xf32>, vector<16x48xf32> -> vector<16x48xf32>
        %22 = vector.broadcast %10 : vector<1x48xf32> to vector<16x48xf32>
        %23 = arith.addf %21, %22 : vector<16x48xf32>
        %24 = vector.extract_strided_slice %23 {offsets = [0, 0], sizes = [2, 48], strides = [1, 1]} : vector<16x48xf32> to vector<2x48xf32>
        %cst_18 = arith.constant dense<0.000000e+00> : vector<2x48xf32>
        %25 = tpu.matmul %arg7, %7, %cst_18 {dimension_numbers = #tpu.dot_dimension_numbers<[1], [0], [0], [1], [0, 0, 1, 1], [], []>} : vector<2x12xf32>, vector<12x48xf32>, vector<2x48xf32> -> vector<2x48xf32>
        %26 = arith.addf %24, %25 : vector<2x48xf32>
        %27 = vector.extract_strided_slice %26 {offsets = [0, 0], sizes = [2, 36], strides = [1, 1]} : vector<2x48xf32> to vector<2x36xf32>
        %cst_19 = arith.constant 0.000000e+00 : f32
        %28 = vector.broadcast %cst_19 : f32 to vector<2x36xf32>
        %29 = arith.subf %28, %27 : vector<2x36xf32>
        %30 = math.exp %29 : vector<2x36xf32>
        %cst_20 = arith.constant 1.000000e+00 : f32
        %31 = vector.broadcast %cst_20 : f32 to vector<2x36xf32>
        %32 = arith.addf %31, %30 : vector<2x36xf32>
        %cst_21 = arith.constant 1.000000e+00 : f32
        %33 = vector.broadcast %cst_21 : f32 to vector<2x36xf32>
        %34 = arith.divf %33, %32 : vector<2x36xf32>
        %35 = vector.extract_strided_slice %34 {offsets = [0, 0], sizes = [2, 12], strides = [1, 1]} : vector<2x36xf32> to vector<2x12xf32>
        %36 = vector.extract_strided_slice %34 {offsets = [0, 12], sizes = [2, 12], strides = [1, 1]} : vector<2x36xf32> to vector<2x12xf32>
        %37 = vector.extract_strided_slice %34 {offsets = [0, 24], sizes = [2, 12], strides = [1, 1]} : vector<2x36xf32> to vector<2x12xf32>
        %38 = vector.extract_strided_slice %26 {offsets = [0, 36], sizes = [2, 12], strides = [1, 1]} : vector<2x48xf32> to vector<2x12xf32>
        %39 = math.tanh %38 : vector<2x12xf32>
        %40 = arith.mulf %36, %arg8 : vector<2x12xf32>
        %41 = arith.mulf %35, %39 : vector<2x12xf32>
        %42 = arith.addf %40, %41 : vector<2x12xf32>
        %43 = math.tanh %42 : vector<2x12xf32>
        %44 = arith.mulf %37, %43 : vector<2x12xf32>
        %45 = arith.index_cast %arg6 : i32 to index
        %c0_22 = arith.constant 0 : index
        %c0_23 = arith.constant 0 : index
        %46 = vector.load %arg4[%45, %c0_22, %c0_23] : memref<15x16x12xf32, #tpu.memory_space<vmem>>, vector<1x2x12xf32>
        %47 = vector.shape_cast %46 : vector<1x2x12xf32> to vector<2x12xf32>
        %48 = vector.shape_cast %44 : vector<2x12xf32> to vector<1x2x12xf32>
        tpu.vector_store %arg4[%45, %c0_22, %c0_23], %48 {strides = array<i32>} : memref<15x16x12xf32, #tpu.memory_space<vmem>>, vector<1x2x12xf32>,
        %49 = vector.extract_strided_slice %23 {offsets = [2, 0], sizes = [2, 48], strides = [1, 1]} : vector<16x48xf32> to vector<2x48xf32>
        %cst_24 = arith.constant dense<0.000000e+00> : vector<2x48xf32>
        %50 = tpu.matmul %44, %7, %cst_24 {dimension_numbers = #tpu.dot_dimension_numbers<[1], [0], [0], [1], [0, 0, 1, 1], [], []>} : vector<2x12xf32>, vector<12x48xf32>, vector<2x48xf32> -> vector<2x48xf32>
        %51 = arith.addf %49, %50 : vector<2x48xf32>
        %52 = vector.extract_strided_slice %51 {offsets = [0, 0], sizes = [2, 36], strides = [1, 1]} : vector<2x48xf32> to vector<2x36xf32>
        %cst_25 = arith.constant 0.000000e+00 : f32
        %53 = vector.broadcast %cst_25 : f32 to vector<2x36xf32>
        %54 = arith.subf %53, %52 : vector<2x36xf32>
        %55 = math.exp %54 : vector<2x36xf32>
        %cst_26 = arith.constant 1.000000e+00 : f32
        %56 = vector.broadcast %cst_26 : f32 to vector<2x36xf32>
        %57 = arith.addf %56, %55 : vector<2x36xf32>
        %cst_27 = arith.constant 1.000000e+00 : f32
        %58 = vector.broadcast %cst_27 : f32 to vector<2x36xf32>
        %59 = arith.divf %58, %57 : vector<2x36xf32>
        %60 = vector.extract_strided_slice %59 {offsets = [0, 0], sizes = [2, 12], strides = [1, 1]} : vector<2x36xf32> to vector<2x12xf32>
        %61 = vector.extract_strided_slice %59 {offsets = [0, 12], sizes = [2, 12], strides = [1, 1]} : vector<2x36xf32> to vector<2x12xf32>
        %62 = vector.extract_strided_slice %59 {offsets = [0, 24], sizes = [2, 12], strides = [1, 1]} : vector<2x36xf32> to vector<2x12xf32>
        %63 = vector.extract_strided_slice %51 {offsets = [0, 36], sizes = [2, 12], strides = [1, 1]} : vector<2x48xf32> to vector<2x12xf32>
        %64 = math.tanh %63 : vector<2x12xf32>
        %65 = arith.mulf %61, %42 : vector<2x12xf32>
        %66 = arith.mulf %60, %64 : vector<2x12xf32>
        %67 = arith.addf %65, %66 : vector<2x12xf32>
        %68 = math.tanh %67 : vector<2x12xf32>
        %69 = arith.mulf %62, %68 : vector<2x12xf32>
        %70 = arith.index_cast %arg6 : i32 to index
        %c2 = arith.constant 2 : index
        %c0_28 = arith.constant 0 : index
        %71 = vector.load %arg4[%70, %c2, %c0_28] : memref<15x16x12xf32, #tpu.memory_space<vmem>>, vector<1x2x12xf32>
        %72 = vector.shape_cast %71 : vector<1x2x12xf32> to vector<2x12xf32>
        %73 = vector.shape_cast %69 : vector<2x12xf32> to vector<1x2x12xf32>
        tpu.vector_store %arg4[%70, %c2, %c0_28], %73 {strides = array<i32>} : memref<15x16x12xf32, #tpu.memory_space<vmem>>, vector<1x2x12xf32>,
        %74 = vector.extract_strided_slice %23 {offsets = [4, 0], sizes = [2, 48], strides = [1, 1]} : vector<16x48xf32> to vector<2x48xf32>
        %cst_29 = arith.constant dense<0.000000e+00> : vector<2x48xf32>
        %75 = tpu.matmul %69, %7, %cst_29 {dimension_numbers = #tpu.dot_dimension_numbers<[1], [0], [0], [1], [0, 0, 1, 1], [], []>} : vector<2x12xf32>, vector<12x48xf32>, vector<2x48xf32> -> vector<2x48xf32>
        %76 = arith.addf %74, %75 : vector<2x48xf32>
        %77 = vector.extract_strided_slice %76 {offsets = [0, 0], sizes = [2, 36], strides = [1, 1]} : vector<2x48xf32> to vector<2x36xf32>
        %cst_30 = arith.constant 0.000000e+00 : f32
        %78 = vector.broadcast %cst_30 : f32 to vector<2x36xf32>
        %79 = arith.subf %78, %77 : vector<2x36xf32>
        %80 = math.exp %79 : vector<2x36xf32>
        %cst_31 = arith.constant 1.000000e+00 : f32
        %81 = vector.broadcast %cst_31 : f32 to vector<2x36xf32>
        %82 = arith.addf %81, %80 : vector<2x36xf32>
        %cst_32 = arith.constant 1.000000e+00 : f32
        %83 = vector.broadcast %cst_32 : f32 to vector<2x36xf32>
        %84 = arith.divf %83, %82 : vector<2x36xf32>
        %85 = vector.extract_strided_slice %84 {offsets = [0, 0], sizes = [2, 12], strides = [1, 1]} : vector<2x36xf32> to vector<2x12xf32>
        %86 = vector.extract_strided_slice %84 {offsets = [0, 12], sizes = [2, 12], strides = [1, 1]} : vector<2x36xf32> to vector<2x12xf32>
        %87 = vector.extract_strided_slice %84 {offsets = [0, 24], sizes = [2, 12], strides = [1, 1]} : vector<2x36xf32> to vector<2x12xf32>
        %88 = vector.extract_strided_slice %76 {offsets = [0, 36], sizes = [2, 12], strides = [1, 1]} : vector<2x48xf32> to vector<2x12xf32>
        %89 = math.tanh %88 : vector<2x12xf32>
        %90 = arith.mulf %86, %67 : vector<2x12xf32>
        %91 = arith.mulf %85, %89 : vector<2x12xf32>
        %92 = arith.addf %90, %91 : vector<2x12xf32>
        %93 = math.tanh %92 : vector<2x12xf32>
        %94 = arith.mulf %87, %93 : vector<2x12xf32>
        %95 = arith.index_cast %arg6 : i32 to index
        %c4 = arith.constant 4 : index
        %c0_33 = arith.constant 0 : index
        %96 = vector.load %arg4[%95, %c4, %c0_33] : memref<15x16x12xf32, #tpu.memory_space<vmem>>, vector<1x2x12xf32>
        %97 = vector.shape_cast %96 : vector<1x2x12xf32> to vector<2x12xf32>
        %98 = vector.shape_cast %94 : vector<2x12xf32> to vector<1x2x12xf32>
        tpu.vector_store %arg4[%95, %c4, %c0_33], %98 {strides = array<i32>} : memref<15x16x12xf32, #tpu.memory_space<vmem>>, vector<1x2x12xf32>,
        %99 = vector.extract_strided_slice %23 {offsets = [6, 0], sizes = [2, 48], strides = [1, 1]} : vector<16x48xf32> to vector<2x48xf32>
        %cst_34 = arith.constant dense<0.000000e+00> : vector<2x48xf32>
        %100 = tpu.matmul %94, %7, %cst_34 {dimension_numbers = #tpu.dot_dimension_numbers<[1], [0], [0], [1], [0, 0, 1, 1], [], []>} : vector<2x12xf32>, vector<12x48xf32>, vector<2x48xf32> -> vector<2x48xf32>
        %101 = arith.addf %99, %100 : vector<2x48xf32>
        %102 = vector.extract_strided_slice %101 {offsets = [0, 0], sizes = [2, 36], strides = [1, 1]} : vector<2x48xf32> to vector<2x36xf32>
        %cst_35 = arith.constant 0.000000e+00 : f32
        %103 = vector.broadcast %cst_35 : f32 to vector<2x36xf32>
        %104 = arith.subf %103, %102 : vector<2x36xf32>
        %105 = math.exp %104 : vector<2x36xf32>
        %cst_36 = arith.constant 1.000000e+00 : f32
        %106 = vector.broadcast %cst_36 : f32 to vector<2x36xf32>
        %107 = arith.addf %106, %105 : vector<2x36xf32>
        %cst_37 = arith.constant 1.000000e+00 : f32
        %108 = vector.broadcast %cst_37 : f32 to vector<2x36xf32>
        %109 = arith.divf %108, %107 : vector<2x36xf32>
        %110 = vector.extract_strided_slice %109 {offsets = [0, 0], sizes = [2, 12], strides = [1, 1]} : vector<2x36xf32> to vector<2x12xf32>
        %111 = vector.extract_strided_slice %109 {offsets = [0, 12], sizes = [2, 12], strides = [1, 1]} : vector<2x36xf32> to vector<2x12xf32>
        %112 = vector.extract_strided_slice %109 {offsets = [0, 24], sizes = [2, 12], strides = [1, 1]} : vector<2x36xf32> to vector<2x12xf32>
        %113 = vector.extract_strided_slice %101 {offsets = [0, 36], sizes = [2, 12], strides = [1, 1]} : vector<2x48xf32> to vector<2x12xf32>
        %114 = math.tanh %113 : vector<2x12xf32>
        %115 = arith.mulf %111, %92 : vector<2x12xf32>
        %116 = arith.mulf %110, %114 : vector<2x12xf32>
        %117 = arith.addf %115, %116 : vector<2x12xf32>
        %118 = math.tanh %117 : vector<2x12xf32>
        %119 = arith.mulf %112, %118 : vector<2x12xf32>
        %120 = arith.index_cast %arg6 : i32 to index
        %c6 = arith.constant 6 : index
        %c0_38 = arith.constant 0 : index
        %121 = vector.load %arg4[%120, %c6, %c0_38] : memref<15x16x12xf32, #tpu.memory_space<vmem>>, vector<1x2x12xf32>
        %122 = vector.shape_cast %121 : vector<1x2x12xf32> to vector<2x12xf32>
        %123 = vector.shape_cast %119 : vector<2x12xf32> to vector<1x2x12xf32>
        tpu.vector_store %arg4[%120, %c6, %c0_38], %123 {strides = array<i32>} : memref<15x16x12xf32, #tpu.memory_space<vmem>>, vector<1x2x12xf32>,
        %124 = vector.extract_strided_slice %23 {offsets = [8, 0], sizes = [2, 48], strides = [1, 1]} : vector<16x48xf32> to vector<2x48xf32>
        %cst_39 = arith.constant dense<0.000000e+00> : vector<2x48xf32>
        %125 = tpu.matmul %119, %7, %cst_39 {dimension_numbers = #tpu.dot_dimension_numbers<[1], [0], [0], [1], [0, 0, 1, 1], [], []>} : vector<2x12xf32>, vector<12x48xf32>, vector<2x48xf32> -> vector<2x48xf32>
        %126 = arith.addf %124, %125 : vector<2x48xf32>
        %127 = vector.extract_strided_slice %126 {offsets = [0, 0], sizes = [2, 36], strides = [1, 1]} : vector<2x48xf32> to vector<2x36xf32>
        %cst_40 = arith.constant 0.000000e+00 : f32
        %128 = vector.broadcast %cst_40 : f32 to vector<2x36xf32>
        %129 = arith.subf %128, %127 : vector<2x36xf32>
        %130 = math.exp %129 : vector<2x36xf32>
        %cst_41 = arith.constant 1.000000e+00 : f32
        %131 = vector.broadcast %cst_41 : f32 to vector<2x36xf32>
        %132 = arith.addf %131, %130 : vector<2x36xf32>
        %cst_42 = arith.constant 1.000000e+00 : f32
        %133 = vector.broadcast %cst_42 : f32 to vector<2x36xf32>
        %134 = arith.divf %133, %132 : vector<2x36xf32>
        %135 = vector.extract_strided_slice %134 {offsets = [0, 0], sizes = [2, 12], strides = [1, 1]} : vector<2x36xf32> to vector<2x12xf32>
        %136 = vector.extract_strided_slice %134 {offsets = [0, 12], sizes = [2, 12], strides = [1, 1]} : vector<2x36xf32> to vector<2x12xf32>
        %137 = vector.extract_strided_slice %134 {offsets = [0, 24], sizes = [2, 12], strides = [1, 1]} : vector<2x36xf32> to vector<2x12xf32>
        %138 = vector.extract_strided_slice %126 {offsets = [0, 36], sizes = [2, 12], strides = [1, 1]} : vector<2x48xf32> to vector<2x12xf32>
        %139 = math.tanh %138 : vector<2x12xf32>
        %140 = arith.mulf %136, %117 : vector<2x12xf32>
        %141 = arith.mulf %135, %139 : vector<2x12xf32>
        %142 = arith.addf %140, %141 : vector<2x12xf32>
        %143 = math.tanh %142 : vector<2x12xf32>
        %144 = arith.mulf %137, %143 : vector<2x12xf32>
        %145 = arith.index_cast %arg6 : i32 to index
        %c8 = arith.constant 8 : index
        %c0_43 = arith.constant 0 : index
        %146 = vector.load %arg4[%145, %c8, %c0_43] : memref<15x16x12xf32, #tpu.memory_space<vmem>>, vector<1x2x12xf32>
        %147 = vector.shape_cast %146 : vector<1x2x12xf32> to vector<2x12xf32>
        %148 = vector.shape_cast %144 : vector<2x12xf32> to vector<1x2x12xf32>
        tpu.vector_store %arg4[%145, %c8, %c0_43], %148 {strides = array<i32>} : memref<15x16x12xf32, #tpu.memory_space<vmem>>, vector<1x2x12xf32>,
        %149 = vector.extract_strided_slice %23 {offsets = [10, 0], sizes = [2, 48], strides = [1, 1]} : vector<16x48xf32> to vector<2x48xf32>
        %cst_44 = arith.constant dense<0.000000e+00> : vector<2x48xf32>
        %150 = tpu.matmul %144, %7, %cst_44 {dimension_numbers = #tpu.dot_dimension_numbers<[1], [0], [0], [1], [0, 0, 1, 1], [], []>} : vector<2x12xf32>, vector<12x48xf32>, vector<2x48xf32> -> vector<2x48xf32>
        %151 = arith.addf %149, %150 : vector<2x48xf32>
        %152 = vector.extract_strided_slice %151 {offsets = [0, 0], sizes = [2, 36], strides = [1, 1]} : vector<2x48xf32> to vector<2x36xf32>
        %cst_45 = arith.constant 0.000000e+00 : f32
        %153 = vector.broadcast %cst_45 : f32 to vector<2x36xf32>
        %154 = arith.subf %153, %152 : vector<2x36xf32>
        %155 = math.exp %154 : vector<2x36xf32>
        %cst_46 = arith.constant 1.000000e+00 : f32
        %156 = vector.broadcast %cst_46 : f32 to vector<2x36xf32>
        %157 = arith.addf %156, %155 : vector<2x36xf32>
        %cst_47 = arith.constant 1.000000e+00 : f32
        %158 = vector.broadcast %cst_47 : f32 to vector<2x36xf32>
        %159 = arith.divf %158, %157 : vector<2x36xf32>
        %160 = vector.extract_strided_slice %159 {offsets = [0, 0], sizes = [2, 12], strides = [1, 1]} : vector<2x36xf32> to vector<2x12xf32>
        %161 = vector.extract_strided_slice %159 {offsets = [0, 12], sizes = [2, 12], strides = [1, 1]} : vector<2x36xf32> to vector<2x12xf32>
        %162 = vector.extract_strided_slice %159 {offsets = [0, 24], sizes = [2, 12], strides = [1, 1]} : vector<2x36xf32> to vector<2x12xf32>
        %163 = vector.extract_strided_slice %151 {offsets = [0, 36], sizes = [2, 12], strides = [1, 1]} : vector<2x48xf32> to vector<2x12xf32>
        %164 = math.tanh %163 : vector<2x12xf32>
        %165 = arith.mulf %161, %142 : vector<2x12xf32>
        %166 = arith.mulf %160, %164 : vector<2x12xf32>
        %167 = arith.addf %165, %166 : vector<2x12xf32>
        %168 = math.tanh %167 : vector<2x12xf32>
        %169 = arith.mulf %162, %168 : vector<2x12xf32>
        %170 = arith.index_cast %arg6 : i32 to index
        %c10 = arith.constant 10 : index
        %c0_48 = arith.constant 0 : index
        %171 = vector.load %arg4[%170, %c10, %c0_48] : memref<15x16x12xf32, #tpu.memory_space<vmem>>, vector<1x2x12xf32>
        %172 = vector.shape_cast %171 : vector<1x2x12xf32> to vector<2x12xf32>
        %173 = vector.shape_cast %169 : vector<2x12xf32> to vector<1x2x12xf32>
        tpu.vector_store %arg4[%170, %c10, %c0_48], %173 {strides = array<i32>} : memref<15x16x12xf32, #tpu.memory_space<vmem>>, vector<1x2x12xf32>,
        %174 = vector.extract_strided_slice %23 {offsets = [12, 0], sizes = [2, 48], strides = [1, 1]} : vector<16x48xf32> to vector<2x48xf32>
        %cst_49 = arith.constant dense<0.000000e+00> : vector<2x48xf32>
        %175 = tpu.matmul %169, %7, %cst_49 {dimension_numbers = #tpu.dot_dimension_numbers<[1], [0], [0], [1], [0, 0, 1, 1], [], []>} : vector<2x12xf32>, vector<12x48xf32>, vector<2x48xf32> -> vector<2x48xf32>
        %176 = arith.addf %174, %175 : vector<2x48xf32>
        %177 = vector.extract_strided_slice %176 {offsets = [0, 0], sizes = [2, 36], strides = [1, 1]} : vector<2x48xf32> to vector<2x36xf32>
        %cst_50 = arith.constant 0.000000e+00 : f32
        %178 = vector.broadcast %cst_50 : f32 to vector<2x36xf32>
        %179 = arith.subf %178, %177 : vector<2x36xf32>
        %180 = math.exp %179 : vector<2x36xf32>
        %cst_51 = arith.constant 1.000000e+00 : f32
        %181 = vector.broadcast %cst_51 : f32 to vector<2x36xf32>
        %182 = arith.addf %181, %180 : vector<2x36xf32>
        %cst_52 = arith.constant 1.000000e+00 : f32
        %183 = vector.broadcast %cst_52 : f32 to vector<2x36xf32>
        %184 = arith.divf %183, %182 : vector<2x36xf32>
        %185 = vector.extract_strided_slice %184 {offsets = [0, 0], sizes = [2, 12], strides = [1, 1]} : vector<2x36xf32> to vector<2x12xf32>
        %186 = vector.extract_strided_slice %184 {offsets = [0, 12], sizes = [2, 12], strides = [1, 1]} : vector<2x36xf32> to vector<2x12xf32>
        %187 = vector.extract_strided_slice %184 {offsets = [0, 24], sizes = [2, 12], strides = [1, 1]} : vector<2x36xf32> to vector<2x12xf32>
        %188 = vector.extract_strided_slice %176 {offsets = [0, 36], sizes = [2, 12], strides = [1, 1]} : vector<2x48xf32> to vector<2x12xf32>
        %189 = math.tanh %188 : vector<2x12xf32>
        %190 = arith.mulf %186, %167 : vector<2x12xf32>
        %191 = arith.mulf %185, %189 : vector<2x12xf32>
        %192 = arith.addf %190, %191 : vector<2x12xf32>
        %193 = math.tanh %192 : vector<2x12xf32>
        %194 = arith.mulf %187, %193 : vector<2x12xf32>
        %195 = arith.index_cast %arg6 : i32 to index
        %c12 = arith.constant 12 : index
        %c0_53 = arith.constant 0 : index
        %196 = vector.load %arg4[%195, %c12, %c0_53] : memref<15x16x12xf32, #tpu.memory_space<vmem>>, vector<1x2x12xf32>
        %197 = vector.shape_cast %196 : vector<1x2x12xf32> to vector<2x12xf32>
        %198 = vector.shape_cast %194 : vector<2x12xf32> to vector<1x2x12xf32>
        tpu.vector_store %arg4[%195, %c12, %c0_53], %198 {strides = array<i32>} : memref<15x16x12xf32, #tpu.memory_space<vmem>>, vector<1x2x12xf32>,
        %199 = vector.extract_strided_slice %23 {offsets = [14, 0], sizes = [2, 48], strides = [1, 1]} : vector<16x48xf32> to vector<2x48xf32>
        %cst_54 = arith.constant dense<0.000000e+00> : vector<2x48xf32>
        %200 = tpu.matmul %194, %7, %cst_54 {dimension_numbers = #tpu.dot_dimension_numbers<[1], [0], [0], [1], [0, 0, 1, 1], [], []>} : vector<2x12xf32>, vector<12x48xf32>, vector<2x48xf32> -> vector<2x48xf32>
        %201 = arith.addf %199, %200 : vector<2x48xf32>
        %202 = vector.extract_strided_slice %201 {offsets = [0, 0], sizes = [2, 36], strides = [1, 1]} : vector<2x48xf32> to vector<2x36xf32>
        %cst_55 = arith.constant 0.000000e+00 : f32
        %203 = vector.broadcast %cst_55 : f32 to vector<2x36xf32>
        %204 = arith.subf %203, %202 : vector<2x36xf32>
        %205 = math.exp %204 : vector<2x36xf32>
        %cst_56 = arith.constant 1.000000e+00 : f32
        %206 = vector.broadcast %cst_56 : f32 to vector<2x36xf32>
        %207 = arith.addf %206, %205 : vector<2x36xf32>
        %cst_57 = arith.constant 1.000000e+00 : f32
        %208 = vector.broadcast %cst_57 : f32 to vector<2x36xf32>
        %209 = arith.divf %208, %207 : vector<2x36xf32>
        %210 = vector.extract_strided_slice %209 {offsets = [0, 0], sizes = [2, 12], strides = [1, 1]} : vector<2x36xf32> to vector<2x12xf32>
        %211 = vector.extract_strided_slice %209 {offsets = [0, 12], sizes = [2, 12], strides = [1, 1]} : vector<2x36xf32> to vector<2x12xf32>
        %212 = vector.extract_strided_slice %209 {offsets = [0, 24], sizes = [2, 12], strides = [1, 1]} : vector<2x36xf32> to vector<2x12xf32>
        %213 = vector.extract_strided_slice %201 {offsets = [0, 36], sizes = [2, 12], strides = [1, 1]} : vector<2x48xf32> to vector<2x12xf32>
        %214 = math.tanh %213 : vector<2x12xf32>
        %215 = arith.mulf %211, %192 : vector<2x12xf32>
        %216 = arith.mulf %210, %214 : vector<2x12xf32>
        %217 = arith.addf %215, %216 : vector<2x12xf32>
        %218 = math.tanh %217 : vector<2x12xf32>
        %219 = arith.mulf %212, %218 : vector<2x12xf32>
        %220 = arith.index_cast %arg6 : i32 to index
        %c14 = arith.constant 14 : index
        %c0_58 = arith.constant 0 : index
        %221 = vector.load %arg4[%220, %c14, %c0_58] : memref<15x16x12xf32, #tpu.memory_space<vmem>>, vector<1x2x12xf32>
        %222 = vector.shape_cast %221 : vector<1x2x12xf32> to vector<2x12xf32>
        %223 = vector.shape_cast %219 : vector<2x12xf32> to vector<1x2x12xf32>
        tpu.vector_store %arg4[%220, %c14, %c0_58], %223 {strides = array<i32>} : memref<15x16x12xf32, #tpu.memory_space<vmem>>, vector<1x2x12xf32>,
        scf.yield %219, %217 : vector<2x12xf32>, vector<2x12xf32>
      }
      %c15_i32_12 = arith.constant 15 : i32
      %14 = arith.index_cast %arg5 : i32 to index
      %c0_13 = arith.constant 0 : index
      %c0_14 = arith.constant 0 : index
      %15 = vector.load %arg3[%14, %c0_13, %c0_14] : memref<120x2x12xf32, #tpu.memory_space<vmem>>, vector<1x2x12xf32>
      %16 = vector.shape_cast %15 : vector<1x2x12xf32> to vector<2x12xf32>
      %17 = vector.shape_cast %13#0 : vector<2x12xf32> to vector<1x2x12xf32>
      tpu.vector_store %arg3[%14, %c0_13, %c0_14], %17 {strides = array<i32>} : memref<120x2x12xf32, #tpu.memory_space<vmem>>, vector<1x2x12xf32>,
    }
    %c120_i32_5 = arith.constant 120 : i32
    return
  }
}

module attributes {stable_mosaic.version = 11 : i64} {
  func.func @_mid_kernel(%arg0: memref<240x12xf32, #tpu.memory_space<vmem>>, %arg1: memref<240x12xf32, #tpu.memory_space<vmem>>, %arg2: memref<12x12xf32, #tpu.memory_space<vmem>>, %arg3: memref<1x12xf32, #tpu.memory_space<vmem>>, %arg4: memref<12x12xf32, #tpu.memory_space<vmem>>, %arg5: memref<1x12xf32, #tpu.memory_space<vmem>>, %arg6: memref<12x24xf32, #tpu.memory_space<vmem>>, %arg7: memref<1x24xf32, #tpu.memory_space<vmem>>, %arg8: memref<12x12xf32, #tpu.memory_space<vmem>>, %arg9: memref<1x12xf32, #tpu.memory_space<vmem>>, %arg10: memref<12x12xf32, #tpu.memory_space<vmem>>, %arg11: memref<1x12xf32, #tpu.memory_space<vmem>>, %arg12: memref<240x12xf32, #tpu.memory_space<vmem>>, %arg13: memref<240x12xf32, #tpu.memory_space<vmem>>, %arg14: memref<240x12xf32, #tpu.memory_space<vmem>>, %arg15: memref<240x12xf32, #tpu.memory_space<vmem>>, %arg16: memref<240x12xf32, #tpu.memory_space<vmem>>) attributes {dimension_semantics = [], scalar_prefetch = 0 : i64, scratch_operands = 0 : i64, tpu.core_type = #tpu.core_type<tc>} {
    %c0 = arith.constant 0 : index
    %c0_0 = arith.constant 0 : index
    %0 = vector.load %arg0[%c0, %c0_0] : memref<240x12xf32, #tpu.memory_space<vmem>>, vector<240x12xf32>
    %c0_1 = arith.constant 0 : index
    %c0_2 = arith.constant 0 : index
    %1 = vector.load %arg2[%c0_1, %c0_2] : memref<12x12xf32, #tpu.memory_space<vmem>>, vector<12x12xf32>
    %cst = arith.constant dense<0.000000e+00> : vector<240x12xf32>
    %2 = tpu.matmul %0, %1, %cst {dimension_numbers = #tpu.dot_dimension_numbers<[1], [0], [0], [1], [0, 0, 1, 1], [], []>} : vector<240x12xf32>, vector<12x12xf32>, vector<240x12xf32> -> vector<240x12xf32>
    %c0_3 = arith.constant 0 : index
    %c0_4 = arith.constant 0 : index
    %3 = vector.load %arg3[%c0_3, %c0_4] : memref<1x12xf32, #tpu.memory_space<vmem>>, vector<1x12xf32>
    %4 = vector.broadcast %3 : vector<1x12xf32> to vector<240x12xf32>
    %5 = arith.addf %2, %4 : vector<240x12xf32>
    %cst_5 = arith.constant 0.000000e+00 : f32
    %6 = vector.broadcast %cst_5 : f32 to vector<240x12xf32>
    %7 = arith.maximumf %5, %6 : vector<240x12xf32>
    %c0_6 = arith.constant 0 : index
    %c0_7 = arith.constant 0 : index
    %8 = vector.load %arg4[%c0_6, %c0_7] : memref<12x12xf32, #tpu.memory_space<vmem>>, vector<12x12xf32>
    %cst_8 = arith.constant dense<0.000000e+00> : vector<240x12xf32>
    %9 = tpu.matmul %7, %8, %cst_8 {dimension_numbers = #tpu.dot_dimension_numbers<[1], [0], [0], [1], [0, 0, 1, 1], [], []>} : vector<240x12xf32>, vector<12x12xf32>, vector<240x12xf32> -> vector<240x12xf32>
    %c0_9 = arith.constant 0 : index
    %c0_10 = arith.constant 0 : index
    %10 = vector.load %arg5[%c0_9, %c0_10] : memref<1x12xf32, #tpu.memory_space<vmem>>, vector<1x12xf32>
    %11 = vector.broadcast %10 : vector<1x12xf32> to vector<240x12xf32>
    %12 = arith.addf %9, %11 : vector<240x12xf32>
    %cst_11 = arith.constant 0.000000e+00 : f32
    %13 = vector.broadcast %cst_11 : f32 to vector<240x12xf32>
    %14 = arith.maximumf %12, %13 : vector<240x12xf32>
    %c0_12 = arith.constant 0 : index
    %c0_13 = arith.constant 0 : index
    %15 = vector.load %arg6[%c0_12, %c0_13] : memref<12x24xf32, #tpu.memory_space<vmem>>, vector<12x24xf32>
    %cst_14 = arith.constant dense<0.000000e+00> : vector<240x24xf32>
    %16 = tpu.matmul %14, %15, %cst_14 {dimension_numbers = #tpu.dot_dimension_numbers<[1], [0], [0], [1], [0, 0, 1, 1], [], []>} : vector<240x12xf32>, vector<12x24xf32>, vector<240x24xf32> -> vector<240x24xf32>
    %c0_15 = arith.constant 0 : index
    %c0_16 = arith.constant 0 : index
    %17 = vector.load %arg7[%c0_15, %c0_16] : memref<1x24xf32, #tpu.memory_space<vmem>>, vector<1x24xf32>
    %18 = vector.broadcast %17 : vector<1x24xf32> to vector<240x24xf32>
    %19 = arith.addf %16, %18 : vector<240x24xf32>
    %20 = vector.extract_strided_slice %19 {offsets = [0, 0], sizes = [240, 12], strides = [1, 1]} : vector<240x24xf32> to vector<240x12xf32>
    %21 = vector.extract_strided_slice %19 {offsets = [0, 12], sizes = [240, 12], strides = [1, 1]} : vector<240x24xf32> to vector<240x12xf32>
    %cst_17 = arith.constant 5.000000e-01 : f32
    %22 = vector.broadcast %cst_17 : f32 to vector<240x12xf32>
    %23 = arith.mulf %21, %22 : vector<240x12xf32>
    %24 = math.exp %23 : vector<240x12xf32>
    %c0_18 = arith.constant 0 : index
    %c0_19 = arith.constant 0 : index
    %25 = vector.load %arg1[%c0_18, %c0_19] : memref<240x12xf32, #tpu.memory_space<vmem>>, vector<240x12xf32>
    %26 = arith.mulf %24, %25 : vector<240x12xf32>
    %27 = arith.addf %20, %26 : vector<240x12xf32>
    %c0_20 = arith.constant 0 : index
    %c0_21 = arith.constant 0 : index
    %28 = vector.load %arg8[%c0_20, %c0_21] : memref<12x12xf32, #tpu.memory_space<vmem>>, vector<12x12xf32>
    %cst_22 = arith.constant dense<0.000000e+00> : vector<240x12xf32>
    %29 = tpu.matmul %27, %28, %cst_22 {dimension_numbers = #tpu.dot_dimension_numbers<[1], [0], [0], [1], [0, 0, 1, 1], [], []>} : vector<240x12xf32>, vector<12x12xf32>, vector<240x12xf32> -> vector<240x12xf32>
    %c0_23 = arith.constant 0 : index
    %c0_24 = arith.constant 0 : index
    %30 = vector.load %arg9[%c0_23, %c0_24] : memref<1x12xf32, #tpu.memory_space<vmem>>, vector<1x12xf32>
    %31 = vector.broadcast %30 : vector<1x12xf32> to vector<240x12xf32>
    %32 = arith.addf %29, %31 : vector<240x12xf32>
    %cst_25 = arith.constant 0.000000e+00 : f32
    %33 = vector.broadcast %cst_25 : f32 to vector<240x12xf32>
    %34 = arith.maximumf %32, %33 : vector<240x12xf32>
    %c0_26 = arith.constant 0 : index
    %c0_27 = arith.constant 0 : index
    %35 = vector.load %arg10[%c0_26, %c0_27] : memref<12x12xf32, #tpu.memory_space<vmem>>, vector<12x12xf32>
    %cst_28 = arith.constant dense<0.000000e+00> : vector<240x12xf32>
    %36 = tpu.matmul %34, %35, %cst_28 {dimension_numbers = #tpu.dot_dimension_numbers<[1], [0], [0], [1], [0, 0, 1, 1], [], []>} : vector<240x12xf32>, vector<12x12xf32>, vector<240x12xf32> -> vector<240x12xf32>
    %c0_29 = arith.constant 0 : index
    %c0_30 = arith.constant 0 : index
    %37 = vector.load %arg11[%c0_29, %c0_30] : memref<1x12xf32, #tpu.memory_space<vmem>>, vector<1x12xf32>
    %38 = vector.broadcast %37 : vector<1x12xf32> to vector<240x12xf32>
    %39 = arith.addf %36, %38 : vector<240x12xf32>
    %cst_31 = arith.constant 0.000000e+00 : f32
    %40 = vector.broadcast %cst_31 : f32 to vector<240x12xf32>
    %41 = arith.maximumf %39, %40 : vector<240x12xf32>
    %c0_32 = arith.constant 0 : index
    %c0_33 = arith.constant 0 : index
    %42 = vector.load %arg12[%c0_32, %c0_33] : memref<240x12xf32, #tpu.memory_space<vmem>>, vector<240x12xf32>
    tpu.vector_store %arg12[%c0_32, %c0_33], %14 {strides = array<i32>} : memref<240x12xf32, #tpu.memory_space<vmem>>, vector<240x12xf32>,
    %c0_34 = arith.constant 0 : index
    %c0_35 = arith.constant 0 : index
    %43 = vector.load %arg13[%c0_34, %c0_35] : memref<240x12xf32, #tpu.memory_space<vmem>>, vector<240x12xf32>
    tpu.vector_store %arg13[%c0_34, %c0_35], %20 {strides = array<i32>} : memref<240x12xf32, #tpu.memory_space<vmem>>, vector<240x12xf32>,
    %c0_36 = arith.constant 0 : index
    %c0_37 = arith.constant 0 : index
    %44 = vector.load %arg14[%c0_36, %c0_37] : memref<240x12xf32, #tpu.memory_space<vmem>>, vector<240x12xf32>
    tpu.vector_store %arg14[%c0_36, %c0_37], %21 {strides = array<i32>} : memref<240x12xf32, #tpu.memory_space<vmem>>, vector<240x12xf32>,
    %c0_38 = arith.constant 0 : index
    %c0_39 = arith.constant 0 : index
    %45 = vector.load %arg15[%c0_38, %c0_39] : memref<240x12xf32, #tpu.memory_space<vmem>>, vector<240x12xf32>
    tpu.vector_store %arg15[%c0_38, %c0_39], %27 {strides = array<i32>} : memref<240x12xf32, #tpu.memory_space<vmem>>, vector<240x12xf32>,
    %c0_40 = arith.constant 0 : index
    %c0_41 = arith.constant 0 : index
    %46 = vector.load %arg16[%c0_40, %c0_41] : memref<240x12xf32, #tpu.memory_space<vmem>>, vector<240x12xf32>
    tpu.vector_store %arg16[%c0_40, %c0_41], %41 {strides = array<i32>} : memref<240x12xf32, #tpu.memory_space<vmem>>, vector<240x12xf32>,
    return
  }
}

module attributes {stable_mosaic.version = 11 : i64} {
  func.func @_dec_tail_kernel(%arg0: memref<240x12xf32, #tpu.memory_space<vmem>>, %arg1: memref<2x128x6xf32, #tpu.memory_space<vmem>>, %arg2: memref<12x12xf32, #tpu.memory_space<vmem>>, %arg3: memref<1x12xf32, #tpu.memory_space<vmem>>, %arg4: memref<12x6xf32, #tpu.memory_space<vmem>>, %arg5: memref<1x6xf32, #tpu.memory_space<vmem>>, %arg6: memref<30x6xf32, #tpu.memory_space<vmem>>, %arg7: memref<1x6xf32, #tpu.memory_space<vmem>>, %arg8: memref<1x6xf32, #tpu.memory_space<vmem>>, %arg9: memref<1x6xf32, #tpu.memory_space<vmem>>, %arg10: memref<30x6xf32, #tpu.memory_space<vmem>>, %arg11: memref<1x6xf32, #tpu.memory_space<vmem>>, %arg12: memref<1x6xf32, #tpu.memory_space<vmem>>, %arg13: memref<1x6xf32, #tpu.memory_space<vmem>>, %arg14: memref<6x6xf32, #tpu.memory_space<vmem>>, %arg15: memref<1x6xf32, #tpu.memory_space<vmem>>, %arg16: memref<1xf32, #tpu.memory_space<smem>>, %arg17: memref<2x128x6xf32, #tpu.memory_space<vmem>>, %arg18: memref<2x1xf32, #tpu.memory_space<vmem>>) attributes {dimension_semantics = [], scalar_prefetch = 0 : i64, scratch_operands = 0 : i64, tpu.core_type = #tpu.core_type<tc>} {
    %c0 = arith.constant 0 : index
    %c0_0 = arith.constant 0 : index
    %0 = vector.load %arg0[%c0, %c0_0] : memref<240x12xf32, #tpu.memory_space<vmem>>, vector<240x12xf32>
    %c0_1 = arith.constant 0 : index
    %c0_2 = arith.constant 0 : index
    %1 = vector.load %arg2[%c0_1, %c0_2] : memref<12x12xf32, #tpu.memory_space<vmem>>, vector<12x12xf32>
    %cst = arith.constant dense<0.000000e+00> : vector<240x12xf32>
    %2 = tpu.matmul %0, %1, %cst {dimension_numbers = #tpu.dot_dimension_numbers<[1], [0], [0], [1], [0, 0, 1, 1], [], []>} : vector<240x12xf32>, vector<12x12xf32>, vector<240x12xf32> -> vector<240x12xf32>
    %c0_3 = arith.constant 0 : index
    %c0_4 = arith.constant 0 : index
    %3 = vector.load %arg3[%c0_3, %c0_4] : memref<1x12xf32, #tpu.memory_space<vmem>>, vector<1x12xf32>
    %4 = vector.broadcast %3 : vector<1x12xf32> to vector<240x12xf32>
    %5 = arith.addf %2, %4 : vector<240x12xf32>
    %cst_5 = arith.constant 0.000000e+00 : f32
    %6 = vector.broadcast %cst_5 : f32 to vector<240x12xf32>
    %7 = arith.maximumf %5, %6 : vector<240x12xf32>
    %c0_6 = arith.constant 0 : index
    %c0_7 = arith.constant 0 : index
    %8 = vector.load %arg4[%c0_6, %c0_7] : memref<12x6xf32, #tpu.memory_space<vmem>>, vector<12x6xf32>
    %cst_8 = arith.constant dense<0.000000e+00> : vector<240x6xf32>
    %9 = tpu.matmul %7, %8, %cst_8 {dimension_numbers = #tpu.dot_dimension_numbers<[1], [0], [0], [1], [0, 0, 1, 1], [], []>} : vector<240x12xf32>, vector<12x6xf32>, vector<240x6xf32> -> vector<240x6xf32>
    %c0_9 = arith.constant 0 : index
    %c0_10 = arith.constant 0 : index
    %10 = vector.load %arg5[%c0_9, %c0_10] : memref<1x6xf32, #tpu.memory_space<vmem>>, vector<1x6xf32>
    %11 = vector.broadcast %10 : vector<1x6xf32> to vector<240x6xf32>
    %12 = arith.addf %9, %11 : vector<240x6xf32>
    %cst_11 = arith.constant 0.000000e+00 : f32
    %13 = vector.broadcast %cst_11 : f32 to vector<240x6xf32>
    %14 = arith.maximumf %12, %13 : vector<240x6xf32>
    %15 = vector.extract_strided_slice %14 {offsets = [0, 0], sizes = [120, 6], strides = [1, 1]} : vector<240x6xf32> to vector<120x6xf32>
    %16 = vector.extract_strided_slice %14 {offsets = [120, 0], sizes = [120, 6], strides = [1, 1]} : vector<240x6xf32> to vector<120x6xf32>
    %c0_12 = arith.constant 0 : index
    %c0_13 = arith.constant 0 : index
    %17 = vector.load %arg6[%c0_12, %c0_13] : memref<30x6xf32, #tpu.memory_space<vmem>>, vector<30x6xf32>
    %c0_14 = arith.constant 0 : index
    %c0_15 = arith.constant 0 : index
    %18 = vector.load %arg7[%c0_14, %c0_15] : memref<1x6xf32, #tpu.memory_space<vmem>>, vector<1x6xf32>
    %c0_16 = arith.constant 0 : index
    %c0_17 = arith.constant 0 : index
    %19 = vector.load %arg8[%c0_16, %c0_17] : memref<1x6xf32, #tpu.memory_space<vmem>>, vector<1x6xf32>
    %c0_18 = arith.constant 0 : index
    %c0_19 = arith.constant 0 : index
    %20 = vector.load %arg9[%c0_18, %c0_19] : memref<1x6xf32, #tpu.memory_space<vmem>>, vector<1x6xf32>
    %cst_20 = arith.constant 0.000000e+00 : f32
    %21 = vector.broadcast %cst_20 : f32 to vector<4x6xf32>
    %22 = tpu.concatenate %21, %15, %21 in 0 : vector<4x6xf32>, vector<120x6xf32>, vector<4x6xf32> -> vector<128x6xf32>
    %23 = vector.extract_strided_slice %22 {offsets = [0, 0], sizes = [124, 6], strides = [1, 1]} : vector<128x6xf32> to vector<124x6xf32>
    %24 = vector.extract_strided_slice %22 {offsets = [1, 0], sizes = [124, 6], strides = [1, 1]} : vector<128x6xf32> to vector<124x6xf32>
    %25 = vector.extract_strided_slice %22 {offsets = [2, 0], sizes = [124, 6], strides = [1, 1]} : vector<128x6xf32> to vector<124x6xf32>
    %26 = vector.extract_strided_slice %22 {offsets = [3, 0], sizes = [124, 6], strides = [1, 1]} : vector<128x6xf32> to vector<124x6xf32>
    %27 = vector.extract_strided_slice %22 {offsets = [4, 0], sizes = [124, 6], strides = [1, 1]} : vector<128x6xf32> to vector<124x6xf32>
    %28 = tpu.concatenate %23, %24, %25, %26, %27 in 1 : vector<124x6xf32>, vector<124x6xf32>, vector<124x6xf32>, vector<124x6xf32>, vector<124x6xf32> -> vector<124x30xf32>
    %cst_21 = arith.constant dense<0.000000e+00> : vector<124x6xf32>
    %29 = tpu.matmul %28, %17, %cst_21 {dimension_numbers = #tpu.dot_dimension_numbers<[1], [0], [0], [1], [0, 0, 1, 1], [], []>} : vector<124x30xf32>, vector<30x6xf32>, vector<124x6xf32> -> vector<124x6xf32>
    %30 = vector.broadcast %18 : vector<1x6xf32> to vector<124x6xf32>
    %31 = arith.addf %29, %30 : vector<124x6xf32>
    %32 = tpu.concatenate %21, %16, %21 in 0 : vector<4x6xf32>, vector<120x6xf32>, vector<4x6xf32> -> vector<128x6xf32>
    %33 = vector.extract_strided_slice %32 {offsets = [0, 0], sizes = [124, 6], strides = [1, 1]} : vector<128x6xf32> to vector<124x6xf32>
    %34 = vector.extract_strided_slice %32 {offsets = [1, 0], sizes = [124, 6], strides = [1, 1]} : vector<128x6xf32> to vector<124x6xf32>
    %35 = vector.extract_strided_slice %32 {offsets = [2, 0], sizes = [124, 6], strides = [1, 1]} : vector<128x6xf32> to vector<124x6xf32>
    %36 = vector.extract_strided_slice %32 {offsets = [3, 0], sizes = [124, 6], strides = [1, 1]} : vector<128x6xf32> to vector<124x6xf32>
    %37 = vector.extract_strided_slice %32 {offsets = [4, 0], sizes = [124, 6], strides = [1, 1]} : vector<128x6xf32> to vector<124x6xf32>
    %38 = tpu.concatenate %33, %34, %35, %36, %37 in 1 : vector<124x6xf32>, vector<124x6xf32>, vector<124x6xf32>, vector<124x6xf32>, vector<124x6xf32> -> vector<124x30xf32>
    %cst_22 = arith.constant dense<0.000000e+00> : vector<124x6xf32>
    %39 = tpu.matmul %38, %17, %cst_22 {dimension_numbers = #tpu.dot_dimension_numbers<[1], [0], [0], [1], [0, 0, 1, 1], [], []>} : vector<124x30xf32>, vector<30x6xf32>, vector<124x6xf32> -> vector<124x6xf32>
    %40 = vector.broadcast %18 : vector<1x6xf32> to vector<124x6xf32>
    %41 = arith.addf %39, %40 : vector<124x6xf32>
    %cst_23 = arith.constant dense<0.000000e+00> : vector<6xf32>
    %42 = vector.multi_reduction <add>, %31, %cst_23 [0] : vector<124x6xf32> to vector<6xf32>
    %43 = vector.shape_cast %42 : vector<6xf32> to vector<1x6xf32>
    %cst_24 = arith.constant 0.000000e+00 : f32
    %44 = vector.broadcast %cst_24 : f32 to vector<1x6xf32>
    %45 = arith.addf %44, %43 : vector<1x6xf32>
    %cst_25 = arith.constant dense<0.000000e+00> : vector<6xf32>
    %46 = vector.multi_reduction <add>, %41, %cst_25 [0] : vector<124x6xf32> to vector<6xf32>
    %47 = vector.shape_cast %46 : vector<6xf32> to vector<1x6xf32>
    %48 = arith.addf %45, %47 : vector<1x6xf32>
    %cst_26 = arith.constant 2.480000e+02 : f32
    %49 = vector.broadcast %cst_26 : f32 to vector<1x6xf32>
    %50 = arith.divf %48, %49 : vector<1x6xf32>
    %51 = vector.broadcast %50 : vector<1x6xf32> to vector<124x6xf32>
    %52 = arith.subf %31, %51 : vector<124x6xf32>
    %53 = vector.broadcast %50 : vector<1x6xf32> to vector<124x6xf32>
    %54 = arith.subf %31, %53 : vector<124x6xf32>
    %55 = arith.mulf %52, %54 : vector<124x6xf32>
    %cst_27 = arith.constant dense<0.000000e+00> : vector<6xf32>
    %56 = vector.multi_reduction <add>, %55, %cst_27 [0] : vector<124x6xf32> to vector<6xf32>
    %57 = vector.shape_cast %56 : vector<6xf32> to vector<1x6xf32>
    %cst_28 = arith.constant 0.000000e+00 : f32
    %58 = vector.broadcast %cst_28 : f32 to vector<1x6xf32>
    %59 = arith.addf %58, %57 : vector<1x6xf32>
    %60 = vector.broadcast %50 : vector<1x6xf32> to vector<124x6xf32>
    %61 = arith.subf %41, %60 : vector<124x6xf32>
    %62 = vector.broadcast %50 : vector<1x6xf32> to vector<124x6xf32>
    %63 = arith.subf %41, %62 : vector<124x6xf32>
    %64 = arith.mulf %61, %63 : vector<124x6xf32>
    %cst_29 = arith.constant dense<0.000000e+00> : vector<6xf32>
    %65 = vector.multi_reduction <add>, %64, %cst_29 [0] : vector<124x6xf32> to vector<6xf32>
    %66 = vector.shape_cast %65 : vector<6xf32> to vector<1x6xf32>
    %67 = arith.addf %59, %66 : vector<1x6xf32>
    %cst_30 = arith.constant 2.480000e+02 : f32
    %68 = vector.broadcast %cst_30 : f32 to vector<1x6xf32>
    %69 = arith.divf %67, %68 : vector<1x6xf32>
    %cst_31 = arith.constant 9.99999974E-6 : f32
    %70 = vector.broadcast %cst_31 : f32 to vector<1x6xf32>
    %71 = arith.addf %69, %70 : vector<1x6xf32>
    %72 = math.rsqrt %71 : vector<1x6xf32>
    %73 = arith.mulf %72, %19 : vector<1x6xf32>
    %74 = vector.broadcast %50 : vector<1x6xf32> to vector<124x6xf32>
    %75 = arith.subf %31, %74 : vector<124x6xf32>
    %76 = vector.broadcast %73 : vector<1x6xf32> to vector<124x6xf32>
    %77 = arith.mulf %75, %76 : vector<124x6xf32>
    %78 = vector.broadcast %20 : vector<1x6xf32> to vector<124x6xf32>
    %79 = arith.addf %77, %78 : vector<124x6xf32>
    %cst_32 = arith.constant 0.000000e+00 : f32
    %80 = vector.broadcast %cst_32 : f32 to vector<124x6xf32>
    %81 = arith.maximumf %79, %80 : vector<124x6xf32>
    %82 = vector.broadcast %50 : vector<1x6xf32> to vector<124x6xf32>
    %83 = arith.subf %41, %82 : vector<124x6xf32>
    %84 = vector.broadcast %73 : vector<1x6xf32> to vector<124x6xf32>
    %85 = arith.mulf %83, %84 : vector<124x6xf32>
    %86 = vector.broadcast %20 : vector<1x6xf32> to vector<124x6xf32>
    %87 = arith.addf %85, %86 : vector<124x6xf32>
    %cst_33 = arith.constant 0.000000e+00 : f32
    %88 = vector.broadcast %cst_33 : f32 to vector<124x6xf32>
    %89 = arith.maximumf %87, %88 : vector<124x6xf32>
    %c0_34 = arith.constant 0 : index
    %c0_35 = arith.constant 0 : index
    %90 = vector.load %arg10[%c0_34, %c0_35] : memref<30x6xf32, #tpu.memory_space<vmem>>, vector<30x6xf32>
    %c0_36 = arith.constant 0 : index
    %c0_37 = arith.constant 0 : index
    %91 = vector.load %arg11[%c0_36, %c0_37] : memref<1x6xf32, #tpu.memory_space<vmem>>, vector<1x6xf32>
    %c0_38 = arith.constant 0 : index
    %c0_39 = arith.constant 0 : index
    %92 = vector.load %arg12[%c0_38, %c0_39] : memref<1x6xf32, #tpu.memory_space<vmem>>, vector<1x6xf32>
    %c0_40 = arith.constant 0 : index
    %c0_41 = arith.constant 0 : index
    %93 = vector.load %arg13[%c0_40, %c0_41] : memref<1x6xf32, #tpu.memory_space<vmem>>, vector<1x6xf32>
    %cst_42 = arith.constant 0.000000e+00 : f32
    %94 = vector.broadcast %cst_42 : f32 to vector<4x6xf32>
    %95 = tpu.concatenate %94, %81, %94 in 0 : vector<4x6xf32>, vector<124x6xf32>, vector<4x6xf32> -> vector<132x6xf32>
    %96 = vector.extract_strided_slice %95 {offsets = [0, 0], sizes = [128, 6], strides = [1, 1]} : vector<132x6xf32> to vector<128x6xf32>
    %97 = vector.extract_strided_slice %95 {offsets = [1, 0], sizes = [128, 6], strides = [1, 1]} : vector<132x6xf32> to vector<128x6xf32>
    %98 = vector.extract_strided_slice %95 {offsets = [2, 0], sizes = [128, 6], strides = [1, 1]} : vector<132x6xf32> to vector<128x6xf32>
    %99 = vector.extract_strided_slice %95 {offsets = [3, 0], sizes = [128, 6], strides = [1, 1]} : vector<132x6xf32> to vector<128x6xf32>
    %100 = vector.extract_strided_slice %95 {offsets = [4, 0], sizes = [128, 6], strides = [1, 1]} : vector<132x6xf32> to vector<128x6xf32>
    %101 = tpu.concatenate %96, %97, %98, %99, %100 in 1 : vector<128x6xf32>, vector<128x6xf32>, vector<128x6xf32>, vector<128x6xf32>, vector<128x6xf32> -> vector<128x30xf32>
    %cst_43 = arith.constant dense<0.000000e+00> : vector<128x6xf32>
    %102 = tpu.matmul %101, %90, %cst_43 {dimension_numbers = #tpu.dot_dimension_numbers<[1], [0], [0], [1], [0, 0, 1, 1], [], []>} : vector<128x30xf32>, vector<30x6xf32>, vector<128x6xf32> -> vector<128x6xf32>
    %103 = vector.broadcast %91 : vector<1x6xf32> to vector<128x6xf32>
    %104 = arith.addf %102, %103 : vector<128x6xf32>
    %105 = tpu.concatenate %94, %89, %94 in 0 : vector<4x6xf32>, vector<124x6xf32>, vector<4x6xf32> -> vector<132x6xf32>
    %106 = vector.extract_strided_slice %105 {offsets = [0, 0], sizes = [128, 6], strides = [1, 1]} : vector<132x6xf32> to vector<128x6xf32>
    %107 = vector.extract_strided_slice %105 {offsets = [1, 0], sizes = [128, 6], strides = [1, 1]} : vector<132x6xf32> to vector<128x6xf32>
    %108 = vector.extract_strided_slice %105 {offsets = [2, 0], sizes = [128, 6], strides = [1, 1]} : vector<132x6xf32> to vector<128x6xf32>
    %109 = vector.extract_strided_slice %105 {offsets = [3, 0], sizes = [128, 6], strides = [1, 1]} : vector<132x6xf32> to vector<128x6xf32>
    %110 = vector.extract_strided_slice %105 {offsets = [4, 0], sizes = [128, 6], strides = [1, 1]} : vector<132x6xf32> to vector<128x6xf32>
    %111 = tpu.concatenate %106, %107, %108, %109, %110 in 1 : vector<128x6xf32>, vector<128x6xf32>, vector<128x6xf32>, vector<128x6xf32>, vector<128x6xf32> -> vector<128x30xf32>
    %cst_44 = arith.constant dense<0.000000e+00> : vector<128x6xf32>
    %112 = tpu.matmul %111, %90, %cst_44 {dimension_numbers = #tpu.dot_dimension_numbers<[1], [0], [0], [1], [0, 0, 1, 1], [], []>} : vector<128x30xf32>, vector<30x6xf32>, vector<128x6xf32> -> vector<128x6xf32>
    %113 = vector.broadcast %91 : vector<1x6xf32> to vector<128x6xf32>
    %114 = arith.addf %112, %113 : vector<128x6xf32>
    %cst_45 = arith.constant dense<0.000000e+00> : vector<6xf32>
    %115 = vector.multi_reduction <add>, %104, %cst_45 [0] : vector<128x6xf32> to vector<6xf32>
    %116 = vector.shape_cast %115 : vector<6xf32> to vector<1x6xf32>
    %cst_46 = arith.constant 0.000000e+00 : f32
    %117 = vector.broadcast %cst_46 : f32 to vector<1x6xf32>
    %118 = arith.addf %117, %116 : vector<1x6xf32>
    %cst_47 = arith.constant dense<0.000000e+00> : vector<6xf32>
    %119 = vector.multi_reduction <add>, %114, %cst_47 [0] : vector<128x6xf32> to vector<6xf32>
    %120 = vector.shape_cast %119 : vector<6xf32> to vector<1x6xf32>
    %121 = arith.addf %118, %120 : vector<1x6xf32>
    %cst_48 = arith.constant 2.560000e+02 : f32
    %122 = vector.broadcast %cst_48 : f32 to vector<1x6xf32>
    %123 = arith.divf %121, %122 : vector<1x6xf32>
    %124 = vector.broadcast %123 : vector<1x6xf32> to vector<128x6xf32>
    %125 = arith.subf %104, %124 : vector<128x6xf32>
    %126 = vector.broadcast %123 : vector<1x6xf32> to vector<128x6xf32>
    %127 = arith.subf %104, %126 : vector<128x6xf32>
    %128 = arith.mulf %125, %127 : vector<128x6xf32>
    %cst_49 = arith.constant dense<0.000000e+00> : vector<6xf32>
    %129 = vector.multi_reduction <add>, %128, %cst_49 [0] : vector<128x6xf32> to vector<6xf32>
    %130 = vector.shape_cast %129 : vector<6xf32> to vector<1x6xf32>
    %cst_50 = arith.constant 0.000000e+00 : f32
    %131 = vector.broadcast %cst_50 : f32 to vector<1x6xf32>
    %132 = arith.addf %131, %130 : vector<1x6xf32>
    %133 = vector.broadcast %123 : vector<1x6xf32> to vector<128x6xf32>
    %134 = arith.subf %114, %133 : vector<128x6xf32>
    %135 = vector.broadcast %123 : vector<1x6xf32> to vector<128x6xf32>
    %136 = arith.subf %114, %135 : vector<128x6xf32>
    %137 = arith.mulf %134, %136 : vector<128x6xf32>
    %cst_51 = arith.constant dense<0.000000e+00> : vector<6xf32>
    %138 = vector.multi_reduction <add>, %137, %cst_51 [0] : vector<128x6xf32> to vector<6xf32>
    %139 = vector.shape_cast %138 : vector<6xf32> to vector<1x6xf32>
    %140 = arith.addf %132, %139 : vector<1x6xf32>
    %cst_52 = arith.constant 2.560000e+02 : f32
    %141 = vector.broadcast %cst_52 : f32 to vector<1x6xf32>
    %142 = arith.divf %140, %141 : vector<1x6xf32>
    %cst_53 = arith.constant 9.99999974E-6 : f32
    %143 = vector.broadcast %cst_53 : f32 to vector<1x6xf32>
    %144 = arith.addf %142, %143 : vector<1x6xf32>
    %145 = math.rsqrt %144 : vector<1x6xf32>
    %146 = arith.mulf %145, %92 : vector<1x6xf32>
    %147 = vector.broadcast %123 : vector<1x6xf32> to vector<128x6xf32>
    %148 = arith.subf %104, %147 : vector<128x6xf32>
    %149 = vector.broadcast %146 : vector<1x6xf32> to vector<128x6xf32>
    %150 = arith.mulf %148, %149 : vector<128x6xf32>
    %151 = vector.broadcast %93 : vector<1x6xf32> to vector<128x6xf32>
    %152 = arith.addf %150, %151 : vector<128x6xf32>
    %cst_54 = arith.constant 0.000000e+00 : f32
    %153 = vector.broadcast %cst_54 : f32 to vector<128x6xf32>
    %154 = arith.maximumf %152, %153 : vector<128x6xf32>
    %155 = vector.broadcast %123 : vector<1x6xf32> to vector<128x6xf32>
    %156 = arith.subf %114, %155 : vector<128x6xf32>
    %157 = vector.broadcast %146 : vector<1x6xf32> to vector<128x6xf32>
    %158 = arith.mulf %156, %157 : vector<128x6xf32>
    %159 = vector.broadcast %93 : vector<1x6xf32> to vector<128x6xf32>
    %160 = arith.addf %158, %159 : vector<128x6xf32>
    %cst_55 = arith.constant 0.000000e+00 : f32
    %161 = vector.broadcast %cst_55 : f32 to vector<128x6xf32>
    %162 = arith.maximumf %160, %161 : vector<128x6xf32>
    %c0_56 = arith.constant 0 : index
    %163 = memref.load %arg16[%c0_56] : memref<1xf32, #tpu.memory_space<smem>>
    %cst_57 = arith.constant -2.000000e+00 : f32
    %164 = arith.mulf %cst_57, %163 : f32
    %165 = math.exp %164 : f32
    %cst_58 = arith.constant 5.000000e-01 : f32
    %166 = arith.mulf %cst_58, %165 : f32
    %cst_59 = arith.constant 0.918938517 : f32
    %167 = arith.addf %163, %cst_59 : f32
    %c0_60 = arith.constant 0 : index
    %c0_61 = arith.constant 0 : index
    %168 = vector.load %arg14[%c0_60, %c0_61] : memref<6x6xf32, #tpu.memory_space<vmem>>, vector<6x6xf32>
    %c0_62 = arith.constant 0 : index
    %c0_63 = arith.constant 0 : index
    %169 = vector.load %arg15[%c0_62, %c0_63] : memref<1x6xf32, #tpu.memory_space<vmem>>, vector<1x6xf32>
    %cst_64 = arith.constant dense<0.000000e+00> : vector<128x6xf32>
    %170 = tpu.matmul %154, %168, %cst_64 {dimension_numbers = #tpu.dot_dimension_numbers<[1], [0], [0], [1], [0, 0, 1, 1], [], []>} : vector<128x6xf32>, vector<6x6xf32>, vector<128x6xf32> -> vector<128x6xf32>
    %171 = vector.broadcast %169 : vector<1x6xf32> to vector<128x6xf32>
    %172 = arith.addf %170, %171 : vector<128x6xf32>
    %c0_65 = arith.constant 0 : index
    %c0_66 = arith.constant 0 : index
    %c0_67 = arith.constant 0 : index
    %173 = vector.load %arg17[%c0_65, %c0_66, %c0_67] : memref<2x128x6xf32, #tpu.memory_space<vmem>>, vector<1x128x6xf32>
    %174 = vector.shape_cast %173 : vector<1x128x6xf32> to vector<128x6xf32>
    %175 = vector.shape_cast %172 : vector<128x6xf32> to vector<1x128x6xf32>
    tpu.vector_store %arg17[%c0_65, %c0_66, %c0_67], %175 {strides = array<i32>} : memref<2x128x6xf32, #tpu.memory_space<vmem>>, vector<1x128x6xf32>,
    %c0_68 = arith.constant 0 : index
    %c0_69 = arith.constant 0 : index
    %c0_70 = arith.constant 0 : index
    %176 = vector.load %arg1[%c0_68, %c0_69, %c0_70] : memref<2x128x6xf32, #tpu.memory_space<vmem>>, vector<1x128x6xf32>
    %177 = vector.shape_cast %176 : vector<1x128x6xf32> to vector<128x6xf32>
    %178 = arith.subf %177, %172 : vector<128x6xf32>
    %179 = arith.mulf %178, %178 : vector<128x6xf32>
    %cst_71 = arith.constant 0.000000e+00 : f32
    %180 = vector.broadcast %cst_71 : f32 to vector<128x6xf32>
    %181 = arith.subf %180, %179 : vector<128x6xf32>
    %182 = vector.broadcast %166 : f32 to vector<128x6xf32>
    %183 = arith.mulf %181, %182 : vector<128x6xf32>
    %184 = vector.broadcast %167 : f32 to vector<128x6xf32>
    %185 = arith.subf %183, %184 : vector<128x6xf32>
    %cst_72 = arith.constant dense<0.000000e+00> : vector<128xf32>
    %186 = vector.multi_reduction <add>, %185, %cst_72 [1] : vector<128x6xf32> to vector<128xf32>
    %187 = vector.shape_cast %186 : vector<128xf32> to vector<128x1xf32>
    %cst_73 = arith.constant dense<0.000000e+00> : vector<1xf32>
    %188 = vector.multi_reduction <add>, %187, %cst_73 [0] : vector<128x1xf32> to vector<1xf32>
    %189 = vector.shape_cast %188 : vector<1xf32> to vector<1x1xf32>
    %c0_74 = arith.constant 0 : index
    %c0_75 = arith.constant 0 : index
    %190 = vector.load %arg18[%c0_74, %c0_75] : memref<2x1xf32, #tpu.memory_space<vmem>>, vector<1x1xf32>
    tpu.vector_store %arg18[%c0_74, %c0_75], %189 {strides = array<i32>} : memref<2x1xf32, #tpu.memory_space<vmem>>, vector<1x1xf32>,
    %cst_76 = arith.constant dense<0.000000e+00> : vector<128x6xf32>
    %191 = tpu.matmul %162, %168, %cst_76 {dimension_numbers = #tpu.dot_dimension_numbers<[1], [0], [0], [1], [0, 0, 1, 1], [], []>} : vector<128x6xf32>, vector<6x6xf32>, vector<128x6xf32> -> vector<128x6xf32>
    %192 = vector.broadcast %169 : vector<1x6xf32> to vector<128x6xf32>
    %193 = arith.addf %191, %192 : vector<128x6xf32>
    %c1 = arith.constant 1 : index
    %c0_77 = arith.constant 0 : index
    %c0_78 = arith.constant 0 : index
    %194 = vector.load %arg17[%c1, %c0_77, %c0_78] : memref<2x128x6xf32, #tpu.memory_space<vmem>>, vector<1x128x6xf32>
    %195 = vector.shape_cast %194 : vector<1x128x6xf32> to vector<128x6xf32>
    %196 = vector.shape_cast %193 : vector<128x6xf32> to vector<1x128x6xf32>
    tpu.vector_store %arg17[%c1, %c0_77, %c0_78], %196 {strides = array<i32>} : memref<2x128x6xf32, #tpu.memory_space<vmem>>, vector<1x128x6xf32>,
    %c1_79 = arith.constant 1 : index
    %c0_80 = arith.constant 0 : index
    %c0_81 = arith.constant 0 : index
    %197 = vector.load %arg1[%c1_79, %c0_80, %c0_81] : memref<2x128x6xf32, #tpu.memory_space<vmem>>, vector<1x128x6xf32>
    %198 = vector.shape_cast %197 : vector<1x128x6xf32> to vector<128x6xf32>
    %199 = arith.subf %198, %193 : vector<128x6xf32>
    %200 = arith.mulf %199, %199 : vector<128x6xf32>
    %cst_82 = arith.constant 0.000000e+00 : f32
    %201 = vector.broadcast %cst_82 : f32 to vector<128x6xf32>
    %202 = arith.subf %201, %200 : vector<128x6xf32>
    %203 = vector.broadcast %166 : f32 to vector<128x6xf32>
    %204 = arith.mulf %202, %203 : vector<128x6xf32>
    %205 = vector.broadcast %167 : f32 to vector<128x6xf32>
    %206 = arith.subf %204, %205 : vector<128x6xf32>
    %cst_83 = arith.constant dense<0.000000e+00> : vector<128xf32>
    %207 = vector.multi_reduction <add>, %206, %cst_83 [1] : vector<128x6xf32> to vector<128xf32>
    %208 = vector.shape_cast %207 : vector<128xf32> to vector<128x1xf32>
    %cst_84 = arith.constant dense<0.000000e+00> : vector<1xf32>
    %209 = vector.multi_reduction <add>, %208, %cst_84 [0] : vector<128x1xf32> to vector<1xf32>
    %210 = vector.shape_cast %209 : vector<1xf32> to vector<1x1xf32>
    %c1_85 = arith.constant 1 : index
    %c0_86 = arith.constant 0 : index
    %211 = vector.load %arg18[%c1_85, %c0_86] : memref<2x1xf32, #tpu.memory_space<vmem>>, vector<1x1xf32>
    tpu.vector_store %arg18[%c1_85, %c0_86], %210 {strides = array<i32>} : memref<2x1xf32, #tpu.memory_space<vmem>>, vector<1x1xf32>,
    return
  }
}

</mosaic_0001>

<llo_original>
// kernel: vae_forward.6
$region0: #{vae_forward.6}
  #allocation0 [shape = 'u32[]', space=smem, size = 0x4, offset = 0x4, fixed_abs, tag = 'smem constant byte address 0x4 - core index']
  #allocation1 [shape = 'u32[72,128]{1,0:T(1,128)}', space=vmem, size = 0x9000, scoped, tag = 'internal scratch']
  #allocation2 [shape = 'f32[15,16,12]{2,1,0:T(8,128)}', space=vmem, size = 0x1e000, scoped, tag = 'scratch operand']
  %s0 = inlined_call_operand.vmem [shape: f32[15,16,12], index: 0, kind: input, shape index: {}]
  %s1 = inlined_call_operand.vmem [shape: f32[120,24,48], index: 1, kind: input, shape index: {}]
  %s2 = inlined_call_operand.vmem [shape: f32[120,1,48], index: 2, kind: input, shape index: {}]
  %s3 = inlined_call_operand.vmem [shape: f32[120,2,12], index: 3, kind: output, shape index: {}]
  %s4 = sld [smem:[#allocation0]]
  $region36: #{vae_forward.6} parent=0
    _
  %s6 = ssub.s32 1, %s4
  %s7 = scalar_select 0, %s6, %s4
  // Predicated region
  $region2: #{vae_forward.6} parent=0 // pred_check
    _
  $region3: #{vae_forward.6} parent=0 // pred_check_branch
    %9 = sbr.rel (0) target = $region5
  $region4: #{vae_forward.6} parent=0 // pred_region
    _
  $region5: #{vae_forward.6} parent=0 // pred_fallthru
    _
  // Predicated region
  $region6: #{vae_forward.6} parent=0 // pred_check
    _
  $region7: #{vae_forward.6} parent=0 // pred_check_branch
    %11 = sbr.rel (0) target = $region9
  $region8: #{vae_forward.6} parent=0 // pred_region
    _
  $region9: #{vae_forward.6} parent=0 // pred_fallthru
    _
  // Predicated region
  $region10: #{vae_forward.6} parent=0 // pred_check
    _
  $region11: #{vae_forward.6} parent=0 // pred_check_branch
    %13 = sbr.rel (0) target = $region13
  $region12: #{vae_forward.6} parent=0 // pred_region
    _
  $region13: #{vae_forward.6} parent=0 // pred_fallthru
    _
  %v14 = vld [vmem:[%s0] sm:$0xff]
  %v15 = vld [vmem:[%s0 + $0x8] sm:$0xff]
  %v16 = vld [vmem:[%s0 + $0x10] sm:$0xff]
  %v17 = vld [vmem:[%s0 + $0x18] sm:$0xff]
  %v18 = vld [vmem:[%s0 + $0x20] sm:$0xff]
  %v19 = vld [vmem:[%s0 + $0x28] sm:$0xff]
  %v20 = vld [vmem:[%s0 + $0x30] sm:$0xff]
  %v21 = vld [vmem:[%s0 + $0x38] sm:$0xff]
  %v22 = vld [vmem:[%s0 + $0x40] sm:$0xff]
  %v23 = vld [vmem:[%s0 + $0x48] sm:$0xff]
  %v24 = vld [vmem:[%s0 + $0x50] sm:$0xff]
  %v25 = vld [vmem:[%s0 + $0x58] sm:$0xff]
  %v26 = vld [vmem:[%s0 + $0x60] sm:$0xff]
  %v27 = vld [vmem:[%s0 + $0x68] sm:$0xff]
  %v28 = vld [vmem:[%s0 + $0x70] sm:$0xff]
  %v29 = vld [vmem:[%s0 + $0x78] sm:$0xff]
  %v30 = vld [vmem:[%s0 + $0x80] sm:$0xff]
  %v31 = vld [vmem:[%s0 + $0x88] sm:$0xff]
  %v32 = vld [vmem:[%s0 + $0x90] sm:$0xff]
  %v33 = vld [vmem:[%s0 + $0x98] sm:$0xff]
  %v34 = vld [vmem:[%s0 + $0xa0] sm:$0xff]
  %v35 = vld [vmem:[%s0 + $0xa8] sm:$0xff]
  %v36 = vld [vmem:[%s0 + $0xb0] sm:$0xff]
  %v37 = vld [vmem:[%s0 + $0xb8] sm:$0xff]
  %v38 = vld [vmem:[%s0 + $0xc0] sm:$0xff]
  %v39 = vld [vmem:[%s0 + $0xc8] sm:$0xff]
  %v40 = vld [vmem:[%s0 + $0xd0] sm:$0xff]
  %v41 = vld [vmem:[%s0 + $0xd8] sm:$0xff]
  %v42 = vld [vmem:[%s0 + $0xe0] sm:$0xff]
  %v43 = vld [vmem:[%s0 + $0xe8] sm:$0xff]
  %vm44 = vcmask 97280
  %45 = vst.msk [vmem:[#allocation2] sm:$0xff] %vm44, %v14
  %46 = vst.msk [vmem:[#allocation2 + $0x8] sm:$0xff] %vm44, %v15
  %47 = vst.msk [vmem:[#allocation2 + $0x10] sm:$0xff] %vm44, %v16
  %48 = vst.msk [vmem:[#allocation2 + $0x18] sm:$0xff] %vm44, %v17
  %49 = vst.msk [vmem:[#allocation2 + $0x20] sm:$0xff] %vm44, %v18
  %50 = vst.msk [vmem:[#allocation2 + $0x28] sm:$0xff] %vm44, %v19
  %51 = vst.msk [vmem:[#allocation2 + $0x30] sm:$0xff] %vm44, %v20
  %52 = vst.msk [vmem:[#allocation2 + $0x38] sm:$0xff] %vm44, %v21
  %53 = vst.msk [vmem:[#allocation2 + $0x40] sm:$0xff] %vm44, %v22
  %54 = vst.msk [vmem:[#allocation2 + $0x48] sm:$0xff] %vm44, %v23
  %55 = vst.msk [vmem:[#allocation2 + $0x50] sm:$0xff] %vm44, %v24
  %56 = vst.msk [vmem:[#allocation2 + $0x58] sm:$0xff] %vm44, %v25
  %57 = vst.msk [vmem:[#allocation2 + $0x60] sm:$0xff] %vm44, %v26
  %58 = vst.msk [vmem:[#allocation2 + $0x68] sm:$0xff] %vm44, %v27
  %59 = vst.msk [vmem:[#allocation2 + $0x70] sm:$0xff] %vm44, %v28
  %60 = vst.msk [vmem:[#allocation2 + $0x78] sm:$0xff] %vm44, %v29
  %61 = vst.msk [vmem:[#allocation2 + $0x80] sm:$0xff] %vm44, %v30
  %62 = vst.msk [vmem:[#allocation2 + $0x88] sm:$0xff] %vm44, %v31
  %63 = vst.msk [vmem:[#allocation2 + $0x90] sm:$0xff] %vm44, %v32
  %64 = vst.msk [vmem:[#allocation2 + $0x98] sm:$0xff] %vm44, %v33
  %65 = vst.msk [vmem:[#allocation2 + $0xa0] sm:$0xff] %vm44, %v34
  %66 = vst.msk [vmem:[#allocation2 + $0xa8] sm:$0xff] %vm44, %v35
  %67 = vst.msk [vmem:[#allocation2 + $0xb0] sm:$0xff] %vm44, %v36
  %68 = vst.msk [vmem:[#allocation2 + $0xb8] sm:$0xff] %vm44, %v37
  %69 = vst.msk [vmem:[#allocation2 + $0xc0] sm:$0xff] %vm44, %v38
  %70 = vst.msk [vmem:[#allocation2 + $0xc8] sm:$0xff] %vm44, %v39
  %71 = vst.msk [vmem:[#allocation2 + $0xd0] sm:$0xff] %vm44, %v40
  %72 = vst.msk [vmem:[#allocation2 + $0xd8] sm:$0xff] %vm44, %v41
  %73 = vst.msk [vmem:[#allocation2 + $0xe0] sm:$0xff] %vm44, %v42
  %74 = vst.msk [vmem:[#allocation2 + $0xe8] sm:$0xff] %vm44, %v43
  loop: start=0, step=1, limit=120
  $region14: #{vae_forward.6} parent=0 // loop_pre_header
    _
  $region15: #{vae_forward.6} parent=0 // loop_header
    %s76 = sphi 0, %s80
    %p77 = scmp.ge.s32.totalorder %s76, 120
  $region16: #{vae_forward.6} parent=0 // loop_header_branch
    %79 = sbr.rel (%p77) target = $region20
  $region17: #{vae_forward.6} parent=0 // loop_body
    %s81 = smul.u32 %s76, 24
    %s82 = scalar_lea.vmem %s1, %s81
    %v83 = vld [vmem:[%s82] sm:$0xff]
    %v84 = vld [vmem:[%s82 + $0x8] sm:$0xff]
    %v85 = vld [vmem:[%s82 + $0x10] sm:$0xff]
    %s86 = scalar_lea.vmem %s2, %s76
    %v87 = vld [vmem:[%s86] sm:$0x1]
    loop: start=0, step=1, limit=15
    $region21: #{vae_forward.6} parent=17 // loop_pre_header
      _
    $region22: #{vae_forward.6} parent=17 // loop_header
      %s89 = sphi 0, %s93
      %p90 = scmp.ge.s32.totalorder %s89, 15
      %v94 = vphi 0.0, %v722
      %v95 = vphi 0.0, %v716
    $region23: #{vae_forward.6} parent=17 // loop_header_branch
      %92 = sbr.rel (%p90) target = $region27
    $region24: #{vae_forward.6} parent=17 // loop_body
      %s96 = smul.u32 %s89, 16
      %s97 = scalar_lea.vmem [#allocation2], %s96
      %v98 = vld [vmem:[%s97] sm:$0xff]
      %v99 = vld [vmem:[%s97 + $0x8] sm:$0xff]
      %v101 = vperm.slane %v87, 0
      %v104 = vsel %vm44, %v98, 0
      %v107 = vsel %vm44, %v99, 0
      %vm109 = vcmask 1043456
      %v111 = vsel %vm109, %v84, 0
      %113 = vmatpush.msra.mxu0 0.0
      %114 = vmatpush.msra.mxu0 0.0
      %115 = vmatpush.msra.mxu0 0.0
      %116 = vmatpush.msra.mxu0 0.0
      %117 = vmatpush.msra.mxu0 0.0
      %118 = vmatpush.msra.mxu0 0.0
      %119 = vmatpush.msra.mxu0 0.0
      %120 = vmatpush.msra.mxu0 0.0
      %121 = vmatpush.msra.mxu0 0.0
      %122 = vmatpush.msra.mxu0 0.0
      %123 = vmatpush.msra.mxu0 0.0
      %124 = vmatpush.msra.mxu0 0.0
      %125 = vmatpush.msra.mxu0 0.0
      %126 = vmatpush.msra.mxu0 0.0
      %127 = vmatpush.msra.mxu0 %v111
      %128 = vmatpush.msra.mxu0 %v83
      %129 = vmatmul.f32.gmra.mxu0 %v104
      %v130 = vpop.f32.mrf.mxu0
      %v131 = vadd.f32 %v101, %v130
      %132 = vmatmul.f32.gmra.mxu0 %v107
      %v133 = vpop.f32.mrf.mxu0
      %v134 = vadd.f32 %v101, %v133
      %135 = vdwg.mxu0
      %v137 = vrot.slane %v94, 6
      %138 = vrot.lane.b32.xlu0 %v137, 104
      %v139 = vpop.permute.xlu0 %138
      %v141 = vrot.slane %v84, 4
      %v142 = vrot.slane %v85, 4
      %v143 = vsel %vm109, %v141, %v142
      %v145 = vsel %vm44, %v139, 0
      %v147 = vsel %vm109, %v142, 0
      %149 = vmatpush.msra.mxu0 0.0
      %150 = vmatpush.msra.mxu0 0.0
      %151 = vmatpush.msra.mxu0 0.0
      %152 = vmatpush.msra.mxu0 0.0
      %153 = vmatpush.msra.mxu0 0.0
      %154 = vmatpush.msra.mxu0 0.0
      %155 = vmatpush.msra.mxu0 0.0
      %156 = vmatpush.msra.mxu0 0.0
      %157 = vmatpush.msra.mxu0 0.0
      %158 = vmatpush.msra.mxu0 0.0
      %159 = vmatpush.msra.mxu0 0.0
      %160 = vmatpush.msra.mxu0 0.0
      %161 = vmatpush.msra.mxu0 0.0
      %162 = vmatpush.msra.mxu0 0.0
      %163 = vmatpush.msra.mxu0 %v147
      %164 = vmatpush.msra.mxu0 %v143
      %165 = vmatmul.f32.gmra.mxu0 %v145
      %v166 = vpop.f32.mrf.mxu0
      %v167 = vadd.f32 0.0, %v166
      %168 = vdwg.mxu0
      %v169 = vadd.f32 %v131, %v167
      %v170 = vsub.f32 0.0, %v169
      %v171 = vmul.f32 %v170, 1.442695
      %v172 = vpow.pop %v171
      %v173 = vadd.f32 %v172, 1.0
      %v174 = vrcp.pop %v173
      %v175 = vmul.f32 %v173, %v174
      %v176 = vsub.f32 1.0, %v175
      %v177 = vmul.f32 %v174, %v176
      %v178 = vadd.f32 %v174, %v177
      %vm179 = vweird.f32 %v173
      %vm180 = vweird.f32 %v174
      %vm181 = vmor %vm179, %vm180
      %v182 = vsel %vm181, %v174, %v178
      %v183 = vand.u32 2147483647, %v173
      %vm184 = vcmp.eq.f32.partialorder %v183, 8.507059e+37
      %v185 = vand.u32 %v173, 2147483648
      %v186 = vor.u32 1.1754944e-38, %v185
      %v187 = vsel %vm184, %v186, %v182
      %v188 = vmul.f32 1.0, %v187
      %v189 = vtanh.pop %v169
      %v191 = vrot.slane %v95, 6
      %v193 = vmul.f32 %v188, %v191
      %195 = vrot.lane.b32.xlu0 %v189, 92
      %v196 = vpop.permute.xlu0 %195
      %v198 = vmul.f32 %v188, %v196
      %200 = vrot.lane.b32.xlu0 %v198, 12
      %v201 = vpop.permute.xlu0 %200
      %v203 = vadd.f32 %v193, %v201
      %v204 = vtanh.pop %v203
      %206 = vrot.lane.b32.xlu0 %v204, 12
      %v207 = vpop.permute.xlu0 %206
      %v209 = vmul.f32 %v188, %v207
      %211 = vrot.lane.b32.xlu0 %v209, 104
      %v212 = vpop.permute.xlu0 %211
      %vm214 = vcmask 91136
      %215 = vst.msk [vmem:[%s97] sm:$0x3] %vm214, %v212
      %v216 = vsel %vm44, %v212, 0
      %218 = vmatpush.msra.mxu0 0.0
      %219 = vmatpush.msra.mxu0 0.0
      %220 = vmatpush.msra.mxu0 0.0
      %221 = vmatpush.msra.mxu0 0.0
      %222 = vmatpush.msra.mxu0 0.0
      %223 = vmatpush.msra.mxu0 0.0
      %224 = vmatpush.msra.mxu0 0.0
      %225 = vmatpush.msra.mxu0 0.0
      %226 = vmatpush.msra.mxu0 0.0
      %227 = vmatpush.msra.mxu0 0.0
      %228 = vmatpush.msra.mxu0 0.0
      %229 = vmatpush.msra.mxu0 0.0
      %230 = vmatpush.msra.mxu0 0.0
      %231 = vmatpush.msra.mxu0 0.0
      %232 = vmatpush.msra.mxu0 %v147
      %233 = vmatpush.msra.mxu0 %v143
      %234 = vmatmul.f32.gmra.mxu0 %v216
      %v235 = vpop.f32.mrf.mxu0
      %v236 = vadd.f32 0.0, %v235
      %237 = vdwg.mxu0
      %v239 = vrot.slane %v236, 6
      %v241 = vadd.f32 %v131, %v239
      %v242 = vsub.f32 0.0, %v241
      %v243 = vmul.f32 %v242, 1.442695
      %v244 = vpow.pop %v243
      %v245 = vadd.f32 %v244, 1.0
      %v246 = vrcp.pop %v245
      %v247 = vmul.f32 %v245, %v246
      %v248 = vsub.f32 1.0, %v247
      %v249 = vmul.f32 %v246, %v248
      %v250 = vadd.f32 %v246, %v249
      %vm251 = vweird.f32 %v245
      %vm252 = vweird.f32 %v246
      %vm253 = vmor %vm251, %vm252
      %v254 = vsel %vm253, %v246, %v250
      %v255 = vand.u32 2147483647, %v245
      %vm256 = vcmp.eq.f32.partialorder %v255, 8.507059e+37
      %v257 = vand.u32 %v245, 2147483648
      %v258 = vor.u32 1.1754944e-38, %v257
      %v259 = vsel %vm256, %v258, %v254
      %v260 = vmul.f32 1.0, %v259
      %v261 = vtanh.pop %v241
      %v263 = vrot.slane %v203, 6
      %v265 = vmul.f32 %v260, %v263
      %267 = vrot.lane.b32.xlu0 %v261, 92
      %v268 = vpop.permute.xlu0 %267
      %v270 = vmul.f32 %v260, %v268
      %272 = vrot.lane.b32.xlu0 %v270, 12
      %v273 = vpop.permute.xlu0 %272
      %v275 = vadd.f32 %v265, %v273
      %v276 = vtanh.pop %v275
      %278 = vrot.lane.b32.xlu0 %v276, 12
      %v279 = vpop.permute.xlu0 %278
      %v281 = vmul.f32 %v260, %v279
      %283 = vrot.lane.b32.xlu0 %v281, 104
      %v284 = vpop.permute.xlu0 %283
      %vm286 = vcmask 93186
      %287 = vst.msk [vmem:[%s97] sm:$0xc] %vm286, %v284
      %v288 = vrot.slane %v281, 2
      %289 = vrot.lane.b32.xlu0 %v288, 104
      %v290 = vpop.permute.xlu0 %289
      %v291 = vsel %vm44, %v290, 0
      %293 = vmatpush.msra.mxu0 0.0
      %294 = vmatpush.msra.mxu0 0.0
      %295 = vmatpush.msra.mxu0 0.0
      %296 = vmatpush.msra.mxu0 0.0
      %297 = vmatpush.msra.mxu0 0.0
      %298 = vmatpush.msra.mxu0 0.0
      %299 = vmatpush.msra.mxu0 0.0
      %300 = vmatpush.msra.mxu0 0.0
      %301 = vmatpush.msra.mxu0 0.0
      %302 = vmatpush.msra.mxu0 0.0
      %303 = vmatpush.msra.mxu0 0.0
      %304 = vmatpush.msra.mxu0 0.0
      %305 = vmatpush.msra.mxu0 0.0
      %306 = vmatpush.msra.mxu0 0.0
      %307 = vmatpush.msra.mxu0 %v147
      %308 = vmatpush.msra.mxu0 %v143
      %309 = vmatmul.f32.gmra.mxu0 %v291
      %v310 = vpop.f32.mrf.mxu0
      %v311 = vadd.f32 0.0, %v310
      %312 = vdwg.mxu0
      %v314 = vrot.slane %v311, 4
      %v316 = vadd.f32 %v131, %v314
      %v317 = vsub.f32 0.0, %v316
      %v318 = vmul.f32 %v317, 1.442695
      %v319 = vpow.pop %v318
      %v320 = vadd.f32 %v319, 1.0
      %v321 = vrcp.pop %v320
      %v322 = vmul.f32 %v320, %v321
      %v323 = vsub.f32 1.0, %v322
      %v324 = vmul.f32 %v321, %v323
      %v325 = vadd.f32 %v321, %v324
      %vm326 = vweird.f32 %v320
      %vm327 = vweird.f32 %v321
      %vm328 = vmor %vm326, %vm327
      %v329 = vsel %vm328, %v321, %v325
      %v330 = vand.u32 2147483647, %v320
      %vm331 = vcmp.eq.f32.partialorder %v330, 8.507059e+37
      %v332 = vand.u32 %v320, 2147483648
      %v333 = vor.u32 1.1754944e-38, %v332
      %v334 = vsel %vm331, %v333, %v329
      %v335 = vmul.f32 1.0, %v334
      %v336 = vtanh.pop %v316
      %v338 = vrot.slane %v275, 6
      %v340 = vmul.f32 %v335, %v338
      %342 = vrot.lane.b32.xlu0 %v336, 92
      %v343 = vpop.permute.xlu0 %342
      %v345 = vmul.f32 %v335, %v343
      %347 = vrot.lane.b32.xlu0 %v345, 12
      %v348 = vpop.permute.xlu0 %347
      %v350 = vadd.f32 %v340, %v348
      %v351 = vtanh.pop %v350
      %353 = vrot.lane.b32.xlu0 %v351, 12
      %v354 = vpop.permute.xlu0 %353
      %v356 = vmul.f32 %v335, %v354
      %358 = vrot.lane.b32.xlu0 %v356, 104
      %v359 = vpop.permute.xlu0 %358
      %vm361 = vcmask 95236
      %362 = vst.msk [vmem:[%s97] sm:$0x30] %vm361, %v359
      %v363 = vrot.slane %v356, 4
      %364 = vrot.lane.b32.xlu0 %v363, 104
      %v365 = vpop.permute.xlu0 %364
      %v366 = vsel %vm44, %v365, 0
      %368 = vmatpush.msra.mxu0 0.0
      %369 = vmatpush.msra.mxu0 0.0
      %370 = vmatpush.msra.mxu0 0.0
      %371 = vmatpush.msra.mxu0 0.0
      %372 = vmatpush.msra.mxu0 0.0
      %373 = vmatpush.msra.mxu0 0.0
      %374 = vmatpush.msra.mxu0 0.0
      %375 = vmatpush.msra.mxu0 0.0
      %376 = vmatpush.msra.mxu0 0.0
      %377 = vmatpush.msra.mxu0 0.0
      %378 = vmatpush.msra.mxu0 0.0
      %379 = vmatpush.msra.mxu0 0.0
      %380 = vmatpush.msra.mxu0 0.0
      %381 = vmatpush.msra.mxu0 0.0
      %382 = vmatpush.msra.mxu0 %v147
      %383 = vmatpush.msra.mxu0 %v143
      %384 = vmatmul.f32.gmra.mxu0 %v366
      %v385 = vpop.f32.mrf.mxu0
      %v386 = vadd.f32 0.0, %v385
      %387 = vdwg.mxu0
      %v389 = vrot.slane %v386, 2
      %v391 = vadd.f32 %v131, %v389
      %v392 = vsub.f32 0.0, %v391
      %v393 = vmul.f32 %v392, 1.442695
      %v394 = vpow.pop %v393
      %v395 = vadd.f32 %v394, 1.0
      %v396 = vrcp.pop %v395
      %v397 = vmul.f32 %v395, %v396
      %v398 = vsub.f32 1.0, %v397
      %v399 = vmul.f32 %v396, %v398
      %v400 = vadd.f32 %v396, %v399
      %vm401 = vweird.f32 %v395
      %vm402 = vweird.f32 %v396
      %vm403 = vmor %vm401, %vm402
      %v404 = vsel %vm403, %v396, %v400
      %v405 = vand.u32 2147483647, %v395
      %vm406 = vcmp.eq.f32.partialorder %v405, 8.507059e+37
      %v407 = vand.u32 %v395, 2147483648
      %v408 = vor.u32 1.1754944e-38, %v407
      %v409 = vsel %vm406, %v408, %v404
      %v410 = vmul.f32 1.0, %v409
      %v411 = vtanh.pop %v391
      %v413 = vrot.slane %v350, 6
      %v415 = vmul.f32 %v410, %v413
      %417 = vrot.lane.b32.xlu0 %v411, 92
      %v418 = vpop.permute.xlu0 %417
      %v420 = vmul.f32 %v410, %v418
      %422 = vrot.lane.b32.xlu0 %v420, 12
      %v423 = vpop.permute.xlu0 %422
      %v425 = vadd.f32 %v415, %v423
      %v426 = vtanh.pop %v425
      %428 = vrot.lane.b32.xlu0 %v426, 12
      %v429 = vpop.permute.xlu0 %428
      %v431 = vmul.f32 %v410, %v429
      %433 = vrot.lane.b32.xlu0 %v431, 104
      %v434 = vpop.permute.xlu0 %433
      %vm436 = vcmask 97286
      %437 = vst.msk [vmem:[%s97] sm:$0xc0] %vm436, %v434
      %v438 = vrot.slane %v431, 6
      %439 = vrot.lane.b32.xlu0 %v438, 104
      %v440 = vpop.permute.xlu0 %439
      %v441 = vsel %vm44, %v440, 0
      %443 = vmatpush.msra.mxu0 0.0
      %444 = vmatpush.msra.mxu0 0.0
      %445 = vmatpush.msra.mxu0 0.0
      %446 = vmatpush.msra.mxu0 0.0
      %447 = vmatpush.msra.mxu0 0.0
      %448 = vmatpush.msra.mxu0 0.0
      %449 = vmatpush.msra.mxu0 0.0
      %450 = vmatpush.msra.mxu0 0.0
      %451 = vmatpush.msra.mxu0 0.0
      %452 = vmatpush.msra.mxu0 0.0
      %453 = vmatpush.msra.mxu0 0.0
      %454 = vmatpush.msra.mxu0 0.0
      %455 = vmatpush.msra.mxu0 0.0
      %456 = vmatpush.msra.mxu0 0.0
      %457 = vmatpush.msra.mxu0 %v147
      %458 = vmatpush.msra.mxu0 %v143
      %459 = vmatmul.f32.gmra.mxu0 %v441
      %v460 = vpop.f32.mrf.mxu0
      %v461 = vadd.f32 0.0, %v460
      %462 = vdwg.mxu0
      %v463 = vadd.f32 %v134, %v461
      %v464 = vsub.f32 0.0, %v463
      %v465 = vmul.f32 %v464, 1.442695
      %v466 = vpow.pop %v465
      %v467 = vadd.f32 %v466, 1.0
      %v468 = vrcp.pop %v467
      %v469 = vmul.f32 %v467, %v468
      %v470 = vsub.f32 1.0, %v469
      %v471 = vmul.f32 %v468, %v470
      %v472 = vadd.f32 %v468, %v471
      %vm473 = vweird.f32 %v467
      %vm474 = vweird.f32 %v468
      %vm475 = vmor %vm473, %vm474
      %v476 = vsel %vm475, %v468, %v472
      %v477 = vand.u32 2147483647, %v467
      %vm478 = vcmp.eq.f32.partialorder %v477, 8.507059e+37
      %v479 = vand.u32 %v467, 2147483648
      %v480 = vor.u32 1.1754944e-38, %v479
      %v481 = vsel %vm478, %v480, %v476
      %v482 = vmul.f32 1.0, %v481
      %v483 = vtanh.pop %v463
      %v485 = vrot.slane %v425, 6
      %v487 = vmul.f32 %v482, %v485
      %489 = vrot.lane.b32.xlu0 %v483, 92
      %v490 = vpop.permute.xlu0 %489
      %v492 = vmul.f32 %v482, %v490
      %494 = vrot.lane.b32.xlu0 %v492, 12
      %v495 = vpop.permute.xlu0 %494
      %v497 = vadd.f32 %v487, %v495
      %v498 = vtanh.pop %v497
      %500 = vrot.lane.b32.xlu0 %v498, 12
      %v501 = vpop.permute.xlu0 %500
      %v503 = vmul.f32 %v482, %v501
      %505 = vrot.lane.b32.xlu0 %v503, 104
      %v506 = vpop.permute.xlu0 %505
      %508 = vst.msk [vmem:[%s97 + $0x8] sm:$0x3] %vm214, %v506
      %v509 = vsel %vm44, %v506, 0
      %511 = vmatpush.msra.mxu0 0.0
      %512 = vmatpush.msra.mxu0 0.0
      %513 = vmatpush.msra.mxu0 0.0
      %514 = vmatpush.msra.mxu0 0.0
      %515 = vmatpush.msra.mxu0 0.0
      %516 = vmatpush.msra.mxu0 0.0
      %517 = vmatpush.msra.mxu0 0.0
      %518 = vmatpush.msra.mxu0 0.0
      %519 = vmatpush.msra.mxu0 0.0
      %520 = vmatpush.msra.mxu0 0.0
      %521 = vmatpush.msra.mxu0 0.0
      %522 = vmatpush.msra.mxu0 0.0
      %523 = vmatpush.msra.mxu0 0.0
      %524 = vmatpush.msra.mxu0 0.0
      %525 = vmatpush.msra.mxu0 %v147
      %526 = vmatpush.msra.mxu0 %v143
      %527 = vmatmul.f32.gmra.mxu0 %v509
      %v528 = vpop.f32.mrf.mxu0
      %v529 = vadd.f32 0.0, %v528
      %530 = vdwg.mxu0
      %v532 = vrot.slane %v529, 6
      %v534 = vadd.f32 %v134, %v532
      %v535 = vsub.f32 0.0, %v534
      %v536 = vmul.f32 %v535, 1.442695
      %v537 = vpow.pop %v536
      %v538 = vadd.f32 %v537, 1.0
      %v539 = vrcp.pop %v538
      %v540 = vmul.f32 %v538, %v539
      %v541 = vsub.f32 1.0, %v540
      %v542 = vmul.f32 %v539, %v541
      %v543 = vadd.f32 %v539, %v542
      %vm544 = vweird.f32 %v538
      %vm545 = vweird.f32 %v539
      %vm546 = vmor %vm544, %vm545
      %v547 = vsel %vm546, %v539, %v543
      %v548 = vand.u32 2147483647, %v538
      %vm549 = vcmp.eq.f32.partialorder %v548, 8.507059e+37
      %v550 = vand.u32 %v538, 2147483648
      %v551 = vor.u32 1.1754944e-38, %v550
      %v552 = vsel %vm549, %v551, %v547
      %v553 = vmul.f32 1.0, %v552
      %v554 = vtanh.pop %v534
      %v556 = vrot.slane %v497, 6
      %v558 = vmul.f32 %v553, %v556
      %560 = vrot.lane.b32.xlu0 %v554, 92
      %v561 = vpop.permute.xlu0 %560
      %v563 = vmul.f32 %v553, %v561
      %565 = vrot.lane.b32.xlu0 %v563, 12
      %v566 = vpop.permute.xlu0 %565
      %v568 = vadd.f32 %v558, %v566
      %v569 = vtanh.pop %v568
      %571 = vrot.lane.b32.xlu0 %v569, 12
      %v572 = vpop.permute.xlu0 %571
      %v574 = vmul.f32 %v553, %v572
      %576 = vrot.lane.b32.xlu0 %v574, 104
      %v577 = vpop.permute.xlu0 %576
      %579 = vst.msk [vmem:[%s97 + $0x8] sm:$0xc] %vm286, %v577
      %v580 = vrot.slane %v574, 2
      %581 = vrot.lane.b32.xlu0 %v580, 104
      %v582 = vpop.permute.xlu0 %581
      %v583 = vsel %vm44, %v582, 0
      %585 = vmatpush.msra.mxu0 0.0
      %586 = vmatpush.msra.mxu0 0.0
      %587 = vmatpush.msra.mxu0 0.0
      %588 = vmatpush.msra.mxu0 0.0
      %589 = vmatpush.msra.mxu0 0.0
      %590 = vmatpush.msra.mxu0 0.0
      %591 = vmatpush.msra.mxu0 0.0
      %592 = vmatpush.msra.mxu0 0.0
      %593 = vmatpush.msra.mxu0 0.0
      %594 = vmatpush.msra.mxu0 0.0
      %595 = vmatpush.msra.mxu0 0.0
      %596 = vmatpush.msra.mxu0 0.0
      %597 = vmatpush.msra.mxu0 0.0
      %598 = vmatpush.msra.mxu0 0.0
      %599 = vmatpush.msra.mxu0 %v147
      %600 = vmatpush.msra.mxu0 %v143
      %601 = vmatmul.f32.gmra.mxu0 %v583
      %v602 = vpop.f32.mrf.mxu0
      %v603 = vadd.f32 0.0, %v602
      %604 = vdwg.mxu0
      %v606 = vrot.slane %v603, 4
      %v608 = vadd.f32 %v134, %v606
      %v609 = vsub.f32 0.0, %v608
      %v610 = vmul.f32 %v609, 1.442695
      %v611 = vpow.pop %v610
      %v612 = vadd.f32 %v611, 1.0
      %v613 = vrcp.pop %v612
      %v614 = vmul.f32 %v612, %v613
      %v615 = vsub.f32 1.0, %v614
      %v616 = vmul.f32 %v613, %v615
      %v617 = vadd.f32 %v613, %v616
      %vm618 = vweird.f32 %v612
      %vm619 = vweird.f32 %v613
      %vm620 = vmor %vm618, %vm619
      %v621 = vsel %vm620, %v613, %v617
      %v622 = vand.u32 2147483647, %v612
      %vm623 = vcmp.eq.f32.partialorder %v622, 8.507059e+37
      %v624 = vand.u32 %v612, 2147483648
      %v625 = vor.u32 1.1754944e-38, %v624
      %v626 = vsel %vm623, %v625, %v621
      %v627 = vmul.f32 1.0, %v626
      %v628 = vtanh.pop %v608
      %v630 = vrot.slane %v568, 6
      %v632 = vmul.f32 %v627, %v630
      %634 = vrot.lane.b32.xlu0 %v628, 92
      %v635 = vpop.permute.xlu0 %634
      %v637 = vmul.f32 %v627, %v635
      %639 = vrot.lane.b32.xlu0 %v637, 12
      %v640 = vpop.permute.xlu0 %639
      %v642 = vadd.f32 %v632, %v640
      %v643 = vtanh.pop %v642
      %645 = vrot.lane.b32.xlu0 %v643, 12
      %v646 = vpop.permute.xlu0 %645
      %v648 = vmul.f32 %v627, %v646
      %650 = vrot.lane.b32.xlu0 %v648, 104
      %v651 = vpop.permute.xlu0 %650
      %653 = vst.msk [vmem:[%s97 + $0x8] sm:$0x30] %vm361, %v651
      %v654 = vrot.slane %v648, 4
      %655 = vrot.lane.b32.xlu0 %v654, 104
      %v656 = vpop.permute.xlu0 %655
      %v657 = vsel %vm44, %v656, 0
      %659 = vmatpush.msra.mxu0 0.0
      %660 = vmatpush.msra.mxu0 0.0
      %661 = vmatpush.msra.mxu0 0.0
      %662 = vmatpush.msra.mxu0 0.0
      %663 = vmatpush.msra.mxu0 0.0
      %664 = vmatpush.msra.mxu0 0.0
      %665 = vmatpush.msra.mxu0 0.0
      %666 = vmatpush.msra.mxu0 0.0
      %667 = vmatpush.msra.mxu0 0.0
      %668 = vmatpush.msra.mxu0 0.0
      %669 = vmatpush.msra.mxu0 0.0
      %670 = vmatpush.msra.mxu0 0.0
      %671 = vmatpush.msra.mxu0 0.0
      %672 = vmatpush.msra.mxu0 0.0
      %673 = vmatpush.msra.mxu0 %v147
      %674 = vmatpush.msra.mxu0 %v143
      %675 = vmatmul.f32.gmra.mxu0 %v657
      %v676 = vpop.f32.mrf.mxu0
      %v677 = vadd.f32 0.0, %v676
      %678 = vdwg.mxu0
      %v680 = vrot.slane %v677, 2
      %v682 = vadd.f32 %v134, %v680
      %v683 = vsub.f32 0.0, %v682
      %v684 = vmul.f32 %v683, 1.442695
      %v685 = vpow.pop %v684
      %v686 = vadd.f32 %v685, 1.0
      %v687 = vrcp.pop %v686
      %v688 = vmul.f32 %v686, %v687
      %v689 = vsub.f32 1.0, %v688
      %v690 = vmul.f32 %v687, %v689
      %v691 = vadd.f32 %v687, %v690
      %vm692 = vweird.f32 %v686
      %vm693 = vweird.f32 %v687
      %vm694 = vmor %vm692, %vm693
      %v695 = vsel %vm694, %v687, %v691
      %v696 = vand.u32 2147483647, %v686
      %vm697 = vcmp.eq.f32.partialorder %v696, 8.507059e+37
      %v698 = vand.u32 %v686, 2147483648
      %v699 = vor.u32 1.1754944e-38, %v698
      %v700 = vsel %vm697, %v699, %v695
      %v701 = vmul.f32 1.0, %v700
      %v702 = vtanh.pop %v682
      %v704 = vrot.slane %v642, 6
      %v706 = vmul.f32 %v701, %v704
      %708 = vrot.lane.b32.xlu0 %v702, 92
      %v709 = vpop.permute.xlu0 %708
      %v711 = vmul.f32 %v701, %v709
      %713 = vrot.lane.b32.xlu0 %v711, 12
      %v714 = vpop.permute.xlu0 %713
      %v716 = vadd.f32 %v706, %v714
      %v717 = vtanh.pop %v716
      %719 = vrot.lane.b32.xlu0 %v717, 12
      %v720 = vpop.permute.xlu0 %719
      %v722 = vmul.f32 %v701, %v720
      %724 = vrot.lane.b32.xlu0 %v722, 104
      %v725 = vpop.permute.xlu0 %724
      %727 = vst.msk [vmem:[%s97 + $0x8] sm:$0xc0] %vm436, %v725
    $region25: #{vae_forward.6} parent=17 // loop_footer
      %s93 = sadd.s32 1, %s89
    $region26: #{vae_forward.6} parent=17 // loop_footer_branch
      %88 = sbr.rel target = $region22
    $region27: #{vae_forward.6} parent=17 // loop_exit
      _
    %729 = vrot.lane.b32.xlu0 %v94, 104
    %v730 = vpop.permute.xlu0 %729
    %s732 = smul.u32 %s76, 2
    %s733 = scalar_lea.vmem %s3, %s732
    %vm734 = vcmask 97286
    %735 = vst.msk [vmem:[%s733 - $0x6] sm:$0xc0] %vm734, %v730
  $region18: #{vae_forward.6} parent=0 // loop_footer
    %s80 = sadd.s32 1, %s76
  $region19: #{vae_forward.6} parent=0 // loop_footer_branch
    %75 = sbr.rel target = $region15
  $region20: #{vae_forward.6} parent=0 // loop_exit
    _
  // Predicated region
  $region28: #{vae_forward.6} parent=0 // pred_check
    _
  $region29: #{vae_forward.6} parent=0 // pred_check_branch
    %737 = sbr.rel (0) target = $region31
  $region30: #{vae_forward.6} parent=0 // pred_region
    _
  $region31: #{vae_forward.6} parent=0 // pred_fallthru
    _
  // Predicated region
  $region32: #{vae_forward.6} parent=0 // pred_check
    _
  $region33: #{vae_forward.6} parent=0 // pred_check_branch
    %739 = sbr.rel (0) target = $region35
  $region34: #{vae_forward.6} parent=0 // pred_region
    _
  $region35: #{vae_forward.6} parent=0 // pred_fallthru
    _

// kernel: vae_forward.5
$region0: #{vae_forward.5}
  #allocation0 [shape = 'u32[]', space=smem, size = 0x4, offset = 0x4, fixed_abs, tag = 'smem constant byte address 0x4 - core index']
  #allocation1 [shape = 'u32[72,128]{1,0:T(1,128)}', space=vmem, size = 0x9000, scoped, tag = 'internal scratch']
  %s0 = inlined_call_operand.vmem [shape: f32[2,128,6], index: 0, kind: input, shape index: {}]
  %s1 = inlined_call_operand.vmem [shape: f32[30,6], index: 1, kind: input, shape index: {}]
  %s2 = inlined_call_operand.hbm [shape: f32[1,6], index: 2, kind: input, shape index: {}]
  %s3 = inlined_call_operand.hbm [shape: f32[1,6], index: 3, kind: input, shape index: {}]
  %s4 = inlined_call_operand.hbm [shape: f32[1,6], index: 4, kind: input, shape index: {}]
  %s5 = inlined_call_operand.vmem [shape: f32[30,6], index: 5, kind: input, shape index: {}]
  %s6 = inlined_call_operand.hbm [shape: f32[1,6], index: 6, kind: input, shape index: {}]
  %s7 = inlined_call_operand.hbm [shape: f32[1,6], index: 7, kind: input, shape index: {}]
  %s8 = inlined_call_operand.hbm [shape: f32[1,6], index: 8, kind: input, shape index: {}]
  %s9 = inlined_call_operand.hbm [shape: f32[6,12], index: 9, kind: input, shape index: {}]
  %s10 = inlined_call_operand.hbm [shape: f32[1,12], index: 10, kind: input, shape index: {}]
  %s11 = inlined_call_operand.vmem [shape: f32[2,120,12], index: 11, kind: output, shape index: {}]
  %s12 = sld [smem:[#allocation0]]
  $region86: #{vae_forward.5} parent=0
    _
  %s14 = ssub.s32 1, %s12
  %s15 = scalar_select 0, %s14, %s12
  $region1: #{vae_forward.5} parent=0
    #allocation2 [shape = 'u8[512]{0}', space=vmem, size = 0x400, scoped, tag = 'input window, operand 2, single buffered']
    #allocation3 [shape = 's32[1]{0}', space=sflag, size = 0x4, scoped, tag = 'scoped memory for vae_forward.5']
    #allocation4 [shape = 'u8[512]{0}', space=vmem, size = 0x400, scoped, tag = 'input window, operand 3, single buffered']
    #allocation5 [shape = 's32[1]{0}', space=sflag, size = 0x4, scoped, tag = 'scoped memory for vae_forward.5']
    #allocation6 [shape = 'u8[512]{0}', space=vmem, size = 0x400, scoped, tag = 'input window, operand 4, single buffered']
    #allocation7 [shape = 'u8[512]{0}', space=vmem, size = 0x400, scoped, tag = 'input window, operand 6, single buffered']
    #allocation8 [shape = 's32[1]{0}', space=sflag, size = 0x4, scoped, tag = 'scoped memory for vae_forward.5']
    #allocation9 [shape = 'u8[512]{0}', space=vmem, size = 0x400, scoped, tag = 'input window, operand 7, single buffered']
    #allocation10 [shape = 'u8[512]{0}', space=vmem, size = 0x400, scoped, tag = 'input window, operand 8, single buffered']
    #allocation11 [shape = 's32[1]{0}', space=sflag, size = 0x4, scoped, tag = 'scoped memory for vae_forward.5']
    #allocation12 [shape = 'u8[4096]{0}', space=vmem, size = 0x1000, scoped, tag = 'input window, operand 9, single buffered']
    #allocation13 [shape = 'u8[512]{0}', space=vmem, size = 0x400, scoped, tag = 'input window, operand 10, single buffered']
    #allocation14 [shape = 's32[1]{0}', space=sflag, size = 0x4, scoped, tag = 'scoped memory for vae_forward.5']
    %16 = vsyncpa [#allocation3], 0
    %17 = vsyncpa [#allocation5], 0
    %18 = vsyncpa [#allocation8], 0
    %19 = vsyncpa [#allocation11], 0
    %20 = vsyncpa [#allocation14], 0
    // Predicated region
    $region2: #{vae_forward.5} parent=1 // pred_check
      _
    $region3: #{vae_forward.5} parent=1 // pred_check_branch
      %22 = sbr.rel (0) target = $region5
    $region4: #{vae_forward.5} parent=1 // pred_region
      _
    $region5: #{vae_forward.5} parent=1 // pred_fallthru
      _
    // Predicated region
    $region6: #{vae_forward.5} parent=1 // pred_check
      _
    $region7: #{vae_forward.5} parent=1 // pred_check_branch
      %24 = sbr.rel (0) target = $region9
    $region8: #{vae_forward.5} parent=1 // pred_region
      _
    $region9: #{vae_forward.5} parent=1 // pred_fallthru
      _
    // Predicated region
    $region10: #{vae_forward.5} parent=1 // pred_check
      _
    $region11: #{vae_forward.5} parent=1 // pred_check_branch
      %26 = sbr.rel (0) target = $region13
    $region12: #{vae_forward.5} parent=1 // pred_region
      %28 = vsyncadd [#allocation3], 0
      %s30 = sshll.u32 %s2, 4
      %s31 = int_to_ptr.hbm [resolvable:$true] %s30
      %s32 = sshll.u32 [#allocation2], 4
      %s33 = int_to_ptr.vmem [resolvable:$true] %s32
      %35 = dma.hbm_to_vmem [thread:$0]  %s31, 16, %s33, [#allocation3]
    $region13: #{vae_forward.5} parent=1 // pred_fallthru
      _
    // Predicated region
    $region14: #{vae_forward.5} parent=1 // pred_check
      _
    $region15: #{vae_forward.5} parent=1 // pred_check_branch
      %37 = sbr.rel (0) target = $region17
    $region16: #{vae_forward.5} parent=1 // pred_region
      %39 = vsyncadd [#allocation5], 0
      %s41 = sshll.u32 %s3, 4
      %s42 = int_to_ptr.hbm [resolvable:$true] %s41
      %s43 = sshll.u32 [#allocation4], 4
      %s44 = int_to_ptr.vmem [resolvable:$true] %s43
      %46 = dma.hbm_to_vmem [thread:$0]  %s42, 16, %s44, [#allocation5]
    $region17: #{vae_forward.5} parent=1 // pred_fallthru
      _
    // Predicated region
    $region18: #{vae_forward.5} parent=1 // pred_check
      _
    $region19: #{vae_forward.5} parent=1 // pred_check_branch
      %48 = sbr.rel (0) target = $region21
    $region20: #{vae_forward.5} parent=1 // pred_region
      %50 = vsyncadd [#allocation5], 0
      %s52 = sshll.u32 %s4, 4
      %s53 = int_to_ptr.hbm [resolvable:$true] %s52
      %s54 = sshll.u32 [#allocation6], 4
      %s55 = int_to_ptr.vmem [resolvable:$true] %s54
      %57 = dma.hbm_to_vmem [thread:$0]  %s53, 16, %s55, [#allocation5]
    $region21: #{vae_forward.5} parent=1 // pred_fallthru
      _
    // Predicated region
    $region22: #{vae_forward.5} parent=1 // pred_check
      _
    $region23: #{vae_forward.5} parent=1 // pred_check_branch
      %59 = sbr.rel (0) target = $region25
    $region24: #{vae_forward.5} parent=1 // pred_region
      _
    $region25: #{vae_forward.5} parent=1 // pred_fallthru
      _
    // Predicated region
    $region26: #{vae_forward.5} parent=1 // pred_check
      _
    $region27: #{vae_forward.5} parent=1 // pred_check_branch
      %61 = sbr.rel (0) target = $region29
    $region28: #{vae_forward.5} parent=1 // pred_region
      %63 = vsyncadd [#allocation8], 0
      %s65 = sshll.u32 %s6, 4
      %s66 = int_to_ptr.hbm [resolvable:$true] %s65
      %s67 = sshll.u32 [#allocation7], 4
      %s68 = int_to_ptr.vmem [resolvable:$true] %s67
      %70 = dma.hbm_to_vmem [thread:$0]  %s66, 16, %s68, [#allocation8]
    $region29: #{vae_forward.5} parent=1 // pred_fallthru
      _
    // Predicated region
    $region30: #{vae_forward.5} parent=1 // pred_check
      _
    $region31: #{vae_forward.5} parent=1 // pred_check_branch
      %72 = sbr.rel (0) target = $region33
    $region32: #{vae_forward.5} parent=1 // pred_region
      %74 = vsyncadd [#allocation8], 0
      %s76 = sshll.u32 %s7, 4
      %s77 = int_to_ptr.hbm [resolvable:$true] %s76
      %s78 = sshll.u32 [#allocation9], 4
      %s79 = int_to_ptr.vmem [resolvable:$true] %s78
      %81 = dma.hbm_to_vmem [thread:$0]  %s77, 16, %s79, [#allocation8]
    $region33: #{vae_forward.5} parent=1 // pred_fallthru
      _
    // Predicated region
    $region34: #{vae_forward.5} parent=1 // pred_check
      _
    $region35: #{vae_forward.5} parent=1 // pred_check_branch
      %83 = sbr.rel (0) target = $region37
    $region36: #{vae_forward.5} parent=1 // pred_region
      %85 = vsyncadd [#allocation11], 0
      %s87 = sshll.u32 %s8, 4
      %s88 = int_to_ptr.hbm [resolvable:$true] %s87
      %s89 = sshll.u32 [#allocation10], 4
      %s90 = int_to_ptr.vmem [resolvable:$true] %s89
      %92 = dma.hbm_to_vmem [thread:$0]  %s88, 16, %s90, [#allocation11]
    $region37: #{vae_forward.5} parent=1 // pred_fallthru
      _
    // Predicated region
    $region38: #{vae_forward.5} parent=1 // pred_check
      _
    $region39: #{vae_forward.5} parent=1 // pred_check_branch
      %94 = sbr.rel (0) target = $region41
    $region40: #{vae_forward.5} parent=1 // pred_region
      %96 = vsyncadd [#allocation11], 0
      %s98 = sshll.u32 %s9, 4
      %s99 = int_to_ptr.hbm [resolvable:$true] %s98
      %s100 = sshll.u32 [#allocation12], 4
      %s101 = int_to_ptr.vmem [resolvable:$true] %s100
      %103 = dma.hbm_to_vmem [thread:$0]  %s99, 128, %s101, [#allocation11]
    $region41: #{vae_forward.5} parent=1 // pred_fallthru
      _
    // Predicated region
    $region42: #{vae_forward.5} parent=1 // pred_check
      _
    $region43: #{vae_forward.5} parent=1 // pred_check_branch
      %105 = sbr.rel (0) target = $region45
    $region44: #{vae_forward.5} parent=1 // pred_region
      %107 = vsyncadd [#allocation14], 0
      %s109 = sshll.u32 %s10, 4
      %s110 = int_to_ptr.hbm [resolvable:$true] %s109
      %s111 = sshll.u32 [#allocation13], 4
      %s112 = int_to_ptr.vmem [resolvable:$true] %s111
      %114 = dma.hbm_to_vmem [thread:$0]  %s110, 16, %s112, [#allocation14]
    $region45: #{vae_forward.5} parent=1 // pred_fallthru
      _
    // Predicated region
    $region46: #{vae_forward.5} parent=1 // pred_check
      _
    $region47: #{vae_forward.5} parent=1 // pred_check_branch
      %116 = sbr.rel (0) target = $region49
    $region48: #{vae_forward.5} parent=1 // pred_region
      %118 = dma.done [#allocation3], 16
    $region49: #{vae_forward.5} parent=1 // pred_fallthru
      _
    // Predicated region
    $region50: #{vae_forward.5} parent=1 // pred_check
      _
    $region51: #{vae_forward.5} parent=1 // pred_check_branch
      %120 = sbr.rel (0) target = $region53
    $region52: #{vae_forward.5} parent=1 // pred_region
      %122 = dma.done [#allocation5], 16
    $region53: #{vae_forward.5} parent=1 // pred_fallthru
      _
    // Predicated region
    $region54: #{vae_forward.5} parent=1 // pred_check
      _
    $region55: #{vae_forward.5} parent=1 // pred_check_branch
      %124 = sbr.rel (0) target = $region57
    $region56: #{vae_forward.5} parent=1 // pred_region
      %126 = dma.done [#allocation5], 16
    $region57: #{vae_forward.5} parent=1 // pred_fallthru
      _
    // Predicated region
    $region58: #{vae_forward.5} parent=1 // pred_check
      _
    $region59: #{vae_forward.5} parent=1 // pred_check_branch
      %128 = sbr.rel (0) target = $region61
    $region60: #{vae_forward.5} parent=1 // pred_region
      %130 = dma.done [#allocation8], 16
    $region61: #{vae_forward.5} parent=1 // pred_fallthru
      _
    // Predicated region
    $region62: #{vae_forward.5} parent=1 // pred_check
      _
    $region63: #{vae_forward.5} parent=1 // pred_check_branch
      %132 = sbr.rel (0) target = $region65
    $region64: #{vae_forward.5} parent=1 // pred_region
      %134 = dma.done [#allocation8], 16
    $region65: #{vae_forward.5} parent=1 // pred_fallthru
      _
    // Predicated region
    $region66: #{vae_forward.5} parent=1 // pred_check
      _
    $region67: #{vae_forward.5} parent=1 // pred_check_branch
      %136 = sbr.rel (0) target = $region69
    $region68: #{vae_forward.5} parent=1 // pred_region
      %138 = dma.done [#allocation11], 16
    $region69: #{vae_forward.5} parent=1 // pred_fallthru
      _
    // Predicated region
    $region70: #{vae_forward.5} parent=1 // pred_check
      _
    $region71: #{vae_forward.5} parent=1 // pred_check_branch
      %140 = sbr.rel (0) target = $region73
    $region72: #{vae_forward.5} parent=1 // pred_region
      %142 = dma.done [#allocation11], 128
    $region73: #{vae_forward.5} parent=1 // pred_fallthru
      _
    // Predicated region
    $region74: #{vae_forward.5} parent=1 // pred_check
      _
    $region75: #{vae_forward.5} parent=1 // pred_check_branch
      %144 = sbr.rel (0) target = $region77
    $region76: #{vae_forward.5} parent=1 // pred_region
      %146 = dma.done [#allocation14], 16
    $region77: #{vae_forward.5} parent=1 // pred_fallthru
      _
    %v147 = vld [vmem:[%s0] sm:$0xff]
    %v148 = vld [vmem:[%s0 + $0x8] sm:$0xff]
    %v149 = vld [vmem:[%s0 + $0x10] sm:$0xff]
    %v150 = vld [vmem:[%s0 + $0x18] sm:$0xff]
    %v151 = vld [vmem:[%s0 + $0x20] sm:$0xff]
    %v152 = vld [vmem:[%s0 + $0x28] sm:$0xff]
    %v153 = vld [vmem:[%s0 + $0x30] sm:$0xff]
    %v154 = vld [vmem:[%s0 + $0x38] sm:$0xff]
    %v155 = vld [vmem:[%s0 + $0x40] sm:$0xff]
    %v156 = vld [vmem:[%s0 + $0x48] sm:$0xff]
    %v157 = vld [vmem:[%s0 + $0x50] sm:$0xff]
    %v158 = vld [vmem:[%s0 + $0x58] sm:$0xff]
    %v159 = vld [vmem:[%s0 + $0x60] sm:$0xff]
    %v160 = vld [vmem:[%s0 + $0x68] sm:$0xff]
    %v161 = vld [vmem:[%s0 + $0x70] sm:$0xff]
    %v162 = vld [vmem:[%s0 + $0x78] sm:$0xff]
    %s163 = scalar_lea.vmem %s0, 128
    %v164 = vld [vmem:[%s163] sm:$0xff]
    %v165 = vld [vmem:[%s163 + $0x8] sm:$0xff]
    %v166 = vld [vmem:[%s163 + $0x10] sm:$0xff]
    %v167 = vld [vmem:[%s163 + $0x18] sm:$0xff]
    %v168 = vld [vmem:[%s163 + $0x20] sm:$0xff]
    %v169 = vld [vmem:[%s163 + $0x28] sm:$0xff]
    %v170 = vld [vmem:[%s163 + $0x30] sm:$0xff]
    %v171 = vld [vmem:[%s163 + $0x38] sm:$0xff]
    %v172 = vld [vmem:[%s163 + $0x40] sm:$0xff]
    %v173 = vld [vmem:[%s163 + $0x48] sm:$0xff]
    %v174 = vld [vmem:[%s163 + $0x50] sm:$0xff]
    %v175 = vld [vmem:[%s163 + $0x58] sm:$0xff]
    %v176 = vld [vmem:[%s163 + $0x60] sm:$0xff]
    %v177 = vld [vmem:[%s163 + $0x68] sm:$0xff]
    %v178 = vld [vmem:[%s163 + $0x70] sm:$0xff]
    %v179 = vld [vmem:[%s163 + $0x78] sm:$0xff]
    %v180 = vld [vmem:[%s1] sm:$0xff]
    %v181 = vld [vmem:[%s1 + $0x8] sm:$0xff]
    %v182 = vld [vmem:[%s1 + $0x10] sm:$0xff]
    %v183 = vld [vmem:[%s1 + $0x18] sm:$0x3f]
    %v184 = vld [vmem:[#allocation2] sm:$0x1]
    %v185 = vld [vmem:[#allocation4] sm:$0x1]
    %v186 = vld [vmem:[#allocation6] sm:$0x1]
    %vm203 = vcmask 1046528
    %v204 = vrot.slane %v147, 1
    %v205 = vrot.slane %v148, 1
    %v206 = vsel %vm203, %v204, %v205
    %v207 = vrot.slane %v149, 1
    %v208 = vsel %vm203, %v205, %v207
    %v209 = vrot.slane %v150, 1
    %v210 = vsel %vm203, %v207, %v209
    %v211 = vrot.slane %v151, 1
    %v212 = vsel %vm203, %v209, %v211
    %v213 = vrot.slane %v152, 1
    %v214 = vsel %vm203, %v211, %v213
    %v215 = vrot.slane %v153, 1
    %v216 = vsel %vm203, %v213, %v215
    %v217 = vrot.slane %v154, 1
    %v218 = vsel %vm203, %v215, %v217
    %v219 = vrot.slane %v155, 1
    %v220 = vsel %vm203, %v217, %v219
    %v221 = vrot.slane %v156, 1
    %v222 = vsel %vm203, %v219, %v221
    %v223 = vrot.slane %v157, 1
    %v224 = vsel %vm203, %v221, %v223
    %v225 = vrot.slane %v158, 1
    %v226 = vsel %vm203, %v223, %v225
    %v227 = vrot.slane %v159, 1
    %v228 = vsel %vm203, %v225, %v227
    %v229 = vrot.slane %v160, 1
    %v230 = vsel %vm203, %v227, %v229
    %v231 = vrot.slane %v161, 1
    %v232 = vsel %vm203, %v229, %v231
    %v233 = vrot.slane %v162, 1
    %v234 = vsel %vm203, %v231, %v233
    %235 = vrot.lane.b32.xlu0 %v206, 6
    %v236 = vpop.permute.xlu0 %235
    %237 = vrot.lane.b32.xlu0 %v208, 6
    %v238 = vpop.permute.xlu0 %237
    %239 = vrot.lane.b32.xlu0 %v210, 6
    %v240 = vpop.permute.xlu0 %239
    %241 = vrot.lane.b32.xlu0 %v212, 6
    %v242 = vpop.permute.xlu0 %241
    %243 = vrot.lane.b32.xlu0 %v214, 6
    %v244 = vpop.permute.xlu0 %243
    %245 = vrot.lane.b32.xlu0 %v216, 6
    %v246 = vpop.permute.xlu0 %245
    %247 = vrot.lane.b32.xlu0 %v218, 6
    %v248 = vpop.permute.xlu0 %247
    %249 = vrot.lane.b32.xlu0 %v220, 6
    %v250 = vpop.permute.xlu0 %249
    %251 = vrot.lane.b32.xlu0 %v222, 6
    %v252 = vpop.permute.xlu0 %251
    %253 = vrot.lane.b32.xlu0 %v224, 6
    %v254 = vpop.permute.xlu0 %253
    %255 = vrot.lane.b32.xlu0 %v226, 6
    %v256 = vpop.permute.xlu0 %255
    %257 = vrot.lane.b32.xlu0 %v228, 6
    %v258 = vpop.permute.xlu0 %257
    %259 = vrot.lane.b32.xlu0 %v230, 6
    %v260 = vpop.permute.xlu0 %259
    %261 = vrot.lane.b32.xlu0 %v232, 6
    %v262 = vpop.permute.xlu0 %261
    %263 = vrot.lane.b32.xlu0 %v234, 6
    %v264 = vpop.permute.xlu0 %263
    %265 = vrot.lane.b32.xlu0 %v233, 6
    %v266 = vpop.permute.xlu0 %265
    %vm283 = vcmask 1045504
    %v284 = vrot.slane %v147, 2
    %v285 = vrot.slane %v148, 2
    %v286 = vsel %vm283, %v284, %v285
    %v287 = vrot.slane %v149, 2
    %v288 = vsel %vm283, %v285, %v287
    %v289 = vrot.slane %v150, 2
    %v290 = vsel %vm283, %v287, %v289
    %v291 = vrot.slane %v151, 2
    %v292 = vsel %vm283, %v289, %v291
    %v293 = vrot.slane %v152, 2
    %v294 = vsel %vm283, %v291, %v293
    %v295 = vrot.slane %v153, 2
    %v296 = vsel %vm283, %v293, %v295
    %v297 = vrot.slane %v154, 2
    %v298 = vsel %vm283, %v295, %v297
    %v299 = vrot.slane %v155, 2
    %v300 = vsel %vm283, %v297, %v299
    %v301 = vrot.slane %v156, 2
    %v302 = vsel %vm283, %v299, %v301
    %v303 = vrot.slane %v157, 2
    %v304 = vsel %vm283, %v301, %v303
    %v305 = vrot.slane %v158, 2
    %v306 = vsel %vm283, %v303, %v305
    %v307 = vrot.slane %v159, 2
    %v308 = vsel %vm283, %v305, %v307
    %v309 = vrot.slane %v160, 2
    %v310 = vsel %vm283, %v307, %v309
    %v311 = vrot.slane %v161, 2
    %v312 = vsel %vm283, %v309, %v311
    %v313 = vrot.slane %v162, 2
    %v314 = vsel %vm283, %v311, %v313
    %315 = vrot.lane.b32.xlu0 %v286, 12
    %v316 = vpop.permute.xlu0 %315
    %317 = vrot.lane.b32.xlu0 %v288, 12
    %v318 = vpop.permute.xlu0 %317
    %319 = vrot.lane.b32.xlu0 %v290, 12
    %v320 = vpop.permute.xlu0 %319
    %321 = vrot.lane.b32.xlu0 %v292, 12
    %v322 = vpop.permute.xlu0 %321
    %323 = vrot.lane.b32.xlu0 %v294, 12
    %v324 = vpop.permute.xlu0 %323
    %325 = vrot.lane.b32.xlu0 %v296, 12
    %v326 = vpop.permute.xlu0 %325
    %327 = vrot.lane.b32.xlu0 %v298, 12
    %v328 = vpop.permute.xlu0 %327
    %329 = vrot.lane.b32.xlu0 %v300, 12
    %v330 = vpop.permute.xlu0 %329
    %331 = vrot.lane.b32.xlu0 %v302, 12
    %v332 = vpop.permute.xlu0 %331
    %333 = vrot.lane.b32.xlu0 %v304, 12
    %v334 = vpop.permute.xlu0 %333
    %335 = vrot.lane.b32.xlu0 %v306, 12
    %v336 = vpop.permute.xlu0 %335
    %337 = vrot.lane.b32.xlu0 %v308, 12
    %v338 = vpop.permute.xlu0 %337
    %339 = vrot.lane.b32.xlu0 %v310, 12
    %v340 = vpop.permute.xlu0 %339
    %341 = vrot.lane.b32.xlu0 %v312, 12
    %v342 = vpop.permute.xlu0 %341
    %343 = vrot.lane.b32.xlu0 %v314, 12
    %v344 = vpop.permute.xlu0 %343
    %345 = vrot.lane.b32.xlu0 %v313, 12
    %v346 = vpop.permute.xlu0 %345
    %vm363 = vcmask 1044480
    %v364 = vrot.slane %v147, 3
    %v365 = vrot.slane %v148, 3
    %v366 = vsel %vm363, %v364, %v365
    %v367 = vrot.slane %v149, 3
    %v368 = vsel %vm363, %v365, %v367
    %v369 = vrot.slane %v150, 3
    %v370 = vsel %vm363, %v367, %v369
    %v371 = vrot.slane %v151, 3
    %v372 = vsel %vm363, %v369, %v371
    %v373 = vrot.slane %v152, 3
    %v374 = vsel %vm363, %v371, %v373
    %v375 = vrot.slane %v153, 3
    %v376 = vsel %vm363, %v373, %v375
    %v377 = vrot.slane %v154, 3
    %v378 = vsel %vm363, %v375, %v377
    %v379 = vrot.slane %v155, 3
    %v380 = vsel %vm363, %v377, %v379
    %v381 = vrot.slane %v156, 3
    %v382 = vsel %vm363, %v379, %v381
    %v383 = vrot.slane %v157, 3
    %v384 = vsel %vm363, %v381, %v383
    %v385 = vrot.slane %v158, 3
    %v386 = vsel %vm363, %v383, %v385
    %v387 = vrot.slane %v159, 3
    %v388 = vsel %vm363, %v385, %v387
    %v389 = vrot.slane %v160, 3
    %v390 = vsel %vm363, %v387, %v389
    %v391 = vrot.slane %v161, 3
    %v392 = vsel %vm363, %v389, %v391
    %v393 = vrot.slane %v162, 3
    %v394 = vsel %vm363, %v391, %v393
    %395 = vrot.lane.b32.xlu0 %v366, 18
    %v396 = vpop.permute.xlu0 %395
    %397 = vrot.lane.b32.xlu0 %v368, 18
    %v398 = vpop.permute.xlu0 %397
    %399 = vrot.lane.b32.xlu0 %v370, 18
    %v400 = vpop.permute.xlu0 %399
    %401 = vrot.lane.b32.xlu0 %v372, 18
    %v402 = vpop.permute.xlu0 %401
    %403 = vrot.lane.b32.xlu0 %v374, 18
    %v404 = vpop.permute.xlu0 %403
    %405 = vrot.lane.b32.xlu0 %v376, 18
    %v406 = vpop.permute.xlu0 %405
    %407 = vrot.lane.b32.xlu0 %v378, 18
    %v408 = vpop.permute.xlu0 %407
    %409 = vrot.lane.b32.xlu0 %v380, 18
    %v410 = vpop.permute.xlu0 %409
    %411 = vrot.lane.b32.xlu0 %v382, 18
    %v412 = vpop.permute.xlu0 %411
    %413 = vrot.lane.b32.xlu0 %v384, 18
    %v414 = vpop.permute.xlu0 %413
    %415 = vrot.lane.b32.xlu0 %v386, 18
    %v416 = vpop.permute.xlu0 %415
    %417 = vrot.lane.b32.xlu0 %v388, 18
    %v418 = vpop.permute.xlu0 %417
    %419 = vrot.lane.b32.xlu0 %v390, 18
    %v420 = vpop.permute.xlu0 %419
    %421 = vrot.lane.b32.xlu0 %v392, 18
    %v422 = vpop.permute.xlu0 %421
    %423 = vrot.lane.b32.xlu0 %v394, 18
    %v424 = vpop.permute.xlu0 %423
    %425 = vrot.lane.b32.xlu0 %v393, 18
    %v426 = vpop.permute.xlu0 %425
    %vm443 = vcmask 1043456
    %v444 = vrot.slane %v147, 4
    %v445 = vrot.slane %v148, 4
    %v446 = vsel %vm443, %v444, %v445
    %v447 = vrot.slane %v149, 4
    %v448 = vsel %vm443, %v445, %v447
    %v449 = vrot.slane %v150, 4
    %v450 = vsel %vm443, %v447, %v449
    %v451 = vrot.slane %v151, 4
    %v452 = vsel %vm443, %v449, %v451
    %v453 = vrot.slane %v152, 4
    %v454 = vsel %vm443, %v451, %v453
    %v455 = vrot.slane %v153, 4
    %v456 = vsel %vm443, %v453, %v455
    %v457 = vrot.slane %v154, 4
    %v458 = vsel %vm443, %v455, %v457
    %v459 = vrot.slane %v155, 4
    %v460 = vsel %vm443, %v457, %v459
    %v461 = vrot.slane %v156, 4
    %v462 = vsel %vm443, %v459, %v461
    %v463 = vrot.slane %v157, 4
    %v464 = vsel %vm443, %v461, %v463
    %v465 = vrot.slane %v158, 4
    %v466 = vsel %vm443, %v463, %v465
    %v467 = vrot.slane %v159, 4
    %v468 = vsel %vm443, %v465, %v467
    %v469 = vrot.slane %v160, 4
    %v470 = vsel %vm443, %v467, %v469
    %v471 = vrot.slane %v161, 4
    %v472 = vsel %vm443, %v469, %v471
    %v473 = vrot.slane %v162, 4
    %v474 = vsel %vm443, %v471, %v473
    %475 = vrot.lane.b32.xlu0 %v446, 24
    %v476 = vpop.permute.xlu0 %475
    %477 = vrot.lane.b32.xlu0 %v448, 24
    %v478 = vpop.permute.xlu0 %477
    %479 = vrot.lane.b32.xlu0 %v450, 24
    %v480 = vpop.permute.xlu0 %479
    %481 = vrot.lane.b32.xlu0 %v452, 24
    %v482 = vpop.permute.xlu0 %481
    %483 = vrot.lane.b32.xlu0 %v454, 24
    %v484 = vpop.permute.xlu0 %483
    %485 = vrot.lane.b32.xlu0 %v456, 24
    %v486 = vpop.permute.xlu0 %485
    %487 = vrot.lane.b32.xlu0 %v458, 24
    %v488 = vpop.permute.xlu0 %487
    %489 = vrot.lane.b32.xlu0 %v460, 24
    %v490 = vpop.permute.xlu0 %489
    %491 = vrot.lane.b32.xlu0 %v462, 24
    %v492 = vpop.permute.xlu0 %491
    %493 = vrot.lane.b32.xlu0 %v464, 24
    %v494 = vpop.permute.xlu0 %493
    %495 = vrot.lane.b32.xlu0 %v466, 24
    %v496 = vpop.permute.xlu0 %495
    %497 = vrot.lane.b32.xlu0 %v468, 24
    %v498 = vpop.permute.xlu0 %497
    %499 = vrot.lane.b32.xlu0 %v470, 24
    %v500 = vpop.permute.xlu0 %499
    %501 = vrot.lane.b32.xlu0 %v472, 24
    %v502 = vpop.permute.xlu0 %501
    %503 = vrot.lane.b32.xlu0 %v474, 24
    %v504 = vpop.permute.xlu0 %503
    %505 = vrot.lane.b32.xlu0 %v473, 24
    %v506 = vpop.permute.xlu0 %505
    %vm523 = vcmask 48128
    %v524 = vsel %vm523, %v147, %v236
    %v525 = vsel %vm523, %v148, %v238
    %v526 = vsel %vm523, %v149, %v240
    %v527 = vsel %vm523, %v150, %v242
    %v528 = vsel %vm523, %v151, %v244
    %v529 = vsel %vm523, %v152, %v246
    %v530 = vsel %vm523, %v153, %v248
    %v531 = vsel %vm523, %v154, %v250
    %v532 = vsel %vm523, %v155, %v252
    %v533 = vsel %vm523, %v156, %v254
    %v534 = vsel %vm523, %v157, %v256
    %v535 = vsel %vm523, %v158, %v258
    %v536 = vsel %vm523, %v159, %v260
    %v537 = vsel %vm523, %v160, %v262
    %v538 = vsel %vm523, %v161, %v264
    %v539 = vsel %vm523, %v162, %v266
    %vm540 = vcmask 97280
    %v541 = vsel %vm540, %v524, %v316
    %v542 = vsel %vm540, %v525, %v318
    %v543 = vsel %vm540, %v526, %v320
    %v544 = vsel %vm540, %v527, %v322
    %v545 = vsel %vm540, %v528, %v324
    %v546 = vsel %vm540, %v529, %v326
    %v547 = vsel %vm540, %v530, %v328
    %v548 = vsel %vm540, %v531, %v330
    %v549 = vsel %vm540, %v532, %v332
    %v550 = vsel %vm540, %v533, %v334
    %v551 = vsel %vm540, %v534, %v336
    %v552 = vsel %vm540, %v535, %v338
    %v553 = vsel %vm540, %v536, %v340
    %v554 = vsel %vm540, %v537, %v342
    %v555 = vsel %vm540, %v538, %v344
    %v556 = vsel %vm540, %v539, %v346
    %vm557 = vcmask 146432
    %v558 = vsel %vm557, %v541, %v396
    %v559 = vsel %vm557, %v542, %v398
    %v560 = vsel %vm557, %v543, %v400
    %v561 = vsel %vm557, %v544, %v402
    %v562 = vsel %vm557, %v545, %v404
    %v563 = vsel %vm557, %v546, %v406
    %v564 = vsel %vm557, %v547, %v408
    %v565 = vsel %vm557, %v548, %v410
    %v566 = vsel %vm557, %v549, %v412
    %v567 = vsel %vm557, %v550, %v414
    %v568 = vsel %vm557, %v551, %v416
    %v569 = vsel %vm557, %v552, %v418
    %v570 = vsel %vm557, %v553, %v420
    %v571 = vsel %vm557, %v554, %v422
    %v572 = vsel %vm557, %v555, %v424
    %v573 = vsel %vm557, %v556, %v426
    %vm574 = vcmask 195584
    %v575 = vsel %vm574, %v558, %v476
    %v576 = vsel %vm574, %v559, %v478
    %v577 = vsel %vm574, %v560, %v480
    %v578 = vsel %vm574, %v561, %v482
    %v579 = vsel %vm574, %v562, %v484
    %v580 = vsel %vm574, %v563, %v486
    %v581 = vsel %vm574, %v564, %v488
    %v582 = vsel %vm574, %v565, %v490
    %v583 = vsel %vm574, %v566, %v492
    %v584 = vsel %vm574, %v567, %v494
    %v585 = vsel %vm574, %v568, %v496
    %v586 = vsel %vm574, %v569, %v498
    %v587 = vsel %vm574, %v570, %v500
    %v588 = vsel %vm574, %v571, %v502
    %v589 = vsel %vm574, %v572, %v504
    %v590 = vsel %vm574, %v573, %v506
    %v592 = vperm.slane %v184, 0
    %vm594 = vcmask 244736
    %v596 = vsel %vm594, %v575, 0
    %v599 = vsel %vm594, %v576, 0
    %v602 = vsel %vm594, %v577, 0
    %v605 = vsel %vm594, %v578, 0
    %v608 = vsel %vm594, %v579, 0
    %v611 = vsel %vm594, %v580, 0
    %v614 = vsel %vm594, %v581, 0
    %v617 = vsel %vm594, %v582, 0
    %v620 = vsel %vm594, %v583, 0
    %v623 = vsel %vm594, %v584, 0
    %v626 = vsel %vm594, %v585, 0
    %v629 = vsel %vm594, %v586, 0
    %v632 = vsel %vm594, %v587, 0
    %v635 = vsel %vm594, %v588, 0
    %v638 = vsel %vm594, %v589, 0
    %v641 = vsel %vm594, %v590, 0
    %v644 = vsel %vm283, %v183, 0
    %646 = vmatpush.msra.mxu0 0.0
    %647 = vmatpush.msra.mxu0 0.0
    %648 = vmatpush.msra.mxu0 0.0
    %649 = vmatpush.msra.mxu0 0.0
    %650 = vmatpush.msra.mxu0 0.0
    %651 = vmatpush.msra.mxu0 0.0
    %652 = vmatpush.msra.mxu0 0.0
    %653 = vmatpush.msra.mxu0 0.0
    %654 = vmatpush.msra.mxu0 0.0
    %655 = vmatpush.msra.mxu0 0.0
    %656 = vmatpush.msra.mxu0 0.0
    %657 = vmatpush.msra.mxu0 0.0
    %658 = vmatpush.msra.mxu0 %v644
    %659 = vmatpush.msra.mxu0 %v182
    %660 = vmatpush.msra.mxu0 %v181
    %661 = vmatpush.msra.mxu0 %v180
    %662 = vmatmul.f32.gmra.mxu0 %v596
    %v663 = vpop.f32.mrf.mxu0
    %v664 = vadd.f32 %v592, %v663
    %665 = vmatmul.f32.gmra.mxu0 %v599
    %v666 = vpop.f32.mrf.mxu0
    %v667 = vadd.f32 %v592, %v666
    %668 = vmatmul.f32.gmra.mxu0 %v602
    %v669 = vpop.f32.mrf.mxu0
    %v670 = vadd.f32 %v592, %v669
    %671 = vmatmul.f32.gmra.mxu0 %v605
    %v672 = vpop.f32.mrf.mxu0
    %v673 = vadd.f32 %v592, %v672
    %674 = vmatmul.f32.gmra.mxu0 %v608
    %v675 = vpop.f32.mrf.mxu0
    %v676 = vadd.f32 %v592, %v675
    %677 = vmatmul.f32.gmra.mxu0 %v611
    %v678 = vpop.f32.mrf.mxu0
    %v679 = vadd.f32 %v592, %v678
    %680 = vmatmul.f32.gmra.mxu0 %v614
    %v681 = vpop.f32.mrf.mxu0
    %v682 = vadd.f32 %v592, %v681
    %683 = vmatmul.f32.gmra.mxu0 %v617
    %v684 = vpop.f32.mrf.mxu0
    %v685 = vadd.f32 %v592, %v684
    %686 = vmatmul.f32.gmra.mxu0 %v620
    %v687 = vpop.f32.mrf.mxu0
    %v688 = vadd.f32 %v592, %v687
    %689 = vmatmul.f32.gmra.mxu0 %v623
    %v690 = vpop.f32.mrf.mxu0
    %v691 = vadd.f32 %v592, %v690
    %692 = vmatmul.f32.gmra.mxu0 %v626
    %v693 = vpop.f32.mrf.mxu0
    %v694 = vadd.f32 %v592, %v693
    %695 = vmatmul.f32.gmra.mxu0 %v629
    %v696 = vpop.f32.mrf.mxu0
    %v697 = vadd.f32 %v592, %v696
    %698 = vmatmul.f32.gmra.mxu0 %v632
    %v699 = vpop.f32.mrf.mxu0
    %v700 = vadd.f32 %v592, %v699
    %701 = vmatmul.f32.gmra.mxu0 %v635
    %v702 = vpop.f32.mrf.mxu0
    %v703 = vadd.f32 %v592, %v702
    %704 = vmatmul.f32.gmra.mxu0 %v638
    %v705 = vpop.f32.mrf.mxu0
    %v706 = vadd.f32 %v592, %v705
    %707 = vmatmul.f32.gmra.mxu0 %v641
    %v708 = vpop.f32.mrf.mxu0
    %v709 = vadd.f32 %v592, %v708
    %710 = vdwg.mxu0
    %v727 = vrot.slane %v164, 1
    %v728 = vrot.slane %v165, 1
    %v729 = vsel %vm203, %v727, %v728
    %v730 = vrot.slane %v166, 1
    %v731 = vsel %vm203, %v728, %v730
    %v732 = vrot.slane %v167, 1
    %v733 = vsel %vm203, %v730, %v732
    %v734 = vrot.slane %v168, 1
    %v735 = vsel %vm203, %v732, %v734
    %v736 = vrot.slane %v169, 1
    %v737 = vsel %vm203, %v734, %v736
    %v738 = vrot.slane %v170, 1
    %v739 = vsel %vm203, %v736, %v738
    %v740 = vrot.slane %v171, 1
    %v741 = vsel %vm203, %v738, %v740
    %v742 = vrot.slane %v172, 1
    %v743 = vsel %vm203, %v740, %v742
    %v744 = vrot.slane %v173, 1
    %v745 = vsel %vm203, %v742, %v744
    %v746 = vrot.slane %v174, 1
    %v747 = vsel %vm203, %v744, %v746
    %v748 = vrot.slane %v175, 1
    %v749 = vsel %vm203, %v746, %v748
    %v750 = vrot.slane %v176, 1
    %v751 = vsel %vm203, %v748, %v750
    %v752 = vrot.slane %v177, 1
    %v753 = vsel %vm203, %v750, %v752
    %v754 = vrot.slane %v178, 1
    %v755 = vsel %vm203, %v752, %v754
    %v756 = vrot.slane %v179, 1
    %v757 = vsel %vm203, %v754, %v756
    %758 = vrot.lane.b32.xlu0 %v729, 6
    %v759 = vpop.permute.xlu0 %758
    %760 = vrot.lane.b32.xlu0 %v731, 6
    %v761 = vpop.permute.xlu0 %760
    %762 = vrot.lane.b32.xlu0 %v733, 6
    %v763 = vpop.permute.xlu0 %762
    %764 = vrot.lane.b32.xlu0 %v735, 6
    %v765 = vpop.permute.xlu0 %764
    %766 = vrot.lane.b32.xlu0 %v737, 6
    %v767 = vpop.permute.xlu0 %766
    %768 = vrot.lane.b32.xlu0 %v739, 6
    %v769 = vpop.permute.xlu0 %768
    %770 = vrot.lane.b32.xlu0 %v741, 6
    %v771 = vpop.permute.xlu0 %770
    %772 = vrot.lane.b32.xlu0 %v743, 6
    %v773 = vpop.permute.xlu0 %772
    %774 = vrot.lane.b32.xlu0 %v745, 6
    %v775 = vpop.permute.xlu0 %774
    %776 = vrot.lane.b32.xlu0 %v747, 6
    %v777 = vpop.permute.xlu0 %776
    %778 = vrot.lane.b32.xlu0 %v749, 6
    %v779 = vpop.permute.xlu0 %778
    %780 = vrot.lane.b32.xlu0 %v751, 6
    %v781 = vpop.permute.xlu0 %780
    %782 = vrot.lane.b32.xlu0 %v753, 6
    %v783 = vpop.permute.xlu0 %782
    %784 = vrot.lane.b32.xlu0 %v755, 6
    %v785 = vpop.permute.xlu0 %784
    %786 = vrot.lane.b32.xlu0 %v757, 6
    %v787 = vpop.permute.xlu0 %786
    %788 = vrot.lane.b32.xlu0 %v756, 6
    %v789 = vpop.permute.xlu0 %788
    %v806 = vrot.slane %v164, 2
    %v807 = vrot.slane %v165, 2
    %v808 = vsel %vm283, %v806, %v807
    %v809 = vrot.slane %v166, 2
    %v810 = vsel %vm283, %v807, %v809
    %v811 = vrot.slane %v167, 2
    %v812 = vsel %vm283, %v809, %v811
    %v813 = vrot.slane %v168, 2
    %v814 = vsel %vm283, %v811, %v813
    %v815 = vrot.slane %v169, 2
    %v816 = vsel %vm283, %v813, %v815
    %v817 = vrot.slane %v170, 2
    %v818 = vsel %vm283, %v815, %v817
    %v819 = vrot.slane %v171, 2
    %v820 = vsel %vm283, %v817, %v819
    %v821 = vrot.slane %v172, 2
    %v822 = vsel %vm283, %v819, %v821
    %v823 = vrot.slane %v173, 2
    %v824 = vsel %vm283, %v821, %v823
    %v825 = vrot.slane %v174, 2
    %v826 = vsel %vm283, %v823, %v825
    %v827 = vrot.slane %v175, 2
    %v828 = vsel %vm283, %v825, %v827
    %v829 = vrot.slane %v176, 2
    %v830 = vsel %vm283, %v827, %v829
    %v831 = vrot.slane %v177, 2
    %v832 = vsel %vm283, %v829, %v831
    %v833 = vrot.slane %v178, 2
    %v834 = vsel %vm283, %v831, %v833
    %v835 = vrot.slane %v179, 2
    %v836 = vsel %vm283, %v833, %v835
    %837 = vrot.lane.b32.xlu0 %v808, 12
    %v838 = vpop.permute.xlu0 %837
    %839 = vrot.lane.b32.xlu0 %v810, 12
    %v840 = vpop.permute.xlu0 %839
    %841 = vrot.lane.b32.xlu0 %v812, 12
    %v842 = vpop.permute.xlu0 %841
    %843 = vrot.lane.b32.xlu0 %v814, 12
    %v844 = vpop.permute.xlu0 %843
    %845 = vrot.lane.b32.xlu0 %v816, 12
    %v846 = vpop.permute.xlu0 %845
    %847 = vrot.lane.b32.xlu0 %v818, 12
    %v848 = vpop.permute.xlu0 %847
    %849 = vrot.lane.b32.xlu0 %v820, 12
    %v850 = vpop.permute.xlu0 %849
    %851 = vrot.lane.b32.xlu0 %v822, 12
    %v852 = vpop.permute.xlu0 %851
    %853 = vrot.lane.b32.xlu0 %v824, 12
    %v854 = vpop.permute.xlu0 %853
    %855 = vrot.lane.b32.xlu0 %v826, 12
    %v856 = vpop.permute.xlu0 %855
    %857 = vrot.lane.b32.xlu0 %v828, 12
    %v858 = vpop.permute.xlu0 %857
    %859 = vrot.lane.b32.xlu0 %v830, 12
    %v860 = vpop.permute.xlu0 %859
    %861 = vrot.lane.b32.xlu0 %v832, 12
    %v862 = vpop.permute.xlu0 %861
    %863 = vrot.lane.b32.xlu0 %v834, 12
    %v864 = vpop.permute.xlu0 %863
    %865 = vrot.lane.b32.xlu0 %v836, 12
    %v866 = vpop.permute.xlu0 %865
    %867 = vrot.lane.b32.xlu0 %v835, 12
    %v868 = vpop.permute.xlu0 %867
    %v885 = vrot.slane %v164, 3
    %v886 = vrot.slane %v165, 3
    %v887 = vsel %vm363, %v885, %v886
    %v888 = vrot.slane %v166, 3
    %v889 = vsel %vm363, %v886, %v888
    %v890 = vrot.slane %v167, 3
    %v891 = vsel %vm363, %v888, %v890
    %v892 = vrot.slane %v168, 3
    %v893 = vsel %vm363, %v890, %v892
    %v894 = vrot.slane %v169, 3
    %v895 = vsel %vm363, %v892, %v894
    %v896 = vrot.slane %v170, 3
    %v897 = vsel %vm363, %v894, %v896
    %v898 = vrot.slane %v171, 3
    %v899 = vsel %vm363, %v896, %v898
    %v900 = vrot.slane %v172, 3
    %v901 = vsel %vm363, %v898, %v900
    %v902 = vrot.slane %v173, 3
    %v903 = vsel %vm363, %v900, %v902
    %v904 = vrot.slane %v174, 3
    %v905 = vsel %vm363, %v902, %v904
    %v906 = vrot.slane %v175, 3
    %v907 = vsel %vm363, %v904, %v906
    %v908 = vrot.slane %v176, 3
    %v909 = vsel %vm363, %v906, %v908
    %v910 = vrot.slane %v177, 3
    %v911 = vsel %vm363, %v908, %v910
    %v912 = vrot.slane %v178, 3
    %v913 = vsel %vm363, %v910, %v912
    %v914 = vrot.slane %v179, 3
    %v915 = vsel %vm363, %v912, %v914
    %916 = vrot.lane.b32.xlu0 %v887, 18
    %v917 = vpop.permute.xlu0 %916
    %918 = vrot.lane.b32.xlu0 %v889, 18
    %v919 = vpop.permute.xlu0 %918
    %920 = vrot.lane.b32.xlu0 %v891, 18
    %v921 = vpop.permute.xlu0 %920
    %922 = vrot.lane.b32.xlu0 %v893, 18
    %v923 = vpop.permute.xlu0 %922
    %924 = vrot.lane.b32.xlu0 %v895, 18
    %v925 = vpop.permute.xlu0 %924
    %926 = vrot.lane.b32.xlu0 %v897, 18
    %v927 = vpop.permute.xlu0 %926
    %928 = vrot.lane.b32.xlu0 %v899, 18
    %v929 = vpop.permute.xlu0 %928
    %930 = vrot.lane.b32.xlu0 %v901, 18
    %v931 = vpop.permute.xlu0 %930
    %932 = vrot.lane.b32.xlu0 %v903, 18
    %v933 = vpop.permute.xlu0 %932
    %934 = vrot.lane.b32.xlu0 %v905, 18
    %v935 = vpop.permute.xlu0 %934
    %936 = vrot.lane.b32.xlu0 %v907, 18
    %v937 = vpop.permute.xlu0 %936
    %938 = vrot.lane.b32.xlu0 %v909, 18
    %v939 = vpop.permute.xlu0 %938
    %940 = vrot.lane.b32.xlu0 %v911, 18
    %v941 = vpop.permute.xlu0 %940
    %942 = vrot.lane.b32.xlu0 %v913, 18
    %v943 = vpop.permute.xlu0 %942
    %944 = vrot.lane.b32.xlu0 %v915, 18
    %v945 = vpop.permute.xlu0 %944
    %946 = vrot.lane.b32.xlu0 %v914, 18
    %v947 = vpop.permute.xlu0 %946
    %v964 = vrot.slane %v164, 4
    %v965 = vrot.slane %v165, 4
    %v966 = vsel %vm443, %v964, %v965
    %v967 = vrot.slane %v166, 4
    %v968 = vsel %vm443, %v965, %v967
    %v969 = vrot.slane %v167, 4
    %v970 = vsel %vm443, %v967, %v969
    %v971 = vrot.slane %v168, 4
    %v972 = vsel %vm443, %v969, %v971
    %v973 = vrot.slane %v169, 4
    %v974 = vsel %vm443, %v971, %v973
    %v975 = vrot.slane %v170, 4
    %v976 = vsel %vm443, %v973, %v975
    %v977 = vrot.slane %v171, 4
    %v978 = vsel %vm443, %v975, %v977
    %v979 = vrot.slane %v172, 4
    %v980 = vsel %vm443, %v977, %v979
    %v981 = vrot.slane %v173, 4
    %v982 = vsel %vm443, %v979, %v981
    %v983 = vrot.slane %v174, 4
    %v984 = vsel %vm443, %v981, %v983
    %v985 = vrot.slane %v175, 4
    %v986 = vsel %vm443, %v983, %v985
    %v987 = vrot.slane %v176, 4
    %v988 = vsel %vm443, %v985, %v987
    %v989 = vrot.slane %v177, 4
    %v990 = vsel %vm443, %v987, %v989
    %v991 = vrot.slane %v178, 4
    %v992 = vsel %vm443, %v989, %v991
    %v993 = vrot.slane %v179, 4
    %v994 = vsel %vm443, %v991, %v993
    %995 = vrot.lane.b32.xlu0 %v966, 24
    %v996 = vpop.permute.xlu0 %995
    %997 = vrot.lane.b32.xlu0 %v968, 24
    %v998 = vpop.permute.xlu0 %997
    %999 = vrot.lane.b32.xlu0 %v970, 24
    %v1000 = vpop.permute.xlu0 %999
    %1001 = vrot.lane.b32.xlu0 %v972, 24
    %v1002 = vpop.permute.xlu0 %1001
    %1003 = vrot.lane.b32.xlu0 %v974, 24
    %v1004 = vpop.permute.xlu0 %1003
    %1005 = vrot.lane.b32.xlu0 %v976, 24
    %v1006 = vpop.permute.xlu0 %1005
    %1007 = vrot.lane.b32.xlu0 %v978, 24
    %v1008 = vpop.permute.xlu0 %1007
    %1009 = vrot.lane.b32.xlu0 %v980, 24
    %v1010 = vpop.permute.xlu0 %1009
    %1011 = vrot.lane.b32.xlu0 %v982, 24
    %v1012 = vpop.permute.xlu0 %1011
    %1013 = vrot.lane.b32.xlu0 %v984, 24
    %v1014 = vpop.permute.xlu0 %1013
    %1015 = vrot.lane.b32.xlu0 %v986, 24
    %v1016 = vpop.permute.xlu0 %1015
    %1017 = vrot.lane.b32.xlu0 %v988, 24
    %v1018 = vpop.permute.xlu0 %1017
    %1019 = vrot.lane.b32.xlu0 %v990, 24
    %v1020 = vpop.permute.xlu0 %1019
    %1021 = vrot.lane.b32.xlu0 %v992, 24
    %v1022 = vpop.permute.xlu0 %1021
    %1023 = vrot.lane.b32.xlu0 %v994, 24
    %v1024 = vpop.permute.xlu0 %1023
    %1025 = vrot.lane.b32.xlu0 %v993, 24
    %v1026 = vpop.permute.xlu0 %1025
    %v1043 = vsel %vm523, %v164, %v759
    %v1044 = vsel %vm523, %v165, %v761
    %v1045 = vsel %vm523, %v166, %v763
    %v1046 = vsel %vm523, %v167, %v765
    %v1047 = vsel %vm523, %v168, %v767
    %v1048 = vsel %vm523, %v169, %v769
    %v1049 = vsel %vm523, %v170, %v771
    %v1050 = vsel %vm523, %v171, %v773
    %v1051 = vsel %vm523, %v172, %v775
    %v1052 = vsel %vm523, %v173, %v777
    %v1053 = vsel %vm523, %v174, %v779
    %v1054 = vsel %vm523, %v175, %v781
    %v1055 = vsel %vm523, %v176, %v783
    %v1056 = vsel %vm523, %v177, %v785
    %v1057 = vsel %vm523, %v178, %v787
    %v1058 = vsel %vm523, %v179, %v789
    %v1059 = vsel %vm540, %v1043, %v838
    %v1060 = vsel %vm540, %v1044, %v840
    %v1061 = vsel %vm540, %v1045, %v842
    %v1062 = vsel %vm540, %v1046, %v844
    %v1063 = vsel %vm540, %v1047, %v846
    %v1064 = vsel %vm540, %v1048, %v848
    %v1065 = vsel %vm540, %v1049, %v850
    %v1066 = vsel %vm540, %v1050, %v852
    %v1067 = vsel %vm540, %v1051, %v854
    %v1068 = vsel %vm540, %v1052, %v856
    %v1069 = vsel %vm540, %v1053, %v858
    %v1070 = vsel %vm540, %v1054, %v860
    %v1071 = vsel %vm540, %v1055, %v862
    %v1072 = vsel %vm540, %v1056, %v864
    %v1073 = vsel %vm540, %v1057, %v866
    %v1074 = vsel %vm540, %v1058, %v868
    %v1075 = vsel %vm557, %v1059, %v917
    %v1076 = vsel %vm557, %v1060, %v919
    %v1077 = vsel %vm557, %v1061, %v921
    %v1078 = vsel %vm557, %v1062, %v923
    %v1079 = vsel %vm557, %v1063, %v925
    %v1080 = vsel %vm557, %v1064, %v927
    %v1081 = vsel %vm557, %v1065, %v929
    %v1082 = vsel %vm557, %v1066, %v931
    %v1083 = vsel %vm557, %v1067, %v933
    %v1084 = vsel %vm557, %v1068, %v935
    %v1085 = vsel %vm557, %v1069, %v937
    %v1086 = vsel %vm557, %v1070, %v939
    %v1087 = vsel %vm557, %v1071, %v941
    %v1088 = vsel %vm557, %v1072, %v943
    %v1089 = vsel %vm557, %v1073, %v945
    %v1090 = vsel %vm557, %v1074, %v947
    %v1091 = vsel %vm574, %v1075, %v996
    %v1092 = vsel %vm574, %v1076, %v998
    %v1093 = vsel %vm574, %v1077, %v1000
    %v1094 = vsel %vm574, %v1078, %v1002
    %v1095 = vsel %vm574, %v1079, %v1004
    %v1096 = vsel %vm574, %v1080, %v1006
    %v1097 = vsel %vm574, %v1081, %v1008
    %v1098 = vsel %vm574, %v1082, %v1010
    %v1099 = vsel %vm574, %v1083, %v1012
    %v1100 = vsel %vm574, %v1084, %v1014
    %v1101 = vsel %vm574, %v1085, %v1016
    %v1102 = vsel %vm574, %v1086, %v1018
    %v1103 = vsel %vm574, %v1087, %v1020
    %v1104 = vsel %vm574, %v1088, %v1022
    %v1105 = vsel %vm574, %v1089, %v1024
    %v1106 = vsel %vm574, %v1090, %v1026
    %v1108 = vsel %vm594, %v1091, 0
    %v1111 = vsel %vm594, %v1092, 0
    %v1114 = vsel %vm594, %v1093, 0
    %v1117 = vsel %vm594, %v1094, 0
    %v1120 = vsel %vm594, %v1095, 0
    %v1123 = vsel %vm594, %v1096, 0
    %v1126 = vsel %vm594, %v1097, 0
    %v1129 = vsel %vm594, %v1098, 0
    %v1132 = vsel %vm594, %v1099, 0
    %v1135 = vsel %vm594, %v1100, 0
    %v1138 = vsel %vm594, %v1101, 0
    %v1141 = vsel %vm594, %v1102, 0
    %v1144 = vsel %vm594, %v1103, 0
    %v1147 = vsel %vm594, %v1104, 0
    %v1150 = vsel %vm594, %v1105, 0
    %v1153 = vsel %vm594, %v1106, 0
    %1155 = vmatpush.msra.mxu0 0.0
    %1156 = vmatpush.msra.mxu0 0.0
    %1157 = vmatpush.msra.mxu0 0.0
    %1158 = vmatpush.msra.mxu0 0.0
    %1159 = vmatpush.msra.mxu0 0.0
    %1160 = vmatpush.msra.mxu0 0.0
    %1161 = vmatpush.msra.mxu0 0.0
    %1162 = vmatpush.msra.mxu0 0.0
    %1163 = vmatpush.msra.mxu0 0.0
    %1164 = vmatpush.msra.mxu0 0.0
    %1165 = vmatpush.msra.mxu0 0.0
    %1166 = vmatpush.msra.mxu0 0.0
    %1167 = vmatpush.msra.mxu0 %v644
    %1168 = vmatpush.msra.mxu0 %v182
    %1169 = vmatpush.msra.mxu0 %v181
    %1170 = vmatpush.msra.mxu0 %v180
    %1171 = vmatmul.f32.gmra.mxu0 %v1108
    %v1172 = vpop.f32.mrf.mxu0
    %v1173 = vadd.f32 %v592, %v1172
    %1174 = vmatmul.f32.gmra.mxu0 %v1111
    %v1175 = vpop.f32.mrf.mxu0
    %v1176 = vadd.f32 %v592, %v1175
    %1177 = vmatmul.f32.gmra.mxu0 %v1114
    %v1178 = vpop.f32.mrf.mxu0
    %v1179 = vadd.f32 %v592, %v1178
    %1180 = vmatmul.f32.gmra.mxu0 %v1117
    %v1181 = vpop.f32.mrf.mxu0
    %v1182 = vadd.f32 %v592, %v1181
    %1183 = vmatmul.f32.gmra.mxu0 %v1120
    %v1184 = vpop.f32.mrf.mxu0
    %v1185 = vadd.f32 %v592, %v1184
    %1186 = vmatmul.f32.gmra.mxu0 %v1123
    %v1187 = vpop.f32.mrf.mxu0
    %v1188 = vadd.f32 %v592, %v1187
    %1189 = vmatmul.f32.gmra.mxu0 %v1126
    %v1190 = vpop.f32.mrf.mxu0
    %v1191 = vadd.f32 %v592, %v1190
    %1192 = vmatmul.f32.gmra.mxu0 %v1129
    %v1193 = vpop.f32.mrf.mxu0
    %v1194 = vadd.f32 %v592, %v1193
    %1195 = vmatmul.f32.gmra.mxu0 %v1132
    %v1196 = vpop.f32.mrf.mxu0
    %v1197 = vadd.f32 %v592, %v1196
    %1198 = vmatmul.f32.gmra.mxu0 %v1135
    %v1199 = vpop.f32.mrf.mxu0
    %v1200 = vadd.f32 %v592, %v1199
    %1201 = vmatmul.f32.gmra.mxu0 %v1138
    %v1202 = vpop.f32.mrf.mxu0
    %v1203 = vadd.f32 %v592, %v1202
    %1204 = vmatmul.f32.gmra.mxu0 %v1141
    %v1205 = vpop.f32.mrf.mxu0
    %v1206 = vadd.f32 %v592, %v1205
    %1207 = vmatmul.f32.gmra.mxu0 %v1144
    %v1208 = vpop.f32.mrf.mxu0
    %v1209 = vadd.f32 %v592, %v1208
    %1210 = vmatmul.f32.gmra.mxu0 %v1147
    %v1211 = vpop.f32.mrf.mxu0
    %v1212 = vadd.f32 %v592, %v1211
    %1213 = vmatmul.f32.gmra.mxu0 %v1150
    %v1214 = vpop.f32.mrf.mxu0
    %v1215 = vadd.f32 %v592, %v1214
    %1216 = vmatmul.f32.gmra.mxu0 %v1153
    %v1217 = vpop.f32.mrf.mxu0
    %v1218 = vadd.f32 %v592, %v1217
    %1219 = vdwg.mxu0
    %v1220 = vsel %vm523, %v664, 0.0
    %v1221 = vsel %vm523, %v667, 0.0
    %v1222 = vadd.f32 %v1220, %v1221
    %v1223 = vsel %vm523, %v670, 0.0
    %v1224 = vadd.f32 %v1222, %v1223
    %v1225 = vsel %vm523, %v673, 0.0
    %v1226 = vadd.f32 %v1224, %v1225
    %v1227 = vsel %vm523, %v676, 0.0
    %v1228 = vadd.f32 %v1226, %v1227
    %v1229 = vsel %vm523, %v679, 0.0
    %v1230 = vadd.f32 %v1228, %v1229
    %v1231 = vsel %vm523, %v682, 0.0
    %v1232 = vadd.f32 %v1230, %v1231
    %v1233 = vsel %vm523, %v685, 0.0
    %v1234 = vadd.f32 %v1232, %v1233
    %v1235 = vsel %vm523, %v688, 0.0
    %v1236 = vadd.f32 %v1234, %v1235
    %v1237 = vsel %vm523, %v691, 0.0
    %v1238 = vadd.f32 %v1236, %v1237
    %v1239 = vsel %vm523, %v694, 0.0
    %v1240 = vadd.f32 %v1238, %v1239
    %v1241 = vsel %vm523, %v697, 0.0
    %v1242 = vadd.f32 %v1240, %v1241
    %v1243 = vsel %vm523, %v700, 0.0
    %v1244 = vadd.f32 %v1242, %v1243
    %v1245 = vsel %vm523, %v703, 0.0
    %v1246 = vadd.f32 %v1244, %v1245
    %v1247 = vsel %vm523, %v706, 0.0
    %v1248 = vadd.f32 %v1246, %v1247
    %vm1249 = vcmask 44032
    %v1250 = vsel %vm1249, %v709, 0.0
    %v1251 = vadd.f32 %v1248, %v1250
    %v1252 = vrot.slane %v1251, 4
    %v1253 = vadd.f32 %v1251, %v1252
    %v1254 = vrot.slane %v1253, 2
    %v1255 = vadd.f32 %v1253, %v1254
    %v1256 = vrot.slane %v1255, 1
    %v1257 = vadd.f32 %v1255, %v1256
    %v1258 = vadd.f32 %v1257, 0.0
    %v1259 = vsel %vm523, %v1173, 0.0
    %v1260 = vsel %vm523, %v1176, 0.0
    %v1261 = vadd.f32 %v1259, %v1260
    %v1262 = vsel %vm523, %v1179, 0.0
    %v1263 = vadd.f32 %v1261, %v1262
    %v1264 = vsel %vm523, %v1182, 0.0
    %v1265 = vadd.f32 %v1263, %v1264
    %v1266 = vsel %vm523, %v1185, 0.0
    %v1267 = vadd.f32 %v1265, %v1266
    %v1268 = vsel %vm523, %v1188, 0.0
    %v1269 = vadd.f32 %v1267, %v1268
    %v1270 = vsel %vm523, %v1191, 0.0
    %v1271 = vadd.f32 %v1269, %v1270
    %v1272 = vsel %vm523, %v1194, 0.0
    %v1273 = vadd.f32 %v1271, %v1272
    %v1274 = vsel %vm523, %v1197, 0.0
    %v1275 = vadd.f32 %v1273, %v1274
    %v1276 = vsel %vm523, %v1200, 0.0
    %v1277 = vadd.f32 %v1275, %v1276
    %v1278 = vsel %vm523, %v1203, 0.0
    %v1279 = vadd.f32 %v1277, %v1278
    %v1280 = vsel %vm523, %v1206, 0.0
    %v1281 = vadd.f32 %v1279, %v1280
    %v1282 = vsel %vm523, %v1209, 0.0
    %v1283 = vadd.f32 %v1281, %v1282
    %v1284 = vsel %vm523, %v1212, 0.0
    %v1285 = vadd.f32 %v1283, %v1284
    %v1286 = vsel %vm523, %v1215, 0.0
    %v1287 = vadd.f32 %v1285, %v1286
    %v1288 = vsel %vm1249, %v1218, 0.0
    %v1289 = vadd.f32 %v1287, %v1288
    %v1290 = vrot.slane %v1289, 4
    %v1291 = vadd.f32 %v1289, %v1290
    %v1292 = vrot.slane %v1291, 2
    %v1293 = vadd.f32 %v1291, %v1292
    %v1294 = vrot.slane %v1293, 1
    %v1295 = vadd.f32 %v1293, %v1294
    %v1296 = vadd.f32 %v1258, %v1295
    %v1297 = vrcp.pop 248.0
    %v1298 = vmul.f32 248.0, %v1297
    %v1299 = vsub.f32 1.0, %v1298
    %v1300 = vmul.f32 %v1297, %v1299
    %v1301 = vadd.f32 %v1297, %v1300
    %vm1302 = vweird.f32 %v1297
    %v1303 = vsel %vm1302, %v1297, %v1301
    %v1304 = vmul.f32 %v1296, %v1303
    %v1305 = vsub.f32 %v664, %v1304
    %v1306 = vsub.f32 %v667, %v1304
    %v1307 = vsub.f32 %v670, %v1304
    %v1308 = vsub.f32 %v673, %v1304
    %v1309 = vsub.f32 %v676, %v1304
    %v1310 = vsub.f32 %v679, %v1304
    %v1311 = vsub.f32 %v682, %v1304
    %v1312 = vsub.f32 %v685, %v1304
    %v1313 = vsub.f32 %v688, %v1304
    %v1314 = vsub.f32 %v691, %v1304
    %v1315 = vsub.f32 %v694, %v1304
    %v1316 = vsub.f32 %v697, %v1304
    %v1317 = vsub.f32 %v700, %v1304
    %v1318 = vsub.f32 %v703, %v1304
    %v1319 = vsub.f32 %v706, %v1304
    %v1320 = vsub.f32 %v709, %v1304
    %v1321 = vmul.f32 %v1305, %v1305
    %v1322 = vmul.f32 %v1306, %v1306
    %v1323 = vmul.f32 %v1307, %v1307
    %v1324 = vmul.f32 %v1308, %v1308
    %v1325 = vmul.f32 %v1309, %v1309
    %v1326 = vmul.f32 %v1310, %v1310
    %v1327 = vmul.f32 %v1311, %v1311
    %v1328 = vmul.f32 %v1312, %v1312
    %v1329 = vmul.f32 %v1313, %v1313
    %v1330 = vmul.f32 %v1314, %v1314
    %v1331 = vmul.f32 %v1315, %v1315
    %v1332 = vmul.f32 %v1316, %v1316
    %v1333 = vmul.f32 %v1317, %v1317
    %v1334 = vmul.f32 %v1318, %v1318
    %v1335 = vmul.f32 %v1319, %v1319
    %v1336 = vmul.f32 %v1320, %v1320
    %v1337 = vsel %vm523, %v1321, 0.0
    %v1338 = vsel %vm523, %v1322, 0.0
    %v1339 = vadd.f32 %v1337, %v1338
    %v1340 = vsel %vm523, %v1323, 0.0
    %v1341 = vadd.f32 %v1339, %v1340
    %v1342 = vsel %vm523, %v1324, 0.0
    %v1343 = vadd.f32 %v1341, %v1342
    %v1344 = vsel %vm523, %v1325, 0.0
    %v1345 = vadd.f32 %v1343, %v1344
    %v1346 = vsel %vm523, %v1326, 0.0
    %v1347 = vadd.f32 %v1345, %v1346
    %v1348 = vsel %vm523, %v1327, 0.0
    %v1349 = vadd.f32 %v1347, %v1348
    %v1350 = vsel %vm523, %v1328, 0.0
    %v1351 = vadd.f32 %v1349, %v1350
    %v1352 = vsel %vm523, %v1329, 0.0
    %v1353 = vadd.f32 %v1351, %v1352
    %v1354 = vsel %vm523, %v1330, 0.0
    %v1355 = vadd.f32 %v1353, %v1354
    %v1356 = vsel %vm523, %v1331, 0.0
    %v1357 = vadd.f32 %v1355, %v1356
    %v1358 = vsel %vm523, %v1332, 0.0
    %v1359 = vadd.f32 %v1357, %v1358
    %v1360 = vsel %vm523, %v1333, 0.0
    %v1361 = vadd.f32 %v1359, %v1360
    %v1362 = vsel %vm523, %v1334, 0.0
    %v1363 = vadd.f32 %v1361, %v1362
    %v1364 = vsel %vm523, %v1335, 0.0
    %v1365 = vadd.f32 %v1363, %v1364
    %v1366 = vsel %vm1249, %v1336, 0.0
    %v1367 = vadd.f32 %v1365, %v1366
    %v1368 = vrot.slane %v1367, 4
    %v1369 = vadd.f32 %v1367, %v1368
    %v1370 = vrot.slane %v1369, 2
    %v1371 = vadd.f32 %v1369, %v1370
    %v1372 = vrot.slane %v1371, 1
    %v1373 = vadd.f32 %v1371, %v1372
    %v1374 = vadd.f32 %v1373, 0.0
    %v1375 = vsub.f32 %v1173, %v1304
    %v1376 = vsub.f32 %v1176, %v1304
    %v1377 = vsub.f32 %v1179, %v1304
    %v1378 = vsub.f32 %v1182, %v1304
    %v1379 = vsub.f32 %v1185, %v1304
    %v1380 = vsub.f32 %v1188, %v1304
    %v1381 = vsub.f32 %v1191, %v1304
    %v1382 = vsub.f32 %v1194, %v1304
    %v1383 = vsub.f32 %v1197, %v1304
    %v1384 = vsub.f32 %v1200, %v1304
    %v1385 = vsub.f32 %v1203, %v1304
    %v1386 = vsub.f32 %v1206, %v1304
    %v1387 = vsub.f32 %v1209, %v1304
    %v1388 = vsub.f32 %v1212, %v1304
    %v1389 = vsub.f32 %v1215, %v1304
    %v1390 = vsub.f32 %v1218, %v1304
    %v1391 = vmul.f32 %v1375, %v1375
    %v1392 = vmul.f32 %v1376, %v1376
    %v1393 = vmul.f32 %v1377, %v1377
    %v1394 = vmul.f32 %v1378, %v1378
    %v1395 = vmul.f32 %v1379, %v1379
    %v1396 = vmul.f32 %v1380, %v1380
    %v1397 = vmul.f32 %v1381, %v1381
    %v1398 = vmul.f32 %v1382, %v1382
    %v1399 = vmul.f32 %v1383, %v1383
    %v1400 = vmul.f32 %v1384, %v1384
    %v1401 = vmul.f32 %v1385, %v1385
    %v1402 = vmul.f32 %v1386, %v1386
    %v1403 = vmul.f32 %v1387, %v1387
    %v1404 = vmul.f32 %v1388, %v1388
    %v1405 = vmul.f32 %v1389, %v1389
    %v1406 = vmul.f32 %v1390, %v1390
    %v1407 = vsel %vm523, %v1391, 0.0
    %v1408 = vsel %vm523, %v1392, 0.0
    %v1409 = vadd.f32 %v1407, %v1408
    %v1410 = vsel %vm523, %v1393, 0.0
    %v1411 = vadd.f32 %v1409, %v1410
    %v1412 = vsel %vm523, %v1394, 0.0
    %v1413 = vadd.f32 %v1411, %v1412
    %v1414 = vsel %vm523, %v1395, 0.0
    %v1415 = vadd.f32 %v1413, %v1414
    %v1416 = vsel %vm523, %v1396, 0.0
    %v1417 = vadd.f32 %v1415, %v1416
    %v1418 = vsel %vm523, %v1397, 0.0
    %v1419 = vadd.f32 %v1417, %v1418
    %v1420 = vsel %vm523, %v1398, 0.0
    %v1421 = vadd.f32 %v1419, %v1420
    %v1422 = vsel %vm523, %v1399, 0.0
    %v1423 = vadd.f32 %v1421, %v1422
    %v1424 = vsel %vm523, %v1400, 0.0
    %v1425 = vadd.f32 %v1423, %v1424
    %v1426 = vsel %vm523, %v1401, 0.0
    %v1427 = vadd.f32 %v1425, %v1426
    %v1428 = vsel %vm523, %v1402, 0.0
    %v1429 = vadd.f32 %v1427, %v1428
    %v1430 = vsel %vm523, %v1403, 0.0
    %v1431 = vadd.f32 %v1429, %v1430
    %v1432 = vsel %vm523, %v1404, 0.0
    %v1433 = vadd.f32 %v1431, %v1432
    %v1434 = vsel %vm523, %v1405, 0.0
    %v1435 = vadd.f32 %v1433, %v1434
    %v1436 = vsel %vm1249, %v1406, 0.0
    %v1437 = vadd.f32 %v1435, %v1436
    %v1438 = vrot.slane %v1437, 4
    %v1439 = vadd.f32 %v1437, %v1438
    %v1440 = vrot.slane %v1439, 2
    %v1441 = vadd.f32 %v1439, %v1440
    %v1442 = vrot.slane %v1441, 1
    %v1443 = vadd.f32 %v1441, %v1442
    %v1444 = vadd.f32 %v1374, %v1443
    %v1445 = vmul.f32 %v1444, %v1303
    %v1446 = vadd.f32 %v1445, 1e-05
    %v1447 = vrsqrt.pop %v1446
    %v1448 = vmul.f32 %v1447, %v1446
    %v1449 = vmul.f32 %v1448, %v1447
    %v1450 = vmul.f32 0.5, %v1449
    %v1451 = vsub.f32 1.5, %v1450
    %v1452 = vmul.f32 %v1447, %v1451
    %vm1453 = vweird.f32 %v1446
    %vm1454 = vweird.f32 %v1447
    %vm1455 = vmor %vm1453, %vm1454
    %v1456 = vsel %vm1455, %v1447, %v1452
    %v1457 = vmul.f32 %v1456, %v185
    %v1458 = vperm.slane %v1457, 0
    %v1459 = vmul.f32 %v1305, %v1458
    %v1460 = vmul.f32 %v1306, %v1458
    %v1461 = vmul.f32 %v1307, %v1458
    %v1462 = vmul.f32 %v1308, %v1458
    %v1463 = vmul.f32 %v1309, %v1458
    %v1464 = vmul.f32 %v1310, %v1458
    %v1465 = vmul.f32 %v1311, %v1458
    %v1466 = vmul.f32 %v1312, %v1458
    %v1467 = vmul.f32 %v1313, %v1458
    %v1468 = vmul.f32 %v1314, %v1458
    %v1469 = vmul.f32 %v1315, %v1458
    %v1470 = vmul.f32 %v1316, %v1458
    %v1471 = vmul.f32 %v1317, %v1458
    %v1472 = vmul.f32 %v1318, %v1458
    %v1473 = vmul.f32 %v1319, %v1458
    %v1474 = vmul.f32 %v1320, %v1458
    %v1476 = vperm.slane %v186, 0
    %v1478 = vadd.f32 %v1459, %v1476
    %v1479 = vadd.f32 %v1460, %v1476
    %v1480 = vadd.f32 %v1461, %v1476
    %v1481 = vadd.f32 %v1462, %v1476
    %v1482 = vadd.f32 %v1463, %v1476
    %v1483 = vadd.f32 %v1464, %v1476
    %v1484 = vadd.f32 %v1465, %v1476
    %v1485 = vadd.f32 %v1466, %v1476
    %v1486 = vadd.f32 %v1467, %v1476
    %v1487 = vadd.f32 %v1468, %v1476
    %v1488 = vadd.f32 %v1469, %v1476
    %v1489 = vadd.f32 %v1470, %v1476
    %v1490 = vadd.f32 %v1471, %v1476
    %v1491 = vadd.f32 %v1472, %v1476
    %v1492 = vadd.f32 %v1473, %v1476
    %v1493 = vadd.f32 %v1474, %v1476
    %v1494 = vmax.f32 %v1478, 0.0
    %v1495 = vmax.f32 %v1479, 0.0
    %v1496 = vmax.f32 %v1480, 0.0
    %v1497 = vmax.f32 %v1481, 0.0
    %v1498 = vmax.f32 %v1482, 0.0
    %v1499 = vmax.f32 %v1483, 0.0
    %v1500 = vmax.f32 %v1484, 0.0
    %v1501 = vmax.f32 %v1485, 0.0
    %v1502 = vmax.f32 %v1486, 0.0
    %v1503 = vmax.f32 %v1487, 0.0
    %v1504 = vmax.f32 %v1488, 0.0
    %v1505 = vmax.f32 %v1489, 0.0
    %v1506 = vmax.f32 %v1490, 0.0
    %v1507 = vmax.f32 %v1491, 0.0
    %v1508 = vmax.f32 %v1492, 0.0
    %v1509 = vmax.f32 %v1493, 0.0
    %v1510 = vmul.f32 %v1375, %v1458
    %v1511 = vmul.f32 %v1376, %v1458
    %v1512 = vmul.f32 %v1377, %v1458
    %v1513 = vmul.f32 %v1378, %v1458
    %v1514 = vmul.f32 %v1379, %v1458
    %v1515 = vmul.f32 %v1380, %v1458
    %v1516 = vmul.f32 %v1381, %v1458
    %v1517 = vmul.f32 %v1382, %v1458
    %v1518 = vmul.f32 %v1383, %v1458
    %v1519 = vmul.f32 %v1384, %v1458
    %v1520 = vmul.f32 %v1385, %v1458
    %v1521 = vmul.f32 %v1386, %v1458
    %v1522 = vmul.f32 %v1387, %v1458
    %v1523 = vmul.f32 %v1388, %v1458
    %v1524 = vmul.f32 %v1389, %v1458
    %v1525 = vmul.f32 %v1390, %v1458
    %v1526 = vadd.f32 %v1510, %v1476
    %v1527 = vadd.f32 %v1511, %v1476
    %v1528 = vadd.f32 %v1512, %v1476
    %v1529 = vadd.f32 %v1513, %v1476
    %v1530 = vadd.f32 %v1514, %v1476
    %v1531 = vadd.f32 %v1515, %v1476
    %v1532 = vadd.f32 %v1516, %v1476
    %v1533 = vadd.f32 %v1517, %v1476
    %v1534 = vadd.f32 %v1518, %v1476
    %v1535 = vadd.f32 %v1519, %v1476
    %v1536 = vadd.f32 %v1520, %v1476
    %v1537 = vadd.f32 %v1521, %v1476
    %v1538 = vadd.f32 %v1522, %v1476
    %v1539 = vadd.f32 %v1523, %v1476
    %v1540 = vadd.f32 %v1524, %v1476
    %v1541 = vadd.f32 %v1525, %v1476
    %v1542 = vmax.f32 %v1526, 0.0
    %v1543 = vmax.f32 %v1527, 0.0
    %v1544 = vmax.f32 %v1528, 0.0
    %v1545 = vmax.f32 %v1529, 0.0
    %v1546 = vmax.f32 %v1530, 0.0
    %v1547 = vmax.f32 %v1531, 0.0
    %v1548 = vmax.f32 %v1532, 0.0
    %v1549 = vmax.f32 %v1533, 0.0
    %v1550 = vmax.f32 %v1534, 0.0
    %v1551 = vmax.f32 %v1535, 0.0
    %v1552 = vmax.f32 %v1536, 0.0
    %v1553 = vmax.f32 %v1537, 0.0
    %v1554 = vmax.f32 %v1538, 0.0
    %v1555 = vmax.f32 %v1539, 0.0
    %v1556 = vmax.f32 %v1540, 0.0
    %v1557 = vmax.f32 %v1541, 0.0
    %v1558 = vld [vmem:[%s5] sm:$0xff]
    %v1559 = vld [vmem:[%s5 + $0x8] sm:$0xff]
    %v1560 = vld [vmem:[%s5 + $0x10] sm:$0xff]
    %v1561 = vld [vmem:[%s5 + $0x18] sm:$0x3f]
    %v1562 = vld [vmem:[#allocation7] sm:$0x1]
    %v1563 = vld [vmem:[#allocation9] sm:$0x1]
    %v1564 = vld [vmem:[#allocation10] sm:$0x1]
    %v1581 = vrot.slane %v1494, 1
    %v1582 = vrot.slane %v1495, 1
    %v1583 = vsel %vm203, %v1581, %v1582
    %v1584 = vrot.slane %v1496, 1
    %v1585 = vsel %vm203, %v1582, %v1584
    %v1586 = vrot.slane %v1497, 1
    %v1587 = vsel %vm203, %v1584, %v1586
    %v1588 = vrot.slane %v1498, 1
    %v1589 = vsel %vm203, %v1586, %v1588
    %v1590 = vrot.slane %v1499, 1
    %v1591 = vsel %vm203, %v1588, %v1590
    %v1592 = vrot.slane %v1500, 1
    %v1593 = vsel %vm203, %v1590, %v1592
    %v1594 = vrot.slane %v1501, 1
    %v1595 = vsel %vm203, %v1592, %v1594
    %v1596 = vrot.slane %v1502, 1
    %v1597 = vsel %vm203, %v1594, %v1596
    %v1598 = vrot.slane %v1503, 1
    %v1599 = vsel %vm203, %v1596, %v1598
    %v1600 = vrot.slane %v1504, 1
    %v1601 = vsel %vm203, %v1598, %v1600
    %v1602 = vrot.slane %v1505, 1
    %v1603 = vsel %vm203, %v1600, %v1602
    %v1604 = vrot.slane %v1506, 1
    %v1605 = vsel %vm203, %v1602, %v1604
    %v1606 = vrot.slane %v1507, 1
    %v1607 = vsel %vm203, %v1604, %v1606
    %v1608 = vrot.slane %v1508, 1
    %v1609 = vsel %vm203, %v1606, %v1608
    %v1610 = vrot.slane %v1509, 1
    %v1611 = vsel %vm203, %v1608, %v1610
    %1612 = vrot.lane.b32.xlu0 %v1583, 6
    %v1613 = vpop.permute.xlu0 %1612
    %1614 = vrot.lane.b32.xlu0 %v1585, 6
    %v1615 = vpop.permute.xlu0 %1614
    %1616 = vrot.lane.b32.xlu0 %v1587, 6
    %v1617 = vpop.permute.xlu0 %1616
    %1618 = vrot.lane.b32.xlu0 %v1589, 6
    %v1619 = vpop.permute.xlu0 %1618
    %1620 = vrot.lane.b32.xlu0 %v1591, 6
    %v1621 = vpop.permute.xlu0 %1620
    %1622 = vrot.lane.b32.xlu0 %v1593, 6
    %v1623 = vpop.permute.xlu0 %1622
    %1624 = vrot.lane.b32.xlu0 %v1595, 6
    %v1625 = vpop.permute.xlu0 %1624
    %1626 = vrot.lane.b32.xlu0 %v1597, 6
    %v1627 = vpop.permute.xlu0 %1626
    %1628 = vrot.lane.b32.xlu0 %v1599, 6
    %v1629 = vpop.permute.xlu0 %1628
    %1630 = vrot.lane.b32.xlu0 %v1601, 6
    %v1631 = vpop.permute.xlu0 %1630
    %1632 = vrot.lane.b32.xlu0 %v1603, 6
    %v1633 = vpop.permute.xlu0 %1632
    %1634 = vrot.lane.b32.xlu0 %v1605, 6
    %v1635 = vpop.permute.xlu0 %1634
    %1636 = vrot.lane.b32.xlu0 %v1607, 6
    %v1637 = vpop.permute.xlu0 %1636
    %1638 = vrot.lane.b32.xlu0 %v1609, 6
    %v1639 = vpop.permute.xlu0 %1638
    %1640 = vrot.lane.b32.xlu0 %v1611, 6
    %v1641 = vpop.permute.xlu0 %1640
    %v1657 = vrot.slane %v1494, 2
    %v1658 = vrot.slane %v1495, 2
    %v1659 = vsel %vm283, %v1657, %v1658
    %v1660 = vrot.slane %v1496, 2
    %v1661 = vsel %vm283, %v1658, %v1660
    %v1662 = vrot.slane %v1497, 2
    %v1663 = vsel %vm283, %v1660, %v1662
    %v1664 = vrot.slane %v1498, 2
    %v1665 = vsel %vm283, %v1662, %v1664
    %v1666 = vrot.slane %v1499, 2
    %v1667 = vsel %vm283, %v1664, %v1666
    %v1668 = vrot.slane %v1500, 2
    %v1669 = vsel %vm283, %v1666, %v1668
    %v1670 = vrot.slane %v1501, 2
    %v1671 = vsel %vm283, %v1668, %v1670
    %v1672 = vrot.slane %v1502, 2
    %v1673 = vsel %vm283, %v1670, %v1672
    %v1674 = vrot.slane %v1503, 2
    %v1675 = vsel %vm283, %v1672, %v1674
    %v1676 = vrot.slane %v1504, 2
    %v1677 = vsel %vm283, %v1674, %v1676
    %v1678 = vrot.slane %v1505, 2
    %v1679 = vsel %vm283, %v1676, %v1678
    %v1680 = vrot.slane %v1506, 2
    %v1681 = vsel %vm283, %v1678, %v1680
    %v1682 = vrot.slane %v1507, 2
    %v1683 = vsel %vm283, %v1680, %v1682
    %v1684 = vrot.slane %v1508, 2
    %v1685 = vsel %vm283, %v1682, %v1684
    %v1686 = vrot.slane %v1509, 2
    %v1687 = vsel %vm283, %v1684, %v1686
    %1688 = vrot.lane.b32.xlu0 %v1659, 12
    %v1689 = vpop.permute.xlu0 %1688
    %1690 = vrot.lane.b32.xlu0 %v1661, 12
    %v1691 = vpop.permute.xlu0 %1690
    %1692 = vrot.lane.b32.xlu0 %v1663, 12
    %v1693 = vpop.permute.xlu0 %1692
    %1694 = vrot.lane.b32.xlu0 %v1665, 12
    %v1695 = vpop.permute.xlu0 %1694
    %1696 = vrot.lane.b32.xlu0 %v1667, 12
    %v1697 = vpop.permute.xlu0 %1696
    %1698 = vrot.lane.b32.xlu0 %v1669, 12
    %v1699 = vpop.permute.xlu0 %1698
    %1700 = vrot.lane.b32.xlu0 %v1671, 12
    %v1701 = vpop.permute.xlu0 %1700
    %1702 = vrot.lane.b32.xlu0 %v1673, 12
    %v1703 = vpop.permute.xlu0 %1702
    %1704 = vrot.lane.b32.xlu0 %v1675, 12
    %v1705 = vpop.permute.xlu0 %1704
    %1706 = vrot.lane.b32.xlu0 %v1677, 12
    %v1707 = vpop.permute.xlu0 %1706
    %1708 = vrot.lane.b32.xlu0 %v1679, 12
    %v1709 = vpop.permute.xlu0 %1708
    %1710 = vrot.lane.b32.xlu0 %v1681, 12
    %v1711 = vpop.permute.xlu0 %1710
    %1712 = vrot.lane.b32.xlu0 %v1683, 12
    %v1713 = vpop.permute.xlu0 %1712
    %1714 = vrot.lane.b32.xlu0 %v1685, 12
    %v1715 = vpop.permute.xlu0 %1714
    %1716 = vrot.lane.b32.xlu0 %v1687, 12
    %v1717 = vpop.permute.xlu0 %1716
    %v1733 = vrot.slane %v1494, 3
    %v1734 = vrot.slane %v1495, 3
    %v1735 = vsel %vm363, %v1733, %v1734
    %v1736 = vrot.slane %v1496, 3
    %v1737 = vsel %vm363, %v1734, %v1736
    %v1738 = vrot.slane %v1497, 3
    %v1739 = vsel %vm363, %v1736, %v1738
    %v1740 = vrot.slane %v1498, 3
    %v1741 = vsel %vm363, %v1738, %v1740
    %v1742 = vrot.slane %v1499, 3
    %v1743 = vsel %vm363, %v1740, %v1742
    %v1744 = vrot.slane %v1500, 3
    %v1745 = vsel %vm363, %v1742, %v1744
    %v1746 = vrot.slane %v1501, 3
    %v1747 = vsel %vm363, %v1744, %v1746
    %v1748 = vrot.slane %v1502, 3
    %v1749 = vsel %vm363, %v1746, %v1748
    %v1750 = vrot.slane %v1503, 3
    %v1751 = vsel %vm363, %v1748, %v1750
    %v1752 = vrot.slane %v1504, 3
    %v1753 = vsel %vm363, %v1750, %v1752
    %v1754 = vrot.slane %v1505, 3
    %v1755 = vsel %vm363, %v1752, %v1754
    %v1756 = vrot.slane %v1506, 3
    %v1757 = vsel %vm363, %v1754, %v1756
    %v1758 = vrot.slane %v1507, 3
    %v1759 = vsel %vm363, %v1756, %v1758
    %v1760 = vrot.slane %v1508, 3
    %v1761 = vsel %vm363, %v1758, %v1760
    %v1762 = vrot.slane %v1509, 3
    %v1763 = vsel %vm363, %v1760, %v1762
    %1764 = vrot.lane.b32.xlu0 %v1735, 18
    %v1765 = vpop.permute.xlu0 %1764
    %1766 = vrot.lane.b32.xlu0 %v1737, 18
    %v1767 = vpop.permute.xlu0 %1766
    %1768 = vrot.lane.b32.xlu0 %v1739, 18
    %v1769 = vpop.permute.xlu0 %1768
    %1770 = vrot.lane.b32.xlu0 %v1741, 18
    %v1771 = vpop.permute.xlu0 %1770
    %1772 = vrot.lane.b32.xlu0 %v1743, 18
    %v1773 = vpop.permute.xlu0 %1772
    %1774 = vrot.lane.b32.xlu0 %v1745, 18
    %v1775 = vpop.permute.xlu0 %1774
    %1776 = vrot.lane.b32.xlu0 %v1747, 18
    %v1777 = vpop.permute.xlu0 %1776
    %1778 = vrot.lane.b32.xlu0 %v1749, 18
    %v1779 = vpop.permute.xlu0 %1778
    %1780 = vrot.lane.b32.xlu0 %v1751, 18
    %v1781 = vpop.permute.xlu0 %1780
    %1782 = vrot.lane.b32.xlu0 %v1753, 18
    %v1783 = vpop.permute.xlu0 %1782
    %1784 = vrot.lane.b32.xlu0 %v1755, 18
    %v1785 = vpop.permute.xlu0 %1784
    %1786 = vrot.lane.b32.xlu0 %v1757, 18
    %v1787 = vpop.permute.xlu0 %1786
    %1788 = vrot.lane.b32.xlu0 %v1759, 18
    %v1789 = vpop.permute.xlu0 %1788
    %1790 = vrot.lane.b32.xlu0 %v1761, 18
    %v1791 = vpop.permute.xlu0 %1790
    %1792 = vrot.lane.b32.xlu0 %v1763, 18
    %v1793 = vpop.permute.xlu0 %1792
    %v1809 = vrot.slane %v1494, 4
    %v1810 = vrot.slane %v1495, 4
    %v1811 = vsel %vm443, %v1809, %v1810
    %v1812 = vrot.slane %v1496, 4
    %v1813 = vsel %vm443, %v1810, %v1812
    %v1814 = vrot.slane %v1497, 4
    %v1815 = vsel %vm443, %v1812, %v1814
    %v1816 = vrot.slane %v1498, 4
    %v1817 = vsel %vm443, %v1814, %v1816
    %v1818 = vrot.slane %v1499, 4
    %v1819 = vsel %vm443, %v1816, %v1818
    %v1820 = vrot.slane %v1500, 4
    %v1821 = vsel %vm443, %v1818, %v1820
    %v1822 = vrot.slane %v1501, 4
    %v1823 = vsel %vm443, %v1820, %v1822
    %v1824 = vrot.slane %v1502, 4
    %v1825 = vsel %vm443, %v1822, %v1824
    %v1826 = vrot.slane %v1503, 4
    %v1827 = vsel %vm443, %v1824, %v1826
    %v1828 = vrot.slane %v1504, 4
    %v1829 = vsel %vm443, %v1826, %v1828
    %v1830 = vrot.slane %v1505, 4
    %v1831 = vsel %vm443, %v1828, %v1830
    %v1832 = vrot.slane %v1506, 4
    %v1833 = vsel %vm443, %v1830, %v1832
    %v1834 = vrot.slane %v1507, 4
    %v1835 = vsel %vm443, %v1832, %v1834
    %v1836 = vrot.slane %v1508, 4
    %v1837 = vsel %vm443, %v1834, %v1836
    %v1838 = vrot.slane %v1509, 4
    %v1839 = vsel %vm443, %v1836, %v1838
    %1840 = vrot.lane.b32.xlu0 %v1811, 24
    %v1841 = vpop.permute.xlu0 %1840
    %1842 = vrot.lane.b32.xlu0 %v1813, 24
    %v1843 = vpop.permute.xlu0 %1842
    %1844 = vrot.lane.b32.xlu0 %v1815, 24
    %v1845 = vpop.permute.xlu0 %1844
    %1846 = vrot.lane.b32.xlu0 %v1817, 24
    %v1847 = vpop.permute.xlu0 %1846
    %1848 = vrot.lane.b32.xlu0 %v1819, 24
    %v1849 = vpop.permute.xlu0 %1848
    %1850 = vrot.lane.b32.xlu0 %v1821, 24
    %v1851 = vpop.permute.xlu0 %1850
    %1852 = vrot.lane.b32.xlu0 %v1823, 24
    %v1853 = vpop.permute.xlu0 %1852
    %1854 = vrot.lane.b32.xlu0 %v1825, 24
    %v1855 = vpop.permute.xlu0 %1854
    %1856 = vrot.lane.b32.xlu0 %v1827, 24
    %v1857 = vpop.permute.xlu0 %1856
    %1858 = vrot.lane.b32.xlu0 %v1829, 24
    %v1859 = vpop.permute.xlu0 %1858
    %1860 = vrot.lane.b32.xlu0 %v1831, 24
    %v1861 = vpop.permute.xlu0 %1860
    %1862 = vrot.lane.b32.xlu0 %v1833, 24
    %v1863 = vpop.permute.xlu0 %1862
    %1864 = vrot.lane.b32.xlu0 %v1835, 24
    %v1865 = vpop.permute.xlu0 %1864
    %1866 = vrot.lane.b32.xlu0 %v1837, 24
    %v1867 = vpop.permute.xlu0 %1866
    %1868 = vrot.lane.b32.xlu0 %v1839, 24
    %v1869 = vpop.permute.xlu0 %1868
    %v1885 = vsel %vm523, %v1494, %v1613
    %v1886 = vsel %vm523, %v1495, %v1615
    %v1887 = vsel %vm523, %v1496, %v1617
    %v1888 = vsel %vm523, %v1497, %v1619
    %v1889 = vsel %vm523, %v1498, %v1621
    %v1890 = vsel %vm523, %v1499, %v1623
    %v1891 = vsel %vm523, %v1500, %v1625
    %v1892 = vsel %vm523, %v1501, %v1627
    %v1893 = vsel %vm523, %v1502, %v1629
    %v1894 = vsel %vm523, %v1503, %v1631
    %v1895 = vsel %vm523, %v1504, %v1633
    %v1896 = vsel %vm523, %v1505, %v1635
    %v1897 = vsel %vm523, %v1506, %v1637
    %v1898 = vsel %vm523, %v1507, %v1639
    %v1899 = vsel %vm523, %v1508, %v1641
    %v1900 = vsel %vm540, %v1885, %v1689
    %v1901 = vsel %vm540, %v1886, %v1691
    %v1902 = vsel %vm540, %v1887, %v1693
    %v1903 = vsel %vm540, %v1888, %v1695
    %v1904 = vsel %vm540, %v1889, %v1697
    %v1905 = vsel %vm540, %v1890, %v1699
    %v1906 = vsel %vm540, %v1891, %v1701
    %v1907 = vsel %vm540, %v1892, %v1703
    %v1908 = vsel %vm540, %v1893, %v1705
    %v1909 = vsel %vm540, %v1894, %v1707
    %v1910 = vsel %vm540, %v1895, %v1709
    %v1911 = vsel %vm540, %v1896, %v1711
    %v1912 = vsel %vm540, %v1897, %v1713
    %v1913 = vsel %vm540, %v1898, %v1715
    %v1914 = vsel %vm540, %v1899, %v1717
    %v1915 = vsel %vm557, %v1900, %v1765
    %v1916 = vsel %vm557, %v1901, %v1767
    %v1917 = vsel %vm557, %v1902, %v1769
    %v1918 = vsel %vm557, %v1903, %v1771
    %v1919 = vsel %vm557, %v1904, %v1773
    %v1920 = vsel %vm557, %v1905, %v1775
    %v1921 = vsel %vm557, %v1906, %v1777
    %v1922 = vsel %vm557, %v1907, %v1779
    %v1923 = vsel %vm557, %v1908, %v1781
    %v1924 = vsel %vm557, %v1909, %v1783
    %v1925 = vsel %vm557, %v1910, %v1785
    %v1926 = vsel %vm557, %v1911, %v1787
    %v1927 = vsel %vm557, %v1912, %v1789
    %v1928 = vsel %vm557, %v1913, %v1791
    %v1929 = vsel %vm557, %v1914, %v1793
    %v1930 = vsel %vm574, %v1915, %v1841
    %v1931 = vsel %vm574, %v1916, %v1843
    %v1932 = vsel %vm574, %v1917, %v1845
    %v1933 = vsel %vm574, %v1918, %v1847
    %v1934 = vsel %vm574, %v1919, %v1849
    %v1935 = vsel %vm574, %v1920, %v1851
    %v1936 = vsel %vm574, %v1921, %v1853
    %v1937 = vsel %vm574, %v1922, %v1855
    %v1938 = vsel %vm574, %v1923, %v1857
    %v1939 = vsel %vm574, %v1924, %v1859
    %v1940 = vsel %vm574, %v1925, %v1861
    %v1941 = vsel %vm574, %v1926, %v1863
    %v1942 = vsel %vm574, %v1927, %v1865
    %v1943 = vsel %vm574, %v1928, %v1867
    %v1944 = vsel %vm574, %v1929, %v1869
    %v1946 = vperm.slane %v1562, 0
    %v1949 = vsel %vm594, %v1930, 0
    %v1952 = vsel %vm594, %v1931, 0
    %v1955 = vsel %vm594, %v1932, 0
    %v1958 = vsel %vm594, %v1933, 0
    %v1961 = vsel %vm594, %v1934, 0
    %v1964 = vsel %vm594, %v1935, 0
    %v1967 = vsel %vm594, %v1936, 0
    %v1970 = vsel %vm594, %v1937, 0
    %v1973 = vsel %vm594, %v1938, 0
    %v1976 = vsel %vm594, %v1939, 0
    %v1979 = vsel %vm594, %v1940, 0
    %v1982 = vsel %vm594, %v1941, 0
    %v1985 = vsel %vm594, %v1942, 0
    %v1988 = vsel %vm594, %v1943, 0
    %v1991 = vsel %vm594, %v1944, 0
    %v1994 = vsel %vm283, %v1561, 0
    %1996 = vmatpush.msra.mxu0 0.0
    %1997 = vmatpush.msra.mxu0 0.0
    %1998 = vmatpush.msra.mxu0 0.0
    %1999 = vmatpush.msra.mxu0 0.0
    %2000 = vmatpush.msra.mxu0 0.0
    %2001 = vmatpush.msra.mxu0 0.0
    %2002 = vmatpush.msra.mxu0 0.0
    %2003 = vmatpush.msra.mxu0 0.0
    %2004 = vmatpush.msra.mxu0 0.0
    %2005 = vmatpush.msra.mxu0 0.0
    %2006 = vmatpush.msra.mxu0 0.0
    %2007 = vmatpush.msra.mxu0 0.0
    %2008 = vmatpush.msra.mxu0 %v1994
    %2009 = vmatpush.msra.mxu0 %v1560
    %2010 = vmatpush.msra.mxu0 %v1559
    %2011 = vmatpush.msra.mxu0 %v1558
    %2012 = vmatmul.f32.gmra.mxu0 %v1949
    %v2013 = vpop.f32.mrf.mxu0
    %v2014 = vadd.f32 %v1946, %v2013
    %2015 = vmatmul.f32.gmra.mxu0 %v1952
    %v2016 = vpop.f32.mrf.mxu0
    %v2017 = vadd.f32 %v1946, %v2016
    %2018 = vmatmul.f32.gmra.mxu0 %v1955
    %v2019 = vpop.f32.mrf.mxu0
    %v2020 = vadd.f32 %v1946, %v2019
    %2021 = vmatmul.f32.gmra.mxu0 %v1958
    %v2022 = vpop.f32.mrf.mxu0
    %v2023 = vadd.f32 %v1946, %v2022
    %2024 = vmatmul.f32.gmra.mxu0 %v1961
    %v2025 = vpop.f32.mrf.mxu0
    %v2026 = vadd.f32 %v1946, %v2025
    %2027 = vmatmul.f32.gmra.mxu0 %v1964
    %v2028 = vpop.f32.mrf.mxu0
    %v2029 = vadd.f32 %v1946, %v2028
    %2030 = vmatmul.f32.gmra.mxu0 %v1967
    %v2031 = vpop.f32.mrf.mxu0
    %v2032 = vadd.f32 %v1946, %v2031
    %2033 = vmatmul.f32.gmra.mxu0 %v1970
    %v2034 = vpop.f32.mrf.mxu0
    %v2035 = vadd.f32 %v1946, %v2034
    %2036 = vmatmul.f32.gmra.mxu0 %v1973
    %v2037 = vpop.f32.mrf.mxu0
    %v2038 = vadd.f32 %v1946, %v2037
    %2039 = vmatmul.f32.gmra.mxu0 %v1976
    %v2040 = vpop.f32.mrf.mxu0
    %v2041 = vadd.f32 %v1946, %v2040
    %2042 = vmatmul.f32.gmra.mxu0 %v1979
    %v2043 = vpop.f32.mrf.mxu0
    %v2044 = vadd.f32 %v1946, %v2043
    %2045 = vmatmul.f32.gmra.mxu0 %v1982
    %v2046 = vpop.f32.mrf.mxu0
    %v2047 = vadd.f32 %v1946, %v2046
    %2048 = vmatmul.f32.gmra.mxu0 %v1985
    %v2049 = vpop.f32.mrf.mxu0
    %v2050 = vadd.f32 %v1946, %v2049
    %2051 = vmatmul.f32.gmra.mxu0 %v1988
    %v2052 = vpop.f32.mrf.mxu0
    %v2053 = vadd.f32 %v1946, %v2052
    %2054 = vmatmul.f32.gmra.mxu0 %v1991
    %v2055 = vpop.f32.mrf.mxu0
    %v2056 = vadd.f32 %v1946, %v2055
    %2057 = vdwg.mxu0
    %v2074 = vrot.slane %v1542, 1
    %v2075 = vrot.slane %v1543, 1
    %v2076 = vsel %vm203, %v2074, %v2075
    %v2077 = vrot.slane %v1544, 1
    %v2078 = vsel %vm203, %v2075, %v2077
    %v2079 = vrot.slane %v1545, 1
    %v2080 = vsel %vm203, %v2077, %v2079
    %v2081 = vrot.slane %v1546, 1
    %v2082 = vsel %vm203, %v2079, %v2081
    %v2083 = vrot.slane %v1547, 1
    %v2084 = vsel %vm203, %v2081, %v2083
    %v2085 = vrot.slane %v1548, 1
    %v2086 = vsel %vm203, %v2083, %v2085
    %v2087 = vrot.slane %v1549, 1
    %v2088 = vsel %vm203, %v2085, %v2087
    %v2089 = vrot.slane %v1550, 1
    %v2090 = vsel %vm203, %v2087, %v2089
    %v2091 = vrot.slane %v1551, 1
    %v2092 = vsel %vm203, %v2089, %v2091
    %v2093 = vrot.slane %v1552, 1
    %v2094 = vsel %vm203, %v2091, %v2093
    %v2095 = vrot.slane %v1553, 1
    %v2096 = vsel %vm203, %v2093, %v2095
    %v2097 = vrot.slane %v1554, 1
    %v2098 = vsel %vm203, %v2095, %v2097
    %v2099 = vrot.slane %v1555, 1
    %v2100 = vsel %vm203, %v2097, %v2099
    %v2101 = vrot.slane %v1556, 1
    %v2102 = vsel %vm203, %v2099, %v2101
    %v2103 = vrot.slane %v1557, 1
    %v2104 = vsel %vm203, %v2101, %v2103
    %2105 = vrot.lane.b32.xlu0 %v2076, 6
    %v2106 = vpop.permute.xlu0 %2105
    %2107 = vrot.lane.b32.xlu0 %v2078, 6
    %v2108 = vpop.permute.xlu0 %2107
    %2109 = vrot.lane.b32.xlu0 %v2080, 6
    %v2110 = vpop.permute.xlu0 %2109
    %2111 = vrot.lane.b32.xlu0 %v2082, 6
    %v2112 = vpop.permute.xlu0 %2111
    %2113 = vrot.lane.b32.xlu0 %v2084, 6
    %v2114 = vpop.permute.xlu0 %2113
    %2115 = vrot.lane.b32.xlu0 %v2086, 6
    %v2116 = vpop.permute.xlu0 %2115
    %2117 = vrot.lane.b32.xlu0 %v2088, 6
    %v2118 = vpop.permute.xlu0 %2117
    %2119 = vrot.lane.b32.xlu0 %v2090, 6
    %v2120 = vpop.permute.xlu0 %2119
    %2121 = vrot.lane.b32.xlu0 %v2092, 6
    %v2122 = vpop.permute.xlu0 %2121
    %2123 = vrot.lane.b32.xlu0 %v2094, 6
    %v2124 = vpop.permute.xlu0 %2123
    %2125 = vrot.lane.b32.xlu0 %v2096, 6
    %v2126 = vpop.permute.xlu0 %2125
    %2127 = vrot.lane.b32.xlu0 %v2098, 6
    %v2128 = vpop.permute.xlu0 %2127
    %2129 = vrot.lane.b32.xlu0 %v2100, 6
    %v2130 = vpop.permute.xlu0 %2129
    %2131 = vrot.lane.b32.xlu0 %v2102, 6
    %v2132 = vpop.permute.xlu0 %2131
    %2133 = vrot.lane.b32.xlu0 %v2104, 6
    %v2134 = vpop.permute.xlu0 %2133
    %v2150 = vrot.slane %v1542, 2
    %v2151 = vrot.slane %v1543, 2
    %v2152 = vsel %vm283, %v2150, %v2151
    %v2153 = vrot.slane %v1544, 2
    %v2154 = vsel %vm283, %v2151, %v2153
    %v2155 = vrot.slane %v1545, 2
    %v2156 = vsel %vm283, %v2153, %v2155
    %v2157 = vrot.slane %v1546, 2
    %v2158 = vsel %vm283, %v2155, %v2157
    %v2159 = vrot.slane %v1547, 2
    %v2160 = vsel %vm283, %v2157, %v2159
    %v2161 = vrot.slane %v1548, 2
    %v2162 = vsel %vm283, %v2159, %v2161
    %v2163 = vrot.slane %v1549, 2
    %v2164 = vsel %vm283, %v2161, %v2163
    %v2165 = vrot.slane %v1550, 2
    %v2166 = vsel %vm283, %v2163, %v2165
    %v2167 = vrot.slane %v1551, 2
    %v2168 = vsel %vm283, %v2165, %v2167
    %v2169 = vrot.slane %v1552, 2
    %v2170 = vsel %vm283, %v2167, %v2169
    %v2171 = vrot.slane %v1553, 2
    %v2172 = vsel %vm283, %v2169, %v2171
    %v2173 = vrot.slane %v1554, 2
    %v2174 = vsel %vm283, %v2171, %v2173
    %v2175 = vrot.slane %v1555, 2
    %v2176 = vsel %vm283, %v2173, %v2175
    %v2177 = vrot.slane %v1556, 2
    %v2178 = vsel %vm283, %v2175, %v2177
    %v2179 = vrot.slane %v1557, 2
    %v2180 = vsel %vm283, %v2177, %v2179
    %2181 = vrot.lane.b32.xlu0 %v2152, 12
    %v2182 = vpop.permute.xlu0 %2181
    %2183 = vrot.lane.b32.xlu0 %v2154, 12
    %v2184 = vpop.permute.xlu0 %2183
    %2185 = vrot.lane.b32.xlu0 %v2156, 12
    %v2186 = vpop.permute.xlu0 %2185
    %2187 = vrot.lane.b32.xlu0 %v2158, 12
    %v2188 = vpop.permute.xlu0 %2187
    %2189 = vrot.lane.b32.xlu0 %v2160, 12
    %v2190 = vpop.permute.xlu0 %2189
    %2191 = vrot.lane.b32.xlu0 %v2162, 12
    %v2192 = vpop.permute.xlu0 %2191
    %2193 = vrot.lane.b32.xlu0 %v2164, 12
    %v2194 = vpop.permute.xlu0 %2193
    %2195 = vrot.lane.b32.xlu0 %v2166, 12
    %v2196 = vpop.permute.xlu0 %2195
    %2197 = vrot.lane.b32.xlu0 %v2168, 12
    %v2198 = vpop.permute.xlu0 %2197
    %2199 = vrot.lane.b32.xlu0 %v2170, 12
    %v2200 = vpop.permute.xlu0 %2199
    %2201 = vrot.lane.b32.xlu0 %v2172, 12
    %v2202 = vpop.permute.xlu0 %2201
    %2203 = vrot.lane.b32.xlu0 %v2174, 12
    %v2204 = vpop.permute.xlu0 %2203
    %2205 = vrot.lane.b32.xlu0 %v2176, 12
    %v2206 = vpop.permute.xlu0 %2205
    %2207 = vrot.lane.b32.xlu0 %v2178, 12
    %v2208 = vpop.permute.xlu0 %2207
    %2209 = vrot.lane.b32.xlu0 %v2180, 12
    %v2210 = vpop.permute.xlu0 %2209
    %v2226 = vrot.slane %v1542, 3
    %v2227 = vrot.slane %v1543, 3
    %v2228 = vsel %vm363, %v2226, %v2227
    %v2229 = vrot.slane %v1544, 3
    %v2230 = vsel %vm363, %v2227, %v2229
    %v2231 = vrot.slane %v1545, 3
    %v2232 = vsel %vm363, %v2229, %v2231
    %v2233 = vrot.slane %v1546, 3
    %v2234 = vsel %vm363, %v2231, %v2233
    %v2235 = vrot.slane %v1547, 3
    %v2236 = vsel %vm363, %v2233, %v2235
    %v2237 = vrot.slane %v1548, 3
    %v2238 = vsel %vm363, %v2235, %v2237
    %v2239 = vrot.slane %v1549, 3
    %v2240 = vsel %vm363, %v2237, %v2239
    %v2241 = vrot.slane %v1550, 3
    %v2242 = vsel %vm363, %v2239, %v2241
    %v2243 = vrot.slane %v1551, 3
    %v2244 = vsel %vm363, %v2241, %v2243
    %v2245 = vrot.slane %v1552, 3
    %v2246 = vsel %vm363, %v2243, %v2245
    %v2247 = vrot.slane %v1553, 3
    %v2248 = vsel %vm363, %v2245, %v2247
    %v2249 = vrot.slane %v1554, 3
    %v2250 = vsel %vm363, %v2247, %v2249
    %v2251 = vrot.slane %v1555, 3
    %v2252 = vsel %vm363, %v2249, %v2251
    %v2253 = vrot.slane %v1556, 3
    %v2254 = vsel %vm363, %v2251, %v2253
    %v2255 = vrot.slane %v1557, 3
    %v2256 = vsel %vm363, %v2253, %v2255
    %2257 = vrot.lane.b32.xlu0 %v2228, 18
    %v2258 = vpop.permute.xlu0 %2257
    %2259 = vrot.lane.b32.xlu0 %v2230, 18
    %v2260 = vpop.permute.xlu0 %2259
    %2261 = vrot.lane.b32.xlu0 %v2232, 18
    %v2262 = vpop.permute.xlu0 %2261
    %2263 = vrot.lane.b32.xlu0 %v2234, 18
    %v2264 = vpop.permute.xlu0 %2263
    %2265 = vrot.lane.b32.xlu0 %v2236, 18
    %v2266 = vpop.permute.xlu0 %2265
    %2267 = vrot.lane.b32.xlu0 %v2238, 18
    %v2268 = vpop.permute.xlu0 %2267
    %2269 = vrot.lane.b32.xlu0 %v2240, 18
    %v2270 = vpop.permute.xlu0 %2269
    %2271 = vrot.lane.b32.xlu0 %v2242, 18
    %v2272 = vpop.permute.xlu0 %2271
    %2273 = vrot.lane.b32.xlu0 %v2244, 18
    %v2274 = vpop.permute.xlu0 %2273
    %2275 = vrot.lane.b32.xlu0 %v2246, 18
    %v2276 = vpop.permute.xlu0 %2275
    %2277 = vrot.lane.b32.xlu0 %v2248, 18
    %v2278 = vpop.permute.xlu0 %2277
    %2279 = vrot.lane.b32.xlu0 %v2250, 18
    %v2280 = vpop.permute.xlu0 %2279
    %2281 = vrot.lane.b32.xlu0 %v2252, 18
    %v2282 = vpop.permute.xlu0 %2281
    %2283 = vrot.lane.b32.xlu0 %v2254, 18
    %v2284 = vpop.permute.xlu0 %2283
    %2285 = vrot.lane.b32.xlu0 %v2256, 18
    %v2286 = vpop.permute.xlu0 %2285
    %v2302 = vrot.slane %v1542, 4
    %v2303 = vrot.slane %v1543, 4
    %v2304 = vsel %vm443, %v2302, %v2303
    %v2305 = vrot.slane %v1544, 4
    %v2306 = vsel %vm443, %v2303, %v2305
    %v2307 = vrot.slane %v1545, 4
    %v2308 = vsel %vm443, %v2305, %v2307
    %v2309 = vrot.slane %v1546, 4
    %v2310 = vsel %vm443, %v2307, %v2309
    %v2311 = vrot.slane %v1547, 4
    %v2312 = vsel %vm443, %v2309, %v2311
    %v2313 = vrot.slane %v1548, 4
    %v2314 = vsel %vm443, %v2311, %v2313
    %v2315 = vrot.slane %v1549, 4
    %v2316 = vsel %vm443, %v2313, %v2315
    %v2317 = vrot.slane %v1550, 4
    %v2318 = vsel %vm443, %v2315, %v2317
    %v2319 = vrot.slane %v1551, 4
    %v2320 = vsel %vm443, %v2317, %v2319
    %v2321 = vrot.slane %v1552, 4
    %v2322 = vsel %vm443, %v2319, %v2321
    %v2323 = vrot.slane %v1553, 4
    %v2324 = vsel %vm443, %v2321, %v2323
    %v2325 = vrot.slane %v1554, 4
    %v2326 = vsel %vm443, %v2323, %v2325
    %v2327 = vrot.slane %v1555, 4
    %v2328 = vsel %vm443, %v2325, %v2327
    %v2329 = vrot.slane %v1556, 4
    %v2330 = vsel %vm443, %v2327, %v2329
    %v2331 = vrot.slane %v1557, 4
    %v2332 = vsel %vm443, %v2329, %v2331
    %2333 = vrot.lane.b32.xlu0 %v2304, 24
    %v2334 = vpop.permute.xlu0 %2333
    %2335 = vrot.lane.b32.xlu0 %v2306, 24
    %v2336 = vpop.permute.xlu0 %2335
    %2337 = vrot.lane.b32.xlu0 %v2308, 24
    %v2338 = vpop.permute.xlu0 %2337
    %2339 = vrot.lane.b32.xlu0 %v2310, 24
    %v2340 = vpop.permute.xlu0 %2339
    %2341 = vrot.lane.b32.xlu0 %v2312, 24
    %v2342 = vpop.permute.xlu0 %2341
    %2343 = vrot.lane.b32.xlu0 %v2314, 24
    %v2344 = vpop.permute.xlu0 %2343
    %2345 = vrot.lane.b32.xlu0 %v2316, 24
    %v2346 = vpop.permute.xlu0 %2345
    %2347 = vrot.lane.b32.xlu0 %v2318, 24
    %v2348 = vpop.permute.xlu0 %2347
    %2349 = vrot.lane.b32.xlu0 %v2320, 24
    %v2350 = vpop.permute.xlu0 %2349
    %2351 = vrot.lane.b32.xlu0 %v2322, 24
    %v2352 = vpop.permute.xlu0 %2351
    %2353 = vrot.lane.b32.xlu0 %v2324, 24
    %v2354 = vpop.permute.xlu0 %2353
    %2355 = vrot.lane.b32.xlu0 %v2326, 24
    %v2356 = vpop.permute.xlu0 %2355
    %2357 = vrot.lane.b32.xlu0 %v2328, 24
    %v2358 = vpop.permute.xlu0 %2357
    %2359 = vrot.lane.b32.xlu0 %v2330, 24
    %v2360 = vpop.permute.xlu0 %2359
    %2361 = vrot.lane.b32.xlu0 %v2332, 24
    %v2362 = vpop.permute.xlu0 %2361
    %v2378 = vsel %vm523, %v1542, %v2106
    %v2379 = vsel %vm523, %v1543, %v2108
    %v2380 = vsel %vm523, %v1544, %v2110
    %v2381 = vsel %vm523, %v1545, %v2112
    %v2382 = vsel %vm523, %v1546, %v2114
    %v2383 = vsel %vm523, %v1547, %v2116
    %v2384 = vsel %vm523, %v1548, %v2118
    %v2385 = vsel %vm523, %v1549, %v2120
    %v2386 = vsel %vm523, %v1550, %v2122
    %v2387 = vsel %vm523, %v1551, %v2124
    %v2388 = vsel %vm523, %v1552, %v2126
    %v2389 = vsel %vm523, %v1553, %v2128
    %v2390 = vsel %vm523, %v1554, %v2130
    %v2391 = vsel %vm523, %v1555, %v2132
    %v2392 = vsel %vm523, %v1556, %v2134
    %v2393 = vsel %vm540, %v2378, %v2182
    %v2394 = vsel %vm540, %v2379, %v2184
    %v2395 = vsel %vm540, %v2380, %v2186
    %v2396 = vsel %vm540, %v2381, %v2188
    %v2397 = vsel %vm540, %v2382, %v2190
    %v2398 = vsel %vm540, %v2383, %v2192
    %v2399 = vsel %vm540, %v2384, %v2194
    %v2400 = vsel %vm540, %v2385, %v2196
    %v2401 = vsel %vm540, %v2386, %v2198
    %v2402 = vsel %vm540, %v2387, %v2200
    %v2403 = vsel %vm540, %v2388, %v2202
    %v2404 = vsel %vm540, %v2389, %v2204
    %v2405 = vsel %vm540, %v2390, %v2206
    %v2406 = vsel %vm540, %v2391, %v2208
    %v2407 = vsel %vm540, %v2392, %v2210
    %v2408 = vsel %vm557, %v2393, %v2258
    %v2409 = vsel %vm557, %v2394, %v2260
    %v2410 = vsel %vm557, %v2395, %v2262
    %v2411 = vsel %vm557, %v2396, %v2264
    %v2412 = vsel %vm557, %v2397, %v2266
    %v2413 = vsel %vm557, %v2398, %v2268
    %v2414 = vsel %vm557, %v2399, %v2270
    %v2415 = vsel %vm557, %v2400, %v2272
    %v2416 = vsel %vm557, %v2401, %v2274
    %v2417 = vsel %vm557, %v2402, %v2276
    %v2418 = vsel %vm557, %v2403, %v2278
    %v2419 = vsel %vm557, %v2404, %v2280
    %v2420 = vsel %vm557, %v2405, %v2282
    %v2421 = vsel %vm557, %v2406, %v2284
    %v2422 = vsel %vm557, %v2407, %v2286
    %v2423 = vsel %vm574, %v2408, %v2334
    %v2424 = vsel %vm574, %v2409, %v2336
    %v2425 = vsel %vm574, %v2410, %v2338
    %v2426 = vsel %vm574, %v2411, %v2340
    %v2427 = vsel %vm574, %v2412, %v2342
    %v2428 = vsel %vm574, %v2413, %v2344
    %v2429 = vsel %vm574, %v2414, %v2346
    %v2430 = vsel %vm574, %v2415, %v2348
    %v2431 = vsel %vm574, %v2416, %v2350
    %v2432 = vsel %vm574, %v2417, %v2352
    %v2433 = vsel %vm574, %v2418, %v2354
    %v2434 = vsel %vm574, %v2419, %v2356
    %v2435 = vsel %vm574, %v2420, %v2358
    %v2436 = vsel %vm574, %v2421, %v2360
    %v2437 = vsel %vm574, %v2422, %v2362
    %v2439 = vsel %vm594, %v2423, 0
    %v2442 = vsel %vm594, %v2424, 0
    %v2445 = vsel %vm594, %v2425, 0
    %v2448 = vsel %vm594, %v2426, 0
    %v2451 = vsel %vm594, %v2427, 0
    %v2454 = vsel %vm594, %v2428, 0
    %v2457 = vsel %vm594, %v2429, 0
    %v2460 = vsel %vm594, %v2430, 0
    %v2463 = vsel %vm594, %v2431, 0
    %v2466 = vsel %vm594, %v2432, 0
    %v2469 = vsel %vm594, %v2433, 0
    %v2472 = vsel %vm594, %v2434, 0
    %v2475 = vsel %vm594, %v2435, 0
    %v2478 = vsel %vm594, %v2436, 0
    %v2481 = vsel %vm594, %v2437, 0
    %2483 = vmatpush.msra.mxu0 0.0
    %2484 = vmatpush.msra.mxu0 0.0
    %2485 = vmatpush.msra.mxu0 0.0
    %2486 = vmatpush.msra.mxu0 0.0
    %2487 = vmatpush.msra.mxu0 0.0
    %2488 = vmatpush.msra.mxu0 0.0
    %2489 = vmatpush.msra.mxu0 0.0
    %2490 = vmatpush.msra.mxu0 0.0
    %2491 = vmatpush.msra.mxu0 0.0
    %2492 = vmatpush.msra.mxu0 0.0
    %2493 = vmatpush.msra.mxu0 0.0
    %2494 = vmatpush.msra.mxu0 0.0
    %2495 = vmatpush.msra.mxu0 %v1994
    %2496 = vmatpush.msra.mxu0 %v1560
    %2497 = vmatpush.msra.mxu0 %v1559
    %2498 = vmatpush.msra.mxu0 %v1558
    %2499 = vmatmul.f32.gmra.mxu0 %v2439
    %v2500 = vpop.f32.mrf.mxu0
    %v2501 = vadd.f32 %v1946, %v2500
    %2502 = vmatmul.f32.gmra.mxu0 %v2442
    %v2503 = vpop.f32.mrf.mxu0
    %v2504 = vadd.f32 %v1946, %v2503
    %2505 = vmatmul.f32.gmra.mxu0 %v2445
    %v2506 = vpop.f32.mrf.mxu0
    %v2507 = vadd.f32 %v1946, %v2506
    %2508 = vmatmul.f32.gmra.mxu0 %v2448
    %v2509 = vpop.f32.mrf.mxu0
    %v2510 = vadd.f32 %v1946, %v2509
    %2511 = vmatmul.f32.gmra.mxu0 %v2451
    %v2512 = vpop.f32.mrf.mxu0
    %v2513 = vadd.f32 %v1946, %v2512
    %2514 = vmatmul.f32.gmra.mxu0 %v2454
    %v2515 = vpop.f32.mrf.mxu0
    %v2516 = vadd.f32 %v1946, %v2515
    %2517 = vmatmul.f32.gmra.mxu0 %v2457
    %v2518 = vpop.f32.mrf.mxu0
    %v2519 = vadd.f32 %v1946, %v2518
    %2520 = vmatmul.f32.gmra.mxu0 %v2460
    %v2521 = vpop.f32.mrf.mxu0
    %v2522 = vadd.f32 %v1946, %v2521
    %2523 = vmatmul.f32.gmra.mxu0 %v2463
    %v2524 = vpop.f32.mrf.mxu0
    %v2525 = vadd.f32 %v1946, %v2524
    %2526 = vmatmul.f32.gmra.mxu0 %v2466
    %v2527 = vpop.f32.mrf.mxu0
    %v2528 = vadd.f32 %v1946, %v2527
    %2529 = vmatmul.f32.gmra.mxu0 %v2469
    %v2530 = vpop.f32.mrf.mxu0
    %v2531 = vadd.f32 %v1946, %v2530
    %2532 = vmatmul.f32.gmra.mxu0 %v2472
    %v2533 = vpop.f32.mrf.mxu0
    %v2534 = vadd.f32 %v1946, %v2533
    %2535 = vmatmul.f32.gmra.mxu0 %v2475
    %v2536 = vpop.f32.mrf.mxu0
    %v2537 = vadd.f32 %v1946, %v2536
    %2538 = vmatmul.f32.gmra.mxu0 %v2478
    %v2539 = vpop.f32.mrf.mxu0
    %v2540 = vadd.f32 %v1946, %v2539
    %2541 = vmatmul.f32.gmra.mxu0 %v2481
    %v2542 = vpop.f32.mrf.mxu0
    %v2543 = vadd.f32 %v1946, %v2542
    %2544 = vdwg.mxu0
    %v2545 = vsel %vm523, %v2014, 0.0
    %v2546 = vsel %vm523, %v2017, 0.0
    %v2547 = vadd.f32 %v2545, %v2546
    %v2548 = vsel %vm523, %v2020, 0.0
    %v2549 = vadd.f32 %v2547, %v2548
    %v2550 = vsel %vm523, %v2023, 0.0
    %v2551 = vadd.f32 %v2549, %v2550
    %v2552 = vsel %vm523, %v2026, 0.0
    %v2553 = vadd.f32 %v2551, %v2552
    %v2554 = vsel %vm523, %v2029, 0.0
    %v2555 = vadd.f32 %v2553, %v2554
    %v2556 = vsel %vm523, %v2032, 0.0
    %v2557 = vadd.f32 %v2555, %v2556
    %v2558 = vsel %vm523, %v2035, 0.0
    %v2559 = vadd.f32 %v2557, %v2558
    %v2560 = vsel %vm523, %v2038, 0.0
    %v2561 = vadd.f32 %v2559, %v2560
    %v2562 = vsel %vm523, %v2041, 0.0
    %v2563 = vadd.f32 %v2561, %v2562
    %v2564 = vsel %vm523, %v2044, 0.0
    %v2565 = vadd.f32 %v2563, %v2564
    %v2566 = vsel %vm523, %v2047, 0.0
    %v2567 = vadd.f32 %v2565, %v2566
    %v2568 = vsel %vm523, %v2050, 0.0
    %v2569 = vadd.f32 %v2567, %v2568
    %v2570 = vsel %vm523, %v2053, 0.0
    %v2571 = vadd.f32 %v2569, %v2570
    %v2572 = vsel %vm523, %v2056, 0.0
    %v2573 = vadd.f32 %v2571, %v2572
    %v2574 = vrot.slane %v2573, 4
    %v2575 = vadd.f32 %v2573, %v2574
    %v2576 = vrot.slane %v2575, 2
    %v2577 = vadd.f32 %v2575, %v2576
    %v2578 = vrot.slane %v2577, 1
    %v2579 = vadd.f32 %v2577, %v2578
    %v2580 = vadd.f32 %v2579, 0.0
    %v2581 = vsel %vm523, %v2501, 0.0
    %v2582 = vsel %vm523, %v2504, 0.0
    %v2583 = vadd.f32 %v2581, %v2582
    %v2584 = vsel %vm523, %v2507, 0.0
    %v2585 = vadd.f32 %v2583, %v2584
    %v2586 = vsel %vm523, %v2510, 0.0
    %v2587 = vadd.f32 %v2585, %v2586
    %v2588 = vsel %vm523, %v2513, 0.0
    %v2589 = vadd.f32 %v2587, %v2588
    %v2590 = vsel %vm523, %v2516, 0.0
    %v2591 = vadd.f32 %v2589, %v2590
    %v2592 = vsel %vm523, %v2519, 0.0
    %v2593 = vadd.f32 %v2591, %v2592
    %v2594 = vsel %vm523, %v2522, 0.0
    %v2595 = vadd.f32 %v2593, %v2594
    %v2596 = vsel %vm523, %v2525, 0.0
    %v2597 = vadd.f32 %v2595, %v2596
    %v2598 = vsel %vm523, %v2528, 0.0
    %v2599 = vadd.f32 %v2597, %v2598
    %v2600 = vsel %vm523, %v2531, 0.0
    %v2601 = vadd.f32 %v2599, %v2600
    %v2602 = vsel %vm523, %v2534, 0.0
    %v2603 = vadd.f32 %v2601, %v2602
    %v2604 = vsel %vm523, %v2537, 0.0
    %v2605 = vadd.f32 %v2603, %v2604
    %v2606 = vsel %vm523, %v2540, 0.0
    %v2607 = vadd.f32 %v2605, %v2606
    %v2608 = vsel %vm523, %v2543, 0.0
    %v2609 = vadd.f32 %v2607, %v2608
    %v2610 = vrot.slane %v2609, 4
    %v2611 = vadd.f32 %v2609, %v2610
    %v2612 = vrot.slane %v2611, 2
    %v2613 = vadd.f32 %v2611, %v2612
    %v2614 = vrot.slane %v2613, 1
    %v2615 = vadd.f32 %v2613, %v2614
    %v2616 = vadd.f32 %v2580, %v2615
    %v2617 = vrcp.pop 240.0
    %v2618 = vmul.f32 240.0, %v2617
    %v2619 = vsub.f32 1.0, %v2618
    %v2620 = vmul.f32 %v2617, %v2619
    %v2621 = vadd.f32 %v2617, %v2620
    %vm2622 = vweird.f32 %v2617
    %v2623 = vsel %vm2622, %v2617, %v2621
    %v2624 = vmul.f32 %v2616, %v2623
    %v2625 = vsub.f32 %v2014, %v2624
    %v2626 = vsub.f32 %v2017, %v2624
    %v2627 = vsub.f32 %v2020, %v2624
    %v2628 = vsub.f32 %v2023, %v2624
    %v2629 = vsub.f32 %v2026, %v2624
    %v2630 = vsub.f32 %v2029, %v2624
    %v2631 = vsub.f32 %v2032, %v2624
    %v2632 = vsub.f32 %v2035, %v2624
    %v2633 = vsub.f32 %v2038, %v2624
    %v2634 = vsub.f32 %v2041, %v2624
    %v2635 = vsub.f32 %v2044, %v2624
    %v2636 = vsub.f32 %v2047, %v2624
    %v2637 = vsub.f32 %v2050, %v2624
    %v2638 = vsub.f32 %v2053, %v2624
    %v2639 = vsub.f32 %v2056, %v2624
    %v2640 = vmul.f32 %v2625, %v2625
    %v2641 = vmul.f32 %v2626, %v2626
    %v2642 = vmul.f32 %v2627, %v2627
    %v2643 = vmul.f32 %v2628, %v2628
    %v2644 = vmul.f32 %v2629, %v2629
    %v2645 = vmul.f32 %v2630, %v2630
    %v2646 = vmul.f32 %v2631, %v2631
    %v2647 = vmul.f32 %v2632, %v2632
    %v2648 = vmul.f32 %v2633, %v2633
    %v2649 = vmul.f32 %v2634, %v2634
    %v2650 = vmul.f32 %v2635, %v2635
    %v2651 = vmul.f32 %v2636, %v2636
    %v2652 = vmul.f32 %v2637, %v2637
    %v2653 = vmul.f32 %v2638, %v2638
    %v2654 = vmul.f32 %v2639, %v2639
    %v2655 = vsel %vm523, %v2640, 0.0
    %v2656 = vsel %vm523, %v2641, 0.0
    %v2657 = vadd.f32 %v2655, %v2656
    %v2658 = vsel %vm523, %v2642, 0.0
    %v2659 = vadd.f32 %v2657, %v2658
    %v2660 = vsel %vm523, %v2643, 0.0
    %v2661 = vadd.f32 %v2659, %v2660
    %v2662 = vsel %vm523, %v2644, 0.0
    %v2663 = vadd.f32 %v2661, %v2662
    %v2664 = vsel %vm523, %v2645, 0.0
    %v2665 = vadd.f32 %v2663, %v2664
    %v2666 = vsel %vm523, %v2646, 0.0
    %v2667 = vadd.f32 %v2665, %v2666
    %v2668 = vsel %vm523, %v2647, 0.0
    %v2669 = vadd.f32 %v2667, %v2668
    %v2670 = vsel %vm523, %v2648, 0.0
    %v2671 = vadd.f32 %v2669, %v2670
    %v2672 = vsel %vm523, %v2649, 0.0
    %v2673 = vadd.f32 %v2671, %v2672
    %v2674 = vsel %vm523, %v2650, 0.0
    %v2675 = vadd.f32 %v2673, %v2674
    %v2676 = vsel %vm523, %v2651, 0.0
    %v2677 = vadd.f32 %v2675, %v2676
    %v2678 = vsel %vm523, %v2652, 0.0
    %v2679 = vadd.f32 %v2677, %v2678
    %v2680 = vsel %vm523, %v2653, 0.0
    %v2681 = vadd.f32 %v2679, %v2680
    %v2682 = vsel %vm523, %v2654, 0.0
    %v2683 = vadd.f32 %v2681, %v2682
    %v2684 = vrot.slane %v2683, 4
    %v2685 = vadd.f32 %v2683, %v2684
    %v2686 = vrot.slane %v2685, 2
    %v2687 = vadd.f32 %v2685, %v2686
    %v2688 = vrot.slane %v2687, 1
    %v2689 = vadd.f32 %v2687, %v2688
    %v2690 = vadd.f32 %v2689, 0.0
    %v2691 = vsub.f32 %v2501, %v2624
    %v2692 = vsub.f32 %v2504, %v2624
    %v2693 = vsub.f32 %v2507, %v2624
    %v2694 = vsub.f32 %v2510, %v2624
    %v2695 = vsub.f32 %v2513, %v2624
    %v2696 = vsub.f32 %v2516, %v2624
    %v2697 = vsub.f32 %v2519, %v2624
    %v2698 = vsub.f32 %v2522, %v2624
    %v2699 = vsub.f32 %v2525, %v2624
    %v2700 = vsub.f32 %v2528, %v2624
    %v2701 = vsub.f32 %v2531, %v2624
    %v2702 = vsub.f32 %v2534, %v2624
    %v2703 = vsub.f32 %v2537, %v2624
    %v2704 = vsub.f32 %v2540, %v2624
    %v2705 = vsub.f32 %v2543, %v2624
    %v2706 = vmul.f32 %v2691, %v2691
    %v2707 = vmul.f32 %v2692, %v2692
    %v2708 = vmul.f32 %v2693, %v2693
    %v2709 = vmul.f32 %v2694, %v2694
    %v2710 = vmul.f32 %v2695, %v2695
    %v2711 = vmul.f32 %v2696, %v2696
    %v2712 = vmul.f32 %v2697, %v2697
    %v2713 = vmul.f32 %v2698, %v2698
    %v2714 = vmul.f32 %v2699, %v2699
    %v2715 = vmul.f32 %v2700, %v2700
    %v2716 = vmul.f32 %v2701, %v2701
    %v2717 = vmul.f32 %v2702, %v2702
    %v2718 = vmul.f32 %v2703, %v2703
    %v2719 = vmul.f32 %v2704, %v2704
    %v2720 = vmul.f32 %v2705, %v2705
    %v2721 = vsel %vm523, %v2706, 0.0
    %v2722 = vsel %vm523, %v2707, 0.0
    %v2723 = vadd.f32 %v2721, %v2722
    %v2724 = vsel %vm523, %v2708, 0.0
    %v2725 = vadd.f32 %v2723, %v2724
    %v2726 = vsel %vm523, %v2709, 0.0
    %v2727 = vadd.f32 %v2725, %v2726
    %v2728 = vsel %vm523, %v2710, 0.0
    %v2729 = vadd.f32 %v2727, %v2728
    %v2730 = vsel %vm523, %v2711, 0.0
    %v2731 = vadd.f32 %v2729, %v2730
    %v2732 = vsel %vm523, %v2712, 0.0
    %v2733 = vadd.f32 %v2731, %v2732
    %v2734 = vsel %vm523, %v2713, 0.0
    %v2735 = vadd.f32 %v2733, %v2734
    %v2736 = vsel %vm523, %v2714, 0.0
    %v2737 = vadd.f32 %v2735, %v2736
    %v2738 = vsel %vm523, %v2715, 0.0
    %v2739 = vadd.f32 %v2737, %v2738
    %v2740 = vsel %vm523, %v2716, 0.0
    %v2741 = vadd.f32 %v2739, %v2740
    %v2742 = vsel %vm523, %v2717, 0.0
    %v2743 = vadd.f32 %v2741, %v2742
    %v2744 = vsel %vm523, %v2718, 0.0
    %v2745 = vadd.f32 %v2743, %v2744
    %v2746 = vsel %vm523, %v2719, 0.0
    %v2747 = vadd.f32 %v2745, %v2746
    %v2748 = vsel %vm523, %v2720, 0.0
    %v2749 = vadd.f32 %v2747, %v2748
    %v2750 = vrot.slane %v2749, 4
    %v2751 = vadd.f32 %v2749, %v2750
    %v2752 = vrot.slane %v2751, 2
    %v2753 = vadd.f32 %v2751, %v2752
    %v2754 = vrot.slane %v2753, 1
    %v2755 = vadd.f32 %v2753, %v2754
    %v2756 = vadd.f32 %v2690, %v2755
    %v2757 = vmul.f32 %v2756, %v2623
    %v2758 = vadd.f32 %v2757, 1e-05
    %v2759 = vrsqrt.pop %v2758
    %v2760 = vmul.f32 %v2759, %v2758
    %v2761 = vmul.f32 %v2760, %v2759
    %v2762 = vmul.f32 0.5, %v2761
    %v2763 = vsub.f32 1.5, %v2762
    %v2764 = vmul.f32 %v2759, %v2763
    %vm2765 = vweird.f32 %v2758
    %vm2766 = vweird.f32 %v2759
    %vm2767 = vmor %vm2765, %vm2766
    %v2768 = vsel %vm2767, %v2759, %v2764
    %v2769 = vmul.f32 %v2768, %v1563
    %v2770 = vperm.slane %v2769, 0
    %v2771 = vmul.f32 %v2625, %v2770
    %v2772 = vmul.f32 %v2626, %v2770
    %v2773 = vmul.f32 %v2627, %v2770
    %v2774 = vmul.f32 %v2628, %v2770
    %v2775 = vmul.f32 %v2629, %v2770
    %v2776 = vmul.f32 %v2630, %v2770
    %v2777 = vmul.f32 %v2631, %v2770
    %v2778 = vmul.f32 %v2632, %v2770
    %v2779 = vmul.f32 %v2633, %v2770
    %v2780 = vmul.f32 %v2634, %v2770
    %v2781 = vmul.f32 %v2635, %v2770
    %v2782 = vmul.f32 %v2636, %v2770
    %v2783 = vmul.f32 %v2637, %v2770
    %v2784 = vmul.f32 %v2638, %v2770
    %v2785 = vmul.f32 %v2639, %v2770
    %v2787 = vperm.slane %v1564, 0
    %v2789 = vadd.f32 %v2771, %v2787
    %v2790 = vadd.f32 %v2772, %v2787
    %v2791 = vadd.f32 %v2773, %v2787
    %v2792 = vadd.f32 %v2774, %v2787
    %v2793 = vadd.f32 %v2775, %v2787
    %v2794 = vadd.f32 %v2776, %v2787
    %v2795 = vadd.f32 %v2777, %v2787
    %v2796 = vadd.f32 %v2778, %v2787
    %v2797 = vadd.f32 %v2779, %v2787
    %v2798 = vadd.f32 %v2780, %v2787
    %v2799 = vadd.f32 %v2781, %v2787
    %v2800 = vadd.f32 %v2782, %v2787
    %v2801 = vadd.f32 %v2783, %v2787
    %v2802 = vadd.f32 %v2784, %v2787
    %v2803 = vadd.f32 %v2785, %v2787
    %v2804 = vmax.f32 %v2789, 0.0
    %v2805 = vmax.f32 %v2790, 0.0
    %v2806 = vmax.f32 %v2791, 0.0
    %v2807 = vmax.f32 %v2792, 0.0
    %v2808 = vmax.f32 %v2793, 0.0
    %v2809 = vmax.f32 %v2794, 0.0
    %v2810 = vmax.f32 %v2795, 0.0
    %v2811 = vmax.f32 %v2796, 0.0
    %v2812 = vmax.f32 %v2797, 0.0
    %v2813 = vmax.f32 %v2798, 0.0
    %v2814 = vmax.f32 %v2799, 0.0
    %v2815 = vmax.f32 %v2800, 0.0
    %v2816 = vmax.f32 %v2801, 0.0
    %v2817 = vmax.f32 %v2802, 0.0
    %v2818 = vmax.f32 %v2803, 0.0
    %v2819 = vmul.f32 %v2691, %v2770
    %v2820 = vmul.f32 %v2692, %v2770
    %v2821 = vmul.f32 %v2693, %v2770
    %v2822 = vmul.f32 %v2694, %v2770
    %v2823 = vmul.f32 %v2695, %v2770
    %v2824 = vmul.f32 %v2696, %v2770
    %v2825 = vmul.f32 %v2697, %v2770
    %v2826 = vmul.f32 %v2698, %v2770
    %v2827 = vmul.f32 %v2699, %v2770
    %v2828 = vmul.f32 %v2700, %v2770
    %v2829 = vmul.f32 %v2701, %v2770
    %v2830 = vmul.f32 %v2702, %v2770
    %v2831 = vmul.f32 %v2703, %v2770
    %v2832 = vmul.f32 %v2704, %v2770
    %v2833 = vmul.f32 %v2705, %v2770
    %v2834 = vadd.f32 %v2819, %v2787
    %v2835 = vadd.f32 %v2820, %v2787
    %v2836 = vadd.f32 %v2821, %v2787
    %v2837 = vadd.f32 %v2822, %v2787
    %v2838 = vadd.f32 %v2823, %v2787
    %v2839 = vadd.f32 %v2824, %v2787
    %v2840 = vadd.f32 %v2825, %v2787
    %v2841 = vadd.f32 %v2826, %v2787
    %v2842 = vadd.f32 %v2827, %v2787
    %v2843 = vadd.f32 %v2828, %v2787
    %v2844 = vadd.f32 %v2829, %v2787
    %v2845 = vadd.f32 %v2830, %v2787
    %v2846 = vadd.f32 %v2831, %v2787
    %v2847 = vadd.f32 %v2832, %v2787
    %v2848 = vadd.f32 %v2833, %v2787
    %v2849 = vmax.f32 %v2834, 0.0
    %v2850 = vmax.f32 %v2835, 0.0
    %v2851 = vmax.f32 %v2836, 0.0
    %v2852 = vmax.f32 %v2837, 0.0
    %v2853 = vmax.f32 %v2838, 0.0
    %v2854 = vmax.f32 %v2839, 0.0
    %v2855 = vmax.f32 %v2840, 0.0
    %v2856 = vmax.f32 %v2841, 0.0
    %v2857 = vmax.f32 %v2842, 0.0
    %v2858 = vmax.f32 %v2843, 0.0
    %v2859 = vmax.f32 %v2844, 0.0
    %v2860 = vmax.f32 %v2845, 0.0
    %v2861 = vmax.f32 %v2846, 0.0
    %v2862 = vmax.f32 %v2847, 0.0
    %v2863 = vmax.f32 %v2848, 0.0
    %v2864 = vld [vmem:[#allocation12] sm:$0x3f]
    %v2865 = vld [vmem:[#allocation13] sm:$0x1]
    %v2867 = vperm.slane %v2865, 0
    %v2870 = vsel %vm523, %v2804, 0
    %v2873 = vsel %vm523, %v2805, 0
    %v2876 = vsel %vm523, %v2806, 0
    %v2879 = vsel %vm523, %v2807, 0
    %v2882 = vsel %vm523, %v2808, 0
    %v2885 = vsel %vm523, %v2809, 0
    %v2888 = vsel %vm523, %v2810, 0
    %v2891 = vsel %vm523, %v2811, 0
    %v2894 = vsel %vm523, %v2812, 0
    %v2897 = vsel %vm523, %v2813, 0
    %v2900 = vsel %vm523, %v2814, 0
    %v2903 = vsel %vm523, %v2815, 0
    %v2906 = vsel %vm523, %v2816, 0
    %v2909 = vsel %vm523, %v2817, 0
    %v2912 = vsel %vm523, %v2818, 0
    %v2915 = vsel %vm283, %v2864, 0
    %2917 = vmatpush.msra.mxu0 0.0
    %2918 = vmatpush.msra.mxu0 0.0
    %2919 = vmatpush.msra.mxu0 0.0
    %2920 = vmatpush.msra.mxu0 0.0
    %2921 = vmatpush.msra.mxu0 0.0
    %2922 = vmatpush.msra.mxu0 0.0
    %2923 = vmatpush.msra.mxu0 0.0
    %2924 = vmatpush.msra.mxu0 0.0
    %2925 = vmatpush.msra.mxu0 0.0
    %2926 = vmatpush.msra.mxu0 0.0
    %2927 = vmatpush.msra.mxu0 0.0
    %2928 = vmatpush.msra.mxu0 0.0
    %2929 = vmatpush.msra.mxu0 0.0
    %2930 = vmatpush.msra.mxu0 0.0
    %2931 = vmatpush.msra.mxu0 0.0
    %2932 = vmatpush.msra.mxu0 %v2915
    %2933 = vmatmul.f32.gmra.mxu0 %v2870
    %v2934 = vpop.f32.mrf.mxu0
    %v2935 = vadd.f32 %v2867, %v2934
    %2936 = vmatmul.f32.gmra.mxu0 %v2873
    %v2937 = vpop.f32.mrf.mxu0
    %v2938 = vadd.f32 %v2867, %v2937
    %2939 = vmatmul.f32.gmra.mxu0 %v2876
    %v2940 = vpop.f32.mrf.mxu0
    %v2941 = vadd.f32 %v2867, %v2940
    %2942 = vmatmul.f32.gmra.mxu0 %v2879
    %v2943 = vpop.f32.mrf.mxu0
    %v2944 = vadd.f32 %v2867, %v2943
    %2945 = vmatmul.f32.gmra.mxu0 %v2882
    %v2946 = vpop.f32.mrf.mxu0
    %v2947 = vadd.f32 %v2867, %v2946
    %2948 = vmatmul.f32.gmra.mxu0 %v2885
    %v2949 = vpop.f32.mrf.mxu0
    %v2950 = vadd.f32 %v2867, %v2949
    %2951 = vmatmul.f32.gmra.mxu0 %v2888
    %v2952 = vpop.f32.mrf.mxu0
    %v2953 = vadd.f32 %v2867, %v2952
    %2954 = vmatmul.f32.gmra.mxu0 %v2891
    %v2955 = vpop.f32.mrf.mxu0
    %v2956 = vadd.f32 %v2867, %v2955
    %2957 = vmatmul.f32.gmra.mxu0 %v2894
    %v2958 = vpop.f32.mrf.mxu0
    %v2959 = vadd.f32 %v2867, %v2958
    %2960 = vmatmul.f32.gmra.mxu0 %v2897
    %v2961 = vpop.f32.mrf.mxu0
    %v2962 = vadd.f32 %v2867, %v2961
    %2963 = vmatmul.f32.gmra.mxu0 %v2900
    %v2964 = vpop.f32.mrf.mxu0
    %v2965 = vadd.f32 %v2867, %v2964
    %2966 = vmatmul.f32.gmra.mxu0 %v2903
    %v2967 = vpop.f32.mrf.mxu0
    %v2968 = vadd.f32 %v2867, %v2967
    %2969 = vmatmul.f32.gmra.mxu0 %v2906
    %v2970 = vpop.f32.mrf.mxu0
    %v2971 = vadd.f32 %v2867, %v2970
    %2972 = vmatmul.f32.gmra.mxu0 %v2909
    %v2973 = vpop.f32.mrf.mxu0
    %v2974 = vadd.f32 %v2867, %v2973
    %2975 = vmatmul.f32.gmra.mxu0 %v2912
    %v2976 = vpop.f32.mrf.mxu0
    %v2977 = vadd.f32 %v2867, %v2976
    %2978 = vdwg.mxu0
    %v2979 = vmax.f32 %v2935, 0.0
    %v2980 = vmax.f32 %v2938, 0.0
    %v2981 = vmax.f32 %v2941, 0.0
    %v2982 = vmax.f32 %v2944, 0.0
    %v2983 = vmax.f32 %v2947, 0.0
    %v2984 = vmax.f32 %v2950, 0.0
    %v2985 = vmax.f32 %v2953, 0.0
    %v2986 = vmax.f32 %v2956, 0.0
    %v2987 = vmax.f32 %v2959, 0.0
    %v2988 = vmax.f32 %v2962, 0.0
    %v2989 = vmax.f32 %v2965, 0.0
    %v2990 = vmax.f32 %v2968, 0.0
    %v2991 = vmax.f32 %v2971, 0.0
    %v2992 = vmax.f32 %v2974, 0.0
    %v2993 = vmax.f32 %v2977, 0.0
    %2994 = vst.msk [vmem:[%s11] sm:$0xff] %vm540, %v2979
    %2995 = vst.msk [vmem:[%s11 + $0x8] sm:$0xff] %vm540, %v2980
    %2996 = vst.msk [vmem:[%s11 + $0x10] sm:$0xff] %vm540, %v2981
    %2997 = vst.msk [vmem:[%s11 + $0x18] sm:$0xff] %vm540, %v2982
    %2998 = vst.msk [vmem:[%s11 + $0x20] sm:$0xff] %vm540, %v2983
    %2999 = vst.msk [vmem:[%s11 + $0x28] sm:$0xff] %vm540, %v2984
    %3000 = vst.msk [vmem:[%s11 + $0x30] sm:$0xff] %vm540, %v2985
    %3001 = vst.msk [vmem:[%s11 + $0x38] sm:$0xff] %vm540, %v2986
    %3002 = vst.msk [vmem:[%s11 + $0x40] sm:$0xff] %vm540, %v2987
    %3003 = vst.msk [vmem:[%s11 + $0x48] sm:$0xff] %vm540, %v2988
    %3004 = vst.msk [vmem:[%s11 + $0x50] sm:$0xff] %vm540, %v2989
    %3005 = vst.msk [vmem:[%s11 + $0x58] sm:$0xff] %vm540, %v2990
    %3006 = vst.msk [vmem:[%s11 + $0x60] sm:$0xff] %vm540, %v2991
    %3007 = vst.msk [vmem:[%s11 + $0x68] sm:$0xff] %vm540, %v2992
    %3008 = vst.msk [vmem:[%s11 + $0x70] sm:$0xff] %vm540, %v2993
    %v3010 = vsel %vm523, %v2849, 0
    %v3013 = vsel %vm523, %v2850, 0
    %v3016 = vsel %vm523, %v2851, 0
    %v3019 = vsel %vm523, %v2852, 0
    %v3022 = vsel %vm523, %v2853, 0
    %v3025 = vsel %vm523, %v2854, 0
    %v3028 = vsel %vm523, %v2855, 0
    %v3031 = vsel %vm523, %v2856, 0
    %v3034 = vsel %vm523, %v2857, 0
    %v3037 = vsel %vm523, %v2858, 0
    %v3040 = vsel %vm523, %v2859, 0
    %v3043 = vsel %vm523, %v2860, 0
    %v3046 = vsel %vm523, %v2861, 0
    %v3049 = vsel %vm523, %v2862, 0
    %v3052 = vsel %vm523, %v2863, 0
    %3054 = vmatpush.msra.mxu0 0.0
    %3055 = vmatpush.msra.mxu0 0.0
    %3056 = vmatpush.msra.mxu0 0.0
    %3057 = vmatpush.msra.mxu0 0.0
    %3058 = vmatpush.msra.mxu0 0.0
    %3059 = vmatpush.msra.mxu0 0.0
    %3060 = vmatpush.msra.mxu0 0.0
    %3061 = vmatpush.msra.mxu0 0.0
    %3062 = vmatpush.msra.mxu0 0.0
    %3063 = vmatpush.msra.mxu0 0.0
    %3064 = vmatpush.msra.mxu0 0.0
    %3065 = vmatpush.msra.mxu0 0.0
    %3066 = vmatpush.msra.mxu0 0.0
    %3067 = vmatpush.msra.mxu0 0.0
    %3068 = vmatpush.msra.mxu0 0.0
    %3069 = vmatpush.msra.mxu0 %v2915
    %3070 = vmatmul.f32.gmra.mxu0 %v3010
    %v3071 = vpop.f32.mrf.mxu0
    %v3072 = vadd.f32 %v2867, %v3071
    %3073 = vmatmul.f32.gmra.mxu0 %v3013
    %v3074 = vpop.f32.mrf.mxu0
    %v3075 = vadd.f32 %v2867, %v3074
    %3076 = vmatmul.f32.gmra.mxu0 %v3016
    %v3077 = vpop.f32.mrf.mxu0
    %v3078 = vadd.f32 %v2867, %v3077
    %3079 = vmatmul.f32.gmra.mxu0 %v3019
    %v3080 = vpop.f32.mrf.mxu0
    %v3081 = vadd.f32 %v2867, %v3080
    %3082 = vmatmul.f32.gmra.mxu0 %v3022
    %v3083 = vpop.f32.mrf.mxu0
    %v3084 = vadd.f32 %v2867, %v3083
    %3085 = vmatmul.f32.gmra.mxu0 %v3025
    %v3086 = vpop.f32.mrf.mxu0
    %v3087 = vadd.f32 %v2867, %v3086
    %3088 = vmatmul.f32.gmra.mxu0 %v3028
    %v3089 = vpop.f32.mrf.mxu0
    %v3090 = vadd.f32 %v2867, %v3089
    %3091 = vmatmul.f32.gmra.mxu0 %v3031
    %v3092 = vpop.f32.mrf.mxu0
    %v3093 = vadd.f32 %v2867, %v3092
    %3094 = vmatmul.f32.gmra.mxu0 %v3034
    %v3095 = vpop.f32.mrf.mxu0
    %v3096 = vadd.f32 %v2867, %v3095
    %3097 = vmatmul.f32.gmra.mxu0 %v3037
    %v3098 = vpop.f32.mrf.mxu0
    %v3099 = vadd.f32 %v2867, %v3098
    %3100 = vmatmul.f32.gmra.mxu0 %v3040
    %v3101 = vpop.f32.mrf.mxu0
    %v3102 = vadd.f32 %v2867, %v3101
    %3103 = vmatmul.f32.gmra.mxu0 %v3043
    %v3104 = vpop.f32.mrf.mxu0
    %v3105 = vadd.f32 %v2867, %v3104
    %3106 = vmatmul.f32.gmra.mxu0 %v3046
    %v3107 = vpop.f32.mrf.mxu0
    %v3108 = vadd.f32 %v2867, %v3107
    %3109 = vmatmul.f32.gmra.mxu0 %v3049
    %v3110 = vpop.f32.mrf.mxu0
    %v3111 = vadd.f32 %v2867, %v3110
    %3112 = vmatmul.f32.gmra.mxu0 %v3052
    %v3113 = vpop.f32.mrf.mxu0
    %v3114 = vadd.f32 %v2867, %v3113
    %3115 = vdwg.mxu0
    %v3116 = vmax.f32 %v3072, 0.0
    %v3117 = vmax.f32 %v3075, 0.0
    %v3118 = vmax.f32 %v3078, 0.0
    %v3119 = vmax.f32 %v3081, 0.0
    %v3120 = vmax.f32 %v3084, 0.0
    %v3121 = vmax.f32 %v3087, 0.0
    %v3122 = vmax.f32 %v3090, 0.0
    %v3123 = vmax.f32 %v3093, 0.0
    %v3124 = vmax.f32 %v3096, 0.0
    %v3125 = vmax.f32 %v3099, 0.0
    %v3126 = vmax.f32 %v3102, 0.0
    %v3127 = vmax.f32 %v3105, 0.0
    %v3128 = vmax.f32 %v3108, 0.0
    %v3129 = vmax.f32 %v3111, 0.0
    %v3130 = vmax.f32 %v3114, 0.0
    %s3131 = scalar_lea.vmem %s11, 120
    %3132 = vst.msk [vmem:[%s3131] sm:$0xff] %vm540, %v3116
    %3133 = vst.msk [vmem:[%s3131 + $0x8] sm:$0xff] %vm540, %v3117
    %3134 = vst.msk [vmem:[%s3131 + $0x10] sm:$0xff] %vm540, %v3118
    %3135 = vst.msk [vmem:[%s3131 + $0x18] sm:$0xff] %vm540, %v3119
    %3136 = vst.msk [vmem:[%s3131 + $0x20] sm:$0xff] %vm540, %v3120
    %3137 = vst.msk [vmem:[%s3131 + $0x28] sm:$0xff] %vm540, %v3121
    %3138 = vst.msk [vmem:[%s3131 + $0x30] sm:$0xff] %vm540, %v3122
    %3139 = vst.msk [vmem:[%s3131 + $0x38] sm:$0xff] %vm540, %v3123
    %3140 = vst.msk [vmem:[%s3131 + $0x40] sm:$0xff] %vm540, %v3124
    %3141 = vst.msk [vmem:[%s3131 + $0x48] sm:$0xff] %vm540, %v3125
    %3142 = vst.msk [vmem:[%s3131 + $0x50] sm:$0xff] %vm540, %v3126
    %3143 = vst.msk [vmem:[%s3131 + $0x58] sm:$0xff] %vm540, %v3127
    %3144 = vst.msk [vmem:[%s3131 + $0x60] sm:$0xff] %vm540, %v3128
    %3145 = vst.msk [vmem:[%s3131 + $0x68] sm:$0xff] %vm540, %v3129
    %3146 = vst.msk [vmem:[%s3131 + $0x70] sm:$0xff] %vm540, %v3130
    // Predicated region
    $region78: #{vae_forward.5} parent=1 // pred_check
      _
    $region79: #{vae_forward.5} parent=1 // pred_check_branch
      %3148 = sbr.rel (0) target = $region81
    $region80: #{vae_forward.5} parent=1 // pred_region
      _
    $region81: #{vae_forward.5} parent=1 // pred_fallthru
      _
    // Predicated region
    $region82: #{vae_forward.5} parent=1 // pred_check
      _
    $region83: #{vae_forward.5} parent=1 // pred_check_branch
      %3150 = sbr.rel (0) target = $region85
    $region84: #{vae_forward.5} parent=1 // pred_region
      _
    $region85: #{vae_forward.5} parent=1 // pred_fallthru
      _
    %3151 = vsyncpa [#allocation3], 1
    %3152 = vsyncpa [#allocation5], 1
    %3153 = vsyncpa [#allocation8], 1
    %3154 = vsyncpa [#allocation11], 1
    %3155 = vsyncpa [#allocation14], 1

// kernel: vae_forward.7
$region0: #{vae_forward.7}
  #allocation0 [shape = 'u32[]', space=smem, size = 0x4, offset = 0x4, fixed_abs, tag = 'smem constant byte address 0x4 - core index']
  #allocation1 [shape = 'u32[72,128]{1,0:T(1,128)}', space=vmem, size = 0x9000, scoped, tag = 'internal scratch']
  %s0 = inlined_call_operand.vmem [shape: f32[240,12], index: 0, kind: input, shape index: {}]
  %s1 = inlined_call_operand.vmem [shape: f32[240,12], index: 1, kind: input, shape index: {}]
  %s2 = inlined_call_operand.vmem [shape: f32[12,12], index: 2, kind: input, shape index: {}]
  %s3 = inlined_call_operand.vmem [shape: f32[1,12], index: 3, kind: input, shape index: {}]
  %s4 = inlined_call_operand.vmem [shape: f32[12,12], index: 4, kind: input, shape index: {}]
  %s5 = inlined_call_operand.vmem [shape: f32[1,12], index: 5, kind: input, shape index: {}]
  %s6 = inlined_call_operand.vmem [shape: f32[12,24], index: 6, kind: input, shape index: {}]
  %s7 = inlined_call_operand.vmem [shape: f32[1,24], index: 7, kind: input, shape index: {}]
  %s8 = inlined_call_operand.vmem [shape: f32[12,12], index: 8, kind: input, shape index: {}]
  %s9 = inlined_call_operand.vmem [shape: f32[1,12], index: 9, kind: input, shape index: {}]
  %s10 = inlined_call_operand.vmem [shape: f32[12,12], index: 10, kind: input, shape index: {}]
  %s11 = inlined_call_operand.vmem [shape: f32[1,12], index: 11, kind: input, shape index: {}]
  %s12 = inlined_call_operand.vmem [shape: f32[240,12], index: 12, kind: output, shape index: {0}]
  %s13 = inlined_call_operand.vmem [shape: f32[240,12], index: 13, kind: output, shape index: {1}]
  %s14 = inlined_call_operand.vmem [shape: f32[240,12], index: 14, kind: output, shape index: {2}]
  %s15 = inlined_call_operand.vmem [shape: f32[240,12], index: 15, kind: output, shape index: {3}]
  %s16 = inlined_call_operand.vmem [shape: f32[240,12], index: 16, kind: output, shape index: {4}]
  %17 = xla_tuple %s12, %s13, %s14, %s15, %s16
  %s18 = sld [smem:[#allocation0]]
  $region90: #{vae_forward.7} parent=0
    _
  %s20 = ssub.s32 1, %s18
  %s21 = scalar_select 0, %s20, %s18
  // Predicated region
  $region2: #{vae_forward.7} parent=0 // pred_check
    _
  $region3: #{vae_forward.7} parent=0 // pred_check_branch
    %23 = sbr.rel (0) target = $region5
  $region4: #{vae_forward.7} parent=0 // pred_region
    _
  $region5: #{vae_forward.7} parent=0 // pred_fallthru
    _
  // Predicated region
  $region6: #{vae_forward.7} parent=0 // pred_check
    _
  $region7: #{vae_forward.7} parent=0 // pred_check_branch
    %25 = sbr.rel (0) target = $region9
  $region8: #{vae_forward.7} parent=0 // pred_region
    _
  $region9: #{vae_forward.7} parent=0 // pred_fallthru
    _
  // Predicated region
  $region10: #{vae_forward.7} parent=0 // pred_check
    _
  $region11: #{vae_forward.7} parent=0 // pred_check_branch
    %27 = sbr.rel (0) target = $region13
  $region12: #{vae_forward.7} parent=0 // pred_region
    _
  $region13: #{vae_forward.7} parent=0 // pred_fallthru
    _
  // Predicated region
  $region14: #{vae_forward.7} parent=0 // pred_check
    _
  $region15: #{vae_forward.7} parent=0 // pred_check_branch
    %29 = sbr.rel (0) target = $region17
  $region16: #{vae_forward.7} parent=0 // pred_region
    _
  $region17: #{vae_forward.7} parent=0 // pred_fallthru
    _
  // Predicated region
  $region18: #{vae_forward.7} parent=0 // pred_check
    _
  $region19: #{vae_forward.7} parent=0 // pred_check_branch
    %31 = sbr.rel (0) target = $region21
  $region20: #{vae_forward.7} parent=0 // pred_region
    _
  $region21: #{vae_forward.7} parent=0 // pred_fallthru
    _
  // Predicated region
  $region22: #{vae_forward.7} parent=0 // pred_check
    _
  $region23: #{vae_forward.7} parent=0 // pred_check_branch
    %33 = sbr.rel (0) target = $region25
  $region24: #{vae_forward.7} parent=0 // pred_region
    _
  $region25: #{vae_forward.7} parent=0 // pred_fallthru
    _
  // Predicated region
  $region26: #{vae_forward.7} parent=0 // pred_check
    _
  $region27: #{vae_forward.7} parent=0 // pred_check_branch
    %35 = sbr.rel (0) target = $region29
  $region28: #{vae_forward.7} parent=0 // pred_region
    _
  $region29: #{vae_forward.7} parent=0 // pred_fallthru
    _
  // Predicated region
  $region30: #{vae_forward.7} parent=0 // pred_check
    _
  $region31: #{vae_forward.7} parent=0 // pred_check_branch
    %37 = sbr.rel (0) target = $region33
  $region32: #{vae_forward.7} parent=0 // pred_region
    _
  $region33: #{vae_forward.7} parent=0 // pred_fallthru
    _
  // Predicated region
  $region34: #{vae_forward.7} parent=0 // pred_check
    _
  $region35: #{vae_forward.7} parent=0 // pred_check_branch
    %39 = sbr.rel (0) target = $region37
  $region36: #{vae_forward.7} parent=0 // pred_region
    _
  $region37: #{vae_forward.7} parent=0 // pred_fallthru
    _
  // Predicated region
  $region38: #{vae_forward.7} parent=0 // pred_check
    _
  $region39: #{vae_forward.7} parent=0 // pred_check_branch
    %41 = sbr.rel (0) target = $region41
  $region40: #{vae_forward.7} parent=0 // pred_region
    _
  $region41: #{vae_forward.7} parent=0 // pred_fallthru
    _
  // Predicated region
  $region42: #{vae_forward.7} parent=0 // pred_check
    _
  $region43: #{vae_forward.7} parent=0 // pred_check_branch
    %43 = sbr.rel (0) target = $region45
  $region44: #{vae_forward.7} parent=0 // pred_region
    _
  $region45: #{vae_forward.7} parent=0 // pred_fallthru
    _
  // Predicated region
  $region46: #{vae_forward.7} parent=0 // pred_check
    _
  $region47: #{vae_forward.7} parent=0 // pred_check_branch
    %45 = sbr.rel (0) target = $region49
  $region48: #{vae_forward.7} parent=0 // pred_region
    _
  $region49: #{vae_forward.7} parent=0 // pred_fallthru
    _
  %v46 = vld [vmem:[%s0] sm:$0xff]
  %v47 = vld [vmem:[%s0 + $0x8] sm:$0xff]
  %v48 = vld [vmem:[%s0 + $0x10] sm:$0xff]
  %v49 = vld [vmem:[%s0 + $0x18] sm:$0xff]
  %v50 = vld [vmem:[%s0 + $0x20] sm:$0xff]
  %v51 = vld [vmem:[%s0 + $0x28] sm:$0xff]
  %v52 = vld [vmem:[%s0 + $0x30] sm:$0xff]
  %v53 = vld [vmem:[%s0 + $0x38] sm:$0xff]
  %v54 = vld [vmem:[%s0 + $0x40] sm:$0xff]
  %v55 = vld [vmem:[%s0 + $0x48] sm:$0xff]
  %v56 = vld [vmem:[%s0 + $0x50] sm:$0xff]
  %v57 = vld [vmem:[%s0 + $0x58] sm:$0xff]
  %v58 = vld [vmem:[%s0 + $0x60] sm:$0xff]
  %v59 = vld [vmem:[%s0 + $0x68] sm:$0xff]
  %v60 = vld [vmem:[%s0 + $0x70] sm:$0xff]
  %v61 = vld [vmem:[%s0 + $0x78] sm:$0xff]
  %v62 = vld [vmem:[%s0 + $0x80] sm:$0xff]
  %v63 = vld [vmem:[%s0 + $0x88] sm:$0xff]
  %v64 = vld [vmem:[%s0 + $0x90] sm:$0xff]
  %v65 = vld [vmem:[%s0 + $0x98] sm:$0xff]
  %v66 = vld [vmem:[%s0 + $0xa0] sm:$0xff]
  %v67 = vld [vmem:[%s0 + $0xa8] sm:$0xff]
  %v68 = vld [vmem:[%s0 + $0xb0] sm:$0xff]
  %v69 = vld [vmem:[%s0 + $0xb8] sm:$0xff]
  %v70 = vld [vmem:[%s0 + $0xc0] sm:$0xff]
  %v71 = vld [vmem:[%s0 + $0xc8] sm:$0xff]
  %v72 = vld [vmem:[%s0 + $0xd0] sm:$0xff]
  %v73 = vld [vmem:[%s0 + $0xd8] sm:$0xff]
  %v74 = vld [vmem:[%s0 + $0xe0] sm:$0xff]
  %v75 = vld [vmem:[%s0 + $0xe8] sm:$0xff]
  %v76 = vld [vmem:[%s2] sm:$0xff]
  %v77 = vld [vmem:[%s2 + $0x8] sm:$0xf]
  %v78 = vld [vmem:[%s3] sm:$0x1]
  %v80 = vperm.slane %v78, 0
  %vm82 = vcmask 97280
  %v84 = vsel %vm82, %v46, 0
  %v87 = vsel %vm82, %v47, 0
  %v90 = vsel %vm82, %v48, 0
  %v93 = vsel %vm82, %v49, 0
  %v96 = vsel %vm82, %v50, 0
  %v99 = vsel %vm82, %v51, 0
  %v102 = vsel %vm82, %v52, 0
  %v105 = vsel %vm82, %v53, 0
  %v108 = vsel %vm82, %v54, 0
  %v111 = vsel %vm82, %v55, 0
  %v114 = vsel %vm82, %v56, 0
  %v117 = vsel %vm82, %v57, 0
  %v120 = vsel %vm82, %v58, 0
  %v123 = vsel %vm82, %v59, 0
  %v126 = vsel %vm82, %v60, 0
  %v129 = vsel %vm82, %v61, 0
  %v132 = vsel %vm82, %v62, 0
  %v135 = vsel %vm82, %v63, 0
  %v138 = vsel %vm82, %v64, 0
  %v141 = vsel %vm82, %v65, 0
  %v144 = vsel %vm82, %v66, 0
  %v147 = vsel %vm82, %v67, 0
  %v150 = vsel %vm82, %v68, 0
  %v153 = vsel %vm82, %v69, 0
  %v156 = vsel %vm82, %v70, 0
  %v159 = vsel %vm82, %v71, 0
  %v162 = vsel %vm82, %v72, 0
  %v165 = vsel %vm82, %v73, 0
  %v168 = vsel %vm82, %v74, 0
  %v171 = vsel %vm82, %v75, 0
  %vm173 = vcmask 1043456
  %v175 = vsel %vm173, %v77, 0
  %177 = vmatpush.msra.mxu0 0.0
  %178 = vmatpush.msra.mxu0 0.0
  %179 = vmatpush.msra.mxu0 0.0
  %180 = vmatpush.msra.mxu0 0.0
  %181 = vmatpush.msra.mxu0 0.0
  %182 = vmatpush.msra.mxu0 0.0
  %183 = vmatpush.msra.mxu0 0.0
  %184 = vmatpush.msra.mxu0 0.0
  %185 = vmatpush.msra.mxu0 0.0
  %186 = vmatpush.msra.mxu0 0.0
  %187 = vmatpush.msra.mxu0 0.0
  %188 = vmatpush.msra.mxu0 0.0
  %189 = vmatpush.msra.mxu0 0.0
  %190 = vmatpush.msra.mxu0 0.0
  %191 = vmatpush.msra.mxu0 %v175
  %192 = vmatpush.msra.mxu0 %v76
  %193 = vmatmul.f32.gmra.mxu0 %v84
  %v194 = vpop.f32.mrf.mxu0
  %v195 = vadd.f32 %v80, %v194
  %196 = vmatmul.f32.gmra.mxu0 %v87
  %v197 = vpop.f32.mrf.mxu0
  %v198 = vadd.f32 %v80, %v197
  %199 = vmatmul.f32.gmra.mxu0 %v90
  %v200 = vpop.f32.mrf.mxu0
  %v201 = vadd.f32 %v80, %v200
  %202 = vmatmul.f32.gmra.mxu0 %v93
  %v203 = vpop.f32.mrf.mxu0
  %v204 = vadd.f32 %v80, %v203
  %205 = vmatmul.f32.gmra.mxu0 %v96
  %v206 = vpop.f32.mrf.mxu0
  %v207 = vadd.f32 %v80, %v206
  %208 = vmatmul.f32.gmra.mxu0 %v99
  %v209 = vpop.f32.mrf.mxu0
  %v210 = vadd.f32 %v80, %v209
  %211 = vmatmul.f32.gmra.mxu0 %v102
  %v212 = vpop.f32.mrf.mxu0
  %v213 = vadd.f32 %v80, %v212
  %214 = vmatmul.f32.gmra.mxu0 %v105
  %v215 = vpop.f32.mrf.mxu0
  %v216 = vadd.f32 %v80, %v215
  %217 = vmatmul.f32.gmra.mxu0 %v108
  %v218 = vpop.f32.mrf.mxu0
  %v219 = vadd.f32 %v80, %v218
  %220 = vmatmul.f32.gmra.mxu0 %v111
  %v221 = vpop.f32.mrf.mxu0
  %v222 = vadd.f32 %v80, %v221
  %223 = vmatmul.f32.gmra.mxu0 %v114
  %v224 = vpop.f32.mrf.mxu0
  %v225 = vadd.f32 %v80, %v224
  %226 = vmatmul.f32.gmra.mxu0 %v117
  %v227 = vpop.f32.mrf.mxu0
  %v228 = vadd.f32 %v80, %v227
  %229 = vmatmul.f32.gmra.mxu0 %v120
  %v230 = vpop.f32.mrf.mxu0
  %v231 = vadd.f32 %v80, %v230
  %232 = vmatmul.f32.gmra.mxu0 %v123
  %v233 = vpop.f32.mrf.mxu0
  %v234 = vadd.f32 %v80, %v233
  %235 = vmatmul.f32.gmra.mxu0 %v126
  %v236 = vpop.f32.mrf.mxu0
  %v237 = vadd.f32 %v80, %v236
  %238 = vmatmul.f32.gmra.mxu0 %v129
  %v239 = vpop.f32.mrf.mxu0
  %v240 = vadd.f32 %v80, %v239
  %241 = vmatmul.f32.gmra.mxu0 %v132
  %v242 = vpop.f32.mrf.mxu0
  %v243 = vadd.f32 %v80, %v242
  %244 = vmatmul.f32.gmra.mxu0 %v135
  %v245 = vpop.f32.mrf.mxu0
  %v246 = vadd.f32 %v80, %v245
  %247 = vmatmul.f32.gmra.mxu0 %v138
  %v248 = vpop.f32.mrf.mxu0
  %v249 = vadd.f32 %v80, %v248
  %250 = vmatmul.f32.gmra.mxu0 %v141
  %v251 = vpop.f32.mrf.mxu0
  %v252 = vadd.f32 %v80, %v251
  %253 = vmatmul.f32.gmra.mxu0 %v144
  %v254 = vpop.f32.mrf.mxu0
  %v255 = vadd.f32 %v80, %v254
  %256 = vmatmul.f32.gmra.mxu0 %v147
  %v257 = vpop.f32.mrf.mxu0
  %v258 = vadd.f32 %v80, %v257
  %259 = vmatmul.f32.gmra.mxu0 %v150
  %v260 = vpop.f32.mrf.mxu0
  %v261 = vadd.f32 %v80, %v260
  %262 = vmatmul.f32.gmra.mxu0 %v153
  %v263 = vpop.f32.mrf.mxu0
  %v264 = vadd.f32 %v80, %v263
  %265 = vmatmul.f32.gmra.mxu0 %v156
  %v266 = vpop.f32.mrf.mxu0
  %v267 = vadd.f32 %v80, %v266
  %268 = vmatmul.f32.gmra.mxu0 %v159
  %v269 = vpop.f32.mrf.mxu0
  %v270 = vadd.f32 %v80, %v269
  %271 = vmatmul.f32.gmra.mxu0 %v162
  %v272 = vpop.f32.mrf.mxu0
  %v273 = vadd.f32 %v80, %v272
  %274 = vmatmul.f32.gmra.mxu0 %v165
  %v275 = vpop.f32.mrf.mxu0
  %v276 = vadd.f32 %v80, %v275
  %277 = vmatmul.f32.gmra.mxu0 %v168
  %v278 = vpop.f32.mrf.mxu0
  %v279 = vadd.f32 %v80, %v278
  %280 = vmatmul.f32.gmra.mxu0 %v171
  %v281 = vpop.f32.mrf.mxu0
  %v282 = vadd.f32 %v80, %v281
  %283 = vdwg.mxu0
  %v284 = vmax.f32 %v195, 0.0
  %v285 = vmax.f32 %v198, 0.0
  %v286 = vmax.f32 %v201, 0.0
  %v287 = vmax.f32 %v204, 0.0
  %v288 = vmax.f32 %v207, 0.0
  %v289 = vmax.f32 %v210, 0.0
  %v290 = vmax.f32 %v213, 0.0
  %v291 = vmax.f32 %v216, 0.0
  %v292 = vmax.f32 %v219, 0.0
  %v293 = vmax.f32 %v222, 0.0
  %v294 = vmax.f32 %v225, 0.0
  %v295 = vmax.f32 %v228, 0.0
  %v296 = vmax.f32 %v231, 0.0
  %v297 = vmax.f32 %v234, 0.0
  %v298 = vmax.f32 %v237, 0.0
  %v299 = vmax.f32 %v240, 0.0
  %v300 = vmax.f32 %v243, 0.0
  %v301 = vmax.f32 %v246, 0.0
  %v302 = vmax.f32 %v249, 0.0
  %v303 = vmax.f32 %v252, 0.0
  %v304 = vmax.f32 %v255, 0.0
  %v305 = vmax.f32 %v258, 0.0
  %v306 = vmax.f32 %v261, 0.0
  %v307 = vmax.f32 %v264, 0.0
  %v308 = vmax.f32 %v267, 0.0
  %v309 = vmax.f32 %v270, 0.0
  %v310 = vmax.f32 %v273, 0.0
  %v311 = vmax.f32 %v276, 0.0
  %v312 = vmax.f32 %v279, 0.0
  %v313 = vmax.f32 %v282, 0.0
  %v314 = vld [vmem:[%s4] sm:$0xff]
  %v315 = vld [vmem:[%s4 + $0x8] sm:$0xf]
  %v316 = vld [vmem:[%s5] sm:$0x1]
  %v318 = vperm.slane %v316, 0
  %v321 = vsel %vm82, %v284, 0
  %v324 = vsel %vm82, %v285, 0
  %v327 = vsel %vm82, %v286, 0
  %v330 = vsel %vm82, %v287, 0
  %v333 = vsel %vm82, %v288, 0
  %v336 = vsel %vm82, %v289, 0
  %v339 = vsel %vm82, %v290, 0
  %v342 = vsel %vm82, %v291, 0
  %v345 = vsel %vm82, %v292, 0
  %v348 = vsel %vm82, %v293, 0
  %v351 = vsel %vm82, %v294, 0
  %v354 = vsel %vm82, %v295, 0
  %v357 = vsel %vm82, %v296, 0
  %v360 = vsel %vm82, %v297, 0
  %v363 = vsel %vm82, %v298, 0
  %v366 = vsel %vm82, %v299, 0
  %v369 = vsel %vm82, %v300, 0
  %v372 = vsel %vm82, %v301, 0
  %v375 = vsel %vm82, %v302, 0
  %v378 = vsel %vm82, %v303, 0
  %v381 = vsel %vm82, %v304, 0
  %v384 = vsel %vm82, %v305, 0
  %v387 = vsel %vm82, %v306, 0
  %v390 = vsel %vm82, %v307, 0
  %v393 = vsel %vm82, %v308, 0
  %v396 = vsel %vm82, %v309, 0
  %v399 = vsel %vm82, %v310, 0
  %v402 = vsel %vm82, %v311, 0
  %v405 = vsel %vm82, %v312, 0
  %v408 = vsel %vm82, %v313, 0
  %v411 = vsel %vm173, %v315, 0
  %413 = vmatpush.msra.mxu0 0.0
  %414 = vmatpush.msra.mxu0 0.0
  %415 = vmatpush.msra.mxu0 0.0
  %416 = vmatpush.msra.mxu0 0.0
  %417 = vmatpush.msra.mxu0 0.0
  %418 = vmatpush.msra.mxu0 0.0
  %419 = vmatpush.msra.mxu0 0.0
  %420 = vmatpush.msra.mxu0 0.0
  %421 = vmatpush.msra.mxu0 0.0
  %422 = vmatpush.msra.mxu0 0.0
  %423 = vmatpush.msra.mxu0 0.0
  %424 = vmatpush.msra.mxu0 0.0
  %425 = vmatpush.msra.mxu0 0.0
  %426 = vmatpush.msra.mxu0 0.0
  %427 = vmatpush.msra.mxu0 %v411
  %428 = vmatpush.msra.mxu0 %v314
  %429 = vmatmul.f32.gmra.mxu0 %v321
  %v430 = vpop.f32.mrf.mxu0
  %v431 = vadd.f32 %v318, %v430
  %432 = vmatmul.f32.gmra.mxu0 %v324
  %v433 = vpop.f32.mrf.mxu0
  %v434 = vadd.f32 %v318, %v433
  %435 = vmatmul.f32.gmra.mxu0 %v327
  %v436 = vpop.f32.mrf.mxu0
  %v437 = vadd.f32 %v318, %v436
  %438 = vmatmul.f32.gmra.mxu0 %v330
  %v439 = vpop.f32.mrf.mxu0
  %v440 = vadd.f32 %v318, %v439
  %441 = vmatmul.f32.gmra.mxu0 %v333
  %v442 = vpop.f32.mrf.mxu0
  %v443 = vadd.f32 %v318, %v442
  %444 = vmatmul.f32.gmra.mxu0 %v336
  %v445 = vpop.f32.mrf.mxu0
  %v446 = vadd.f32 %v318, %v445
  %447 = vmatmul.f32.gmra.mxu0 %v339
  %v448 = vpop.f32.mrf.mxu0
  %v449 = vadd.f32 %v318, %v448
  %450 = vmatmul.f32.gmra.mxu0 %v342
  %v451 = vpop.f32.mrf.mxu0
  %v452 = vadd.f32 %v318, %v451
  %453 = vmatmul.f32.gmra.mxu0 %v345
  %v454 = vpop.f32.mrf.mxu0
  %v455 = vadd.f32 %v318, %v454
  %456 = vmatmul.f32.gmra.mxu0 %v348
  %v457 = vpop.f32.mrf.mxu0
  %v458 = vadd.f32 %v318, %v457
  %459 = vmatmul.f32.gmra.mxu0 %v351
  %v460 = vpop.f32.mrf.mxu0
  %v461 = vadd.f32 %v318, %v460
  %462 = vmatmul.f32.gmra.mxu0 %v354
  %v463 = vpop.f32.mrf.mxu0
  %v464 = vadd.f32 %v318, %v463
  %465 = vmatmul.f32.gmra.mxu0 %v357
  %v466 = vpop.f32.mrf.mxu0
  %v467 = vadd.f32 %v318, %v466
  %468 = vmatmul.f32.gmra.mxu0 %v360
  %v469 = vpop.f32.mrf.mxu0
  %v470 = vadd.f32 %v318, %v469
  %471 = vmatmul.f32.gmra.mxu0 %v363
  %v472 = vpop.f32.mrf.mxu0
  %v473 = vadd.f32 %v318, %v472
  %474 = vmatmul.f32.gmra.mxu0 %v366
  %v475 = vpop.f32.mrf.mxu0
  %v476 = vadd.f32 %v318, %v475
  %477 = vmatmul.f32.gmra.mxu0 %v369
  %v478 = vpop.f32.mrf.mxu0
  %v479 = vadd.f32 %v318, %v478
  %480 = vmatmul.f32.gmra.mxu0 %v372
  %v481 = vpop.f32.mrf.mxu0
  %v482 = vadd.f32 %v318, %v481
  %483 = vmatmul.f32.gmra.mxu0 %v375
  %v484 = vpop.f32.mrf.mxu0
  %v485 = vadd.f32 %v318, %v484
  %486 = vmatmul.f32.gmra.mxu0 %v378
  %v487 = vpop.f32.mrf.mxu0
  %v488 = vadd.f32 %v318, %v487
  %489 = vmatmul.f32.gmra.mxu0 %v381
  %v490 = vpop.f32.mrf.mxu0
  %v491 = vadd.f32 %v318, %v490
  %492 = vmatmul.f32.gmra.mxu0 %v384
  %v493 = vpop.f32.mrf.mxu0
  %v494 = vadd.f32 %v318, %v493
  %495 = vmatmul.f32.gmra.mxu0 %v387
  %v496 = vpop.f32.mrf.mxu0
  %v497 = vadd.f32 %v318, %v496
  %498 = vmatmul.f32.gmra.mxu0 %v390
  %v499 = vpop.f32.mrf.mxu0
  %v500 = vadd.f32 %v318, %v499
  %501 = vmatmul.f32.gmra.mxu0 %v393
  %v502 = vpop.f32.mrf.mxu0
  %v503 = vadd.f32 %v318, %v502
  %504 = vmatmul.f32.gmra.mxu0 %v396
  %v505 = vpop.f32.mrf.mxu0
  %v506 = vadd.f32 %v318, %v505
  %507 = vmatmul.f32.gmra.mxu0 %v399
  %v508 = vpop.f32.mrf.mxu0
  %v509 = vadd.f32 %v318, %v508
  %510 = vmatmul.f32.gmra.mxu0 %v402
  %v511 = vpop.f32.mrf.mxu0
  %v512 = vadd.f32 %v318, %v511
  %513 = vmatmul.f32.gmra.mxu0 %v405
  %v514 = vpop.f32.mrf.mxu0
  %v515 = vadd.f32 %v318, %v514
  %516 = vmatmul.f32.gmra.mxu0 %v408
  %v517 = vpop.f32.mrf.mxu0
  %v518 = vadd.f32 %v318, %v517
  %519 = vdwg.mxu0
  %v520 = vmax.f32 %v431, 0.0
  %v521 = vmax.f32 %v434, 0.0
  %v522 = vmax.f32 %v437, 0.0
  %v523 = vmax.f32 %v440, 0.0
  %v524 = vmax.f32 %v443, 0.0
  %v525 = vmax.f32 %v446, 0.0
  %v526 = vmax.f32 %v449, 0.0
  %v527 = vmax.f32 %v452, 0.0
  %v528 = vmax.f32 %v455, 0.0
  %v529 = vmax.f32 %v458, 0.0
  %v530 = vmax.f32 %v461, 0.0
  %v531 = vmax.f32 %v464, 0.0
  %v532 = vmax.f32 %v467, 0.0
  %v533 = vmax.f32 %v470, 0.0
  %v534 = vmax.f32 %v473, 0.0
  %v535 = vmax.f32 %v476, 0.0
  %v536 = vmax.f32 %v479, 0.0
  %v537 = vmax.f32 %v482, 0.0
  %v538 = vmax.f32 %v485, 0.0
  %v539 = vmax.f32 %v488, 0.0
  %v540 = vmax.f32 %v491, 0.0
  %v541 = vmax.f32 %v494, 0.0
  %v542 = vmax.f32 %v497, 0.0
  %v543 = vmax.f32 %v500, 0.0
  %v544 = vmax.f32 %v503, 0.0
  %v545 = vmax.f32 %v506, 0.0
  %v546 = vmax.f32 %v509, 0.0
  %v547 = vmax.f32 %v512, 0.0
  %v548 = vmax.f32 %v515, 0.0
  %v549 = vmax.f32 %v518, 0.0
  %v550 = vld [vmem:[%s6] sm:$0xff]
  %v551 = vld [vmem:[%s6 + $0x8] sm:$0xf]
  %v552 = vld [vmem:[%s7] sm:$0x1]
  %v554 = vperm.slane %v552, 0
  %v557 = vsel %vm82, %v520, 0
  %v560 = vsel %vm82, %v521, 0
  %v563 = vsel %vm82, %v522, 0
  %v566 = vsel %vm82, %v523, 0
  %v569 = vsel %vm82, %v524, 0
  %v572 = vsel %vm82, %v525, 0
  %v575 = vsel %vm82, %v526, 0
  %v578 = vsel %vm82, %v527, 0
  %v581 = vsel %vm82, %v528, 0
  %v584 = vsel %vm82, %v529, 0
  %v587 = vsel %vm82, %v530, 0
  %v590 = vsel %vm82, %v531, 0
  %v593 = vsel %vm82, %v532, 0
  %v596 = vsel %vm82, %v533, 0
  %v599 = vsel %vm82, %v534, 0
  %v602 = vsel %vm82, %v535, 0
  %v605 = vsel %vm82, %v536, 0
  %v608 = vsel %vm82, %v537, 0
  %v611 = vsel %vm82, %v538, 0
  %v614 = vsel %vm82, %v539, 0
  %v617 = vsel %vm82, %v540, 0
  %v620 = vsel %vm82, %v541, 0
  %v623 = vsel %vm82, %v542, 0
  %v626 = vsel %vm82, %v543, 0
  %v629 = vsel %vm82, %v544, 0
  %v632 = vsel %vm82, %v545, 0
  %v635 = vsel %vm82, %v546, 0
  %v638 = vsel %vm82, %v547, 0
  %v641 = vsel %vm82, %v548, 0
  %v644 = vsel %vm82, %v549, 0
  %v647 = vsel %vm173, %v551, 0
  %649 = vmatpush.msra.mxu0 0.0
  %650 = vmatpush.msra.mxu0 0.0
  %651 = vmatpush.msra.mxu0 0.0
  %652 = vmatpush.msra.mxu0 0.0
  %653 = vmatpush.msra.mxu0 0.0
  %654 = vmatpush.msra.mxu0 0.0
  %655 = vmatpush.msra.mxu0 0.0
  %656 = vmatpush.msra.mxu0 0.0
  %657 = vmatpush.msra.mxu0 0.0
  %658 = vmatpush.msra.mxu0 0.0
  %659 = vmatpush.msra.mxu0 0.0
  %660 = vmatpush.msra.mxu0 0.0
  %661 = vmatpush.msra.mxu0 0.0
  %662 = vmatpush.msra.mxu0 0.0
  %663 = vmatpush.msra.mxu0 %v647
  %664 = vmatpush.msra.mxu0 %v550
  %665 = vmatmul.f32.gmra.mxu0 %v557
  %v666 = vpop.f32.mrf.mxu0
  %v667 = vadd.f32 %v554, %v666
  %668 = vmatmul.f32.gmra.mxu0 %v560
  %v669 = vpop.f32.mrf.mxu0
  %v670 = vadd.f32 %v554, %v669
  %671 = vmatmul.f32.gmra.mxu0 %v563
  %v672 = vpop.f32.mrf.mxu0
  %v673 = vadd.f32 %v554, %v672
  %674 = vmatmul.f32.gmra.mxu0 %v566
  %v675 = vpop.f32.mrf.mxu0
  %v676 = vadd.f32 %v554, %v675
  %677 = vmatmul.f32.gmra.mxu0 %v569
  %v678 = vpop.f32.mrf.mxu0
  %v679 = vadd.f32 %v554, %v678
  %680 = vmatmul.f32.gmra.mxu0 %v572
  %v681 = vpop.f32.mrf.mxu0
  %v682 = vadd.f32 %v554, %v681
  %683 = vmatmul.f32.gmra.mxu0 %v575
  %v684 = vpop.f32.mrf.mxu0
  %v685 = vadd.f32 %v554, %v684
  %686 = vmatmul.f32.gmra.mxu0 %v578
  %v687 = vpop.f32.mrf.mxu0
  %v688 = vadd.f32 %v554, %v687
  %689 = vmatmul.f32.gmra.mxu0 %v581
  %v690 = vpop.f32.mrf.mxu0
  %v691 = vadd.f32 %v554, %v690
  %692 = vmatmul.f32.gmra.mxu0 %v584
  %v693 = vpop.f32.mrf.mxu0
  %v694 = vadd.f32 %v554, %v693
  %695 = vmatmul.f32.gmra.mxu0 %v587
  %v696 = vpop.f32.mrf.mxu0
  %v697 = vadd.f32 %v554, %v696
  %698 = vmatmul.f32.gmra.mxu0 %v590
  %v699 = vpop.f32.mrf.mxu0
  %v700 = vadd.f32 %v554, %v699
  %701 = vmatmul.f32.gmra.mxu0 %v593
  %v702 = vpop.f32.mrf.mxu0
  %v703 = vadd.f32 %v554, %v702
  %704 = vmatmul.f32.gmra.mxu0 %v596
  %v705 = vpop.f32.mrf.mxu0
  %v706 = vadd.f32 %v554, %v705
  %707 = vmatmul.f32.gmra.mxu0 %v599
  %v708 = vpop.f32.mrf.mxu0
  %v709 = vadd.f32 %v554, %v708
  %710 = vmatmul.f32.gmra.mxu0 %v602
  %v711 = vpop.f32.mrf.mxu0
  %v712 = vadd.f32 %v554, %v711
  %713 = vmatmul.f32.gmra.mxu0 %v605
  %v714 = vpop.f32.mrf.mxu0
  %v715 = vadd.f32 %v554, %v714
  %716 = vmatmul.f32.gmra.mxu0 %v608
  %v717 = vpop.f32.mrf.mxu0
  %v718 = vadd.f32 %v554, %v717
  %719 = vmatmul.f32.gmra.mxu0 %v611
  %v720 = vpop.f32.mrf.mxu0
  %v721 = vadd.f32 %v554, %v720
  %722 = vmatmul.f32.gmra.mxu0 %v614
  %v723 = vpop.f32.mrf.mxu0
  %v724 = vadd.f32 %v554, %v723
  %725 = vmatmul.f32.gmra.mxu0 %v617
  %v726 = vpop.f32.mrf.mxu0
  %v727 = vadd.f32 %v554, %v726
  %728 = vmatmul.f32.gmra.mxu0 %v620
  %v729 = vpop.f32.mrf.mxu0
  %v730 = vadd.f32 %v554, %v729
  %731 = vmatmul.f32.gmra.mxu0 %v623
  %v732 = vpop.f32.mrf.mxu0
  %v733 = vadd.f32 %v554, %v732
  %734 = vmatmul.f32.gmra.mxu0 %v626
  %v735 = vpop.f32.mrf.mxu0
  %v736 = vadd.f32 %v554, %v735
  %737 = vmatmul.f32.gmra.mxu0 %v629
  %v738 = vpop.f32.mrf.mxu0
  %v739 = vadd.f32 %v554, %v738
  %740 = vmatmul.f32.gmra.mxu0 %v632
  %v741 = vpop.f32.mrf.mxu0
  %v742 = vadd.f32 %v554, %v741
  %743 = vmatmul.f32.gmra.mxu0 %v635
  %v744 = vpop.f32.mrf.mxu0
  %v745 = vadd.f32 %v554, %v744
  %746 = vmatmul.f32.gmra.mxu0 %v638
  %v747 = vpop.f32.mrf.mxu0
  %v748 = vadd.f32 %v554, %v747
  %749 = vmatmul.f32.gmra.mxu0 %v641
  %v750 = vpop.f32.mrf.mxu0
  %v751 = vadd.f32 %v554, %v750
  %752 = vmatmul.f32.gmra.mxu0 %v644
  %v753 = vpop.f32.mrf.mxu0
  %v754 = vadd.f32 %v554, %v753
  %755 = vdwg.mxu0
  %v756 = vmul.f32 %v667, 0.5
  %v757 = vmul.f32 %v670, 0.5
  %v758 = vmul.f32 %v673, 0.5
  %v759 = vmul.f32 %v676, 0.5
  %v760 = vmul.f32 %v679, 0.5
  %v761 = vmul.f32 %v682, 0.5
  %v762 = vmul.f32 %v685, 0.5
  %v763 = vmul.f32 %v688, 0.5
  %v764 = vmul.f32 %v691, 0.5
  %v765 = vmul.f32 %v694, 0.5
  %v766 = vmul.f32 %v697, 0.5
  %v767 = vmul.f32 %v700, 0.5
  %v768 = vmul.f32 %v703, 0.5
  %v769 = vmul.f32 %v706, 0.5
  %v770 = vmul.f32 %v709, 0.5
  %v771 = vmul.f32 %v712, 0.5
  %v772 = vmul.f32 %v715, 0.5
  %v773 = vmul.f32 %v718, 0.5
  %v774 = vmul.f32 %v721, 0.5
  %v775 = vmul.f32 %v724, 0.5
  %v776 = vmul.f32 %v727, 0.5
  %v777 = vmul.f32 %v730, 0.5
  %v778 = vmul.f32 %v733, 0.5
  %v779 = vmul.f32 %v736, 0.5
  %v780 = vmul.f32 %v739, 0.5
  %v781 = vmul.f32 %v742, 0.5
  %v782 = vmul.f32 %v745, 0.5
  %v783 = vmul.f32 %v748, 0.5
  %v784 = vmul.f32 %v751, 0.5
  %v785 = vmul.f32 %v754, 0.5
  %v786 = vmul.f32 %v756, 1.442695
  %v787 = vpow.pop %v786
  %v788 = vmul.f32 %v757, 1.442695
  %v789 = vpow.pop %v788
  %v790 = vmul.f32 %v758, 1.442695
  %v791 = vpow.pop %v790
  %v792 = vmul.f32 %v759, 1.442695
  %v793 = vpow.pop %v792
  %v794 = vmul.f32 %v760, 1.442695
  %v795 = vpow.pop %v794
  %v796 = vmul.f32 %v761, 1.442695
  %v797 = vpow.pop %v796
  %v798 = vmul.f32 %v762, 1.442695
  %v799 = vpow.pop %v798
  %v800 = vmul.f32 %v763, 1.442695
  %v801 = vpow.pop %v800
  %v802 = vmul.f32 %v764, 1.442695
  %v803 = vpow.pop %v802
  %v804 = vmul.f32 %v765, 1.442695
  %v805 = vpow.pop %v804
  %v806 = vmul.f32 %v766, 1.442695
  %v807 = vpow.pop %v806
  %v808 = vmul.f32 %v767, 1.442695
  %v809 = vpow.pop %v808
  %v810 = vmul.f32 %v768, 1.442695
  %v811 = vpow.pop %v810
  %v812 = vmul.f32 %v769, 1.442695
  %v813 = vpow.pop %v812
  %v814 = vmul.f32 %v770, 1.442695
  %v815 = vpow.pop %v814
  %v816 = vmul.f32 %v771, 1.442695
  %v817 = vpow.pop %v816
  %v818 = vmul.f32 %v772, 1.442695
  %v819 = vpow.pop %v818
  %v820 = vmul.f32 %v773, 1.442695
  %v821 = vpow.pop %v820
  %v822 = vmul.f32 %v774, 1.442695
  %v823 = vpow.pop %v822
  %v824 = vmul.f32 %v775, 1.442695
  %v825 = vpow.pop %v824
  %v826 = vmul.f32 %v776, 1.442695
  %v827 = vpow.pop %v826
  %v828 = vmul.f32 %v777, 1.442695
  %v829 = vpow.pop %v828
  %v830 = vmul.f32 %v778, 1.442695
  %v831 = vpow.pop %v830
  %v832 = vmul.f32 %v779, 1.442695
  %v833 = vpow.pop %v832
  %v834 = vmul.f32 %v780, 1.442695
  %v835 = vpow.pop %v834
  %v836 = vmul.f32 %v781, 1.442695
  %v837 = vpow.pop %v836
  %v838 = vmul.f32 %v782, 1.442695
  %v839 = vpow.pop %v838
  %v840 = vmul.f32 %v783, 1.442695
  %v841 = vpow.pop %v840
  %v842 = vmul.f32 %v784, 1.442695
  %v843 = vpow.pop %v842
  %v844 = vmul.f32 %v785, 1.442695
  %v845 = vpow.pop %v844
  %v846 = vld [vmem:[%s1] sm:$0xff]
  %v847 = vld [vmem:[%s1 + $0x8] sm:$0xff]
  %v848 = vld [vmem:[%s1 + $0x10] sm:$0xff]
  %v849 = vld [vmem:[%s1 + $0x18] sm:$0xff]
  %v850 = vld [vmem:[%s1 + $0x20] sm:$0xff]
  %v851 = vld [vmem:[%s1 + $0x28] sm:$0xff]
  %v852 = vld [vmem:[%s1 + $0x30] sm:$0xff]
  %v853 = vld [vmem:[%s1 + $0x38] sm:$0xff]
  %v854 = vld [vmem:[%s1 + $0x40] sm:$0xff]
  %v855 = vld [vmem:[%s1 + $0x48] sm:$0xff]
  %v856 = vld [vmem:[%s1 + $0x50] sm:$0xff]
  %v857 = vld [vmem:[%s1 + $0x58] sm:$0xff]
  %v858 = vld [vmem:[%s1 + $0x60] sm:$0xff]
  %v859 = vld [vmem:[%s1 + $0x68] sm:$0xff]
  %v860 = vld [vmem:[%s1 + $0x70] sm:$0xff]
  %v861 = vld [vmem:[%s1 + $0x78] sm:$0xff]
  %v862 = vld [vmem:[%s1 + $0x80] sm:$0xff]
  %v863 = vld [vmem:[%s1 + $0x88] sm:$0xff]
  %v864 = vld [vmem:[%s1 + $0x90] sm:$0xff]
  %v865 = vld [vmem:[%s1 + $0x98] sm:$0xff]
  %v866 = vld [vmem:[%s1 + $0xa0] sm:$0xff]
  %v867 = vld [vmem:[%s1 + $0xa8] sm:$0xff]
  %v868 = vld [vmem:[%s1 + $0xb0] sm:$0xff]
  %v869 = vld [vmem:[%s1 + $0xb8] sm:$0xff]
  %v870 = vld [vmem:[%s1 + $0xc0] sm:$0xff]
  %v871 = vld [vmem:[%s1 + $0xc8] sm:$0xff]
  %v872 = vld [vmem:[%s1 + $0xd0] sm:$0xff]
  %v873 = vld [vmem:[%s1 + $0xd8] sm:$0xff]
  %v874 = vld [vmem:[%s1 + $0xe0] sm:$0xff]
  %v875 = vld [vmem:[%s1 + $0xe8] sm:$0xff]
  %906 = vrot.lane.b32.xlu0 %v846, 12
  %v907 = vpop.permute.xlu0 %906
  %908 = vrot.lane.b32.xlu0 %v847, 12
  %v909 = vpop.permute.xlu0 %908
  %910 = vrot.lane.b32.xlu0 %v848, 12
  %v911 = vpop.permute.xlu0 %910
  %912 = vrot.lane.b32.xlu0 %v849, 12
  %v913 = vpop.permute.xlu0 %912
  %914 = vrot.lane.b32.xlu0 %v850, 12
  %v915 = vpop.permute.xlu0 %914
  %916 = vrot.lane.b32.xlu0 %v851, 12
  %v917 = vpop.permute.xlu0 %916
  %918 = vrot.lane.b32.xlu0 %v852, 12
  %v919 = vpop.permute.xlu0 %918
  %920 = vrot.lane.b32.xlu0 %v853, 12
  %v921 = vpop.permute.xlu0 %920
  %922 = vrot.lane.b32.xlu0 %v854, 12
  %v923 = vpop.permute.xlu0 %922
  %924 = vrot.lane.b32.xlu0 %v855, 12
  %v925 = vpop.permute.xlu0 %924
  %926 = vrot.lane.b32.xlu0 %v856, 12
  %v927 = vpop.permute.xlu0 %926
  %928 = vrot.lane.b32.xlu0 %v857, 12
  %v929 = vpop.permute.xlu0 %928
  %930 = vrot.lane.b32.xlu0 %v858, 12
  %v931 = vpop.permute.xlu0 %930
  %932 = vrot.lane.b32.xlu0 %v859, 12
  %v933 = vpop.permute.xlu0 %932
  %934 = vrot.lane.b32.xlu0 %v860, 12
  %v935 = vpop.permute.xlu0 %934
  %936 = vrot.lane.b32.xlu0 %v861, 12
  %v937 = vpop.permute.xlu0 %936
  %938 = vrot.lane.b32.xlu0 %v862, 12
  %v939 = vpop.permute.xlu0 %938
  %940 = vrot.lane.b32.xlu0 %v863, 12
  %v941 = vpop.permute.xlu0 %940
  %942 = vrot.lane.b32.xlu0 %v864, 12
  %v943 = vpop.permute.xlu0 %942
  %944 = vrot.lane.b32.xlu0 %v865, 12
  %v945 = vpop.permute.xlu0 %944
  %946 = vrot.lane.b32.xlu0 %v866, 12
  %v947 = vpop.permute.xlu0 %946
  %948 = vrot.lane.b32.xlu0 %v867, 12
  %v949 = vpop.permute.xlu0 %948
  %950 = vrot.lane.b32.xlu0 %v868, 12
  %v951 = vpop.permute.xlu0 %950
  %952 = vrot.lane.b32.xlu0 %v869, 12
  %v953 = vpop.permute.xlu0 %952
  %954 = vrot.lane.b32.xlu0 %v870, 12
  %v955 = vpop.permute.xlu0 %954
  %956 = vrot.lane.b32.xlu0 %v871, 12
  %v957 = vpop.permute.xlu0 %956
  %958 = vrot.lane.b32.xlu0 %v872, 12
  %v959 = vpop.permute.xlu0 %958
  %960 = vrot.lane.b32.xlu0 %v873, 12
  %v961 = vpop.permute.xlu0 %960
  %962 = vrot.lane.b32.xlu0 %v874, 12
  %v963 = vpop.permute.xlu0 %962
  %964 = vrot.lane.b32.xlu0 %v875, 12
  %v965 = vpop.permute.xlu0 %964
  %v996 = vmul.f32 %v787, %v907
  %v997 = vmul.f32 %v789, %v909
  %v998 = vmul.f32 %v791, %v911
  %v999 = vmul.f32 %v793, %v913
  %v1000 = vmul.f32 %v795, %v915
  %v1001 = vmul.f32 %v797, %v917
  %v1002 = vmul.f32 %v799, %v919
  %v1003 = vmul.f32 %v801, %v921
  %v1004 = vmul.f32 %v803, %v923
  %v1005 = vmul.f32 %v805, %v925
  %v1006 = vmul.f32 %v807, %v927
  %v1007 = vmul.f32 %v809, %v929
  %v1008 = vmul.f32 %v811, %v931
  %v1009 = vmul.f32 %v813, %v933
  %v1010 = vmul.f32 %v815, %v935
  %v1011 = vmul.f32 %v817, %v937
  %v1012 = vmul.f32 %v819, %v939
  %v1013 = vmul.f32 %v821, %v941
  %v1014 = vmul.f32 %v823, %v943
  %v1015 = vmul.f32 %v825, %v945
  %v1016 = vmul.f32 %v827, %v947
  %v1017 = vmul.f32 %v829, %v949
  %v1018 = vmul.f32 %v831, %v951
  %v1019 = vmul.f32 %v833, %v953
  %v1020 = vmul.f32 %v835, %v955
  %v1021 = vmul.f32 %v837, %v957
  %v1022 = vmul.f32 %v839, %v959
  %v1023 = vmul.f32 %v841, %v961
  %v1024 = vmul.f32 %v843, %v963
  %v1025 = vmul.f32 %v845, %v965
  %1056 = vrot.lane.b32.xlu0 %v996, 116
  %v1057 = vpop.permute.xlu0 %1056
  %1058 = vrot.lane.b32.xlu0 %v997, 116
  %v1059 = vpop.permute.xlu0 %1058
  %1060 = vrot.lane.b32.xlu0 %v998, 116
  %v1061 = vpop.permute.xlu0 %1060
  %1062 = vrot.lane.b32.xlu0 %v999, 116
  %v1063 = vpop.permute.xlu0 %1062
  %1064 = vrot.lane.b32.xlu0 %v1000, 116
  %v1065 = vpop.permute.xlu0 %1064
  %1066 = vrot.lane.b32.xlu0 %v1001, 116
  %v1067 = vpop.permute.xlu0 %1066
  %1068 = vrot.lane.b32.xlu0 %v1002, 116
  %v1069 = vpop.permute.xlu0 %1068
  %1070 = vrot.lane.b32.xlu0 %v1003, 116
  %v1071 = vpop.permute.xlu0 %1070
  %1072 = vrot.lane.b32.xlu0 %v1004, 116
  %v1073 = vpop.permute.xlu0 %1072
  %1074 = vrot.lane.b32.xlu0 %v1005, 116
  %v1075 = vpop.permute.xlu0 %1074
  %1076 = vrot.lane.b32.xlu0 %v1006, 116
  %v1077 = vpop.permute.xlu0 %1076
  %1078 = vrot.lane.b32.xlu0 %v1007, 116
  %v1079 = vpop.permute.xlu0 %1078
  %1080 = vrot.lane.b32.xlu0 %v1008, 116
  %v1081 = vpop.permute.xlu0 %1080
  %1082 = vrot.lane.b32.xlu0 %v1009, 116
  %v1083 = vpop.permute.xlu0 %1082
  %1084 = vrot.lane.b32.xlu0 %v1010, 116
  %v1085 = vpop.permute.xlu0 %1084
  %1086 = vrot.lane.b32.xlu0 %v1011, 116
  %v1087 = vpop.permute.xlu0 %1086
  %1088 = vrot.lane.b32.xlu0 %v1012, 116
  %v1089 = vpop.permute.xlu0 %1088
  %1090 = vrot.lane.b32.xlu0 %v1013, 116
  %v1091 = vpop.permute.xlu0 %1090
  %1092 = vrot.lane.b32.xlu0 %v1014, 116
  %v1093 = vpop.permute.xlu0 %1092
  %1094 = vrot.lane.b32.xlu0 %v1015, 116
  %v1095 = vpop.permute.xlu0 %1094
  %1096 = vrot.lane.b32.xlu0 %v1016, 116
  %v1097 = vpop.permute.xlu0 %1096
  %1098 = vrot.lane.b32.xlu0 %v1017, 116
  %v1099 = vpop.permute.xlu0 %1098
  %1100 = vrot.lane.b32.xlu0 %v1018, 116
  %v1101 = vpop.permute.xlu0 %1100
  %1102 = vrot.lane.b32.xlu0 %v1019, 116
  %v1103 = vpop.permute.xlu0 %1102
  %1104 = vrot.lane.b32.xlu0 %v1020, 116
  %v1105 = vpop.permute.xlu0 %1104
  %1106 = vrot.lane.b32.xlu0 %v1021, 116
  %v1107 = vpop.permute.xlu0 %1106
  %1108 = vrot.lane.b32.xlu0 %v1022, 116
  %v1109 = vpop.permute.xlu0 %1108
  %1110 = vrot.lane.b32.xlu0 %v1023, 116
  %v1111 = vpop.permute.xlu0 %1110
  %1112 = vrot.lane.b32.xlu0 %v1024, 116
  %v1113 = vpop.permute.xlu0 %1112
  %1114 = vrot.lane.b32.xlu0 %v1025, 116
  %v1115 = vpop.permute.xlu0 %1114
  %v1146 = vadd.f32 %v667, %v1057
  %v1147 = vadd.f32 %v670, %v1059
  %v1148 = vadd.f32 %v673, %v1061
  %v1149 = vadd.f32 %v676, %v1063
  %v1150 = vadd.f32 %v679, %v1065
  %v1151 = vadd.f32 %v682, %v1067
  %v1152 = vadd.f32 %v685, %v1069
  %v1153 = vadd.f32 %v688, %v1071
  %v1154 = vadd.f32 %v691, %v1073
  %v1155 = vadd.f32 %v694, %v1075
  %v1156 = vadd.f32 %v697, %v1077
  %v1157 = vadd.f32 %v700, %v1079
  %v1158 = vadd.f32 %v703, %v1081
  %v1159 = vadd.f32 %v706, %v1083
  %v1160 = vadd.f32 %v709, %v1085
  %v1161 = vadd.f32 %v712, %v1087
  %v1162 = vadd.f32 %v715, %v1089
  %v1163 = vadd.f32 %v718, %v1091
  %v1164 = vadd.f32 %v721, %v1093
  %v1165 = vadd.f32 %v724, %v1095
  %v1166 = vadd.f32 %v727, %v1097
  %v1167 = vadd.f32 %v730, %v1099
  %v1168 = vadd.f32 %v733, %v1101
  %v1169 = vadd.f32 %v736, %v1103
  %v1170 = vadd.f32 %v739, %v1105
  %v1171 = vadd.f32 %v742, %v1107
  %v1172 = vadd.f32 %v745, %v1109
  %v1173 = vadd.f32 %v748, %v1111
  %v1174 = vadd.f32 %v751, %v1113
  %v1175 = vadd.f32 %v754, %v1115
  %v1176 = vld [vmem:[%s8] sm:$0xff]
  %v1177 = vld [vmem:[%s8 + $0x8] sm:$0xf]
  %v1178 = vld [vmem:[%s9] sm:$0x1]
  %v1180 = vperm.slane %v1178, 0
  %v1183 = vsel %vm82, %v1146, 0
  %v1186 = vsel %vm82, %v1147, 0
  %v1189 = vsel %vm82, %v1148, 0
  %v1192 = vsel %vm82, %v1149, 0
  %v1195 = vsel %vm82, %v1150, 0
  %v1198 = vsel %vm82, %v1151, 0
  %v1201 = vsel %vm82, %v1152, 0
  %v1204 = vsel %vm82, %v1153, 0
  %v1207 = vsel %vm82, %v1154, 0
  %v1210 = vsel %vm82, %v1155, 0
  %v1213 = vsel %vm82, %v1156, 0
  %v1216 = vsel %vm82, %v1157, 0
  %v1219 = vsel %vm82, %v1158, 0
  %v1222 = vsel %vm82, %v1159, 0
  %v1225 = vsel %vm82, %v1160, 0
  %v1228 = vsel %vm82, %v1161, 0
  %v1231 = vsel %vm82, %v1162, 0
  %v1234 = vsel %vm82, %v1163, 0
  %v1237 = vsel %vm82, %v1164, 0
  %v1240 = vsel %vm82, %v1165, 0
  %v1243 = vsel %vm82, %v1166, 0
  %v1246 = vsel %vm82, %v1167, 0
  %v1249 = vsel %vm82, %v1168, 0
  %v1252 = vsel %vm82, %v1169, 0
  %v1255 = vsel %vm82, %v1170, 0
  %v1258 = vsel %vm82, %v1171, 0
  %v1261 = vsel %vm82, %v1172, 0
  %v1264 = vsel %vm82, %v1173, 0
  %v1267 = vsel %vm82, %v1174, 0
  %v1270 = vsel %vm82, %v1175, 0
  %v1273 = vsel %vm173, %v1177, 0
  %1275 = vmatpush.msra.mxu0 0.0
  %1276 = vmatpush.msra.mxu0 0.0
  %1277 = vmatpush.msra.mxu0 0.0
  %1278 = vmatpush.msra.mxu0 0.0
  %1279 = vmatpush.msra.mxu0 0.0
  %1280 = vmatpush.msra.mxu0 0.0
  %1281 = vmatpush.msra.mxu0 0.0
  %1282 = vmatpush.msra.mxu0 0.0
  %1283 = vmatpush.msra.mxu0 0.0
  %1284 = vmatpush.msra.mxu0 0.0
  %1285 = vmatpush.msra.mxu0 0.0
  %1286 = vmatpush.msra.mxu0 0.0
  %1287 = vmatpush.msra.mxu0 0.0
  %1288 = vmatpush.msra.mxu0 0.0
  %1289 = vmatpush.msra.mxu0 %v1273
  %1290 = vmatpush.msra.mxu0 %v1176
  %1291 = vmatmul.f32.gmra.mxu0 %v1183
  %v1292 = vpop.f32.mrf.mxu0
  %v1293 = vadd.f32 %v1180, %v1292
  %1294 = vmatmul.f32.gmra.mxu0 %v1186
  %v1295 = vpop.f32.mrf.mxu0
  %v1296 = vadd.f32 %v1180, %v1295
  %1297 = vmatmul.f32.gmra.mxu0 %v1189
  %v1298 = vpop.f32.mrf.mxu0
  %v1299 = vadd.f32 %v1180, %v1298
  %1300 = vmatmul.f32.gmra.mxu0 %v1192
  %v1301 = vpop.f32.mrf.mxu0
  %v1302 = vadd.f32 %v1180, %v1301
  %1303 = vmatmul.f32.gmra.mxu0 %v1195
  %v1304 = vpop.f32.mrf.mxu0
  %v1305 = vadd.f32 %v1180, %v1304
  %1306 = vmatmul.f32.gmra.mxu0 %v1198
  %v1307 = vpop.f32.mrf.mxu0
  %v1308 = vadd.f32 %v1180, %v1307
  %1309 = vmatmul.f32.gmra.mxu0 %v1201
  %v1310 = vpop.f32.mrf.mxu0
  %v1311 = vadd.f32 %v1180, %v1310
  %1312 = vmatmul.f32.gmra.mxu0 %v1204
  %v1313 = vpop.f32.mrf.mxu0
  %v1314 = vadd.f32 %v1180, %v1313
  %1315 = vmatmul.f32.gmra.mxu0 %v1207
  %v1316 = vpop.f32.mrf.mxu0
  %v1317 = vadd.f32 %v1180, %v1316
  %1318 = vmatmul.f32.gmra.mxu0 %v1210
  %v1319 = vpop.f32.mrf.mxu0
  %v1320 = vadd.f32 %v1180, %v1319
  %1321 = vmatmul.f32.gmra.mxu0 %v1213
  %v1322 = vpop.f32.mrf.mxu0
  %v1323 = vadd.f32 %v1180, %v1322
  %1324 = vmatmul.f32.gmra.mxu0 %v1216
  %v1325 = vpop.f32.mrf.mxu0
  %v1326 = vadd.f32 %v1180, %v1325
  %1327 = vmatmul.f32.gmra.mxu0 %v1219
  %v1328 = vpop.f32.mrf.mxu0
  %v1329 = vadd.f32 %v1180, %v1328
  %1330 = vmatmul.f32.gmra.mxu0 %v1222
  %v1331 = vpop.f32.mrf.mxu0
  %v1332 = vadd.f32 %v1180, %v1331
  %1333 = vmatmul.f32.gmra.mxu0 %v1225
  %v1334 = vpop.f32.mrf.mxu0
  %v1335 = vadd.f32 %v1180, %v1334
  %1336 = vmatmul.f32.gmra.mxu0 %v1228
  %v1337 = vpop.f32.mrf.mxu0
  %v1338 = vadd.f32 %v1180, %v1337
  %1339 = vmatmul.f32.gmra.mxu0 %v1231
  %v1340 = vpop.f32.mrf.mxu0
  %v1341 = vadd.f32 %v1180, %v1340
  %1342 = vmatmul.f32.gmra.mxu0 %v1234
  %v1343 = vpop.f32.mrf.mxu0
  %v1344 = vadd.f32 %v1180, %v1343
  %1345 = vmatmul.f32.gmra.mxu0 %v1237
  %v1346 = vpop.f32.mrf.mxu0
  %v1347 = vadd.f32 %v1180, %v1346
  %1348 = vmatmul.f32.gmra.mxu0 %v1240
  %v1349 = vpop.f32.mrf.mxu0
  %v1350 = vadd.f32 %v1180, %v1349
  %1351 = vmatmul.f32.gmra.mxu0 %v1243
  %v1352 = vpop.f32.mrf.mxu0
  %v1353 = vadd.f32 %v1180, %v1352
  %1354 = vmatmul.f32.gmra.mxu0 %v1246
  %v1355 = vpop.f32.mrf.mxu0
  %v1356 = vadd.f32 %v1180, %v1355
  %1357 = vmatmul.f32.gmra.mxu0 %v1249
  %v1358 = vpop.f32.mrf.mxu0
  %v1359 = vadd.f32 %v1180, %v1358
  %1360 = vmatmul.f32.gmra.mxu0 %v1252
  %v1361 = vpop.f32.mrf.mxu0
  %v1362 = vadd.f32 %v1180, %v1361
  %1363 = vmatmul.f32.gmra.mxu0 %v1255
  %v1364 = vpop.f32.mrf.mxu0
  %v1365 = vadd.f32 %v1180, %v1364
  %1366 = vmatmul.f32.gmra.mxu0 %v1258
  %v1367 = vpop.f32.mrf.mxu0
  %v1368 = vadd.f32 %v1180, %v1367
  %1369 = vmatmul.f32.gmra.mxu0 %v1261
  %v1370 = vpop.f32.mrf.mxu0
  %v1371 = vadd.f32 %v1180, %v1370
  %1372 = vmatmul.f32.gmra.mxu0 %v1264
  %v1373 = vpop.f32.mrf.mxu0
  %v1374 = vadd.f32 %v1180, %v1373
  %1375 = vmatmul.f32.gmra.mxu0 %v1267
  %v1376 = vpop.f32.mrf.mxu0
  %v1377 = vadd.f32 %v1180, %v1376
  %1378 = vmatmul.f32.gmra.mxu0 %v1270
  %v1379 = vpop.f32.mrf.mxu0
  %v1380 = vadd.f32 %v1180, %v1379
  %1381 = vdwg.mxu0
  %v1382 = vmax.f32 %v1293, 0.0
  %v1383 = vmax.f32 %v1296, 0.0
  %v1384 = vmax.f32 %v1299, 0.0
  %v1385 = vmax.f32 %v1302, 0.0
  %v1386 = vmax.f32 %v1305, 0.0
  %v1387 = vmax.f32 %v1308, 0.0
  %v1388 = vmax.f32 %v1311, 0.0
  %v1389 = vmax.f32 %v1314, 0.0
  %v1390 = vmax.f32 %v1317, 0.0
  %v1391 = vmax.f32 %v1320, 0.0
  %v1392 = vmax.f32 %v1323, 0.0
  %v1393 = vmax.f32 %v1326, 0.0
  %v1394 = vmax.f32 %v1329, 0.0
  %v1395 = vmax.f32 %v1332, 0.0
  %v1396 = vmax.f32 %v1335, 0.0
  %v1397 = vmax.f32 %v1338, 0.0
  %v1398 = vmax.f32 %v1341, 0.0
  %v1399 = vmax.f32 %v1344, 0.0
  %v1400 = vmax.f32 %v1347, 0.0
  %v1401 = vmax.f32 %v1350, 0.0
  %v1402 = vmax.f32 %v1353, 0.0
  %v1403 = vmax.f32 %v1356, 0.0
  %v1404 = vmax.f32 %v1359, 0.0
  %v1405 = vmax.f32 %v1362, 0.0
  %v1406 = vmax.f32 %v1365, 0.0
  %v1407 = vmax.f32 %v1368, 0.0
  %v1408 = vmax.f32 %v1371, 0.0
  %v1409 = vmax.f32 %v1374, 0.0
  %v1410 = vmax.f32 %v1377, 0.0
  %v1411 = vmax.f32 %v1380, 0.0
  %v1412 = vld [vmem:[%s10] sm:$0xff]
  %v1413 = vld [vmem:[%s10 + $0x8] sm:$0xf]
  %v1414 = vld [vmem:[%s11] sm:$0x1]
  %v1416 = vperm.slane %v1414, 0
  %v1419 = vsel %vm82, %v1382, 0
  %v1422 = vsel %vm82, %v1383, 0
  %v1425 = vsel %vm82, %v1384, 0
  %v1428 = vsel %vm82, %v1385, 0
  %v1431 = vsel %vm82, %v1386, 0
  %v1434 = vsel %vm82, %v1387, 0
  %v1437 = vsel %vm82, %v1388, 0
  %v1440 = vsel %vm82, %v1389, 0
  %v1443 = vsel %vm82, %v1390, 0
  %v1446 = vsel %vm82, %v1391, 0
  %v1449 = vsel %vm82, %v1392, 0
  %v1452 = vsel %vm82, %v1393, 0
  %v1455 = vsel %vm82, %v1394, 0
  %v1458 = vsel %vm82, %v1395, 0
  %v1461 = vsel %vm82, %v1396, 0
  %v1464 = vsel %vm82, %v1397, 0
  %v1467 = vsel %vm82, %v1398, 0
  %v1470 = vsel %vm82, %v1399, 0
  %v1473 = vsel %vm82, %v1400, 0
  %v1476 = vsel %vm82, %v1401, 0
  %v1479 = vsel %vm82, %v1402, 0
  %v1482 = vsel %vm82, %v1403, 0
  %v1485 = vsel %vm82, %v1404, 0
  %v1488 = vsel %vm82, %v1405, 0
  %v1491 = vsel %vm82, %v1406, 0
  %v1494 = vsel %vm82, %v1407, 0
  %v1497 = vsel %vm82, %v1408, 0
  %v1500 = vsel %vm82, %v1409, 0
  %v1503 = vsel %vm82, %v1410, 0
  %v1506 = vsel %vm82, %v1411, 0
  %v1509 = vsel %vm173, %v1413, 0
  %1511 = vmatpush.msra.mxu0 0.0
  %1512 = vmatpush.msra.mxu0 0.0
  %1513 = vmatpush.msra.mxu0 0.0
  %1514 = vmatpush.msra.mxu0 0.0
  %1515 = vmatpush.msra.mxu0 0.0
  %1516 = vmatpush.msra.mxu0 0.0
  %1517 = vmatpush.msra.mxu0 0.0
  %1518 = vmatpush.msra.mxu0 0.0
  %1519 = vmatpush.msra.mxu0 0.0
  %1520 = vmatpush.msra.mxu0 0.0
  %1521 = vmatpush.msra.mxu0 0.0
  %1522 = vmatpush.msra.mxu0 0.0
  %1523 = vmatpush.msra.mxu0 0.0
  %1524 = vmatpush.msra.mxu0 0.0
  %1525 = vmatpush.msra.mxu0 %v1509
  %1526 = vmatpush.msra.mxu0 %v1412
  %1527 = vmatmul.f32.gmra.mxu0 %v1419
  %v1528 = vpop.f32.mrf.mxu0
  %v1529 = vadd.f32 %v1416, %v1528
  %1530 = vmatmul.f32.gmra.mxu0 %v1422
  %v1531 = vpop.f32.mrf.mxu0
  %v1532 = vadd.f32 %v1416, %v1531
  %1533 = vmatmul.f32.gmra.mxu0 %v1425
  %v1534 = vpop.f32.mrf.mxu0
  %v1535 = vadd.f32 %v1416, %v1534
  %1536 = vmatmul.f32.gmra.mxu0 %v1428
  %v1537 = vpop.f32.mrf.mxu0
  %v1538 = vadd.f32 %v1416, %v1537
  %1539 = vmatmul.f32.gmra.mxu0 %v1431
  %v1540 = vpop.f32.mrf.mxu0
  %v1541 = vadd.f32 %v1416, %v1540
  %1542 = vmatmul.f32.gmra.mxu0 %v1434
  %v1543 = vpop.f32.mrf.mxu0
  %v1544 = vadd.f32 %v1416, %v1543
  %1545 = vmatmul.f32.gmra.mxu0 %v1437
  %v1546 = vpop.f32.mrf.mxu0
  %v1547 = vadd.f32 %v1416, %v1546
  %1548 = vmatmul.f32.gmra.mxu0 %v1440
  %v1549 = vpop.f32.mrf.mxu0
  %v1550 = vadd.f32 %v1416, %v1549
  %1551 = vmatmul.f32.gmra.mxu0 %v1443
  %v1552 = vpop.f32.mrf.mxu0
  %v1553 = vadd.f32 %v1416, %v1552
  %1554 = vmatmul.f32.gmra.mxu0 %v1446
  %v1555 = vpop.f32.mrf.mxu0
  %v1556 = vadd.f32 %v1416, %v1555
  %1557 = vmatmul.f32.gmra.mxu0 %v1449
  %v1558 = vpop.f32.mrf.mxu0
  %v1559 = vadd.f32 %v1416, %v1558
  %1560 = vmatmul.f32.gmra.mxu0 %v1452
  %v1561 = vpop.f32.mrf.mxu0
  %v1562 = vadd.f32 %v1416, %v1561
  %1563 = vmatmul.f32.gmra.mxu0 %v1455
  %v1564 = vpop.f32.mrf.mxu0
  %v1565 = vadd.f32 %v1416, %v1564
  %1566 = vmatmul.f32.gmra.mxu0 %v1458
  %v1567 = vpop.f32.mrf.mxu0
  %v1568 = vadd.f32 %v1416, %v1567
  %1569 = vmatmul.f32.gmra.mxu0 %v1461
  %v1570 = vpop.f32.mrf.mxu0
  %v1571 = vadd.f32 %v1416, %v1570
  %1572 = vmatmul.f32.gmra.mxu0 %v1464
  %v1573 = vpop.f32.mrf.mxu0
  %v1574 = vadd.f32 %v1416, %v1573
  %1575 = vmatmul.f32.gmra.mxu0 %v1467
  %v1576 = vpop.f32.mrf.mxu0
  %v1577 = vadd.f32 %v1416, %v1576
  %1578 = vmatmul.f32.gmra.mxu0 %v1470
  %v1579 = vpop.f32.mrf.mxu0
  %v1580 = vadd.f32 %v1416, %v1579
  %1581 = vmatmul.f32.gmra.mxu0 %v1473
  %v1582 = vpop.f32.mrf.mxu0
  %v1583 = vadd.f32 %v1416, %v1582
  %1584 = vmatmul.f32.gmra.mxu0 %v1476
  %v1585 = vpop.f32.mrf.mxu0
  %v1586 = vadd.f32 %v1416, %v1585
  %1587 = vmatmul.f32.gmra.mxu0 %v1479
  %v1588 = vpop.f32.mrf.mxu0
  %v1589 = vadd.f32 %v1416, %v1588
  %1590 = vmatmul.f32.gmra.mxu0 %v1482
  %v1591 = vpop.f32.mrf.mxu0
  %v1592 = vadd.f32 %v1416, %v1591
  %1593 = vmatmul.f32.gmra.mxu0 %v1485
  %v1594 = vpop.f32.mrf.mxu0
  %v1595 = vadd.f32 %v1416, %v1594
  %1596 = vmatmul.f32.gmra.mxu0 %v1488
  %v1597 = vpop.f32.mrf.mxu0
  %v1598 = vadd.f32 %v1416, %v1597
  %1599 = vmatmul.f32.gmra.mxu0 %v1491
  %v1600 = vpop.f32.mrf.mxu0
  %v1601 = vadd.f32 %v1416, %v1600
  %1602 = vmatmul.f32.gmra.mxu0 %v1494
  %v1603 = vpop.f32.mrf.mxu0
  %v1604 = vadd.f32 %v1416, %v1603
  %1605 = vmatmul.f32.gmra.mxu0 %v1497
  %v1606 = vpop.f32.mrf.mxu0
  %v1607 = vadd.f32 %v1416, %v1606
  %1608 = vmatmul.f32.gmra.mxu0 %v1500
  %v1609 = vpop.f32.mrf.mxu0
  %v1610 = vadd.f32 %v1416, %v1609
  %1611 = vmatmul.f32.gmra.mxu0 %v1503
  %v1612 = vpop.f32.mrf.mxu0
  %v1613 = vadd.f32 %v1416, %v1612
  %1614 = vmatmul.f32.gmra.mxu0 %v1506
  %v1615 = vpop.f32.mrf.mxu0
  %v1616 = vadd.f32 %v1416, %v1615
  %1617 = vdwg.mxu0
  %v1618 = vmax.f32 %v1529, 0.0
  %v1619 = vmax.f32 %v1532, 0.0
  %v1620 = vmax.f32 %v1535, 0.0
  %v1621 = vmax.f32 %v1538, 0.0
  %v1622 = vmax.f32 %v1541, 0.0
  %v1623 = vmax.f32 %v1544, 0.0
  %v1624 = vmax.f32 %v1547, 0.0
  %v1625 = vmax.f32 %v1550, 0.0
  %v1626 = vmax.f32 %v1553, 0.0
  %v1627 = vmax.f32 %v1556, 0.0
  %v1628 = vmax.f32 %v1559, 0.0
  %v1629 = vmax.f32 %v1562, 0.0
  %v1630 = vmax.f32 %v1565, 0.0
  %v1631 = vmax.f32 %v1568, 0.0
  %v1632 = vmax.f32 %v1571, 0.0
  %v1633 = vmax.f32 %v1574, 0.0
  %v1634 = vmax.f32 %v1577, 0.0
  %v1635 = vmax.f32 %v1580, 0.0
  %v1636 = vmax.f32 %v1583, 0.0
  %v1637 = vmax.f32 %v1586, 0.0
  %v1638 = vmax.f32 %v1589, 0.0
  %v1639 = vmax.f32 %v1592, 0.0
  %v1640 = vmax.f32 %v1595, 0.0
  %v1641 = vmax.f32 %v1598, 0.0
  %v1642 = vmax.f32 %v1601, 0.0
  %v1643 = vmax.f32 %v1604, 0.0
  %v1644 = vmax.f32 %v1607, 0.0
  %v1645 = vmax.f32 %v1610, 0.0
  %v1646 = vmax.f32 %v1613, 0.0
  %v1647 = vmax.f32 %v1616, 0.0
  %1648 = vst.msk [vmem:[%s12] sm:$0xff] %vm82, %v520
  %1649 = vst.msk [vmem:[%s12 + $0x8] sm:$0xff] %vm82, %v521
  %1650 = vst.msk [vmem:[%s12 + $0x10] sm:$0xff] %vm82, %v522
  %1651 = vst.msk [vmem:[%s12 + $0x18] sm:$0xff] %vm82, %v523
  %1652 = vst.msk [vmem:[%s12 + $0x20] sm:$0xff] %vm82, %v524
  %1653 = vst.msk [vmem:[%s12 + $0x28] sm:$0xff] %vm82, %v525
  %1654 = vst.msk [vmem:[%s12 + $0x30] sm:$0xff] %vm82, %v526
  %1655 = vst.msk [vmem:[%s12 + $0x38] sm:$0xff] %vm82, %v527
  %1656 = vst.msk [vmem:[%s12 + $0x40] sm:$0xff] %vm82, %v528
  %1657 = vst.msk [vmem:[%s12 + $0x48] sm:$0xff] %vm82, %v529
  %1658 = vst.msk [vmem:[%s12 + $0x50] sm:$0xff] %vm82, %v530
  %1659 = vst.msk [vmem:[%s12 + $0x58] sm:$0xff] %vm82, %v531
  %1660 = vst.msk [vmem:[%s12 + $0x60] sm:$0xff] %vm82, %v532
  %1661 = vst.msk [vmem:[%s12 + $0x68] sm:$0xff] %vm82, %v533
  %1662 = vst.msk [vmem:[%s12 + $0x70] sm:$0xff] %vm82, %v534
  %1663 = vst.msk [vmem:[%s12 + $0x78] sm:$0xff] %vm82, %v535
  %1664 = vst.msk [vmem:[%s12 + $0x80] sm:$0xff] %vm82, %v536
  %1665 = vst.msk [vmem:[%s12 + $0x88] sm:$0xff] %vm82, %v537
  %1666 = vst.msk [vmem:[%s12 + $0x90] sm:$0xff] %vm82, %v538
  %1667 = vst.msk [vmem:[%s12 + $0x98] sm:$0xff] %vm82, %v539
  %1668 = vst.msk [vmem:[%s12 + $0xa0] sm:$0xff] %vm82, %v540
  %1669 = vst.msk [vmem:[%s12 + $0xa8] sm:$0xff] %vm82, %v541
  %1670 = vst.msk [vmem:[%s12 + $0xb0] sm:$0xff] %vm82, %v542
  %1671 = vst.msk [vmem:[%s12 + $0xb8] sm:$0xff] %vm82, %v543
  %1672 = vst.msk [vmem:[%s12 + $0xc0] sm:$0xff] %vm82, %v544
  %1673 = vst.msk [vmem:[%s12 + $0xc8] sm:$0xff] %vm82, %v545
  %1674 = vst.msk [vmem:[%s12 + $0xd0] sm:$0xff] %vm82, %v546
  %1675 = vst.msk [vmem:[%s12 + $0xd8] sm:$0xff] %vm82, %v547
  %1676 = vst.msk [vmem:[%s12 + $0xe0] sm:$0xff] %vm82, %v548
  %1677 = vst.msk [vmem:[%s12 + $0xe8] sm:$0xff] %vm82, %v549
  %1678 = vst.msk [vmem:[%s13] sm:$0xff] %vm82, %v667
  %1679 = vst.msk [vmem:[%s13 + $0x8] sm:$0xff] %vm82, %v670
  %1680 = vst.msk [vmem:[%s13 + $0x10] sm:$0xff] %vm82, %v673
  %1681 = vst.msk [vmem:[%s13 + $0x18] sm:$0xff] %vm82, %v676
  %1682 = vst.msk [vmem:[%s13 + $0x20] sm:$0xff] %vm82, %v679
  %1683 = vst.msk [vmem:[%s13 + $0x28] sm:$0xff] %vm82, %v682
  %1684 = vst.msk [vmem:[%s13 + $0x30] sm:$0xff] %vm82, %v685
  %1685 = vst.msk [vmem:[%s13 + $0x38] sm:$0xff] %vm82, %v688
  %1686 = vst.msk [vmem:[%s13 + $0x40] sm:$0xff] %vm82, %v691
  %1687 = vst.msk [vmem:[%s13 + $0x48] sm:$0xff] %vm82, %v694
  %1688 = vst.msk [vmem:[%s13 + $0x50] sm:$0xff] %vm82, %v697
  %1689 = vst.msk [vmem:[%s13 + $0x58] sm:$0xff] %vm82, %v700
  %1690 = vst.msk [vmem:[%s13 + $0x60] sm:$0xff] %vm82, %v703
  %1691 = vst.msk [vmem:[%s13 + $0x68] sm:$0xff] %vm82, %v706
  %1692 = vst.msk [vmem:[%s13 + $0x70] sm:$0xff] %vm82, %v709
  %1693 = vst.msk [vmem:[%s13 + $0x78] sm:$0xff] %vm82, %v712
  %1694 = vst.msk [vmem:[%s13 + $0x80] sm:$0xff] %vm82, %v715
  %1695 = vst.msk [vmem:[%s13 + $0x88] sm:$0xff] %vm82, %v718
  %1696 = vst.msk [vmem:[%s13 + $0x90] sm:$0xff] %vm82, %v721
  %1697 = vst.msk [vmem:[%s13 + $0x98] sm:$0xff] %vm82, %v724
  %1698 = vst.msk [vmem:[%s13 + $0xa0] sm:$0xff] %vm82, %v727
  %1699 = vst.msk [vmem:[%s13 + $0xa8] sm:$0xff] %vm82, %v730
  %1700 = vst.msk [vmem:[%s13 + $0xb0] sm:$0xff] %vm82, %v733
  %1701 = vst.msk [vmem:[%s13 + $0xb8] sm:$0xff] %vm82, %v736
  %1702 = vst.msk [vmem:[%s13 + $0xc0] sm:$0xff] %vm82, %v739
  %1703 = vst.msk [vmem:[%s13 + $0xc8] sm:$0xff] %vm82, %v742
  %1704 = vst.msk [vmem:[%s13 + $0xd0] sm:$0xff] %vm82, %v745
  %1705 = vst.msk [vmem:[%s13 + $0xd8] sm:$0xff] %vm82, %v748
  %1706 = vst.msk [vmem:[%s13 + $0xe0] sm:$0xff] %vm82, %v751
  %1707 = vst.msk [vmem:[%s13 + $0xe8] sm:$0xff] %vm82, %v754
  %1738 = vrot.lane.b32.xlu0 %v667, 116
  %v1739 = vpop.permute.xlu0 %1738
  %1740 = vrot.lane.b32.xlu0 %v670, 116
  %v1741 = vpop.permute.xlu0 %1740
  %1742 = vrot.lane.b32.xlu0 %v673, 116
  %v1743 = vpop.permute.xlu0 %1742
  %1744 = vrot.lane.b32.xlu0 %v676, 116
  %v1745 = vpop.permute.xlu0 %1744
  %1746 = vrot.lane.b32.xlu0 %v679, 116
  %v1747 = vpop.permute.xlu0 %1746
  %1748 = vrot.lane.b32.xlu0 %v682, 116
  %v1749 = vpop.permute.xlu0 %1748
  %1750 = vrot.lane.b32.xlu0 %v685, 116
  %v1751 = vpop.permute.xlu0 %1750
  %1752 = vrot.lane.b32.xlu0 %v688, 116
  %v1753 = vpop.permute.xlu0 %1752
  %1754 = vrot.lane.b32.xlu0 %v691, 116
  %v1755 = vpop.permute.xlu0 %1754
  %1756 = vrot.lane.b32.xlu0 %v694, 116
  %v1757 = vpop.permute.xlu0 %1756
  %1758 = vrot.lane.b32.xlu0 %v697, 116
  %v1759 = vpop.permute.xlu0 %1758
  %1760 = vrot.lane.b32.xlu0 %v700, 116
  %v1761 = vpop.permute.xlu0 %1760
  %1762 = vrot.lane.b32.xlu0 %v703, 116
  %v1763 = vpop.permute.xlu0 %1762
  %1764 = vrot.lane.b32.xlu0 %v706, 116
  %v1765 = vpop.permute.xlu0 %1764
  %1766 = vrot.lane.b32.xlu0 %v709, 116
  %v1767 = vpop.permute.xlu0 %1766
  %1768 = vrot.lane.b32.xlu0 %v712, 116
  %v1769 = vpop.permute.xlu0 %1768
  %1770 = vrot.lane.b32.xlu0 %v715, 116
  %v1771 = vpop.permute.xlu0 %1770
  %1772 = vrot.lane.b32.xlu0 %v718, 116
  %v1773 = vpop.permute.xlu0 %1772
  %1774 = vrot.lane.b32.xlu0 %v721, 116
  %v1775 = vpop.permute.xlu0 %1774
  %1776 = vrot.lane.b32.xlu0 %v724, 116
  %v1777 = vpop.permute.xlu0 %1776
  %1778 = vrot.lane.b32.xlu0 %v727, 116
  %v1779 = vpop.permute.xlu0 %1778
  %1780 = vrot.lane.b32.xlu0 %v730, 116
  %v1781 = vpop.permute.xlu0 %1780
  %1782 = vrot.lane.b32.xlu0 %v733, 116
  %v1783 = vpop.permute.xlu0 %1782
  %1784 = vrot.lane.b32.xlu0 %v736, 116
  %v1785 = vpop.permute.xlu0 %1784
  %1786 = vrot.lane.b32.xlu0 %v739, 116
  %v1787 = vpop.permute.xlu0 %1786
  %1788 = vrot.lane.b32.xlu0 %v742, 116
  %v1789 = vpop.permute.xlu0 %1788
  %1790 = vrot.lane.b32.xlu0 %v745, 116
  %v1791 = vpop.permute.xlu0 %1790
  %1792 = vrot.lane.b32.xlu0 %v748, 116
  %v1793 = vpop.permute.xlu0 %1792
  %1794 = vrot.lane.b32.xlu0 %v751, 116
  %v1795 = vpop.permute.xlu0 %1794
  %1796 = vrot.lane.b32.xlu0 %v754, 116
  %v1797 = vpop.permute.xlu0 %1796
  %1828 = vst.msk [vmem:[%s14] sm:$0xff] %vm82, %v1739
  %1829 = vst.msk [vmem:[%s14 + $0x8] sm:$0xff] %vm82, %v1741
  %1830 = vst.msk [vmem:[%s14 + $0x10] sm:$0xff] %vm82, %v1743
  %1831 = vst.msk [vmem:[%s14 + $0x18] sm:$0xff] %vm82, %v1745
  %1832 = vst.msk [vmem:[%s14 + $0x20] sm:$0xff] %vm82, %v1747
  %1833 = vst.msk [vmem:[%s14 + $0x28] sm:$0xff] %vm82, %v1749
  %1834 = vst.msk [vmem:[%s14 + $0x30] sm:$0xff] %vm82, %v1751
  %1835 = vst.msk [vmem:[%s14 + $0x38] sm:$0xff] %vm82, %v1753
  %1836 = vst.msk [vmem:[%s14 + $0x40] sm:$0xff] %vm82, %v1755
  %1837 = vst.msk [vmem:[%s14 + $0x48] sm:$0xff] %vm82, %v1757
  %1838 = vst.msk [vmem:[%s14 + $0x50] sm:$0xff] %vm82, %v1759
  %1839 = vst.msk [vmem:[%s14 + $0x58] sm:$0xff] %vm82, %v1761
  %1840 = vst.msk [vmem:[%s14 + $0x60] sm:$0xff] %vm82, %v1763
  %1841 = vst.msk [vmem:[%s14 + $0x68] sm:$0xff] %vm82, %v1765
  %1842 = vst.msk [vmem:[%s14 + $0x70] sm:$0xff] %vm82, %v1767
  %1843 = vst.msk [vmem:[%s14 + $0x78] sm:$0xff] %vm82, %v1769
  %1844 = vst.msk [vmem:[%s14 + $0x80] sm:$0xff] %vm82, %v1771
  %1845 = vst.msk [vmem:[%s14 + $0x88] sm:$0xff] %vm82, %v1773
  %1846 = vst.msk [vmem:[%s14 + $0x90] sm:$0xff] %vm82, %v1775
  %1847 = vst.msk [vmem:[%s14 + $0x98] sm:$0xff] %vm82, %v1777
  %1848 = vst.msk [vmem:[%s14 + $0xa0] sm:$0xff] %vm82, %v1779
  %1849 = vst.msk [vmem:[%s14 + $0xa8] sm:$0xff] %vm82, %v1781
  %1850 = vst.msk [vmem:[%s14 + $0xb0] sm:$0xff] %vm82, %v1783
  %1851 = vst.msk [vmem:[%s14 + $0xb8] sm:$0xff] %vm82, %v1785
  %1852 = vst.msk [vmem:[%s14 + $0xc0] sm:$0xff] %vm82, %v1787
  %1853 = vst.msk [vmem:[%s14 + $0xc8] sm:$0xff] %vm82, %v1789
  %1854 = vst.msk [vmem:[%s14 + $0xd0] sm:$0xff] %vm82, %v1791
  %1855 = vst.msk [vmem:[%s14 + $0xd8] sm:$0xff] %vm82, %v1793
  %1856 = vst.msk [vmem:[%s14 + $0xe0] sm:$0xff] %vm82, %v1795
  %1857 = vst.msk [vmem:[%s14 + $0xe8] sm:$0xff] %vm82, %v1797
  %1858 = vst.msk [vmem:[%s15] sm:$0xff] %vm82, %v1146
  %1859 = vst.msk [vmem:[%s15 + $0x8] sm:$0xff] %vm82, %v1147
  %1860 = vst.msk [vmem:[%s15 + $0x10] sm:$0xff] %vm82, %v1148
  %1861 = vst.msk [vmem:[%s15 + $0x18] sm:$0xff] %vm82, %v1149
  %1862 = vst.msk [vmem:[%s15 + $0x20] sm:$0xff] %vm82, %v1150
  %1863 = vst.msk [vmem:[%s15 + $0x28] sm:$0xff] %vm82, %v1151
  %1864 = vst.msk [vmem:[%s15 + $0x30] sm:$0xff] %vm82, %v1152
  %1865 = vst.msk [vmem:[%s15 + $0x38] sm:$0xff] %vm82, %v1153
  %1866 = vst.msk [vmem:[%s15 + $0x40] sm:$0xff] %vm82, %v1154
  %1867 = vst.msk [vmem:[%s15 + $0x48] sm:$0xff] %vm82, %v1155
  %1868 = vst.msk [vmem:[%s15 + $0x50] sm:$0xff] %vm82, %v1156
  %1869 = vst.msk [vmem:[%s15 + $0x58] sm:$0xff] %vm82, %v1157
  %1870 = vst.msk [vmem:[%s15 + $0x60] sm:$0xff] %vm82, %v1158
  %1871 = vst.msk [vmem:[%s15 + $0x68] sm:$0xff] %vm82, %v1159
  %1872 = vst.msk [vmem:[%s15 + $0x70] sm:$0xff] %vm82, %v1160
  %1873 = vst.msk [vmem:[%s15 + $0x78] sm:$0xff] %vm82, %v1161
  %1874 = vst.msk [vmem:[%s15 + $0x80] sm:$0xff] %vm82, %v1162
  %1875 = vst.msk [vmem:[%s15 + $0x88] sm:$0xff] %vm82, %v1163
  %1876 = vst.msk [vmem:[%s15 + $0x90] sm:$0xff] %vm82, %v1164
  %1877 = vst.msk [vmem:[%s15 + $0x98] sm:$0xff] %vm82, %v1165
  %1878 = vst.msk [vmem:[%s15 + $0xa0] sm:$0xff] %vm82, %v1166
  %1879 = vst.msk [vmem:[%s15 + $0xa8] sm:$0xff] %vm82, %v1167
  %1880 = vst.msk [vmem:[%s15 + $0xb0] sm:$0xff] %vm82, %v1168
  %1881 = vst.msk [vmem:[%s15 + $0xb8] sm:$0xff] %vm82, %v1169
  %1882 = vst.msk [vmem:[%s15 + $0xc0] sm:$0xff] %vm82, %v1170
  %1883 = vst.msk [vmem:[%s15 + $0xc8] sm:$0xff] %vm82, %v1171
  %1884 = vst.msk [vmem:[%s15 + $0xd0] sm:$0xff] %vm82, %v1172
  %1885 = vst.msk [vmem:[%s15 + $0xd8] sm:$0xff] %vm82, %v1173
  %1886 = vst.msk [vmem:[%s15 + $0xe0] sm:$0xff] %vm82, %v1174
  %1887 = vst.msk [vmem:[%s15 + $0xe8] sm:$0xff] %vm82, %v1175
  %1888 = vst.msk [vmem:[%s16] sm:$0xff] %vm82, %v1618
  %1889 = vst.msk [vmem:[%s16 + $0x8] sm:$0xff] %vm82, %v1619
  %1890 = vst.msk [vmem:[%s16 + $0x10] sm:$0xff] %vm82, %v1620
  %1891 = vst.msk [vmem:[%s16 + $0x18] sm:$0xff] %vm82, %v1621
  %1892 = vst.msk [vmem:[%s16 + $0x20] sm:$0xff] %vm82, %v1622
  %1893 = vst.msk [vmem:[%s16 + $0x28] sm:$0xff] %vm82, %v1623
  %1894 = vst.msk [vmem:[%s16 + $0x30] sm:$0xff] %vm82, %v1624
  %1895 = vst.msk [vmem:[%s16 + $0x38] sm:$0xff] %vm82, %v1625
  %1896 = vst.msk [vmem:[%s16 + $0x40] sm:$0xff] %vm82, %v1626
  %1897 = vst.msk [vmem:[%s16 + $0x48] sm:$0xff] %vm82, %v1627
  %1898 = vst.msk [vmem:[%s16 + $0x50] sm:$0xff] %vm82, %v1628
  %1899 = vst.msk [vmem:[%s16 + $0x58] sm:$0xff] %vm82, %v1629
  %1900 = vst.msk [vmem:[%s16 + $0x60] sm:$0xff] %vm82, %v1630
  %1901 = vst.msk [vmem:[%s16 + $0x68] sm:$0xff] %vm82, %v1631
  %1902 = vst.msk [vmem:[%s16 + $0x70] sm:$0xff] %vm82, %v1632
  %1903 = vst.msk [vmem:[%s16 + $0x78] sm:$0xff] %vm82, %v1633
  %1904 = vst.msk [vmem:[%s16 + $0x80] sm:$0xff] %vm82, %v1634
  %1905 = vst.msk [vmem:[%s16 + $0x88] sm:$0xff] %vm82, %v1635
  %1906 = vst.msk [vmem:[%s16 + $0x90] sm:$0xff] %vm82, %v1636
  %1907 = vst.msk [vmem:[%s16 + $0x98] sm:$0xff] %vm82, %v1637
  %1908 = vst.msk [vmem:[%s16 + $0xa0] sm:$0xff] %vm82, %v1638
  %1909 = vst.msk [vmem:[%s16 + $0xa8] sm:$0xff] %vm82, %v1639
  %1910 = vst.msk [vmem:[%s16 + $0xb0] sm:$0xff] %vm82, %v1640
  %1911 = vst.msk [vmem:[%s16 + $0xb8] sm:$0xff] %vm82, %v1641
  %1912 = vst.msk [vmem:[%s16 + $0xc0] sm:$0xff] %vm82, %v1642
  %1913 = vst.msk [vmem:[%s16 + $0xc8] sm:$0xff] %vm82, %v1643
  %1914 = vst.msk [vmem:[%s16 + $0xd0] sm:$0xff] %vm82, %v1644
  %1915 = vst.msk [vmem:[%s16 + $0xd8] sm:$0xff] %vm82, %v1645
  %1916 = vst.msk [vmem:[%s16 + $0xe0] sm:$0xff] %vm82, %v1646
  %1917 = vst.msk [vmem:[%s16 + $0xe8] sm:$0xff] %vm82, %v1647
  // Predicated region
  $region50: #{vae_forward.7} parent=0 // pred_check
    _
  $region51: #{vae_forward.7} parent=0 // pred_check_branch
    %1919 = sbr.rel (0) target = $region53
  $region52: #{vae_forward.7} parent=0 // pred_region
    _
  $region53: #{vae_forward.7} parent=0 // pred_fallthru
    _
  // Predicated region
  $region54: #{vae_forward.7} parent=0 // pred_check
    _
  $region55: #{vae_forward.7} parent=0 // pred_check_branch
    %1921 = sbr.rel (0) target = $region57
  $region56: #{vae_forward.7} parent=0 // pred_region
    _
  $region57: #{vae_forward.7} parent=0 // pred_fallthru
    _
  // Predicated region
  $region58: #{vae_forward.7} parent=0 // pred_check
    _
  $region59: #{vae_forward.7} parent=0 // pred_check_branch
    %1923 = sbr.rel (0) target = $region61
  $region60: #{vae_forward.7} parent=0 // pred_region
    _
  $region61: #{vae_forward.7} parent=0 // pred_fallthru
    _
  // Predicated region
  $region62: #{vae_forward.7} parent=0 // pred_check
    _
  $region63: #{vae_forward.7} parent=0 // pred_check_branch
    %1925 = sbr.rel (0) target = $region65
  $region64: #{vae_forward.7} parent=0 // pred_region
    _
  $region65: #{vae_forward.7} parent=0 // pred_fallthru
    _
  // Predicated region
  $region66: #{vae_forward.7} parent=0 // pred_check
    _
  $region67: #{vae_forward.7} parent=0 // pred_check_branch
    %1927 = sbr.rel (0) target = $region69
  $region68: #{vae_forward.7} parent=0 // pred_region
    _
  $region69: #{vae_forward.7} parent=0 // pred_fallthru
    _
  // Predicated region
  $region70: #{vae_forward.7} parent=0 // pred_check
    _
  $region71: #{vae_forward.7} parent=0 // pred_check_branch
    %1929 = sbr.rel (0) target = $region73
  $region72: #{vae_forward.7} parent=0 // pred_region
    _
  $region73: #{vae_forward.7} parent=0 // pred_fallthru
    _
  // Predicated region
  $region74: #{vae_forward.7} parent=0 // pred_check
    _
  $region75: #{vae_forward.7} parent=0 // pred_check_branch
    %1931 = sbr.rel (0) target = $region77
  $region76: #{vae_forward.7} parent=0 // pred_region
    _
  $region77: #{vae_forward.7} parent=0 // pred_fallthru
    _
  // Predicated region
  $region78: #{vae_forward.7} parent=0 // pred_check
    _
  $region79: #{vae_forward.7} parent=0 // pred_check_branch
    %1933 = sbr.rel (0) target = $region81
  $region80: #{vae_forward.7} parent=0 // pred_region
    _
  $region81: #{vae_forward.7} parent=0 // pred_fallthru
    _
  // Predicated region
  $region82: #{vae_forward.7} parent=0 // pred_check
    _
  $region83: #{vae_forward.7} parent=0 // pred_check_branch
    %1935 = sbr.rel (0) target = $region85
  $region84: #{vae_forward.7} parent=0 // pred_region
    _
  $region85: #{vae_forward.7} parent=0 // pred_fallthru
    _
  // Predicated region
  $region86: #{vae_forward.7} parent=0 // pred_check
    _
  $region87: #{vae_forward.7} parent=0 // pred_check_branch
    %1937 = sbr.rel (0) target = $region89
  $region88: #{vae_forward.7} parent=0 // pred_region
    _
  $region89: #{vae_forward.7} parent=0 // pred_fallthru
    _

// kernel: vae_forward.9
$region0: #{vae_forward.9}
  #allocation0 [shape = 'u32[]', space=smem, size = 0x4, offset = 0x4, fixed_abs, tag = 'smem constant byte address 0x4 - core index']
  #allocation1 [shape = 'u32[72,128]{1,0:T(1,128)}', space=vmem, size = 0x9000, scoped, tag = 'internal scratch']
  #allocation2 [shape = 'f32[1]{0:T(128)S(6)}', space=smem, size = 0x200, scoped, tag = 'scoped memory for vae_forward.9']
  %s0 = inlined_call_operand.vmem [shape: f32[240,12], index: 0, kind: input, shape index: {}]
  %s1 = inlined_call_operand.vmem [shape: f32[2,128,6], index: 1, kind: input, shape index: {}]
  %s2 = inlined_call_operand.vmem [shape: f32[12,12], index: 2, kind: input, shape index: {}]
  %s3 = inlined_call_operand.vmem [shape: f32[1,12], index: 3, kind: input, shape index: {}]
  %s4 = inlined_call_operand.vmem [shape: f32[12,6], index: 4, kind: input, shape index: {}]
  %s5 = inlined_call_operand.vmem [shape: f32[1,6], index: 5, kind: input, shape index: {}]
  %s6 = inlined_call_operand.vmem [shape: f32[30,6], index: 6, kind: input, shape index: {}]
  %s7 = inlined_call_operand.vmem [shape: f32[1,6], index: 7, kind: input, shape index: {}]
  %s8 = inlined_call_operand.vmem [shape: f32[1,6], index: 8, kind: input, shape index: {}]
  %s9 = inlined_call_operand.vmem [shape: f32[1,6], index: 9, kind: input, shape index: {}]
  %s10 = inlined_call_operand.vmem [shape: f32[30,6], index: 10, kind: input, shape index: {}]
  %s11 = inlined_call_operand.vmem [shape: f32[1,6], index: 11, kind: input, shape index: {}]
  %s12 = inlined_call_operand.vmem [shape: f32[1,6], index: 12, kind: input, shape index: {}]
  %s13 = inlined_call_operand.vmem [shape: f32[1,6], index: 13, kind: input, shape index: {}]
  %s14 = inlined_call_operand.vmem [shape: f32[6,6], index: 14, kind: input, shape index: {}]
  %s15 = inlined_call_operand.vmem [shape: f32[1,6], index: 15, kind: input, shape index: {}]
  %s16 = inlined_call_operand.<no memory space> [shape: f32[1], index: 16, kind: input, shape index: {}]
  %s17 = inlined_call_operand.vmem [shape: f32[2,128,6], index: 17, kind: output, shape index: {0}]
  %s18 = inlined_call_operand.vmem [shape: f32[2,1], index: 18, kind: output, shape index: {1}]
  %19 = xla_tuple %s17, %s18
  %s20 = sld [smem:[#allocation0]]
  $region86: #{vae_forward.9} parent=0
    _
  %s22 = ssub.s32 1, %s20
  %s23 = scalar_select 0, %s22, %s20
  %24 = sst [smem:[#allocation2]] %s16
  // Predicated region
  $region2: #{vae_forward.9} parent=0 // pred_check
    _
  $region3: #{vae_forward.9} parent=0 // pred_check_branch
    %26 = sbr.rel (0) target = $region5
  $region4: #{vae_forward.9} parent=0 // pred_region
    _
  $region5: #{vae_forward.9} parent=0 // pred_fallthru
    _
  // Predicated region
  $region6: #{vae_forward.9} parent=0 // pred_check
    _
  $region7: #{vae_forward.9} parent=0 // pred_check_branch
    %28 = sbr.rel (0) target = $region9
  $region8: #{vae_forward.9} parent=0 // pred_region
    _
  $region9: #{vae_forward.9} parent=0 // pred_fallthru
    _
  // Predicated region
  $region10: #{vae_forward.9} parent=0 // pred_check
    _
  $region11: #{vae_forward.9} parent=0 // pred_check_branch
    %30 = sbr.rel (0) target = $region13
  $region12: #{vae_forward.9} parent=0 // pred_region
    _
  $region13: #{vae_forward.9} parent=0 // pred_fallthru
    _
  // Predicated region
  $region14: #{vae_forward.9} parent=0 // pred_check
    _
  $region15: #{vae_forward.9} parent=0 // pred_check_branch
    %32 = sbr.rel (0) target = $region17
  $region16: #{vae_forward.9} parent=0 // pred_region
    _
  $region17: #{vae_forward.9} parent=0 // pred_fallthru
    _
  // Predicated region
  $region18: #{vae_forward.9} parent=0 // pred_check
    _
  $region19: #{vae_forward.9} parent=0 // pred_check_branch
    %34 = sbr.rel (0) target = $region21
  $region20: #{vae_forward.9} parent=0 // pred_region
    _
  $region21: #{vae_forward.9} parent=0 // pred_fallthru
    _
  // Predicated region
  $region22: #{vae_forward.9} parent=0 // pred_check
    _
  $region23: #{vae_forward.9} parent=0 // pred_check_branch
    %36 = sbr.rel (0) target = $region25
  $region24: #{vae_forward.9} parent=0 // pred_region
    _
  $region25: #{vae_forward.9} parent=0 // pred_fallthru
    _
  // Predicated region
  $region26: #{vae_forward.9} parent=0 // pred_check
    _
  $region27: #{vae_forward.9} parent=0 // pred_check_branch
    %38 = sbr.rel (0) target = $region29
  $region28: #{vae_forward.9} parent=0 // pred_region
    _
  $region29: #{vae_forward.9} parent=0 // pred_fallthru
    _
  // Predicated region
  $region30: #{vae_forward.9} parent=0 // pred_check
    _
  $region31: #{vae_forward.9} parent=0 // pred_check_branch
    %40 = sbr.rel (0) target = $region33
  $region32: #{vae_forward.9} parent=0 // pred_region
    _
  $region33: #{vae_forward.9} parent=0 // pred_fallthru
    _
  // Predicated region
  $region34: #{vae_forward.9} parent=0 // pred_check
    _
  $region35: #{vae_forward.9} parent=0 // pred_check_branch
    %42 = sbr.rel (0) target = $region37
  $region36: #{vae_forward.9} parent=0 // pred_region
    _
  $region37: #{vae_forward.9} parent=0 // pred_fallthru
    _
  // Predicated region
  $region38: #{vae_forward.9} parent=0 // pred_check
    _
  $region39: #{vae_forward.9} parent=0 // pred_check_branch
    %44 = sbr.rel (0) target = $region41
  $region40: #{vae_forward.9} parent=0 // pred_region
    _
  $region41: #{vae_forward.9} parent=0 // pred_fallthru
    _
  // Predicated region
  $region42: #{vae_forward.9} parent=0 // pred_check
    _
  $region43: #{vae_forward.9} parent=0 // pred_check_branch
    %46 = sbr.rel (0) target = $region45
  $region44: #{vae_forward.9} parent=0 // pred_region
    _
  $region45: #{vae_forward.9} parent=0 // pred_fallthru
    _
  // Predicated region
  $region46: #{vae_forward.9} parent=0 // pred_check
    _
  $region47: #{vae_forward.9} parent=0 // pred_check_branch
    %48 = sbr.rel (0) target = $region49
  $region48: #{vae_forward.9} parent=0 // pred_region
    _
  $region49: #{vae_forward.9} parent=0 // pred_fallthru
    _
  // Predicated region
  $region50: #{vae_forward.9} parent=0 // pred_check
    _
  $region51: #{vae_forward.9} parent=0 // pred_check_branch
    %50 = sbr.rel (0) target = $region53
  $region52: #{vae_forward.9} parent=0 // pred_region
    _
  $region53: #{vae_forward.9} parent=0 // pred_fallthru
    _
  // Predicated region
  $region54: #{vae_forward.9} parent=0 // pred_check
    _
  $region55: #{vae_forward.9} parent=0 // pred_check_branch
    %52 = sbr.rel (0) target = $region57
  $region56: #{vae_forward.9} parent=0 // pred_region
    _
  $region57: #{vae_forward.9} parent=0 // pred_fallthru
    _
  // Predicated region
  $region58: #{vae_forward.9} parent=0 // pred_check
    _
  $region59: #{vae_forward.9} parent=0 // pred_check_branch
    %54 = sbr.rel (0) target = $region61
  $region60: #{vae_forward.9} parent=0 // pred_region
    _
  $region61: #{vae_forward.9} parent=0 // pred_fallthru
    _
  // Predicated region
  $region62: #{vae_forward.9} parent=0 // pred_check
    _
  $region63: #{vae_forward.9} parent=0 // pred_check_branch
    %56 = sbr.rel (0) target = $region65
  $region64: #{vae_forward.9} parent=0 // pred_region
    _
  $region65: #{vae_forward.9} parent=0 // pred_fallthru
    _
  // Predicated region
  $region66: #{vae_forward.9} parent=0 // pred_check
    _
  $region67: #{vae_forward.9} parent=0 // pred_check_branch
    %58 = sbr.rel (0) target = $region69
  $region68: #{vae_forward.9} parent=0 // pred_region
    _
  $region69: #{vae_forward.9} parent=0 // pred_fallthru
    _
  %v59 = vld [vmem:[%s0] sm:$0xff]
  %v60 = vld [vmem:[%s0 + $0x8] sm:$0xff]
  %v61 = vld [vmem:[%s0 + $0x10] sm:$0xff]
  %v62 = vld [vmem:[%s0 + $0x18] sm:$0xff]
  %v63 = vld [vmem:[%s0 + $0x20] sm:$0xff]
  %v64 = vld [vmem:[%s0 + $0x28] sm:$0xff]
  %v65 = vld [vmem:[%s0 + $0x30] sm:$0xff]
  %v66 = vld [vmem:[%s0 + $0x38] sm:$0xff]
  %v67 = vld [vmem:[%s0 + $0x40] sm:$0xff]
  %v68 = vld [vmem:[%s0 + $0x48] sm:$0xff]
  %v69 = vld [vmem:[%s0 + $0x50] sm:$0xff]
  %v70 = vld [vmem:[%s0 + $0x58] sm:$0xff]
  %v71 = vld [vmem:[%s0 + $0x60] sm:$0xff]
  %v72 = vld [vmem:[%s0 + $0x68] sm:$0xff]
  %v73 = vld [vmem:[%s0 + $0x70] sm:$0xff]
  %v74 = vld [vmem:[%s0 + $0x78] sm:$0xff]
  %v75 = vld [vmem:[%s0 + $0x80] sm:$0xff]
  %v76 = vld [vmem:[%s0 + $0x88] sm:$0xff]
  %v77 = vld [vmem:[%s0 + $0x90] sm:$0xff]
  %v78 = vld [vmem:[%s0 + $0x98] sm:$0xff]
  %v79 = vld [vmem:[%s0 + $0xa0] sm:$0xff]
  %v80 = vld [vmem:[%s0 + $0xa8] sm:$0xff]
  %v81 = vld [vmem:[%s0 + $0xb0] sm:$0xff]
  %v82 = vld [vmem:[%s0 + $0xb8] sm:$0xff]
  %v83 = vld [vmem:[%s0 + $0xc0] sm:$0xff]
  %v84 = vld [vmem:[%s0 + $0xc8] sm:$0xff]
  %v85 = vld [vmem:[%s0 + $0xd0] sm:$0xff]
  %v86 = vld [vmem:[%s0 + $0xd8] sm:$0xff]
  %v87 = vld [vmem:[%s0 + $0xe0] sm:$0xff]
  %v88 = vld [vmem:[%s0 + $0xe8] sm:$0xff]
  %v89 = vld [vmem:[%s2] sm:$0xff]
  %v90 = vld [vmem:[%s2 + $0x8] sm:$0xf]
  %v91 = vld [vmem:[%s3] sm:$0x1]
  %v93 = vperm.slane %v91, 0
  %vm95 = vcmask 97280
  %v97 = vsel %vm95, %v59, 0
  %v100 = vsel %vm95, %v60, 0
  %v103 = vsel %vm95, %v61, 0
  %v106 = vsel %vm95, %v62, 0
  %v109 = vsel %vm95, %v63, 0
  %v112 = vsel %vm95, %v64, 0
  %v115 = vsel %vm95, %v65, 0
  %v118 = vsel %vm95, %v66, 0
  %v121 = vsel %vm95, %v67, 0
  %v124 = vsel %vm95, %v68, 0
  %v127 = vsel %vm95, %v69, 0
  %v130 = vsel %vm95, %v70, 0
  %v133 = vsel %vm95, %v71, 0
  %v136 = vsel %vm95, %v72, 0
  %v139 = vsel %vm95, %v73, 0
  %v142 = vsel %vm95, %v74, 0
  %v145 = vsel %vm95, %v75, 0
  %v148 = vsel %vm95, %v76, 0
  %v151 = vsel %vm95, %v77, 0
  %v154 = vsel %vm95, %v78, 0
  %v157 = vsel %vm95, %v79, 0
  %v160 = vsel %vm95, %v80, 0
  %v163 = vsel %vm95, %v81, 0
  %v166 = vsel %vm95, %v82, 0
  %v169 = vsel %vm95, %v83, 0
  %v172 = vsel %vm95, %v84, 0
  %v175 = vsel %vm95, %v85, 0
  %v178 = vsel %vm95, %v86, 0
  %v181 = vsel %vm95, %v87, 0
  %v184 = vsel %vm95, %v88, 0
  %vm186 = vcmask 1043456
  %v188 = vsel %vm186, %v90, 0
  %190 = vmatpush.msra.mxu0 0.0
  %191 = vmatpush.msra.mxu0 0.0
  %192 = vmatpush.msra.mxu0 0.0
  %193 = vmatpush.msra.mxu0 0.0
  %194 = vmatpush.msra.mxu0 0.0
  %195 = vmatpush.msra.mxu0 0.0
  %196 = vmatpush.msra.mxu0 0.0
  %197 = vmatpush.msra.mxu0 0.0
  %198 = vmatpush.msra.mxu0 0.0
  %199 = vmatpush.msra.mxu0 0.0
  %200 = vmatpush.msra.mxu0 0.0
  %201 = vmatpush.msra.mxu0 0.0
  %202 = vmatpush.msra.mxu0 0.0
  %203 = vmatpush.msra.mxu0 0.0
  %204 = vmatpush.msra.mxu0 %v188
  %205 = vmatpush.msra.mxu0 %v89
  %206 = vmatmul.f32.gmra.mxu0 %v97
  %v207 = vpop.f32.mrf.mxu0
  %v208 = vadd.f32 %v93, %v207
  %209 = vmatmul.f32.gmra.mxu0 %v100
  %v210 = vpop.f32.mrf.mxu0
  %v211 = vadd.f32 %v93, %v210
  %212 = vmatmul.f32.gmra.mxu0 %v103
  %v213 = vpop.f32.mrf.mxu0
  %v214 = vadd.f32 %v93, %v213
  %215 = vmatmul.f32.gmra.mxu0 %v106
  %v216 = vpop.f32.mrf.mxu0
  %v217 = vadd.f32 %v93, %v216
  %218 = vmatmul.f32.gmra.mxu0 %v109
  %v219 = vpop.f32.mrf.mxu0
  %v220 = vadd.f32 %v93, %v219
  %221 = vmatmul.f32.gmra.mxu0 %v112
  %v222 = vpop.f32.mrf.mxu0
  %v223 = vadd.f32 %v93, %v222
  %224 = vmatmul.f32.gmra.mxu0 %v115
  %v225 = vpop.f32.mrf.mxu0
  %v226 = vadd.f32 %v93, %v225
  %227 = vmatmul.f32.gmra.mxu0 %v118
  %v228 = vpop.f32.mrf.mxu0
  %v229 = vadd.f32 %v93, %v228
  %230 = vmatmul.f32.gmra.mxu0 %v121
  %v231 = vpop.f32.mrf.mxu0
  %v232 = vadd.f32 %v93, %v231
  %233 = vmatmul.f32.gmra.mxu0 %v124
  %v234 = vpop.f32.mrf.mxu0
  %v235 = vadd.f32 %v93, %v234
  %236 = vmatmul.f32.gmra.mxu0 %v127
  %v237 = vpop.f32.mrf.mxu0
  %v238 = vadd.f32 %v93, %v237
  %239 = vmatmul.f32.gmra.mxu0 %v130
  %v240 = vpop.f32.mrf.mxu0
  %v241 = vadd.f32 %v93, %v240
  %242 = vmatmul.f32.gmra.mxu0 %v133
  %v243 = vpop.f32.mrf.mxu0
  %v244 = vadd.f32 %v93, %v243
  %245 = vmatmul.f32.gmra.mxu0 %v136
  %v246 = vpop.f32.mrf.mxu0
  %v247 = vadd.f32 %v93, %v246
  %248 = vmatmul.f32.gmra.mxu0 %v139
  %v249 = vpop.f32.mrf.mxu0
  %v250 = vadd.f32 %v93, %v249
  %251 = vmatmul.f32.gmra.mxu0 %v142
  %v252 = vpop.f32.mrf.mxu0
  %v253 = vadd.f32 %v93, %v252
  %254 = vmatmul.f32.gmra.mxu0 %v145
  %v255 = vpop.f32.mrf.mxu0
  %v256 = vadd.f32 %v93, %v255
  %257 = vmatmul.f32.gmra.mxu0 %v148
  %v258 = vpop.f32.mrf.mxu0
  %v259 = vadd.f32 %v93, %v258
  %260 = vmatmul.f32.gmra.mxu0 %v151
  %v261 = vpop.f32.mrf.mxu0
  %v262 = vadd.f32 %v93, %v261
  %263 = vmatmul.f32.gmra.mxu0 %v154
  %v264 = vpop.f32.mrf.mxu0
  %v265 = vadd.f32 %v93, %v264
  %266 = vmatmul.f32.gmra.mxu0 %v157
  %v267 = vpop.f32.mrf.mxu0
  %v268 = vadd.f32 %v93, %v267
  %269 = vmatmul.f32.gmra.mxu0 %v160
  %v270 = vpop.f32.mrf.mxu0
  %v271 = vadd.f32 %v93, %v270
  %272 = vmatmul.f32.gmra.mxu0 %v163
  %v273 = vpop.f32.mrf.mxu0
  %v274 = vadd.f32 %v93, %v273
  %275 = vmatmul.f32.gmra.mxu0 %v166
  %v276 = vpop.f32.mrf.mxu0
  %v277 = vadd.f32 %v93, %v276
  %278 = vmatmul.f32.gmra.mxu0 %v169
  %v279 = vpop.f32.mrf.mxu0
  %v280 = vadd.f32 %v93, %v279
  %281 = vmatmul.f32.gmra.mxu0 %v172
  %v282 = vpop.f32.mrf.mxu0
  %v283 = vadd.f32 %v93, %v282
  %284 = vmatmul.f32.gmra.mxu0 %v175
  %v285 = vpop.f32.mrf.mxu0
  %v286 = vadd.f32 %v93, %v285
  %287 = vmatmul.f32.gmra.mxu0 %v178
  %v288 = vpop.f32.mrf.mxu0
  %v289 = vadd.f32 %v93, %v288
  %290 = vmatmul.f32.gmra.mxu0 %v181
  %v291 = vpop.f32.mrf.mxu0
  %v292 = vadd.f32 %v93, %v291
  %293 = vmatmul.f32.gmra.mxu0 %v184
  %v294 = vpop.f32.mrf.mxu0
  %v295 = vadd.f32 %v93, %v294
  %296 = vdwg.mxu0
  %v297 = vmax.f32 %v208, 0.0
  %v298 = vmax.f32 %v211, 0.0
  %v299 = vmax.f32 %v214, 0.0
  %v300 = vmax.f32 %v217, 0.0
  %v301 = vmax.f32 %v220, 0.0
  %v302 = vmax.f32 %v223, 0.0
  %v303 = vmax.f32 %v226, 0.0
  %v304 = vmax.f32 %v229, 0.0
  %v305 = vmax.f32 %v232, 0.0
  %v306 = vmax.f32 %v235, 0.0
  %v307 = vmax.f32 %v238, 0.0
  %v308 = vmax.f32 %v241, 0.0
  %v309 = vmax.f32 %v244, 0.0
  %v310 = vmax.f32 %v247, 0.0
  %v311 = vmax.f32 %v250, 0.0
  %v312 = vmax.f32 %v253, 0.0
  %v313 = vmax.f32 %v256, 0.0
  %v314 = vmax.f32 %v259, 0.0
  %v315 = vmax.f32 %v262, 0.0
  %v316 = vmax.f32 %v265, 0.0
  %v317 = vmax.f32 %v268, 0.0
  %v318 = vmax.f32 %v271, 0.0
  %v319 = vmax.f32 %v274, 0.0
  %v320 = vmax.f32 %v277, 0.0
  %v321 = vmax.f32 %v280, 0.0
  %v322 = vmax.f32 %v283, 0.0
  %v323 = vmax.f32 %v286, 0.0
  %v324 = vmax.f32 %v289, 0.0
  %v325 = vmax.f32 %v292, 0.0
  %v326 = vmax.f32 %v295, 0.0
  %v327 = vld [vmem:[%s4] sm:$0xff]
  %v328 = vld [vmem:[%s4 + $0x8] sm:$0xf]
  %v329 = vld [vmem:[%s5] sm:$0x1]
  %v331 = vperm.slane %v329, 0
  %v334 = vsel %vm95, %v297, 0
  %v337 = vsel %vm95, %v298, 0
  %v340 = vsel %vm95, %v299, 0
  %v343 = vsel %vm95, %v300, 0
  %v346 = vsel %vm95, %v301, 0
  %v349 = vsel %vm95, %v302, 0
  %v352 = vsel %vm95, %v303, 0
  %v355 = vsel %vm95, %v304, 0
  %v358 = vsel %vm95, %v305, 0
  %v361 = vsel %vm95, %v306, 0
  %v364 = vsel %vm95, %v307, 0
  %v367 = vsel %vm95, %v308, 0
  %v370 = vsel %vm95, %v309, 0
  %v373 = vsel %vm95, %v310, 0
  %v376 = vsel %vm95, %v311, 0
  %v379 = vsel %vm95, %v312, 0
  %v382 = vsel %vm95, %v313, 0
  %v385 = vsel %vm95, %v314, 0
  %v388 = vsel %vm95, %v315, 0
  %v391 = vsel %vm95, %v316, 0
  %v394 = vsel %vm95, %v317, 0
  %v397 = vsel %vm95, %v318, 0
  %v400 = vsel %vm95, %v319, 0
  %v403 = vsel %vm95, %v320, 0
  %v406 = vsel %vm95, %v321, 0
  %v409 = vsel %vm95, %v322, 0
  %v412 = vsel %vm95, %v323, 0
  %v415 = vsel %vm95, %v324, 0
  %v418 = vsel %vm95, %v325, 0
  %v421 = vsel %vm95, %v326, 0
  %v424 = vsel %vm186, %v328, 0
  %426 = vmatpush.msra.mxu0 0.0
  %427 = vmatpush.msra.mxu0 0.0
  %428 = vmatpush.msra.mxu0 0.0
  %429 = vmatpush.msra.mxu0 0.0
  %430 = vmatpush.msra.mxu0 0.0
  %431 = vmatpush.msra.mxu0 0.0
  %432 = vmatpush.msra.mxu0 0.0
  %433 = vmatpush.msra.mxu0 0.0
  %434 = vmatpush.msra.mxu0 0.0
  %435 = vmatpush.msra.mxu0 0.0
  %436 = vmatpush.msra.mxu0 0.0
  %437 = vmatpush.msra.mxu0 0.0
  %438 = vmatpush.msra.mxu0 0.0
  %439 = vmatpush.msra.mxu0 0.0
  %440 = vmatpush.msra.mxu0 %v424
  %441 = vmatpush.msra.mxu0 %v327
  %442 = vmatmul.f32.gmra.mxu0 %v334
  %v443 = vpop.f32.mrf.mxu0
  %v444 = vadd.f32 %v331, %v443
  %445 = vmatmul.f32.gmra.mxu0 %v337
  %v446 = vpop.f32.mrf.mxu0
  %v447 = vadd.f32 %v331, %v446
  %448 = vmatmul.f32.gmra.mxu0 %v340
  %v449 = vpop.f32.mrf.mxu0
  %v450 = vadd.f32 %v331, %v449
  %451 = vmatmul.f32.gmra.mxu0 %v343
  %v452 = vpop.f32.mrf.mxu0
  %v453 = vadd.f32 %v331, %v452
  %454 = vmatmul.f32.gmra.mxu0 %v346
  %v455 = vpop.f32.mrf.mxu0
  %v456 = vadd.f32 %v331, %v455
  %457 = vmatmul.f32.gmra.mxu0 %v349
  %v458 = vpop.f32.mrf.mxu0
  %v459 = vadd.f32 %v331, %v458
  %460 = vmatmul.f32.gmra.mxu0 %v352
  %v461 = vpop.f32.mrf.mxu0
  %v462 = vadd.f32 %v331, %v461
  %463 = vmatmul.f32.gmra.mxu0 %v355
  %v464 = vpop.f32.mrf.mxu0
  %v465 = vadd.f32 %v331, %v464
  %466 = vmatmul.f32.gmra.mxu0 %v358
  %v467 = vpop.f32.mrf.mxu0
  %v468 = vadd.f32 %v331, %v467
  %469 = vmatmul.f32.gmra.mxu0 %v361
  %v470 = vpop.f32.mrf.mxu0
  %v471 = vadd.f32 %v331, %v470
  %472 = vmatmul.f32.gmra.mxu0 %v364
  %v473 = vpop.f32.mrf.mxu0
  %v474 = vadd.f32 %v331, %v473
  %475 = vmatmul.f32.gmra.mxu0 %v367
  %v476 = vpop.f32.mrf.mxu0
  %v477 = vadd.f32 %v331, %v476
  %478 = vmatmul.f32.gmra.mxu0 %v370
  %v479 = vpop.f32.mrf.mxu0
  %v480 = vadd.f32 %v331, %v479
  %481 = vmatmul.f32.gmra.mxu0 %v373
  %v482 = vpop.f32.mrf.mxu0
  %v483 = vadd.f32 %v331, %v482
  %484 = vmatmul.f32.gmra.mxu0 %v376
  %v485 = vpop.f32.mrf.mxu0
  %v486 = vadd.f32 %v331, %v485
  %487 = vmatmul.f32.gmra.mxu0 %v379
  %v488 = vpop.f32.mrf.mxu0
  %v489 = vadd.f32 %v331, %v488
  %490 = vmatmul.f32.gmra.mxu0 %v382
  %v491 = vpop.f32.mrf.mxu0
  %v492 = vadd.f32 %v331, %v491
  %493 = vmatmul.f32.gmra.mxu0 %v385
  %v494 = vpop.f32.mrf.mxu0
  %v495 = vadd.f32 %v331, %v494
  %496 = vmatmul.f32.gmra.mxu0 %v388
  %v497 = vpop.f32.mrf.mxu0
  %v498 = vadd.f32 %v331, %v497
  %499 = vmatmul.f32.gmra.mxu0 %v391
  %v500 = vpop.f32.mrf.mxu0
  %v501 = vadd.f32 %v331, %v500
  %502 = vmatmul.f32.gmra.mxu0 %v394
  %v503 = vpop.f32.mrf.mxu0
  %v504 = vadd.f32 %v331, %v503
  %505 = vmatmul.f32.gmra.mxu0 %v397
  %v506 = vpop.f32.mrf.mxu0
  %v507 = vadd.f32 %v331, %v506
  %508 = vmatmul.f32.gmra.mxu0 %v400
  %v509 = vpop.f32.mrf.mxu0
  %v510 = vadd.f32 %v331, %v509
  %511 = vmatmul.f32.gmra.mxu0 %v403
  %v512 = vpop.f32.mrf.mxu0
  %v513 = vadd.f32 %v331, %v512
  %514 = vmatmul.f32.gmra.mxu0 %v406
  %v515 = vpop.f32.mrf.mxu0
  %v516 = vadd.f32 %v331, %v515
  %517 = vmatmul.f32.gmra.mxu0 %v409
  %v518 = vpop.f32.mrf.mxu0
  %v519 = vadd.f32 %v331, %v518
  %520 = vmatmul.f32.gmra.mxu0 %v412
  %v521 = vpop.f32.mrf.mxu0
  %v522 = vadd.f32 %v331, %v521
  %523 = vmatmul.f32.gmra.mxu0 %v415
  %v524 = vpop.f32.mrf.mxu0
  %v525 = vadd.f32 %v331, %v524
  %526 = vmatmul.f32.gmra.mxu0 %v418
  %v527 = vpop.f32.mrf.mxu0
  %v528 = vadd.f32 %v331, %v527
  %529 = vmatmul.f32.gmra.mxu0 %v421
  %v530 = vpop.f32.mrf.mxu0
  %v531 = vadd.f32 %v331, %v530
  %532 = vdwg.mxu0
  %v533 = vmax.f32 %v444, 0.0
  %v534 = vmax.f32 %v447, 0.0
  %v535 = vmax.f32 %v450, 0.0
  %v536 = vmax.f32 %v453, 0.0
  %v537 = vmax.f32 %v456, 0.0
  %v538 = vmax.f32 %v459, 0.0
  %v539 = vmax.f32 %v462, 0.0
  %v540 = vmax.f32 %v465, 0.0
  %v541 = vmax.f32 %v468, 0.0
  %v542 = vmax.f32 %v471, 0.0
  %v543 = vmax.f32 %v474, 0.0
  %v544 = vmax.f32 %v477, 0.0
  %v545 = vmax.f32 %v480, 0.0
  %v546 = vmax.f32 %v483, 0.0
  %v547 = vmax.f32 %v486, 0.0
  %v548 = vmax.f32 %v489, 0.0
  %v549 = vmax.f32 %v492, 0.0
  %v550 = vmax.f32 %v495, 0.0
  %v551 = vmax.f32 %v498, 0.0
  %v552 = vmax.f32 %v501, 0.0
  %v553 = vmax.f32 %v504, 0.0
  %v554 = vmax.f32 %v507, 0.0
  %v555 = vmax.f32 %v510, 0.0
  %v556 = vmax.f32 %v513, 0.0
  %v557 = vmax.f32 %v516, 0.0
  %v558 = vmax.f32 %v519, 0.0
  %v559 = vmax.f32 %v522, 0.0
  %v560 = vmax.f32 %v525, 0.0
  %v561 = vmax.f32 %v528, 0.0
  %v562 = vmax.f32 %v531, 0.0
  %v563 = vld [vmem:[%s6] sm:$0xff]
  %v564 = vld [vmem:[%s6 + $0x8] sm:$0xff]
  %v565 = vld [vmem:[%s6 + $0x10] sm:$0xff]
  %v566 = vld [vmem:[%s6 + $0x18] sm:$0x3f]
  %v567 = vld [vmem:[%s7] sm:$0x1]
  %v568 = vld [vmem:[%s8] sm:$0x1]
  %v569 = vld [vmem:[%s9] sm:$0x1]
  %v585 = vrot.slane %v533, 4
  %v586 = vrot.slane %v534, 4
  %v587 = vsel %vm186, %v585, %v586
  %v588 = vrot.slane %v535, 4
  %v589 = vsel %vm186, %v586, %v588
  %v590 = vrot.slane %v536, 4
  %v591 = vsel %vm186, %v588, %v590
  %v592 = vrot.slane %v537, 4
  %v593 = vsel %vm186, %v590, %v592
  %v594 = vrot.slane %v538, 4
  %v595 = vsel %vm186, %v592, %v594
  %v596 = vrot.slane %v539, 4
  %v597 = vsel %vm186, %v594, %v596
  %v598 = vrot.slane %v540, 4
  %v599 = vsel %vm186, %v596, %v598
  %v600 = vrot.slane %v541, 4
  %v601 = vsel %vm186, %v598, %v600
  %v602 = vrot.slane %v542, 4
  %v603 = vsel %vm186, %v600, %v602
  %v604 = vrot.slane %v543, 4
  %v605 = vsel %vm186, %v602, %v604
  %v606 = vrot.slane %v544, 4
  %v607 = vsel %vm186, %v604, %v606
  %v608 = vrot.slane %v545, 4
  %v609 = vsel %vm186, %v606, %v608
  %v610 = vrot.slane %v546, 4
  %v611 = vsel %vm186, %v608, %v610
  %v612 = vrot.slane %v547, 4
  %v613 = vsel %vm186, %v610, %v612
  %v630 = vsel %vm186, 0.0, %v585
  %v631 = vsel %vm186, %v612, 0.0
  %vm634 = vcmask 1046528
  %v635 = vrot.slane %v630, 1
  %v636 = vrot.slane %v587, 1
  %v637 = vsel %vm634, %v635, %v636
  %v638 = vrot.slane %v589, 1
  %v639 = vsel %vm634, %v636, %v638
  %v640 = vrot.slane %v591, 1
  %v641 = vsel %vm634, %v638, %v640
  %v642 = vrot.slane %v593, 1
  %v643 = vsel %vm634, %v640, %v642
  %v644 = vrot.slane %v595, 1
  %v645 = vsel %vm634, %v642, %v644
  %v646 = vrot.slane %v597, 1
  %v647 = vsel %vm634, %v644, %v646
  %v648 = vrot.slane %v599, 1
  %v649 = vsel %vm634, %v646, %v648
  %v650 = vrot.slane %v601, 1
  %v651 = vsel %vm634, %v648, %v650
  %v652 = vrot.slane %v603, 1
  %v653 = vsel %vm634, %v650, %v652
  %v654 = vrot.slane %v605, 1
  %v655 = vsel %vm634, %v652, %v654
  %v656 = vrot.slane %v607, 1
  %v657 = vsel %vm634, %v654, %v656
  %v658 = vrot.slane %v609, 1
  %v659 = vsel %vm634, %v656, %v658
  %v660 = vrot.slane %v611, 1
  %v661 = vsel %vm634, %v658, %v660
  %v662 = vrot.slane %v613, 1
  %v663 = vsel %vm634, %v660, %v662
  %v664 = vrot.slane %v631, 1
  %v665 = vsel %vm634, %v662, %v664
  %666 = vrot.lane.b32.xlu0 %v637, 6
  %v667 = vpop.permute.xlu0 %666
  %668 = vrot.lane.b32.xlu0 %v639, 6
  %v669 = vpop.permute.xlu0 %668
  %670 = vrot.lane.b32.xlu0 %v641, 6
  %v671 = vpop.permute.xlu0 %670
  %672 = vrot.lane.b32.xlu0 %v643, 6
  %v673 = vpop.permute.xlu0 %672
  %674 = vrot.lane.b32.xlu0 %v645, 6
  %v675 = vpop.permute.xlu0 %674
  %676 = vrot.lane.b32.xlu0 %v647, 6
  %v677 = vpop.permute.xlu0 %676
  %678 = vrot.lane.b32.xlu0 %v649, 6
  %v679 = vpop.permute.xlu0 %678
  %680 = vrot.lane.b32.xlu0 %v651, 6
  %v681 = vpop.permute.xlu0 %680
  %682 = vrot.lane.b32.xlu0 %v653, 6
  %v683 = vpop.permute.xlu0 %682
  %684 = vrot.lane.b32.xlu0 %v655, 6
  %v685 = vpop.permute.xlu0 %684
  %686 = vrot.lane.b32.xlu0 %v657, 6
  %v687 = vpop.permute.xlu0 %686
  %688 = vrot.lane.b32.xlu0 %v659, 6
  %v689 = vpop.permute.xlu0 %688
  %690 = vrot.lane.b32.xlu0 %v661, 6
  %v691 = vpop.permute.xlu0 %690
  %692 = vrot.lane.b32.xlu0 %v663, 6
  %v693 = vpop.permute.xlu0 %692
  %694 = vrot.lane.b32.xlu0 %v665, 6
  %v695 = vpop.permute.xlu0 %694
  %696 = vrot.lane.b32.xlu0 %v664, 6
  %v697 = vpop.permute.xlu0 %696
  %vm714 = vcmask 1045504
  %v715 = vrot.slane %v630, 2
  %v716 = vrot.slane %v587, 2
  %v717 = vsel %vm714, %v715, %v716
  %v718 = vrot.slane %v589, 2
  %v719 = vsel %vm714, %v716, %v718
  %v720 = vrot.slane %v591, 2
  %v721 = vsel %vm714, %v718, %v720
  %v722 = vrot.slane %v593, 2
  %v723 = vsel %vm714, %v720, %v722
  %v724 = vrot.slane %v595, 2
  %v725 = vsel %vm714, %v722, %v724
  %v726 = vrot.slane %v597, 2
  %v727 = vsel %vm714, %v724, %v726
  %v728 = vrot.slane %v599, 2
  %v729 = vsel %vm714, %v726, %v728
  %v730 = vrot.slane %v601, 2
  %v731 = vsel %vm714, %v728, %v730
  %v732 = vrot.slane %v603, 2
  %v733 = vsel %vm714, %v730, %v732
  %v734 = vrot.slane %v605, 2
  %v735 = vsel %vm714, %v732, %v734
  %v736 = vrot.slane %v607, 2
  %v737 = vsel %vm714, %v734, %v736
  %v738 = vrot.slane %v609, 2
  %v739 = vsel %vm714, %v736, %v738
  %v740 = vrot.slane %v611, 2
  %v741 = vsel %vm714, %v738, %v740
  %v742 = vrot.slane %v613, 2
  %v743 = vsel %vm714, %v740, %v742
  %v744 = vrot.slane %v631, 2
  %v745 = vsel %vm714, %v742, %v744
  %746 = vrot.lane.b32.xlu0 %v717, 12
  %v747 = vpop.permute.xlu0 %746
  %748 = vrot.lane.b32.xlu0 %v719, 12
  %v749 = vpop.permute.xlu0 %748
  %750 = vrot.lane.b32.xlu0 %v721, 12
  %v751 = vpop.permute.xlu0 %750
  %752 = vrot.lane.b32.xlu0 %v723, 12
  %v753 = vpop.permute.xlu0 %752
  %754 = vrot.lane.b32.xlu0 %v725, 12
  %v755 = vpop.permute.xlu0 %754
  %756 = vrot.lane.b32.xlu0 %v727, 12
  %v757 = vpop.permute.xlu0 %756
  %758 = vrot.lane.b32.xlu0 %v729, 12
  %v759 = vpop.permute.xlu0 %758
  %760 = vrot.lane.b32.xlu0 %v731, 12
  %v761 = vpop.permute.xlu0 %760
  %762 = vrot.lane.b32.xlu0 %v733, 12
  %v763 = vpop.permute.xlu0 %762
  %764 = vrot.lane.b32.xlu0 %v735, 12
  %v765 = vpop.permute.xlu0 %764
  %766 = vrot.lane.b32.xlu0 %v737, 12
  %v767 = vpop.permute.xlu0 %766
  %768 = vrot.lane.b32.xlu0 %v739, 12
  %v769 = vpop.permute.xlu0 %768
  %770 = vrot.lane.b32.xlu0 %v741, 12
  %v771 = vpop.permute.xlu0 %770
  %772 = vrot.lane.b32.xlu0 %v743, 12
  %v773 = vpop.permute.xlu0 %772
  %774 = vrot.lane.b32.xlu0 %v745, 12
  %v775 = vpop.permute.xlu0 %774
  %776 = vrot.lane.b32.xlu0 %v744, 12
  %v777 = vpop.permute.xlu0 %776
  %vm794 = vcmask 1044480
  %v795 = vrot.slane %v630, 3
  %v796 = vrot.slane %v587, 3
  %v797 = vsel %vm794, %v795, %v796
  %v798 = vrot.slane %v589, 3
  %v799 = vsel %vm794, %v796, %v798
  %v800 = vrot.slane %v591, 3
  %v801 = vsel %vm794, %v798, %v800
  %v802 = vrot.slane %v593, 3
  %v803 = vsel %vm794, %v800, %v802
  %v804 = vrot.slane %v595, 3
  %v805 = vsel %vm794, %v802, %v804
  %v806 = vrot.slane %v597, 3
  %v807 = vsel %vm794, %v804, %v806
  %v808 = vrot.slane %v599, 3
  %v809 = vsel %vm794, %v806, %v808
  %v810 = vrot.slane %v601, 3
  %v811 = vsel %vm794, %v808, %v810
  %v812 = vrot.slane %v603, 3
  %v813 = vsel %vm794, %v810, %v812
  %v814 = vrot.slane %v605, 3
  %v815 = vsel %vm794, %v812, %v814
  %v816 = vrot.slane %v607, 3
  %v817 = vsel %vm794, %v814, %v816
  %v818 = vrot.slane %v609, 3
  %v819 = vsel %vm794, %v816, %v818
  %v820 = vrot.slane %v611, 3
  %v821 = vsel %vm794, %v818, %v820
  %v822 = vrot.slane %v613, 3
  %v823 = vsel %vm794, %v820, %v822
  %v824 = vrot.slane %v631, 3
  %v825 = vsel %vm794, %v822, %v824
  %826 = vrot.lane.b32.xlu0 %v797, 18
  %v827 = vpop.permute.xlu0 %826
  %828 = vrot.lane.b32.xlu0 %v799, 18
  %v829 = vpop.permute.xlu0 %828
  %830 = vrot.lane.b32.xlu0 %v801, 18
  %v831 = vpop.permute.xlu0 %830
  %832 = vrot.lane.b32.xlu0 %v803, 18
  %v833 = vpop.permute.xlu0 %832
  %834 = vrot.lane.b32.xlu0 %v805, 18
  %v835 = vpop.permute.xlu0 %834
  %836 = vrot.lane.b32.xlu0 %v807, 18
  %v837 = vpop.permute.xlu0 %836
  %838 = vrot.lane.b32.xlu0 %v809, 18
  %v839 = vpop.permute.xlu0 %838
  %840 = vrot.lane.b32.xlu0 %v811, 18
  %v841 = vpop.permute.xlu0 %840
  %842 = vrot.lane.b32.xlu0 %v813, 18
  %v843 = vpop.permute.xlu0 %842
  %844 = vrot.lane.b32.xlu0 %v815, 18
  %v845 = vpop.permute.xlu0 %844
  %846 = vrot.lane.b32.xlu0 %v817, 18
  %v847 = vpop.permute.xlu0 %846
  %848 = vrot.lane.b32.xlu0 %v819, 18
  %v849 = vpop.permute.xlu0 %848
  %850 = vrot.lane.b32.xlu0 %v821, 18
  %v851 = vpop.permute.xlu0 %850
  %852 = vrot.lane.b32.xlu0 %v823, 18
  %v853 = vpop.permute.xlu0 %852
  %854 = vrot.lane.b32.xlu0 %v825, 18
  %v855 = vpop.permute.xlu0 %854
  %856 = vrot.lane.b32.xlu0 %v824, 18
  %v857 = vpop.permute.xlu0 %856
  %v874 = vrot.slane %v630, 4
  %v875 = vrot.slane %v587, 4
  %v876 = vsel %vm186, %v874, %v875
  %v877 = vrot.slane %v589, 4
  %v878 = vsel %vm186, %v875, %v877
  %v879 = vrot.slane %v591, 4
  %v880 = vsel %vm186, %v877, %v879
  %v881 = vrot.slane %v593, 4
  %v882 = vsel %vm186, %v879, %v881
  %v883 = vrot.slane %v595, 4
  %v884 = vsel %vm186, %v881, %v883
  %v885 = vrot.slane %v597, 4
  %v886 = vsel %vm186, %v883, %v885
  %v887 = vrot.slane %v599, 4
  %v888 = vsel %vm186, %v885, %v887
  %v889 = vrot.slane %v601, 4
  %v890 = vsel %vm186, %v887, %v889
  %v891 = vrot.slane %v603, 4
  %v892 = vsel %vm186, %v889, %v891
  %v893 = vrot.slane %v605, 4
  %v894 = vsel %vm186, %v891, %v893
  %v895 = vrot.slane %v607, 4
  %v896 = vsel %vm186, %v893, %v895
  %v897 = vrot.slane %v609, 4
  %v898 = vsel %vm186, %v895, %v897
  %v899 = vrot.slane %v611, 4
  %v900 = vsel %vm186, %v897, %v899
  %v901 = vrot.slane %v613, 4
  %v902 = vsel %vm186, %v899, %v901
  %v903 = vrot.slane %v631, 4
  %v904 = vsel %vm186, %v901, %v903
  %905 = vrot.lane.b32.xlu0 %v876, 24
  %v906 = vpop.permute.xlu0 %905
  %907 = vrot.lane.b32.xlu0 %v878, 24
  %v908 = vpop.permute.xlu0 %907
  %909 = vrot.lane.b32.xlu0 %v880, 24
  %v910 = vpop.permute.xlu0 %909
  %911 = vrot.lane.b32.xlu0 %v882, 24
  %v912 = vpop.permute.xlu0 %911
  %913 = vrot.lane.b32.xlu0 %v884, 24
  %v914 = vpop.permute.xlu0 %913
  %915 = vrot.lane.b32.xlu0 %v886, 24
  %v916 = vpop.permute.xlu0 %915
  %917 = vrot.lane.b32.xlu0 %v888, 24
  %v918 = vpop.permute.xlu0 %917
  %919 = vrot.lane.b32.xlu0 %v890, 24
  %v920 = vpop.permute.xlu0 %919
  %921 = vrot.lane.b32.xlu0 %v892, 24
  %v922 = vpop.permute.xlu0 %921
  %923 = vrot.lane.b32.xlu0 %v894, 24
  %v924 = vpop.permute.xlu0 %923
  %925 = vrot.lane.b32.xlu0 %v896, 24
  %v926 = vpop.permute.xlu0 %925
  %927 = vrot.lane.b32.xlu0 %v898, 24
  %v928 = vpop.permute.xlu0 %927
  %929 = vrot.lane.b32.xlu0 %v900, 24
  %v930 = vpop.permute.xlu0 %929
  %931 = vrot.lane.b32.xlu0 %v902, 24
  %v932 = vpop.permute.xlu0 %931
  %933 = vrot.lane.b32.xlu0 %v904, 24
  %v934 = vpop.permute.xlu0 %933
  %935 = vrot.lane.b32.xlu0 %v903, 24
  %v936 = vpop.permute.xlu0 %935
  %vm953 = vcmask 48128
  %v954 = vsel %vm953, %v630, %v667
  %v955 = vsel %vm953, %v587, %v669
  %v956 = vsel %vm953, %v589, %v671
  %v957 = vsel %vm953, %v591, %v673
  %v958 = vsel %vm953, %v593, %v675
  %v959 = vsel %vm953, %v595, %v677
  %v960 = vsel %vm953, %v597, %v679
  %v961 = vsel %vm953, %v599, %v681
  %v962 = vsel %vm953, %v601, %v683
  %v963 = vsel %vm953, %v603, %v685
  %v964 = vsel %vm953, %v605, %v687
  %v965 = vsel %vm953, %v607, %v689
  %v966 = vsel %vm953, %v609, %v691
  %v967 = vsel %vm953, %v611, %v693
  %v968 = vsel %vm953, %v613, %v695
  %v969 = vsel %vm953, %v631, %v697
  %v970 = vsel %vm95, %v954, %v747
  %v971 = vsel %vm95, %v955, %v749
  %v972 = vsel %vm95, %v956, %v751
  %v973 = vsel %vm95, %v957, %v753
  %v974 = vsel %vm95, %v958, %v755
  %v975 = vsel %vm95, %v959, %v757
  %v976 = vsel %vm95, %v960, %v759
  %v977 = vsel %vm95, %v961, %v761
  %v978 = vsel %vm95, %v962, %v763
  %v979 = vsel %vm95, %v963, %v765
  %v980 = vsel %vm95, %v964, %v767
  %v981 = vsel %vm95, %v965, %v769
  %v982 = vsel %vm95, %v966, %v771
  %v983 = vsel %vm95, %v967, %v773
  %v984 = vsel %vm95, %v968, %v775
  %v985 = vsel %vm95, %v969, %v777
  %vm986 = vcmask 146432
  %v987 = vsel %vm986, %v970, %v827
  %v988 = vsel %vm986, %v971, %v829
  %v989 = vsel %vm986, %v972, %v831
  %v990 = vsel %vm986, %v973, %v833
  %v991 = vsel %vm986, %v974, %v835
  %v992 = vsel %vm986, %v975, %v837
  %v993 = vsel %vm986, %v976, %v839
  %v994 = vsel %vm986, %v977, %v841
  %v995 = vsel %vm986, %v978, %v843
  %v996 = vsel %vm986, %v979, %v845
  %v997 = vsel %vm986, %v980, %v847
  %v998 = vsel %vm986, %v981, %v849
  %v999 = vsel %vm986, %v982, %v851
  %v1000 = vsel %vm986, %v983, %v853
  %v1001 = vsel %vm986, %v984, %v855
  %v1002 = vsel %vm986, %v985, %v857
  %vm1003 = vcmask 195584
  %v1004 = vsel %vm1003, %v987, %v906
  %v1005 = vsel %vm1003, %v988, %v908
  %v1006 = vsel %vm1003, %v989, %v910
  %v1007 = vsel %vm1003, %v990, %v912
  %v1008 = vsel %vm1003, %v991, %v914
  %v1009 = vsel %vm1003, %v992, %v916
  %v1010 = vsel %vm1003, %v993, %v918
  %v1011 = vsel %vm1003, %v994, %v920
  %v1012 = vsel %vm1003, %v995, %v922
  %v1013 = vsel %vm1003, %v996, %v924
  %v1014 = vsel %vm1003, %v997, %v926
  %v1015 = vsel %vm1003, %v998, %v928
  %v1016 = vsel %vm1003, %v999, %v930
  %v1017 = vsel %vm1003, %v1000, %v932
  %v1018 = vsel %vm1003, %v1001, %v934
  %v1019 = vsel %vm1003, %v1002, %v936
  %v1021 = vperm.slane %v567, 0
  %vm1023 = vcmask 244736
  %v1025 = vsel %vm1023, %v1004, 0
  %v1028 = vsel %vm1023, %v1005, 0
  %v1031 = vsel %vm1023, %v1006, 0
  %v1034 = vsel %vm1023, %v1007, 0
  %v1037 = vsel %vm1023, %v1008, 0
  %v1040 = vsel %vm1023, %v1009, 0
  %v1043 = vsel %vm1023, %v1010, 0
  %v1046 = vsel %vm1023, %v1011, 0
  %v1049 = vsel %vm1023, %v1012, 0
  %v1052 = vsel %vm1023, %v1013, 0
  %v1055 = vsel %vm1023, %v1014, 0
  %v1058 = vsel %vm1023, %v1015, 0
  %v1061 = vsel %vm1023, %v1016, 0
  %v1064 = vsel %vm1023, %v1017, 0
  %v1067 = vsel %vm1023, %v1018, 0
  %v1070 = vsel %vm1023, %v1019, 0
  %v1073 = vsel %vm714, %v566, 0
  %1075 = vmatpush.msra.mxu0 0.0
  %1076 = vmatpush.msra.mxu0 0.0
  %1077 = vmatpush.msra.mxu0 0.0
  %1078 = vmatpush.msra.mxu0 0.0
  %1079 = vmatpush.msra.mxu0 0.0
  %1080 = vmatpush.msra.mxu0 0.0
  %1081 = vmatpush.msra.mxu0 0.0
  %1082 = vmatpush.msra.mxu0 0.0
  %1083 = vmatpush.msra.mxu0 0.0
  %1084 = vmatpush.msra.mxu0 0.0
  %1085 = vmatpush.msra.mxu0 0.0
  %1086 = vmatpush.msra.mxu0 0.0
  %1087 = vmatpush.msra.mxu0 %v1073
  %1088 = vmatpush.msra.mxu0 %v565
  %1089 = vmatpush.msra.mxu0 %v564
  %1090 = vmatpush.msra.mxu0 %v563
  %1091 = vmatmul.f32.gmra.mxu0 %v1025
  %v1092 = vpop.f32.mrf.mxu0
  %v1093 = vadd.f32 %v1021, %v1092
  %1094 = vmatmul.f32.gmra.mxu0 %v1028
  %v1095 = vpop.f32.mrf.mxu0
  %v1096 = vadd.f32 %v1021, %v1095
  %1097 = vmatmul.f32.gmra.mxu0 %v1031
  %v1098 = vpop.f32.mrf.mxu0
  %v1099 = vadd.f32 %v1021, %v1098
  %1100 = vmatmul.f32.gmra.mxu0 %v1034
  %v1101 = vpop.f32.mrf.mxu0
  %v1102 = vadd.f32 %v1021, %v1101
  %1103 = vmatmul.f32.gmra.mxu0 %v1037
  %v1104 = vpop.f32.mrf.mxu0
  %v1105 = vadd.f32 %v1021, %v1104
  %1106 = vmatmul.f32.gmra.mxu0 %v1040
  %v1107 = vpop.f32.mrf.mxu0
  %v1108 = vadd.f32 %v1021, %v1107
  %1109 = vmatmul.f32.gmra.mxu0 %v1043
  %v1110 = vpop.f32.mrf.mxu0
  %v1111 = vadd.f32 %v1021, %v1110
  %1112 = vmatmul.f32.gmra.mxu0 %v1046
  %v1113 = vpop.f32.mrf.mxu0
  %v1114 = vadd.f32 %v1021, %v1113
  %1115 = vmatmul.f32.gmra.mxu0 %v1049
  %v1116 = vpop.f32.mrf.mxu0
  %v1117 = vadd.f32 %v1021, %v1116
  %1118 = vmatmul.f32.gmra.mxu0 %v1052
  %v1119 = vpop.f32.mrf.mxu0
  %v1120 = vadd.f32 %v1021, %v1119
  %1121 = vmatmul.f32.gmra.mxu0 %v1055
  %v1122 = vpop.f32.mrf.mxu0
  %v1123 = vadd.f32 %v1021, %v1122
  %1124 = vmatmul.f32.gmra.mxu0 %v1058
  %v1125 = vpop.f32.mrf.mxu0
  %v1126 = vadd.f32 %v1021, %v1125
  %1127 = vmatmul.f32.gmra.mxu0 %v1061
  %v1128 = vpop.f32.mrf.mxu0
  %v1129 = vadd.f32 %v1021, %v1128
  %1130 = vmatmul.f32.gmra.mxu0 %v1064
  %v1131 = vpop.f32.mrf.mxu0
  %v1132 = vadd.f32 %v1021, %v1131
  %1133 = vmatmul.f32.gmra.mxu0 %v1067
  %v1134 = vpop.f32.mrf.mxu0
  %v1135 = vadd.f32 %v1021, %v1134
  %1136 = vmatmul.f32.gmra.mxu0 %v1070
  %v1137 = vpop.f32.mrf.mxu0
  %v1138 = vadd.f32 %v1021, %v1137
  %1139 = vdwg.mxu0
  %v1155 = vrot.slane %v548, 4
  %v1156 = vrot.slane %v549, 4
  %v1157 = vsel %vm186, %v1155, %v1156
  %v1158 = vrot.slane %v550, 4
  %v1159 = vsel %vm186, %v1156, %v1158
  %v1160 = vrot.slane %v551, 4
  %v1161 = vsel %vm186, %v1158, %v1160
  %v1162 = vrot.slane %v552, 4
  %v1163 = vsel %vm186, %v1160, %v1162
  %v1164 = vrot.slane %v553, 4
  %v1165 = vsel %vm186, %v1162, %v1164
  %v1166 = vrot.slane %v554, 4
  %v1167 = vsel %vm186, %v1164, %v1166
  %v1168 = vrot.slane %v555, 4
  %v1169 = vsel %vm186, %v1166, %v1168
  %v1170 = vrot.slane %v556, 4
  %v1171 = vsel %vm186, %v1168, %v1170
  %v1172 = vrot.slane %v557, 4
  %v1173 = vsel %vm186, %v1170, %v1172
  %v1174 = vrot.slane %v558, 4
  %v1175 = vsel %vm186, %v1172, %v1174
  %v1176 = vrot.slane %v559, 4
  %v1177 = vsel %vm186, %v1174, %v1176
  %v1178 = vrot.slane %v560, 4
  %v1179 = vsel %vm186, %v1176, %v1178
  %v1180 = vrot.slane %v561, 4
  %v1181 = vsel %vm186, %v1178, %v1180
  %v1182 = vrot.slane %v562, 4
  %v1183 = vsel %vm186, %v1180, %v1182
  %v1200 = vsel %vm186, 0.0, %v1155
  %v1201 = vsel %vm186, %v1182, 0.0
  %v1204 = vrot.slane %v1200, 1
  %v1205 = vrot.slane %v1157, 1
  %v1206 = vsel %vm634, %v1204, %v1205
  %v1207 = vrot.slane %v1159, 1
  %v1208 = vsel %vm634, %v1205, %v1207
  %v1209 = vrot.slane %v1161, 1
  %v1210 = vsel %vm634, %v1207, %v1209
  %v1211 = vrot.slane %v1163, 1
  %v1212 = vsel %vm634, %v1209, %v1211
  %v1213 = vrot.slane %v1165, 1
  %v1214 = vsel %vm634, %v1211, %v1213
  %v1215 = vrot.slane %v1167, 1
  %v1216 = vsel %vm634, %v1213, %v1215
  %v1217 = vrot.slane %v1169, 1
  %v1218 = vsel %vm634, %v1215, %v1217
  %v1219 = vrot.slane %v1171, 1
  %v1220 = vsel %vm634, %v1217, %v1219
  %v1221 = vrot.slane %v1173, 1
  %v1222 = vsel %vm634, %v1219, %v1221
  %v1223 = vrot.slane %v1175, 1
  %v1224 = vsel %vm634, %v1221, %v1223
  %v1225 = vrot.slane %v1177, 1
  %v1226 = vsel %vm634, %v1223, %v1225
  %v1227 = vrot.slane %v1179, 1
  %v1228 = vsel %vm634, %v1225, %v1227
  %v1229 = vrot.slane %v1181, 1
  %v1230 = vsel %vm634, %v1227, %v1229
  %v1231 = vrot.slane %v1183, 1
  %v1232 = vsel %vm634, %v1229, %v1231
  %v1233 = vrot.slane %v1201, 1
  %v1234 = vsel %vm634, %v1231, %v1233
  %1235 = vrot.lane.b32.xlu0 %v1206, 6
  %v1236 = vpop.permute.xlu0 %1235
  %1237 = vrot.lane.b32.xlu0 %v1208, 6
  %v1238 = vpop.permute.xlu0 %1237
  %1239 = vrot.lane.b32.xlu0 %v1210, 6
  %v1240 = vpop.permute.xlu0 %1239
  %1241 = vrot.lane.b32.xlu0 %v1212, 6
  %v1242 = vpop.permute.xlu0 %1241
  %1243 = vrot.lane.b32.xlu0 %v1214, 6
  %v1244 = vpop.permute.xlu0 %1243
  %1245 = vrot.lane.b32.xlu0 %v1216, 6
  %v1246 = vpop.permute.xlu0 %1245
  %1247 = vrot.lane.b32.xlu0 %v1218, 6
  %v1248 = vpop.permute.xlu0 %1247
  %1249 = vrot.lane.b32.xlu0 %v1220, 6
  %v1250 = vpop.permute.xlu0 %1249
  %1251 = vrot.lane.b32.xlu0 %v1222, 6
  %v1252 = vpop.permute.xlu0 %1251
  %1253 = vrot.lane.b32.xlu0 %v1224, 6
  %v1254 = vpop.permute.xlu0 %1253
  %1255 = vrot.lane.b32.xlu0 %v1226, 6
  %v1256 = vpop.permute.xlu0 %1255
  %1257 = vrot.lane.b32.xlu0 %v1228, 6
  %v1258 = vpop.permute.xlu0 %1257
  %1259 = vrot.lane.b32.xlu0 %v1230, 6
  %v1260 = vpop.permute.xlu0 %1259
  %1261 = vrot.lane.b32.xlu0 %v1232, 6
  %v1262 = vpop.permute.xlu0 %1261
  %1263 = vrot.lane.b32.xlu0 %v1234, 6
  %v1264 = vpop.permute.xlu0 %1263
  %1265 = vrot.lane.b32.xlu0 %v1233, 6
  %v1266 = vpop.permute.xlu0 %1265
  %v1283 = vrot.slane %v1200, 2
  %v1284 = vrot.slane %v1157, 2
  %v1285 = vsel %vm714, %v1283, %v1284
  %v1286 = vrot.slane %v1159, 2
  %v1287 = vsel %vm714, %v1284, %v1286
  %v1288 = vrot.slane %v1161, 2
  %v1289 = vsel %vm714, %v1286, %v1288
  %v1290 = vrot.slane %v1163, 2
  %v1291 = vsel %vm714, %v1288, %v1290
  %v1292 = vrot.slane %v1165, 2
  %v1293 = vsel %vm714, %v1290, %v1292
  %v1294 = vrot.slane %v1167, 2
  %v1295 = vsel %vm714, %v1292, %v1294
  %v1296 = vrot.slane %v1169, 2
  %v1297 = vsel %vm714, %v1294, %v1296
  %v1298 = vrot.slane %v1171, 2
  %v1299 = vsel %vm714, %v1296, %v1298
  %v1300 = vrot.slane %v1173, 2
  %v1301 = vsel %vm714, %v1298, %v1300
  %v1302 = vrot.slane %v1175, 2
  %v1303 = vsel %vm714, %v1300, %v1302
  %v1304 = vrot.slane %v1177, 2
  %v1305 = vsel %vm714, %v1302, %v1304
  %v1306 = vrot.slane %v1179, 2
  %v1307 = vsel %vm714, %v1304, %v1306
  %v1308 = vrot.slane %v1181, 2
  %v1309 = vsel %vm714, %v1306, %v1308
  %v1310 = vrot.slane %v1183, 2
  %v1311 = vsel %vm714, %v1308, %v1310
  %v1312 = vrot.slane %v1201, 2
  %v1313 = vsel %vm714, %v1310, %v1312
  %1314 = vrot.lane.b32.xlu0 %v1285, 12
  %v1315 = vpop.permute.xlu0 %1314
  %1316 = vrot.lane.b32.xlu0 %v1287, 12
  %v1317 = vpop.permute.xlu0 %1316
  %1318 = vrot.lane.b32.xlu0 %v1289, 12
  %v1319 = vpop.permute.xlu0 %1318
  %1320 = vrot.lane.b32.xlu0 %v1291, 12
  %v1321 = vpop.permute.xlu0 %1320
  %1322 = vrot.lane.b32.xlu0 %v1293, 12
  %v1323 = vpop.permute.xlu0 %1322
  %1324 = vrot.lane.b32.xlu0 %v1295, 12
  %v1325 = vpop.permute.xlu0 %1324
  %1326 = vrot.lane.b32.xlu0 %v1297, 12
  %v1327 = vpop.permute.xlu0 %1326
  %1328 = vrot.lane.b32.xlu0 %v1299, 12
  %v1329 = vpop.permute.xlu0 %1328
  %1330 = vrot.lane.b32.xlu0 %v1301, 12
  %v1331 = vpop.permute.xlu0 %1330
  %1332 = vrot.lane.b32.xlu0 %v1303, 12
  %v1333 = vpop.permute.xlu0 %1332
  %1334 = vrot.lane.b32.xlu0 %v1305, 12
  %v1335 = vpop.permute.xlu0 %1334
  %1336 = vrot.lane.b32.xlu0 %v1307, 12
  %v1337 = vpop.permute.xlu0 %1336
  %1338 = vrot.lane.b32.xlu0 %v1309, 12
  %v1339 = vpop.permute.xlu0 %1338
  %1340 = vrot.lane.b32.xlu0 %v1311, 12
  %v1341 = vpop.permute.xlu0 %1340
  %1342 = vrot.lane.b32.xlu0 %v1313, 12
  %v1343 = vpop.permute.xlu0 %1342
  %1344 = vrot.lane.b32.xlu0 %v1312, 12
  %v1345 = vpop.permute.xlu0 %1344
  %v1362 = vrot.slane %v1200, 3
  %v1363 = vrot.slane %v1157, 3
  %v1364 = vsel %vm794, %v1362, %v1363
  %v1365 = vrot.slane %v1159, 3
  %v1366 = vsel %vm794, %v1363, %v1365
  %v1367 = vrot.slane %v1161, 3
  %v1368 = vsel %vm794, %v1365, %v1367
  %v1369 = vrot.slane %v1163, 3
  %v1370 = vsel %vm794, %v1367, %v1369
  %v1371 = vrot.slane %v1165, 3
  %v1372 = vsel %vm794, %v1369, %v1371
  %v1373 = vrot.slane %v1167, 3
  %v1374 = vsel %vm794, %v1371, %v1373
  %v1375 = vrot.slane %v1169, 3
  %v1376 = vsel %vm794, %v1373, %v1375
  %v1377 = vrot.slane %v1171, 3
  %v1378 = vsel %vm794, %v1375, %v1377
  %v1379 = vrot.slane %v1173, 3
  %v1380 = vsel %vm794, %v1377, %v1379
  %v1381 = vrot.slane %v1175, 3
  %v1382 = vsel %vm794, %v1379, %v1381
  %v1383 = vrot.slane %v1177, 3
  %v1384 = vsel %vm794, %v1381, %v1383
  %v1385 = vrot.slane %v1179, 3
  %v1386 = vsel %vm794, %v1383, %v1385
  %v1387 = vrot.slane %v1181, 3
  %v1388 = vsel %vm794, %v1385, %v1387
  %v1389 = vrot.slane %v1183, 3
  %v1390 = vsel %vm794, %v1387, %v1389
  %v1391 = vrot.slane %v1201, 3
  %v1392 = vsel %vm794, %v1389, %v1391
  %1393 = vrot.lane.b32.xlu0 %v1364, 18
  %v1394 = vpop.permute.xlu0 %1393
  %1395 = vrot.lane.b32.xlu0 %v1366, 18
  %v1396 = vpop.permute.xlu0 %1395
  %1397 = vrot.lane.b32.xlu0 %v1368, 18
  %v1398 = vpop.permute.xlu0 %1397
  %1399 = vrot.lane.b32.xlu0 %v1370, 18
  %v1400 = vpop.permute.xlu0 %1399
  %1401 = vrot.lane.b32.xlu0 %v1372, 18
  %v1402 = vpop.permute.xlu0 %1401
  %1403 = vrot.lane.b32.xlu0 %v1374, 18
  %v1404 = vpop.permute.xlu0 %1403
  %1405 = vrot.lane.b32.xlu0 %v1376, 18
  %v1406 = vpop.permute.xlu0 %1405
  %1407 = vrot.lane.b32.xlu0 %v1378, 18
  %v1408 = vpop.permute.xlu0 %1407
  %1409 = vrot.lane.b32.xlu0 %v1380, 18
  %v1410 = vpop.permute.xlu0 %1409
  %1411 = vrot.lane.b32.xlu0 %v1382, 18
  %v1412 = vpop.permute.xlu0 %1411
  %1413 = vrot.lane.b32.xlu0 %v1384, 18
  %v1414 = vpop.permute.xlu0 %1413
  %1415 = vrot.lane.b32.xlu0 %v1386, 18
  %v1416 = vpop.permute.xlu0 %1415
  %1417 = vrot.lane.b32.xlu0 %v1388, 18
  %v1418 = vpop.permute.xlu0 %1417
  %1419 = vrot.lane.b32.xlu0 %v1390, 18
  %v1420 = vpop.permute.xlu0 %1419
  %1421 = vrot.lane.b32.xlu0 %v1392, 18
  %v1422 = vpop.permute.xlu0 %1421
  %1423 = vrot.lane.b32.xlu0 %v1391, 18
  %v1424 = vpop.permute.xlu0 %1423
  %v1441 = vrot.slane %v1200, 4
  %v1442 = vrot.slane %v1157, 4
  %v1443 = vsel %vm186, %v1441, %v1442
  %v1444 = vrot.slane %v1159, 4
  %v1445 = vsel %vm186, %v1442, %v1444
  %v1446 = vrot.slane %v1161, 4
  %v1447 = vsel %vm186, %v1444, %v1446
  %v1448 = vrot.slane %v1163, 4
  %v1449 = vsel %vm186, %v1446, %v1448
  %v1450 = vrot.slane %v1165, 4
  %v1451 = vsel %vm186, %v1448, %v1450
  %v1452 = vrot.slane %v1167, 4
  %v1453 = vsel %vm186, %v1450, %v1452
  %v1454 = vrot.slane %v1169, 4
  %v1455 = vsel %vm186, %v1452, %v1454
  %v1456 = vrot.slane %v1171, 4
  %v1457 = vsel %vm186, %v1454, %v1456
  %v1458 = vrot.slane %v1173, 4
  %v1459 = vsel %vm186, %v1456, %v1458
  %v1460 = vrot.slane %v1175, 4
  %v1461 = vsel %vm186, %v1458, %v1460
  %v1462 = vrot.slane %v1177, 4
  %v1463 = vsel %vm186, %v1460, %v1462
  %v1464 = vrot.slane %v1179, 4
  %v1465 = vsel %vm186, %v1462, %v1464
  %v1466 = vrot.slane %v1181, 4
  %v1467 = vsel %vm186, %v1464, %v1466
  %v1468 = vrot.slane %v1183, 4
  %v1469 = vsel %vm186, %v1466, %v1468
  %v1470 = vrot.slane %v1201, 4
  %v1471 = vsel %vm186, %v1468, %v1470
  %1472 = vrot.lane.b32.xlu0 %v1443, 24
  %v1473 = vpop.permute.xlu0 %1472
  %1474 = vrot.lane.b32.xlu0 %v1445, 24
  %v1475 = vpop.permute.xlu0 %1474
  %1476 = vrot.lane.b32.xlu0 %v1447, 24
  %v1477 = vpop.permute.xlu0 %1476
  %1478 = vrot.lane.b32.xlu0 %v1449, 24
  %v1479 = vpop.permute.xlu0 %1478
  %1480 = vrot.lane.b32.xlu0 %v1451, 24
  %v1481 = vpop.permute.xlu0 %1480
  %1482 = vrot.lane.b32.xlu0 %v1453, 24
  %v1483 = vpop.permute.xlu0 %1482
  %1484 = vrot.lane.b32.xlu0 %v1455, 24
  %v1485 = vpop.permute.xlu0 %1484
  %1486 = vrot.lane.b32.xlu0 %v1457, 24
  %v1487 = vpop.permute.xlu0 %1486
  %1488 = vrot.lane.b32.xlu0 %v1459, 24
  %v1489 = vpop.permute.xlu0 %1488
  %1490 = vrot.lane.b32.xlu0 %v1461, 24
  %v1491 = vpop.permute.xlu0 %1490
  %1492 = vrot.lane.b32.xlu0 %v1463, 24
  %v1493 = vpop.permute.xlu0 %1492
  %1494 = vrot.lane.b32.xlu0 %v1465, 24
  %v1495 = vpop.permute.xlu0 %1494
  %1496 = vrot.lane.b32.xlu0 %v1467, 24
  %v1497 = vpop.permute.xlu0 %1496
  %1498 = vrot.lane.b32.xlu0 %v1469, 24
  %v1499 = vpop.permute.xlu0 %1498
  %1500 = vrot.lane.b32.xlu0 %v1471, 24
  %v1501 = vpop.permute.xlu0 %1500
  %1502 = vrot.lane.b32.xlu0 %v1470, 24
  %v1503 = vpop.permute.xlu0 %1502
  %v1520 = vsel %vm953, %v1200, %v1236
  %v1521 = vsel %vm953, %v1157, %v1238
  %v1522 = vsel %vm953, %v1159, %v1240
  %v1523 = vsel %vm953, %v1161, %v1242
  %v1524 = vsel %vm953, %v1163, %v1244
  %v1525 = vsel %vm953, %v1165, %v1246
  %v1526 = vsel %vm953, %v1167, %v1248
  %v1527 = vsel %vm953, %v1169, %v1250
  %v1528 = vsel %vm953, %v1171, %v1252
  %v1529 = vsel %vm953, %v1173, %v1254
  %v1530 = vsel %vm953, %v1175, %v1256
  %v1531 = vsel %vm953, %v1177, %v1258
  %v1532 = vsel %vm953, %v1179, %v1260
  %v1533 = vsel %vm953, %v1181, %v1262
  %v1534 = vsel %vm953, %v1183, %v1264
  %v1535 = vsel %vm953, %v1201, %v1266
  %v1536 = vsel %vm95, %v1520, %v1315
  %v1537 = vsel %vm95, %v1521, %v1317
  %v1538 = vsel %vm95, %v1522, %v1319
  %v1539 = vsel %vm95, %v1523, %v1321
  %v1540 = vsel %vm95, %v1524, %v1323
  %v1541 = vsel %vm95, %v1525, %v1325
  %v1542 = vsel %vm95, %v1526, %v1327
  %v1543 = vsel %vm95, %v1527, %v1329
  %v1544 = vsel %vm95, %v1528, %v1331
  %v1545 = vsel %vm95, %v1529, %v1333
  %v1546 = vsel %vm95, %v1530, %v1335
  %v1547 = vsel %vm95, %v1531, %v1337
  %v1548 = vsel %vm95, %v1532, %v1339
  %v1549 = vsel %vm95, %v1533, %v1341
  %v1550 = vsel %vm95, %v1534, %v1343
  %v1551 = vsel %vm95, %v1535, %v1345
  %v1552 = vsel %vm986, %v1536, %v1394
  %v1553 = vsel %vm986, %v1537, %v1396
  %v1554 = vsel %vm986, %v1538, %v1398
  %v1555 = vsel %vm986, %v1539, %v1400
  %v1556 = vsel %vm986, %v1540, %v1402
  %v1557 = vsel %vm986, %v1541, %v1404
  %v1558 = vsel %vm986, %v1542, %v1406
  %v1559 = vsel %vm986, %v1543, %v1408
  %v1560 = vsel %vm986, %v1544, %v1410
  %v1561 = vsel %vm986, %v1545, %v1412
  %v1562 = vsel %vm986, %v1546, %v1414
  %v1563 = vsel %vm986, %v1547, %v1416
  %v1564 = vsel %vm986, %v1548, %v1418
  %v1565 = vsel %vm986, %v1549, %v1420
  %v1566 = vsel %vm986, %v1550, %v1422
  %v1567 = vsel %vm986, %v1551, %v1424
  %v1568 = vsel %vm1003, %v1552, %v1473
  %v1569 = vsel %vm1003, %v1553, %v1475
  %v1570 = vsel %vm1003, %v1554, %v1477
  %v1571 = vsel %vm1003, %v1555, %v1479
  %v1572 = vsel %vm1003, %v1556, %v1481
  %v1573 = vsel %vm1003, %v1557, %v1483
  %v1574 = vsel %vm1003, %v1558, %v1485
  %v1575 = vsel %vm1003, %v1559, %v1487
  %v1576 = vsel %vm1003, %v1560, %v1489
  %v1577 = vsel %vm1003, %v1561, %v1491
  %v1578 = vsel %vm1003, %v1562, %v1493
  %v1579 = vsel %vm1003, %v1563, %v1495
  %v1580 = vsel %vm1003, %v1564, %v1497
  %v1581 = vsel %vm1003, %v1565, %v1499
  %v1582 = vsel %vm1003, %v1566, %v1501
  %v1583 = vsel %vm1003, %v1567, %v1503
  %v1585 = vsel %vm1023, %v1568, 0
  %v1588 = vsel %vm1023, %v1569, 0
  %v1591 = vsel %vm1023, %v1570, 0
  %v1594 = vsel %vm1023, %v1571, 0
  %v1597 = vsel %vm1023, %v1572, 0
  %v1600 = vsel %vm1023, %v1573, 0
  %v1603 = vsel %vm1023, %v1574, 0
  %v1606 = vsel %vm1023, %v1575, 0
  %v1609 = vsel %vm1023, %v1576, 0
  %v1612 = vsel %vm1023, %v1577, 0
  %v1615 = vsel %vm1023, %v1578, 0
  %v1618 = vsel %vm1023, %v1579, 0
  %v1621 = vsel %vm1023, %v1580, 0
  %v1624 = vsel %vm1023, %v1581, 0
  %v1627 = vsel %vm1023, %v1582, 0
  %v1630 = vsel %vm1023, %v1583, 0
  %1632 = vmatpush.msra.mxu0 0.0
  %1633 = vmatpush.msra.mxu0 0.0
  %1634 = vmatpush.msra.mxu0 0.0
  %1635 = vmatpush.msra.mxu0 0.0
  %1636 = vmatpush.msra.mxu0 0.0
  %1637 = vmatpush.msra.mxu0 0.0
  %1638 = vmatpush.msra.mxu0 0.0
  %1639 = vmatpush.msra.mxu0 0.0
  %1640 = vmatpush.msra.mxu0 0.0
  %1641 = vmatpush.msra.mxu0 0.0
  %1642 = vmatpush.msra.mxu0 0.0
  %1643 = vmatpush.msra.mxu0 0.0
  %1644 = vmatpush.msra.mxu0 %v1073
  %1645 = vmatpush.msra.mxu0 %v565
  %1646 = vmatpush.msra.mxu0 %v564
  %1647 = vmatpush.msra.mxu0 %v563
  %1648 = vmatmul.f32.gmra.mxu0 %v1585
  %v1649 = vpop.f32.mrf.mxu0
  %v1650 = vadd.f32 %v1021, %v1649
  %1651 = vmatmul.f32.gmra.mxu0 %v1588
  %v1652 = vpop.f32.mrf.mxu0
  %v1653 = vadd.f32 %v1021, %v1652
  %1654 = vmatmul.f32.gmra.mxu0 %v1591
  %v1655 = vpop.f32.mrf.mxu0
  %v1656 = vadd.f32 %v1021, %v1655
  %1657 = vmatmul.f32.gmra.mxu0 %v1594
  %v1658 = vpop.f32.mrf.mxu0
  %v1659 = vadd.f32 %v1021, %v1658
  %1660 = vmatmul.f32.gmra.mxu0 %v1597
  %v1661 = vpop.f32.mrf.mxu0
  %v1662 = vadd.f32 %v1021, %v1661
  %1663 = vmatmul.f32.gmra.mxu0 %v1600
  %v1664 = vpop.f32.mrf.mxu0
  %v1665 = vadd.f32 %v1021, %v1664
  %1666 = vmatmul.f32.gmra.mxu0 %v1603
  %v1667 = vpop.f32.mrf.mxu0
  %v1668 = vadd.f32 %v1021, %v1667
  %1669 = vmatmul.f32.gmra.mxu0 %v1606
  %v1670 = vpop.f32.mrf.mxu0
  %v1671 = vadd.f32 %v1021, %v1670
  %1672 = vmatmul.f32.gmra.mxu0 %v1609
  %v1673 = vpop.f32.mrf.mxu0
  %v1674 = vadd.f32 %v1021, %v1673
  %1675 = vmatmul.f32.gmra.mxu0 %v1612
  %v1676 = vpop.f32.mrf.mxu0
  %v1677 = vadd.f32 %v1021, %v1676
  %1678 = vmatmul.f32.gmra.mxu0 %v1615
  %v1679 = vpop.f32.mrf.mxu0
  %v1680 = vadd.f32 %v1021, %v1679
  %1681 = vmatmul.f32.gmra.mxu0 %v1618
  %v1682 = vpop.f32.mrf.mxu0
  %v1683 = vadd.f32 %v1021, %v1682
  %1684 = vmatmul.f32.gmra.mxu0 %v1621
  %v1685 = vpop.f32.mrf.mxu0
  %v1686 = vadd.f32 %v1021, %v1685
  %1687 = vmatmul.f32.gmra.mxu0 %v1624
  %v1688 = vpop.f32.mrf.mxu0
  %v1689 = vadd.f32 %v1021, %v1688
  %1690 = vmatmul.f32.gmra.mxu0 %v1627
  %v1691 = vpop.f32.mrf.mxu0
  %v1692 = vadd.f32 %v1021, %v1691
  %1693 = vmatmul.f32.gmra.mxu0 %v1630
  %v1694 = vpop.f32.mrf.mxu0
  %v1695 = vadd.f32 %v1021, %v1694
  %1696 = vdwg.mxu0
  %v1697 = vsel %vm953, %v1093, 0.0
  %v1698 = vsel %vm953, %v1096, 0.0
  %v1699 = vadd.f32 %v1697, %v1698
  %v1700 = vsel %vm953, %v1099, 0.0
  %v1701 = vadd.f32 %v1699, %v1700
  %v1702 = vsel %vm953, %v1102, 0.0
  %v1703 = vadd.f32 %v1701, %v1702
  %v1704 = vsel %vm953, %v1105, 0.0
  %v1705 = vadd.f32 %v1703, %v1704
  %v1706 = vsel %vm953, %v1108, 0.0
  %v1707 = vadd.f32 %v1705, %v1706
  %v1708 = vsel %vm953, %v1111, 0.0
  %v1709 = vadd.f32 %v1707, %v1708
  %v1710 = vsel %vm953, %v1114, 0.0
  %v1711 = vadd.f32 %v1709, %v1710
  %v1712 = vsel %vm953, %v1117, 0.0
  %v1713 = vadd.f32 %v1711, %v1712
  %v1714 = vsel %vm953, %v1120, 0.0
  %v1715 = vadd.f32 %v1713, %v1714
  %v1716 = vsel %vm953, %v1123, 0.0
  %v1717 = vadd.f32 %v1715, %v1716
  %v1718 = vsel %vm953, %v1126, 0.0
  %v1719 = vadd.f32 %v1717, %v1718
  %v1720 = vsel %vm953, %v1129, 0.0
  %v1721 = vadd.f32 %v1719, %v1720
  %v1722 = vsel %vm953, %v1132, 0.0
  %v1723 = vadd.f32 %v1721, %v1722
  %v1724 = vsel %vm953, %v1135, 0.0
  %v1725 = vadd.f32 %v1723, %v1724
  %vm1726 = vcmask 44032
  %v1727 = vsel %vm1726, %v1138, 0.0
  %v1728 = vadd.f32 %v1725, %v1727
  %v1729 = vrot.slane %v1728, 4
  %v1730 = vadd.f32 %v1728, %v1729
  %v1731 = vrot.slane %v1730, 2
  %v1732 = vadd.f32 %v1730, %v1731
  %v1733 = vrot.slane %v1732, 1
  %v1734 = vadd.f32 %v1732, %v1733
  %v1735 = vadd.f32 %v1734, 0.0
  %v1736 = vsel %vm953, %v1650, 0.0
  %v1737 = vsel %vm953, %v1653, 0.0
  %v1738 = vadd.f32 %v1736, %v1737
  %v1739 = vsel %vm953, %v1656, 0.0
  %v1740 = vadd.f32 %v1738, %v1739
  %v1741 = vsel %vm953, %v1659, 0.0
  %v1742 = vadd.f32 %v1740, %v1741
  %v1743 = vsel %vm953, %v1662, 0.0
  %v1744 = vadd.f32 %v1742, %v1743
  %v1745 = vsel %vm953, %v1665, 0.0
  %v1746 = vadd.f32 %v1744, %v1745
  %v1747 = vsel %vm953, %v1668, 0.0
  %v1748 = vadd.f32 %v1746, %v1747
  %v1749 = vsel %vm953, %v1671, 0.0
  %v1750 = vadd.f32 %v1748, %v1749
  %v1751 = vsel %vm953, %v1674, 0.0
  %v1752 = vadd.f32 %v1750, %v1751
  %v1753 = vsel %vm953, %v1677, 0.0
  %v1754 = vadd.f32 %v1752, %v1753
  %v1755 = vsel %vm953, %v1680, 0.0
  %v1756 = vadd.f32 %v1754, %v1755
  %v1757 = vsel %vm953, %v1683, 0.0
  %v1758 = vadd.f32 %v1756, %v1757
  %v1759 = vsel %vm953, %v1686, 0.0
  %v1760 = vadd.f32 %v1758, %v1759
  %v1761 = vsel %vm953, %v1689, 0.0
  %v1762 = vadd.f32 %v1760, %v1761
  %v1763 = vsel %vm953, %v1692, 0.0
  %v1764 = vadd.f32 %v1762, %v1763
  %v1765 = vsel %vm1726, %v1695, 0.0
  %v1766 = vadd.f32 %v1764, %v1765
  %v1767 = vrot.slane %v1766, 4
  %v1768 = vadd.f32 %v1766, %v1767
  %v1769 = vrot.slane %v1768, 2
  %v1770 = vadd.f32 %v1768, %v1769
  %v1771 = vrot.slane %v1770, 1
  %v1772 = vadd.f32 %v1770, %v1771
  %v1773 = vadd.f32 %v1735, %v1772
  %v1774 = vrcp.pop 248.0
  %v1775 = vmul.f32 248.0, %v1774
  %v1776 = vsub.f32 1.0, %v1775
  %v1777 = vmul.f32 %v1774, %v1776
  %v1778 = vadd.f32 %v1774, %v1777
  %vm1779 = vweird.f32 %v1774
  %v1780 = vsel %vm1779, %v1774, %v1778
  %v1781 = vmul.f32 %v1773, %v1780
  %v1782 = vsub.f32 %v1093, %v1781
  %v1783 = vsub.f32 %v1096, %v1781
  %v1784 = vsub.f32 %v1099, %v1781
  %v1785 = vsub.f32 %v1102, %v1781
  %v1786 = vsub.f32 %v1105, %v1781
  %v1787 = vsub.f32 %v1108, %v1781
  %v1788 = vsub.f32 %v1111, %v1781
  %v1789 = vsub.f32 %v1114, %v1781
  %v1790 = vsub.f32 %v1117, %v1781
  %v1791 = vsub.f32 %v1120, %v1781
  %v1792 = vsub.f32 %v1123, %v1781
  %v1793 = vsub.f32 %v1126, %v1781
  %v1794 = vsub.f32 %v1129, %v1781
  %v1795 = vsub.f32 %v1132, %v1781
  %v1796 = vsub.f32 %v1135, %v1781
  %v1797 = vsub.f32 %v1138, %v1781
  %v1798 = vmul.f32 %v1782, %v1782
  %v1799 = vmul.f32 %v1783, %v1783
  %v1800 = vmul.f32 %v1784, %v1784
  %v1801 = vmul.f32 %v1785, %v1785
  %v1802 = vmul.f32 %v1786, %v1786
  %v1803 = vmul.f32 %v1787, %v1787
  %v1804 = vmul.f32 %v1788, %v1788
  %v1805 = vmul.f32 %v1789, %v1789
  %v1806 = vmul.f32 %v1790, %v1790
  %v1807 = vmul.f32 %v1791, %v1791
  %v1808 = vmul.f32 %v1792, %v1792
  %v1809 = vmul.f32 %v1793, %v1793
  %v1810 = vmul.f32 %v1794, %v1794
  %v1811 = vmul.f32 %v1795, %v1795
  %v1812 = vmul.f32 %v1796, %v1796
  %v1813 = vmul.f32 %v1797, %v1797
  %v1814 = vsel %vm953, %v1798, 0.0
  %v1815 = vsel %vm953, %v1799, 0.0
  %v1816 = vadd.f32 %v1814, %v1815
  %v1817 = vsel %vm953, %v1800, 0.0
  %v1818 = vadd.f32 %v1816, %v1817
  %v1819 = vsel %vm953, %v1801, 0.0
  %v1820 = vadd.f32 %v1818, %v1819
  %v1821 = vsel %vm953, %v1802, 0.0
  %v1822 = vadd.f32 %v1820, %v1821
  %v1823 = vsel %vm953, %v1803, 0.0
  %v1824 = vadd.f32 %v1822, %v1823
  %v1825 = vsel %vm953, %v1804, 0.0
  %v1826 = vadd.f32 %v1824, %v1825
  %v1827 = vsel %vm953, %v1805, 0.0
  %v1828 = vadd.f32 %v1826, %v1827
  %v1829 = vsel %vm953, %v1806, 0.0
  %v1830 = vadd.f32 %v1828, %v1829
  %v1831 = vsel %vm953, %v1807, 0.0
  %v1832 = vadd.f32 %v1830, %v1831
  %v1833 = vsel %vm953, %v1808, 0.0
  %v1834 = vadd.f32 %v1832, %v1833
  %v1835 = vsel %vm953, %v1809, 0.0
  %v1836 = vadd.f32 %v1834, %v1835
  %v1837 = vsel %vm953, %v1810, 0.0
  %v1838 = vadd.f32 %v1836, %v1837
  %v1839 = vsel %vm953, %v1811, 0.0
  %v1840 = vadd.f32 %v1838, %v1839
  %v1841 = vsel %vm953, %v1812, 0.0
  %v1842 = vadd.f32 %v1840, %v1841
  %v1843 = vsel %vm1726, %v1813, 0.0
  %v1844 = vadd.f32 %v1842, %v1843
  %v1845 = vrot.slane %v1844, 4
  %v1846 = vadd.f32 %v1844, %v1845
  %v1847 = vrot.slane %v1846, 2
  %v1848 = vadd.f32 %v1846, %v1847
  %v1849 = vrot.slane %v1848, 1
  %v1850 = vadd.f32 %v1848, %v1849
  %v1851 = vadd.f32 %v1850, 0.0
  %v1852 = vsub.f32 %v1650, %v1781
  %v1853 = vsub.f32 %v1653, %v1781
  %v1854 = vsub.f32 %v1656, %v1781
  %v1855 = vsub.f32 %v1659, %v1781
  %v1856 = vsub.f32 %v1662, %v1781
  %v1857 = vsub.f32 %v1665, %v1781
  %v1858 = vsub.f32 %v1668, %v1781
  %v1859 = vsub.f32 %v1671, %v1781
  %v1860 = vsub.f32 %v1674, %v1781
  %v1861 = vsub.f32 %v1677, %v1781
  %v1862 = vsub.f32 %v1680, %v1781
  %v1863 = vsub.f32 %v1683, %v1781
  %v1864 = vsub.f32 %v1686, %v1781
  %v1865 = vsub.f32 %v1689, %v1781
  %v1866 = vsub.f32 %v1692, %v1781
  %v1867 = vsub.f32 %v1695, %v1781
  %v1868 = vmul.f32 %v1852, %v1852
  %v1869 = vmul.f32 %v1853, %v1853
  %v1870 = vmul.f32 %v1854, %v1854
  %v1871 = vmul.f32 %v1855, %v1855
  %v1872 = vmul.f32 %v1856, %v1856
  %v1873 = vmul.f32 %v1857, %v1857
  %v1874 = vmul.f32 %v1858, %v1858
  %v1875 = vmul.f32 %v1859, %v1859
  %v1876 = vmul.f32 %v1860, %v1860
  %v1877 = vmul.f32 %v1861, %v1861
  %v1878 = vmul.f32 %v1862, %v1862
  %v1879 = vmul.f32 %v1863, %v1863
  %v1880 = vmul.f32 %v1864, %v1864
  %v1881 = vmul.f32 %v1865, %v1865
  %v1882 = vmul.f32 %v1866, %v1866
  %v1883 = vmul.f32 %v1867, %v1867
  %v1884 = vsel %vm953, %v1868, 0.0
  %v1885 = vsel %vm953, %v1869, 0.0
  %v1886 = vadd.f32 %v1884, %v1885
  %v1887 = vsel %vm953, %v1870, 0.0
  %v1888 = vadd.f32 %v1886, %v1887
  %v1889 = vsel %vm953, %v1871, 0.0
  %v1890 = vadd.f32 %v1888, %v1889
  %v1891 = vsel %vm953, %v1872, 0.0
  %v1892 = vadd.f32 %v1890, %v1891
  %v1893 = vsel %vm953, %v1873, 0.0
  %v1894 = vadd.f32 %v1892, %v1893
  %v1895 = vsel %vm953, %v1874, 0.0
  %v1896 = vadd.f32 %v1894, %v1895
  %v1897 = vsel %vm953, %v1875, 0.0
  %v1898 = vadd.f32 %v1896, %v1897
  %v1899 = vsel %vm953, %v1876, 0.0
  %v1900 = vadd.f32 %v1898, %v1899
  %v1901 = vsel %vm953, %v1877, 0.0
  %v1902 = vadd.f32 %v1900, %v1901
  %v1903 = vsel %vm953, %v1878, 0.0
  %v1904 = vadd.f32 %v1902, %v1903
  %v1905 = vsel %vm953, %v1879, 0.0
  %v1906 = vadd.f32 %v1904, %v1905
  %v1907 = vsel %vm953, %v1880, 0.0
  %v1908 = vadd.f32 %v1906, %v1907
  %v1909 = vsel %vm953, %v1881, 0.0
  %v1910 = vadd.f32 %v1908, %v1909
  %v1911 = vsel %vm953, %v1882, 0.0
  %v1912 = vadd.f32 %v1910, %v1911
  %v1913 = vsel %vm1726, %v1883, 0.0
  %v1914 = vadd.f32 %v1912, %v1913
  %v1915 = vrot.slane %v1914, 4
  %v1916 = vadd.f32 %v1914, %v1915
  %v1917 = vrot.slane %v1916, 2
  %v1918 = vadd.f32 %v1916, %v1917
  %v1919 = vrot.slane %v1918, 1
  %v1920 = vadd.f32 %v1918, %v1919
  %v1921 = vadd.f32 %v1851, %v1920
  %v1922 = vmul.f32 %v1921, %v1780
  %v1923 = vadd.f32 %v1922, 1e-05
  %v1924 = vrsqrt.pop %v1923
  %v1925 = vmul.f32 %v1924, %v1923
  %v1926 = vmul.f32 %v1925, %v1924
  %v1927 = vmul.f32 0.5, %v1926
  %v1928 = vsub.f32 1.5, %v1927
  %v1929 = vmul.f32 %v1924, %v1928
  %vm1930 = vweird.f32 %v1923
  %vm1931 = vweird.f32 %v1924
  %vm1932 = vmor %vm1930, %vm1931
  %v1933 = vsel %vm1932, %v1924, %v1929
  %v1934 = vmul.f32 %v1933, %v568
  %v1935 = vperm.slane %v1934, 0
  %v1936 = vmul.f32 %v1782, %v1935
  %v1937 = vmul.f32 %v1783, %v1935
  %v1938 = vmul.f32 %v1784, %v1935
  %v1939 = vmul.f32 %v1785, %v1935
  %v1940 = vmul.f32 %v1786, %v1935
  %v1941 = vmul.f32 %v1787, %v1935
  %v1942 = vmul.f32 %v1788, %v1935
  %v1943 = vmul.f32 %v1789, %v1935
  %v1944 = vmul.f32 %v1790, %v1935
  %v1945 = vmul.f32 %v1791, %v1935
  %v1946 = vmul.f32 %v1792, %v1935
  %v1947 = vmul.f32 %v1793, %v1935
  %v1948 = vmul.f32 %v1794, %v1935
  %v1949 = vmul.f32 %v1795, %v1935
  %v1950 = vmul.f32 %v1796, %v1935
  %v1951 = vmul.f32 %v1797, %v1935
  %v1953 = vperm.slane %v569, 0
  %v1955 = vadd.f32 %v1936, %v1953
  %v1956 = vadd.f32 %v1937, %v1953
  %v1957 = vadd.f32 %v1938, %v1953
  %v1958 = vadd.f32 %v1939, %v1953
  %v1959 = vadd.f32 %v1940, %v1953
  %v1960 = vadd.f32 %v1941, %v1953
  %v1961 = vadd.f32 %v1942, %v1953
  %v1962 = vadd.f32 %v1943, %v1953
  %v1963 = vadd.f32 %v1944, %v1953
  %v1964 = vadd.f32 %v1945, %v1953
  %v1965 = vadd.f32 %v1946, %v1953
  %v1966 = vadd.f32 %v1947, %v1953
  %v1967 = vadd.f32 %v1948, %v1953
  %v1968 = vadd.f32 %v1949, %v1953
  %v1969 = vadd.f32 %v1950, %v1953
  %v1970 = vadd.f32 %v1951, %v1953
  %v1971 = vmax.f32 %v1955, 0.0
  %v1972 = vmax.f32 %v1956, 0.0
  %v1973 = vmax.f32 %v1957, 0.0
  %v1974 = vmax.f32 %v1958, 0.0
  %v1975 = vmax.f32 %v1959, 0.0
  %v1976 = vmax.f32 %v1960, 0.0
  %v1977 = vmax.f32 %v1961, 0.0
  %v1978 = vmax.f32 %v1962, 0.0
  %v1979 = vmax.f32 %v1963, 0.0
  %v1980 = vmax.f32 %v1964, 0.0
  %v1981 = vmax.f32 %v1965, 0.0
  %v1982 = vmax.f32 %v1966, 0.0
  %v1983 = vmax.f32 %v1967, 0.0
  %v1984 = vmax.f32 %v1968, 0.0
  %v1985 = vmax.f32 %v1969, 0.0
  %v1986 = vmax.f32 %v1970, 0.0
  %v1987 = vmul.f32 %v1852, %v1935
  %v1988 = vmul.f32 %v1853, %v1935
  %v1989 = vmul.f32 %v1854, %v1935
  %v1990 = vmul.f32 %v1855, %v1935
  %v1991 = vmul.f32 %v1856, %v1935
  %v1992 = vmul.f32 %v1857, %v1935
  %v1993 = vmul.f32 %v1858, %v1935
  %v1994 = vmul.f32 %v1859, %v1935
  %v1995 = vmul.f32 %v1860, %v1935
  %v1996 = vmul.f32 %v1861, %v1935
  %v1997 = vmul.f32 %v1862, %v1935
  %v1998 = vmul.f32 %v1863, %v1935
  %v1999 = vmul.f32 %v1864, %v1935
  %v2000 = vmul.f32 %v1865, %v1935
  %v2001 = vmul.f32 %v1866, %v1935
  %v2002 = vmul.f32 %v1867, %v1935
  %v2003 = vadd.f32 %v1987, %v1953
  %v2004 = vadd.f32 %v1988, %v1953
  %v2005 = vadd.f32 %v1989, %v1953
  %v2006 = vadd.f32 %v1990, %v1953
  %v2007 = vadd.f32 %v1991, %v1953
  %v2008 = vadd.f32 %v1992, %v1953
  %v2009 = vadd.f32 %v1993, %v1953
  %v2010 = vadd.f32 %v1994, %v1953
  %v2011 = vadd.f32 %v1995, %v1953
  %v2012 = vadd.f32 %v1996, %v1953
  %v2013 = vadd.f32 %v1997, %v1953
  %v2014 = vadd.f32 %v1998, %v1953
  %v2015 = vadd.f32 %v1999, %v1953
  %v2016 = vadd.f32 %v2000, %v1953
  %v2017 = vadd.f32 %v2001, %v1953
  %v2018 = vadd.f32 %v2002, %v1953
  %v2019 = vmax.f32 %v2003, 0.0
  %v2020 = vmax.f32 %v2004, 0.0
  %v2021 = vmax.f32 %v2005, 0.0
  %v2022 = vmax.f32 %v2006, 0.0
  %v2023 = vmax.f32 %v2007, 0.0
  %v2024 = vmax.f32 %v2008, 0.0
  %v2025 = vmax.f32 %v2009, 0.0
  %v2026 = vmax.f32 %v2010, 0.0
  %v2027 = vmax.f32 %v2011, 0.0
  %v2028 = vmax.f32 %v2012, 0.0
  %v2029 = vmax.f32 %v2013, 0.0
  %v2030 = vmax.f32 %v2014, 0.0
  %v2031 = vmax.f32 %v2015, 0.0
  %v2032 = vmax.f32 %v2016, 0.0
  %v2033 = vmax.f32 %v2017, 0.0
  %v2034 = vmax.f32 %v2018, 0.0
  %v2035 = vld [vmem:[%s10] sm:$0xff]
  %v2036 = vld [vmem:[%s10 + $0x8] sm:$0xff]
  %v2037 = vld [vmem:[%s10 + $0x10] sm:$0xff]
  %v2038 = vld [vmem:[%s10 + $0x18] sm:$0x3f]
  %v2039 = vld [vmem:[%s11] sm:$0x1]
  %v2040 = vld [vmem:[%s12] sm:$0x1]
  %v2041 = vld [vmem:[%s13] sm:$0x1]
  %v2058 = vrot.slane %v1971, 4
  %v2059 = vrot.slane %v1972, 4
  %v2060 = vsel %vm186, %v2058, %v2059
  %v2061 = vrot.slane %v1973, 4
  %v2062 = vsel %vm186, %v2059, %v2061
  %v2063 = vrot.slane %v1974, 4
  %v2064 = vsel %vm186, %v2061, %v2063
  %v2065 = vrot.slane %v1975, 4
  %v2066 = vsel %vm186, %v2063, %v2065
  %v2067 = vrot.slane %v1976, 4
  %v2068 = vsel %vm186, %v2065, %v2067
  %v2069 = vrot.slane %v1977, 4
  %v2070 = vsel %vm186, %v2067, %v2069
  %v2071 = vrot.slane %v1978, 4
  %v2072 = vsel %vm186, %v2069, %v2071
  %v2073 = vrot.slane %v1979, 4
  %v2074 = vsel %vm186, %v2071, %v2073
  %v2075 = vrot.slane %v1980, 4
  %v2076 = vsel %vm186, %v2073, %v2075
  %v2077 = vrot.slane %v1981, 4
  %v2078 = vsel %vm186, %v2075, %v2077
  %v2079 = vrot.slane %v1982, 4
  %v2080 = vsel %vm186, %v2077, %v2079
  %v2081 = vrot.slane %v1983, 4
  %v2082 = vsel %vm186, %v2079, %v2081
  %v2083 = vrot.slane %v1984, 4
  %v2084 = vsel %vm186, %v2081, %v2083
  %v2085 = vrot.slane %v1985, 4
  %v2086 = vsel %vm186, %v2083, %v2085
  %v2087 = vrot.slane %v1986, 4
  %v2088 = vsel %vm186, %v2085, %v2087
  %v2105 = vsel %vm186, 0.0, %v2058
  %v2108 = vrot.slane %v2105, 1
  %v2109 = vrot.slane %v2060, 1
  %v2110 = vsel %vm634, %v2108, %v2109
  %v2111 = vrot.slane %v2062, 1
  %v2112 = vsel %vm634, %v2109, %v2111
  %v2113 = vrot.slane %v2064, 1
  %v2114 = vsel %vm634, %v2111, %v2113
  %v2115 = vrot.slane %v2066, 1
  %v2116 = vsel %vm634, %v2113, %v2115
  %v2117 = vrot.slane %v2068, 1
  %v2118 = vsel %vm634, %v2115, %v2117
  %v2119 = vrot.slane %v2070, 1
  %v2120 = vsel %vm634, %v2117, %v2119
  %v2121 = vrot.slane %v2072, 1
  %v2122 = vsel %vm634, %v2119, %v2121
  %v2123 = vrot.slane %v2074, 1
  %v2124 = vsel %vm634, %v2121, %v2123
  %v2125 = vrot.slane %v2076, 1
  %v2126 = vsel %vm634, %v2123, %v2125
  %v2127 = vrot.slane %v2078, 1
  %v2128 = vsel %vm634, %v2125, %v2127
  %v2129 = vrot.slane %v2080, 1
  %v2130 = vsel %vm634, %v2127, %v2129
  %v2131 = vrot.slane %v2082, 1
  %v2132 = vsel %vm634, %v2129, %v2131
  %v2133 = vrot.slane %v2084, 1
  %v2134 = vsel %vm634, %v2131, %v2133
  %v2135 = vrot.slane %v2086, 1
  %v2136 = vsel %vm634, %v2133, %v2135
  %v2137 = vrot.slane %v2088, 1
  %v2138 = vsel %vm634, %v2135, %v2137
  %v2139 = vrot.slane 0.0, 1
  %v2140 = vsel %vm634, %v2137, %v2139
  %2141 = vrot.lane.b32.xlu0 %v2110, 6
  %v2142 = vpop.permute.xlu0 %2141
  %2143 = vrot.lane.b32.xlu0 %v2112, 6
  %v2144 = vpop.permute.xlu0 %2143
  %2145 = vrot.lane.b32.xlu0 %v2114, 6
  %v2146 = vpop.permute.xlu0 %2145
  %2147 = vrot.lane.b32.xlu0 %v2116, 6
  %v2148 = vpop.permute.xlu0 %2147
  %2149 = vrot.lane.b32.xlu0 %v2118, 6
  %v2150 = vpop.permute.xlu0 %2149
  %2151 = vrot.lane.b32.xlu0 %v2120, 6
  %v2152 = vpop.permute.xlu0 %2151
  %2153 = vrot.lane.b32.xlu0 %v2122, 6
  %v2154 = vpop.permute.xlu0 %2153
  %2155 = vrot.lane.b32.xlu0 %v2124, 6
  %v2156 = vpop.permute.xlu0 %2155
  %2157 = vrot.lane.b32.xlu0 %v2126, 6
  %v2158 = vpop.permute.xlu0 %2157
  %2159 = vrot.lane.b32.xlu0 %v2128, 6
  %v2160 = vpop.permute.xlu0 %2159
  %2161 = vrot.lane.b32.xlu0 %v2130, 6
  %v2162 = vpop.permute.xlu0 %2161
  %2163 = vrot.lane.b32.xlu0 %v2132, 6
  %v2164 = vpop.permute.xlu0 %2163
  %2165 = vrot.lane.b32.xlu0 %v2134, 6
  %v2166 = vpop.permute.xlu0 %2165
  %2167 = vrot.lane.b32.xlu0 %v2136, 6
  %v2168 = vpop.permute.xlu0 %2167
  %2169 = vrot.lane.b32.xlu0 %v2138, 6
  %v2170 = vpop.permute.xlu0 %2169
  %2171 = vrot.lane.b32.xlu0 %v2140, 6
  %v2172 = vpop.permute.xlu0 %2171
  %v2189 = vrot.slane %v2105, 2
  %v2190 = vrot.slane %v2060, 2
  %v2191 = vsel %vm714, %v2189, %v2190
  %v2192 = vrot.slane %v2062, 2
  %v2193 = vsel %vm714, %v2190, %v2192
  %v2194 = vrot.slane %v2064, 2
  %v2195 = vsel %vm714, %v2192, %v2194
  %v2196 = vrot.slane %v2066, 2
  %v2197 = vsel %vm714, %v2194, %v2196
  %v2198 = vrot.slane %v2068, 2
  %v2199 = vsel %vm714, %v2196, %v2198
  %v2200 = vrot.slane %v2070, 2
  %v2201 = vsel %vm714, %v2198, %v2200
  %v2202 = vrot.slane %v2072, 2
  %v2203 = vsel %vm714, %v2200, %v2202
  %v2204 = vrot.slane %v2074, 2
  %v2205 = vsel %vm714, %v2202, %v2204
  %v2206 = vrot.slane %v2076, 2
  %v2207 = vsel %vm714, %v2204, %v2206
  %v2208 = vrot.slane %v2078, 2
  %v2209 = vsel %vm714, %v2206, %v2208
  %v2210 = vrot.slane %v2080, 2
  %v2211 = vsel %vm714, %v2208, %v2210
  %v2212 = vrot.slane %v2082, 2
  %v2213 = vsel %vm714, %v2210, %v2212
  %v2214 = vrot.slane %v2084, 2
  %v2215 = vsel %vm714, %v2212, %v2214
  %v2216 = vrot.slane %v2086, 2
  %v2217 = vsel %vm714, %v2214, %v2216
  %v2218 = vrot.slane %v2088, 2
  %v2219 = vsel %vm714, %v2216, %v2218
  %v2220 = vrot.slane 0.0, 2
  %v2221 = vsel %vm714, %v2218, %v2220
  %2222 = vrot.lane.b32.xlu0 %v2191, 12
  %v2223 = vpop.permute.xlu0 %2222
  %2224 = vrot.lane.b32.xlu0 %v2193, 12
  %v2225 = vpop.permute.xlu0 %2224
  %2226 = vrot.lane.b32.xlu0 %v2195, 12
  %v2227 = vpop.permute.xlu0 %2226
  %2228 = vrot.lane.b32.xlu0 %v2197, 12
  %v2229 = vpop.permute.xlu0 %2228
  %2230 = vrot.lane.b32.xlu0 %v2199, 12
  %v2231 = vpop.permute.xlu0 %2230
  %2232 = vrot.lane.b32.xlu0 %v2201, 12
  %v2233 = vpop.permute.xlu0 %2232
  %2234 = vrot.lane.b32.xlu0 %v2203, 12
  %v2235 = vpop.permute.xlu0 %2234
  %2236 = vrot.lane.b32.xlu0 %v2205, 12
  %v2237 = vpop.permute.xlu0 %2236
  %2238 = vrot.lane.b32.xlu0 %v2207, 12
  %v2239 = vpop.permute.xlu0 %2238
  %2240 = vrot.lane.b32.xlu0 %v2209, 12
  %v2241 = vpop.permute.xlu0 %2240
  %2242 = vrot.lane.b32.xlu0 %v2211, 12
  %v2243 = vpop.permute.xlu0 %2242
  %2244 = vrot.lane.b32.xlu0 %v2213, 12
  %v2245 = vpop.permute.xlu0 %2244
  %2246 = vrot.lane.b32.xlu0 %v2215, 12
  %v2247 = vpop.permute.xlu0 %2246
  %2248 = vrot.lane.b32.xlu0 %v2217, 12
  %v2249 = vpop.permute.xlu0 %2248
  %2250 = vrot.lane.b32.xlu0 %v2219, 12
  %v2251 = vpop.permute.xlu0 %2250
  %2252 = vrot.lane.b32.xlu0 %v2221, 12
  %v2253 = vpop.permute.xlu0 %2252
  %v2270 = vrot.slane %v2105, 3
  %v2271 = vrot.slane %v2060, 3
  %v2272 = vsel %vm794, %v2270, %v2271
  %v2273 = vrot.slane %v2062, 3
  %v2274 = vsel %vm794, %v2271, %v2273
  %v2275 = vrot.slane %v2064, 3
  %v2276 = vsel %vm794, %v2273, %v2275
  %v2277 = vrot.slane %v2066, 3
  %v2278 = vsel %vm794, %v2275, %v2277
  %v2279 = vrot.slane %v2068, 3
  %v2280 = vsel %vm794, %v2277, %v2279
  %v2281 = vrot.slane %v2070, 3
  %v2282 = vsel %vm794, %v2279, %v2281
  %v2283 = vrot.slane %v2072, 3
  %v2284 = vsel %vm794, %v2281, %v2283
  %v2285 = vrot.slane %v2074, 3
  %v2286 = vsel %vm794, %v2283, %v2285
  %v2287 = vrot.slane %v2076, 3
  %v2288 = vsel %vm794, %v2285, %v2287
  %v2289 = vrot.slane %v2078, 3
  %v2290 = vsel %vm794, %v2287, %v2289
  %v2291 = vrot.slane %v2080, 3
  %v2292 = vsel %vm794, %v2289, %v2291
  %v2293 = vrot.slane %v2082, 3
  %v2294 = vsel %vm794, %v2291, %v2293
  %v2295 = vrot.slane %v2084, 3
  %v2296 = vsel %vm794, %v2293, %v2295
  %v2297 = vrot.slane %v2086, 3
  %v2298 = vsel %vm794, %v2295, %v2297
  %v2299 = vrot.slane %v2088, 3
  %v2300 = vsel %vm794, %v2297, %v2299
  %v2301 = vrot.slane 0.0, 3
  %v2302 = vsel %vm794, %v2299, %v2301
  %2303 = vrot.lane.b32.xlu0 %v2272, 18
  %v2304 = vpop.permute.xlu0 %2303
  %2305 = vrot.lane.b32.xlu0 %v2274, 18
  %v2306 = vpop.permute.xlu0 %2305
  %2307 = vrot.lane.b32.xlu0 %v2276, 18
  %v2308 = vpop.permute.xlu0 %2307
  %2309 = vrot.lane.b32.xlu0 %v2278, 18
  %v2310 = vpop.permute.xlu0 %2309
  %2311 = vrot.lane.b32.xlu0 %v2280, 18
  %v2312 = vpop.permute.xlu0 %2311
  %2313 = vrot.lane.b32.xlu0 %v2282, 18
  %v2314 = vpop.permute.xlu0 %2313
  %2315 = vrot.lane.b32.xlu0 %v2284, 18
  %v2316 = vpop.permute.xlu0 %2315
  %2317 = vrot.lane.b32.xlu0 %v2286, 18
  %v2318 = vpop.permute.xlu0 %2317
  %2319 = vrot.lane.b32.xlu0 %v2288, 18
  %v2320 = vpop.permute.xlu0 %2319
  %2321 = vrot.lane.b32.xlu0 %v2290, 18
  %v2322 = vpop.permute.xlu0 %2321
  %2323 = vrot.lane.b32.xlu0 %v2292, 18
  %v2324 = vpop.permute.xlu0 %2323
  %2325 = vrot.lane.b32.xlu0 %v2294, 18
  %v2326 = vpop.permute.xlu0 %2325
  %2327 = vrot.lane.b32.xlu0 %v2296, 18
  %v2328 = vpop.permute.xlu0 %2327
  %2329 = vrot.lane.b32.xlu0 %v2298, 18
  %v2330 = vpop.permute.xlu0 %2329
  %2331 = vrot.lane.b32.xlu0 %v2300, 18
  %v2332 = vpop.permute.xlu0 %2331
  %2333 = vrot.lane.b32.xlu0 %v2302, 18
  %v2334 = vpop.permute.xlu0 %2333
  %v2351 = vrot.slane %v2105, 4
  %v2352 = vrot.slane %v2060, 4
  %v2353 = vsel %vm186, %v2351, %v2352
  %v2354 = vrot.slane %v2062, 4
  %v2355 = vsel %vm186, %v2352, %v2354
  %v2356 = vrot.slane %v2064, 4
  %v2357 = vsel %vm186, %v2354, %v2356
  %v2358 = vrot.slane %v2066, 4
  %v2359 = vsel %vm186, %v2356, %v2358
  %v2360 = vrot.slane %v2068, 4
  %v2361 = vsel %vm186, %v2358, %v2360
  %v2362 = vrot.slane %v2070, 4
  %v2363 = vsel %vm186, %v2360, %v2362
  %v2364 = vrot.slane %v2072, 4
  %v2365 = vsel %vm186, %v2362, %v2364
  %v2366 = vrot.slane %v2074, 4
  %v2367 = vsel %vm186, %v2364, %v2366
  %v2368 = vrot.slane %v2076, 4
  %v2369 = vsel %vm186, %v2366, %v2368
  %v2370 = vrot.slane %v2078, 4
  %v2371 = vsel %vm186, %v2368, %v2370
  %v2372 = vrot.slane %v2080, 4
  %v2373 = vsel %vm186, %v2370, %v2372
  %v2374 = vrot.slane %v2082, 4
  %v2375 = vsel %vm186, %v2372, %v2374
  %v2376 = vrot.slane %v2084, 4
  %v2377 = vsel %vm186, %v2374, %v2376
  %v2378 = vrot.slane %v2086, 4
  %v2379 = vsel %vm186, %v2376, %v2378
  %v2380 = vrot.slane %v2088, 4
  %v2381 = vsel %vm186, %v2378, %v2380
  %v2382 = vrot.slane 0.0, 4
  %v2383 = vsel %vm186, %v2380, %v2382
  %2384 = vrot.lane.b32.xlu0 %v2353, 24
  %v2385 = vpop.permute.xlu0 %2384
  %2386 = vrot.lane.b32.xlu0 %v2355, 24
  %v2387 = vpop.permute.xlu0 %2386
  %2388 = vrot.lane.b32.xlu0 %v2357, 24
  %v2389 = vpop.permute.xlu0 %2388
  %2390 = vrot.lane.b32.xlu0 %v2359, 24
  %v2391 = vpop.permute.xlu0 %2390
  %2392 = vrot.lane.b32.xlu0 %v2361, 24
  %v2393 = vpop.permute.xlu0 %2392
  %2394 = vrot.lane.b32.xlu0 %v2363, 24
  %v2395 = vpop.permute.xlu0 %2394
  %2396 = vrot.lane.b32.xlu0 %v2365, 24
  %v2397 = vpop.permute.xlu0 %2396
  %2398 = vrot.lane.b32.xlu0 %v2367, 24
  %v2399 = vpop.permute.xlu0 %2398
  %2400 = vrot.lane.b32.xlu0 %v2369, 24
  %v2401 = vpop.permute.xlu0 %2400
  %2402 = vrot.lane.b32.xlu0 %v2371, 24
  %v2403 = vpop.permute.xlu0 %2402
  %2404 = vrot.lane.b32.xlu0 %v2373, 24
  %v2405 = vpop.permute.xlu0 %2404
  %2406 = vrot.lane.b32.xlu0 %v2375, 24
  %v2407 = vpop.permute.xlu0 %2406
  %2408 = vrot.lane.b32.xlu0 %v2377, 24
  %v2409 = vpop.permute.xlu0 %2408
  %2410 = vrot.lane.b32.xlu0 %v2379, 24
  %v2411 = vpop.permute.xlu0 %2410
  %2412 = vrot.lane.b32.xlu0 %v2381, 24
  %v2413 = vpop.permute.xlu0 %2412
  %2414 = vrot.lane.b32.xlu0 %v2383, 24
  %v2415 = vpop.permute.xlu0 %2414
  %v2432 = vsel %vm953, %v2105, %v2142
  %v2433 = vsel %vm953, %v2060, %v2144
  %v2434 = vsel %vm953, %v2062, %v2146
  %v2435 = vsel %vm953, %v2064, %v2148
  %v2436 = vsel %vm953, %v2066, %v2150
  %v2437 = vsel %vm953, %v2068, %v2152
  %v2438 = vsel %vm953, %v2070, %v2154
  %v2439 = vsel %vm953, %v2072, %v2156
  %v2440 = vsel %vm953, %v2074, %v2158
  %v2441 = vsel %vm953, %v2076, %v2160
  %v2442 = vsel %vm953, %v2078, %v2162
  %v2443 = vsel %vm953, %v2080, %v2164
  %v2444 = vsel %vm953, %v2082, %v2166
  %v2445 = vsel %vm953, %v2084, %v2168
  %v2446 = vsel %vm953, %v2086, %v2170
  %v2447 = vsel %vm953, %v2088, %v2172
  %v2448 = vsel %vm95, %v2432, %v2223
  %v2449 = vsel %vm95, %v2433, %v2225
  %v2450 = vsel %vm95, %v2434, %v2227
  %v2451 = vsel %vm95, %v2435, %v2229
  %v2452 = vsel %vm95, %v2436, %v2231
  %v2453 = vsel %vm95, %v2437, %v2233
  %v2454 = vsel %vm95, %v2438, %v2235
  %v2455 = vsel %vm95, %v2439, %v2237
  %v2456 = vsel %vm95, %v2440, %v2239
  %v2457 = vsel %vm95, %v2441, %v2241
  %v2458 = vsel %vm95, %v2442, %v2243
  %v2459 = vsel %vm95, %v2443, %v2245
  %v2460 = vsel %vm95, %v2444, %v2247
  %v2461 = vsel %vm95, %v2445, %v2249
  %v2462 = vsel %vm95, %v2446, %v2251
  %v2463 = vsel %vm95, %v2447, %v2253
  %v2464 = vsel %vm986, %v2448, %v2304
  %v2465 = vsel %vm986, %v2449, %v2306
  %v2466 = vsel %vm986, %v2450, %v2308
  %v2467 = vsel %vm986, %v2451, %v2310
  %v2468 = vsel %vm986, %v2452, %v2312
  %v2469 = vsel %vm986, %v2453, %v2314
  %v2470 = vsel %vm986, %v2454, %v2316
  %v2471 = vsel %vm986, %v2455, %v2318
  %v2472 = vsel %vm986, %v2456, %v2320
  %v2473 = vsel %vm986, %v2457, %v2322
  %v2474 = vsel %vm986, %v2458, %v2324
  %v2475 = vsel %vm986, %v2459, %v2326
  %v2476 = vsel %vm986, %v2460, %v2328
  %v2477 = vsel %vm986, %v2461, %v2330
  %v2478 = vsel %vm986, %v2462, %v2332
  %v2479 = vsel %vm986, %v2463, %v2334
  %v2480 = vsel %vm1003, %v2464, %v2385
  %v2481 = vsel %vm1003, %v2465, %v2387
  %v2482 = vsel %vm1003, %v2466, %v2389
  %v2483 = vsel %vm1003, %v2467, %v2391
  %v2484 = vsel %vm1003, %v2468, %v2393
  %v2485 = vsel %vm1003, %v2469, %v2395
  %v2486 = vsel %vm1003, %v2470, %v2397
  %v2487 = vsel %vm1003, %v2471, %v2399
  %v2488 = vsel %vm1003, %v2472, %v2401
  %v2489 = vsel %vm1003, %v2473, %v2403
  %v2490 = vsel %vm1003, %v2474, %v2405
  %v2491 = vsel %vm1003, %v2475, %v2407
  %v2492 = vsel %vm1003, %v2476, %v2409
  %v2493 = vsel %vm1003, %v2477, %v2411
  %v2494 = vsel %vm1003, %v2478, %v2413
  %v2495 = vsel %vm1003, %v2479, %v2415
  %v2497 = vperm.slane %v2039, 0
  %v2500 = vsel %vm1023, %v2480, 0
  %v2503 = vsel %vm1023, %v2481, 0
  %v2506 = vsel %vm1023, %v2482, 0
  %v2509 = vsel %vm1023, %v2483, 0
  %v2512 = vsel %vm1023, %v2484, 0
  %v2515 = vsel %vm1023, %v2485, 0
  %v2518 = vsel %vm1023, %v2486, 0
  %v2521 = vsel %vm1023, %v2487, 0
  %v2524 = vsel %vm1023, %v2488, 0
  %v2527 = vsel %vm1023, %v2489, 0
  %v2530 = vsel %vm1023, %v2490, 0
  %v2533 = vsel %vm1023, %v2491, 0
  %v2536 = vsel %vm1023, %v2492, 0
  %v2539 = vsel %vm1023, %v2493, 0
  %v2542 = vsel %vm1023, %v2494, 0
  %v2545 = vsel %vm1023, %v2495, 0
  %v2548 = vsel %vm714, %v2038, 0
  %2550 = vmatpush.msra.mxu0 0.0
  %2551 = vmatpush.msra.mxu0 0.0
  %2552 = vmatpush.msra.mxu0 0.0
  %2553 = vmatpush.msra.mxu0 0.0
  %2554 = vmatpush.msra.mxu0 0.0
  %2555 = vmatpush.msra.mxu0 0.0
  %2556 = vmatpush.msra.mxu0 0.0
  %2557 = vmatpush.msra.mxu0 0.0
  %2558 = vmatpush.msra.mxu0 0.0
  %2559 = vmatpush.msra.mxu0 0.0
  %2560 = vmatpush.msra.mxu0 0.0
  %2561 = vmatpush.msra.mxu0 0.0
  %2562 = vmatpush.msra.mxu0 %v2548
  %2563 = vmatpush.msra.mxu0 %v2037
  %2564 = vmatpush.msra.mxu0 %v2036
  %2565 = vmatpush.msra.mxu0 %v2035
  %2566 = vmatmul.f32.gmra.mxu0 %v2500
  %v2567 = vpop.f32.mrf.mxu0
  %v2568 = vadd.f32 %v2497, %v2567
  %2569 = vmatmul.f32.gmra.mxu0 %v2503
  %v2570 = vpop.f32.mrf.mxu0
  %v2571 = vadd.f32 %v2497, %v2570
  %2572 = vmatmul.f32.gmra.mxu0 %v2506
  %v2573 = vpop.f32.mrf.mxu0
  %v2574 = vadd.f32 %v2497, %v2573
  %2575 = vmatmul.f32.gmra.mxu0 %v2509
  %v2576 = vpop.f32.mrf.mxu0
  %v2577 = vadd.f32 %v2497, %v2576
  %2578 = vmatmul.f32.gmra.mxu0 %v2512
  %v2579 = vpop.f32.mrf.mxu0
  %v2580 = vadd.f32 %v2497, %v2579
  %2581 = vmatmul.f32.gmra.mxu0 %v2515
  %v2582 = vpop.f32.mrf.mxu0
  %v2583 = vadd.f32 %v2497, %v2582
  %2584 = vmatmul.f32.gmra.mxu0 %v2518
  %v2585 = vpop.f32.mrf.mxu0
  %v2586 = vadd.f32 %v2497, %v2585
  %2587 = vmatmul.f32.gmra.mxu0 %v2521
  %v2588 = vpop.f32.mrf.mxu0
  %v2589 = vadd.f32 %v2497, %v2588
  %2590 = vmatmul.f32.gmra.mxu0 %v2524
  %v2591 = vpop.f32.mrf.mxu0
  %v2592 = vadd.f32 %v2497, %v2591
  %2593 = vmatmul.f32.gmra.mxu0 %v2527
  %v2594 = vpop.f32.mrf.mxu0
  %v2595 = vadd.f32 %v2497, %v2594
  %2596 = vmatmul.f32.gmra.mxu0 %v2530
  %v2597 = vpop.f32.mrf.mxu0
  %v2598 = vadd.f32 %v2497, %v2597
  %2599 = vmatmul.f32.gmra.mxu0 %v2533
  %v2600 = vpop.f32.mrf.mxu0
  %v2601 = vadd.f32 %v2497, %v2600
  %2602 = vmatmul.f32.gmra.mxu0 %v2536
  %v2603 = vpop.f32.mrf.mxu0
  %v2604 = vadd.f32 %v2497, %v2603
  %2605 = vmatmul.f32.gmra.mxu0 %v2539
  %v2606 = vpop.f32.mrf.mxu0
  %v2607 = vadd.f32 %v2497, %v2606
  %2608 = vmatmul.f32.gmra.mxu0 %v2542
  %v2609 = vpop.f32.mrf.mxu0
  %v2610 = vadd.f32 %v2497, %v2609
  %2611 = vmatmul.f32.gmra.mxu0 %v2545
  %v2612 = vpop.f32.mrf.mxu0
  %v2613 = vadd.f32 %v2497, %v2612
  %2614 = vdwg.mxu0
  %v2631 = vrot.slane %v2019, 4
  %v2632 = vrot.slane %v2020, 4
  %v2633 = vsel %vm186, %v2631, %v2632
  %v2634 = vrot.slane %v2021, 4
  %v2635 = vsel %vm186, %v2632, %v2634
  %v2636 = vrot.slane %v2022, 4
  %v2637 = vsel %vm186, %v2634, %v2636
  %v2638 = vrot.slane %v2023, 4
  %v2639 = vsel %vm186, %v2636, %v2638
  %v2640 = vrot.slane %v2024, 4
  %v2641 = vsel %vm186, %v2638, %v2640
  %v2642 = vrot.slane %v2025, 4
  %v2643 = vsel %vm186, %v2640, %v2642
  %v2644 = vrot.slane %v2026, 4
  %v2645 = vsel %vm186, %v2642, %v2644
  %v2646 = vrot.slane %v2027, 4
  %v2647 = vsel %vm186, %v2644, %v2646
  %v2648 = vrot.slane %v2028, 4
  %v2649 = vsel %vm186, %v2646, %v2648
  %v2650 = vrot.slane %v2029, 4
  %v2651 = vsel %vm186, %v2648, %v2650
  %v2652 = vrot.slane %v2030, 4
  %v2653 = vsel %vm186, %v2650, %v2652
  %v2654 = vrot.slane %v2031, 4
  %v2655 = vsel %vm186, %v2652, %v2654
  %v2656 = vrot.slane %v2032, 4
  %v2657 = vsel %vm186, %v2654, %v2656
  %v2658 = vrot.slane %v2033, 4
  %v2659 = vsel %vm186, %v2656, %v2658
  %v2660 = vrot.slane %v2034, 4
  %v2661 = vsel %vm186, %v2658, %v2660
  %v2678 = vsel %vm186, 0.0, %v2631
  %v2680 = vrot.slane %v2678, 1
  %v2681 = vrot.slane %v2633, 1
  %v2682 = vsel %vm634, %v2680, %v2681
  %v2683 = vrot.slane %v2635, 1
  %v2684 = vsel %vm634, %v2681, %v2683
  %v2685 = vrot.slane %v2637, 1
  %v2686 = vsel %vm634, %v2683, %v2685
  %v2687 = vrot.slane %v2639, 1
  %v2688 = vsel %vm634, %v2685, %v2687
  %v2689 = vrot.slane %v2641, 1
  %v2690 = vsel %vm634, %v2687, %v2689
  %v2691 = vrot.slane %v2643, 1
  %v2692 = vsel %vm634, %v2689, %v2691
  %v2693 = vrot.slane %v2645, 1
  %v2694 = vsel %vm634, %v2691, %v2693
  %v2695 = vrot.slane %v2647, 1
  %v2696 = vsel %vm634, %v2693, %v2695
  %v2697 = vrot.slane %v2649, 1
  %v2698 = vsel %vm634, %v2695, %v2697
  %v2699 = vrot.slane %v2651, 1
  %v2700 = vsel %vm634, %v2697, %v2699
  %v2701 = vrot.slane %v2653, 1
  %v2702 = vsel %vm634, %v2699, %v2701
  %v2703 = vrot.slane %v2655, 1
  %v2704 = vsel %vm634, %v2701, %v2703
  %v2705 = vrot.slane %v2657, 1
  %v2706 = vsel %vm634, %v2703, %v2705
  %v2707 = vrot.slane %v2659, 1
  %v2708 = vsel %vm634, %v2705, %v2707
  %v2709 = vrot.slane %v2661, 1
  %v2710 = vsel %vm634, %v2707, %v2709
  %v2711 = vsel %vm634, %v2709, %v2139
  %2712 = vrot.lane.b32.xlu0 %v2682, 6
  %v2713 = vpop.permute.xlu0 %2712
  %2714 = vrot.lane.b32.xlu0 %v2684, 6
  %v2715 = vpop.permute.xlu0 %2714
  %2716 = vrot.lane.b32.xlu0 %v2686, 6
  %v2717 = vpop.permute.xlu0 %2716
  %2718 = vrot.lane.b32.xlu0 %v2688, 6
  %v2719 = vpop.permute.xlu0 %2718
  %2720 = vrot.lane.b32.xlu0 %v2690, 6
  %v2721 = vpop.permute.xlu0 %2720
  %2722 = vrot.lane.b32.xlu0 %v2692, 6
  %v2723 = vpop.permute.xlu0 %2722
  %2724 = vrot.lane.b32.xlu0 %v2694, 6
  %v2725 = vpop.permute.xlu0 %2724
  %2726 = vrot.lane.b32.xlu0 %v2696, 6
  %v2727 = vpop.permute.xlu0 %2726
  %2728 = vrot.lane.b32.xlu0 %v2698, 6
  %v2729 = vpop.permute.xlu0 %2728
  %2730 = vrot.lane.b32.xlu0 %v2700, 6
  %v2731 = vpop.permute.xlu0 %2730
  %2732 = vrot.lane.b32.xlu0 %v2702, 6
  %v2733 = vpop.permute.xlu0 %2732
  %2734 = vrot.lane.b32.xlu0 %v2704, 6
  %v2735 = vpop.permute.xlu0 %2734
  %2736 = vrot.lane.b32.xlu0 %v2706, 6
  %v2737 = vpop.permute.xlu0 %2736
  %2738 = vrot.lane.b32.xlu0 %v2708, 6
  %v2739 = vpop.permute.xlu0 %2738
  %2740 = vrot.lane.b32.xlu0 %v2710, 6
  %v2741 = vpop.permute.xlu0 %2740
  %2742 = vrot.lane.b32.xlu0 %v2711, 6
  %v2743 = vpop.permute.xlu0 %2742
  %v2760 = vrot.slane %v2678, 2
  %v2761 = vrot.slane %v2633, 2
  %v2762 = vsel %vm714, %v2760, %v2761
  %v2763 = vrot.slane %v2635, 2
  %v2764 = vsel %vm714, %v2761, %v2763
  %v2765 = vrot.slane %v2637, 2
  %v2766 = vsel %vm714, %v2763, %v2765
  %v2767 = vrot.slane %v2639, 2
  %v2768 = vsel %vm714, %v2765, %v2767
  %v2769 = vrot.slane %v2641, 2
  %v2770 = vsel %vm714, %v2767, %v2769
  %v2771 = vrot.slane %v2643, 2
  %v2772 = vsel %vm714, %v2769, %v2771
  %v2773 = vrot.slane %v2645, 2
  %v2774 = vsel %vm714, %v2771, %v2773
  %v2775 = vrot.slane %v2647, 2
  %v2776 = vsel %vm714, %v2773, %v2775
  %v2777 = vrot.slane %v2649, 2
  %v2778 = vsel %vm714, %v2775, %v2777
  %v2779 = vrot.slane %v2651, 2
  %v2780 = vsel %vm714, %v2777, %v2779
  %v2781 = vrot.slane %v2653, 2
  %v2782 = vsel %vm714, %v2779, %v2781
  %v2783 = vrot.slane %v2655, 2
  %v2784 = vsel %vm714, %v2781, %v2783
  %v2785 = vrot.slane %v2657, 2
  %v2786 = vsel %vm714, %v2783, %v2785
  %v2787 = vrot.slane %v2659, 2
  %v2788 = vsel %vm714, %v2785, %v2787
  %v2789 = vrot.slane %v2661, 2
  %v2790 = vsel %vm714, %v2787, %v2789
  %v2791 = vsel %vm714, %v2789, %v2220
  %2792 = vrot.lane.b32.xlu0 %v2762, 12
  %v2793 = vpop.permute.xlu0 %2792
  %2794 = vrot.lane.b32.xlu0 %v2764, 12
  %v2795 = vpop.permute.xlu0 %2794
  %2796 = vrot.lane.b32.xlu0 %v2766, 12
  %v2797 = vpop.permute.xlu0 %2796
  %2798 = vrot.lane.b32.xlu0 %v2768, 12
  %v2799 = vpop.permute.xlu0 %2798
  %2800 = vrot.lane.b32.xlu0 %v2770, 12
  %v2801 = vpop.permute.xlu0 %2800
  %2802 = vrot.lane.b32.xlu0 %v2772, 12
  %v2803 = vpop.permute.xlu0 %2802
  %2804 = vrot.lane.b32.xlu0 %v2774, 12
  %v2805 = vpop.permute.xlu0 %2804
  %2806 = vrot.lane.b32.xlu0 %v2776, 12
  %v2807 = vpop.permute.xlu0 %2806
  %2808 = vrot.lane.b32.xlu0 %v2778, 12
  %v2809 = vpop.permute.xlu0 %2808
  %2810 = vrot.lane.b32.xlu0 %v2780, 12
  %v2811 = vpop.permute.xlu0 %2810
  %2812 = vrot.lane.b32.xlu0 %v2782, 12
  %v2813 = vpop.permute.xlu0 %2812
  %2814 = vrot.lane.b32.xlu0 %v2784, 12
  %v2815 = vpop.permute.xlu0 %2814
  %2816 = vrot.lane.b32.xlu0 %v2786, 12
  %v2817 = vpop.permute.xlu0 %2816
  %2818 = vrot.lane.b32.xlu0 %v2788, 12
  %v2819 = vpop.permute.xlu0 %2818
  %2820 = vrot.lane.b32.xlu0 %v2790, 12
  %v2821 = vpop.permute.xlu0 %2820
  %2822 = vrot.lane.b32.xlu0 %v2791, 12
  %v2823 = vpop.permute.xlu0 %2822
  %v2840 = vrot.slane %v2678, 3
  %v2841 = vrot.slane %v2633, 3
  %v2842 = vsel %vm794, %v2840, %v2841
  %v2843 = vrot.slane %v2635, 3
  %v2844 = vsel %vm794, %v2841, %v2843
  %v2845 = vrot.slane %v2637, 3
  %v2846 = vsel %vm794, %v2843, %v2845
  %v2847 = vrot.slane %v2639, 3
  %v2848 = vsel %vm794, %v2845, %v2847
  %v2849 = vrot.slane %v2641, 3
  %v2850 = vsel %vm794, %v2847, %v2849
  %v2851 = vrot.slane %v2643, 3
  %v2852 = vsel %vm794, %v2849, %v2851
  %v2853 = vrot.slane %v2645, 3
  %v2854 = vsel %vm794, %v2851, %v2853
  %v2855 = vrot.slane %v2647, 3
  %v2856 = vsel %vm794, %v2853, %v2855
  %v2857 = vrot.slane %v2649, 3
  %v2858 = vsel %vm794, %v2855, %v2857
  %v2859 = vrot.slane %v2651, 3
  %v2860 = vsel %vm794, %v2857, %v2859
  %v2861 = vrot.slane %v2653, 3
  %v2862 = vsel %vm794, %v2859, %v2861
  %v2863 = vrot.slane %v2655, 3
  %v2864 = vsel %vm794, %v2861, %v2863
  %v2865 = vrot.slane %v2657, 3
  %v2866 = vsel %vm794, %v2863, %v2865
  %v2867 = vrot.slane %v2659, 3
  %v2868 = vsel %vm794, %v2865, %v2867
  %v2869 = vrot.slane %v2661, 3
  %v2870 = vsel %vm794, %v2867, %v2869
  %v2871 = vsel %vm794, %v2869, %v2301
  %2872 = vrot.lane.b32.xlu0 %v2842, 18
  %v2873 = vpop.permute.xlu0 %2872
  %2874 = vrot.lane.b32.xlu0 %v2844, 18
  %v2875 = vpop.permute.xlu0 %2874
  %2876 = vrot.lane.b32.xlu0 %v2846, 18
  %v2877 = vpop.permute.xlu0 %2876
  %2878 = vrot.lane.b32.xlu0 %v2848, 18
  %v2879 = vpop.permute.xlu0 %2878
  %2880 = vrot.lane.b32.xlu0 %v2850, 18
  %v2881 = vpop.permute.xlu0 %2880
  %2882 = vrot.lane.b32.xlu0 %v2852, 18
  %v2883 = vpop.permute.xlu0 %2882
  %2884 = vrot.lane.b32.xlu0 %v2854, 18
  %v2885 = vpop.permute.xlu0 %2884
  %2886 = vrot.lane.b32.xlu0 %v2856, 18
  %v2887 = vpop.permute.xlu0 %2886
  %2888 = vrot.lane.b32.xlu0 %v2858, 18
  %v2889 = vpop.permute.xlu0 %2888
  %2890 = vrot.lane.b32.xlu0 %v2860, 18
  %v2891 = vpop.permute.xlu0 %2890
  %2892 = vrot.lane.b32.xlu0 %v2862, 18
  %v2893 = vpop.permute.xlu0 %2892
  %2894 = vrot.lane.b32.xlu0 %v2864, 18
  %v2895 = vpop.permute.xlu0 %2894
  %2896 = vrot.lane.b32.xlu0 %v2866, 18
  %v2897 = vpop.permute.xlu0 %2896
  %2898 = vrot.lane.b32.xlu0 %v2868, 18
  %v2899 = vpop.permute.xlu0 %2898
  %2900 = vrot.lane.b32.xlu0 %v2870, 18
  %v2901 = vpop.permute.xlu0 %2900
  %2902 = vrot.lane.b32.xlu0 %v2871, 18
  %v2903 = vpop.permute.xlu0 %2902
  %v2920 = vrot.slane %v2678, 4
  %v2921 = vrot.slane %v2633, 4
  %v2922 = vsel %vm186, %v2920, %v2921
  %v2923 = vrot.slane %v2635, 4
  %v2924 = vsel %vm186, %v2921, %v2923
  %v2925 = vrot.slane %v2637, 4
  %v2926 = vsel %vm186, %v2923, %v2925
  %v2927 = vrot.slane %v2639, 4
  %v2928 = vsel %vm186, %v2925, %v2927
  %v2929 = vrot.slane %v2641, 4
  %v2930 = vsel %vm186, %v2927, %v2929
  %v2931 = vrot.slane %v2643, 4
  %v2932 = vsel %vm186, %v2929, %v2931
  %v2933 = vrot.slane %v2645, 4
  %v2934 = vsel %vm186, %v2931, %v2933
  %v2935 = vrot.slane %v2647, 4
  %v2936 = vsel %vm186, %v2933, %v2935
  %v2937 = vrot.slane %v2649, 4
  %v2938 = vsel %vm186, %v2935, %v2937
  %v2939 = vrot.slane %v2651, 4
  %v2940 = vsel %vm186, %v2937, %v2939
  %v2941 = vrot.slane %v2653, 4
  %v2942 = vsel %vm186, %v2939, %v2941
  %v2943 = vrot.slane %v2655, 4
  %v2944 = vsel %vm186, %v2941, %v2943
  %v2945 = vrot.slane %v2657, 4
  %v2946 = vsel %vm186, %v2943, %v2945
  %v2947 = vrot.slane %v2659, 4
  %v2948 = vsel %vm186, %v2945, %v2947
  %v2949 = vrot.slane %v2661, 4
  %v2950 = vsel %vm186, %v2947, %v2949
  %v2951 = vsel %vm186, %v2949, %v2382
  %2952 = vrot.lane.b32.xlu0 %v2922, 24
  %v2953 = vpop.permute.xlu0 %2952
  %2954 = vrot.lane.b32.xlu0 %v2924, 24
  %v2955 = vpop.permute.xlu0 %2954
  %2956 = vrot.lane.b32.xlu0 %v2926, 24
  %v2957 = vpop.permute.xlu0 %2956
  %2958 = vrot.lane.b32.xlu0 %v2928, 24
  %v2959 = vpop.permute.xlu0 %2958
  %2960 = vrot.lane.b32.xlu0 %v2930, 24
  %v2961 = vpop.permute.xlu0 %2960
  %2962 = vrot.lane.b32.xlu0 %v2932, 24
  %v2963 = vpop.permute.xlu0 %2962
  %2964 = vrot.lane.b32.xlu0 %v2934, 24
  %v2965 = vpop.permute.xlu0 %2964
  %2966 = vrot.lane.b32.xlu0 %v2936, 24
  %v2967 = vpop.permute.xlu0 %2966
  %2968 = vrot.lane.b32.xlu0 %v2938, 24
  %v2969 = vpop.permute.xlu0 %2968
  %2970 = vrot.lane.b32.xlu0 %v2940, 24
  %v2971 = vpop.permute.xlu0 %2970
  %2972 = vrot.lane.b32.xlu0 %v2942, 24
  %v2973 = vpop.permute.xlu0 %2972
  %2974 = vrot.lane.b32.xlu0 %v2944, 24
  %v2975 = vpop.permute.xlu0 %2974
  %2976 = vrot.lane.b32.xlu0 %v2946, 24
  %v2977 = vpop.permute.xlu0 %2976
  %2978 = vrot.lane.b32.xlu0 %v2948, 24
  %v2979 = vpop.permute.xlu0 %2978
  %2980 = vrot.lane.b32.xlu0 %v2950, 24
  %v2981 = vpop.permute.xlu0 %2980
  %2982 = vrot.lane.b32.xlu0 %v2951, 24
  %v2983 = vpop.permute.xlu0 %2982
  %v3000 = vsel %vm953, %v2678, %v2713
  %v3001 = vsel %vm953, %v2633, %v2715
  %v3002 = vsel %vm953, %v2635, %v2717
  %v3003 = vsel %vm953, %v2637, %v2719
  %v3004 = vsel %vm953, %v2639, %v2721
  %v3005 = vsel %vm953, %v2641, %v2723
  %v3006 = vsel %vm953, %v2643, %v2725
  %v3007 = vsel %vm953, %v2645, %v2727
  %v3008 = vsel %vm953, %v2647, %v2729
  %v3009 = vsel %vm953, %v2649, %v2731
  %v3010 = vsel %vm953, %v2651, %v2733
  %v3011 = vsel %vm953, %v2653, %v2735
  %v3012 = vsel %vm953, %v2655, %v2737
  %v3013 = vsel %vm953, %v2657, %v2739
  %v3014 = vsel %vm953, %v2659, %v2741
  %v3015 = vsel %vm953, %v2661, %v2743
  %v3016 = vsel %vm95, %v3000, %v2793
  %v3017 = vsel %vm95, %v3001, %v2795
  %v3018 = vsel %vm95, %v3002, %v2797
  %v3019 = vsel %vm95, %v3003, %v2799
  %v3020 = vsel %vm95, %v3004, %v2801
  %v3021 = vsel %vm95, %v3005, %v2803
  %v3022 = vsel %vm95, %v3006, %v2805
  %v3023 = vsel %vm95, %v3007, %v2807
  %v3024 = vsel %vm95, %v3008, %v2809
  %v3025 = vsel %vm95, %v3009, %v2811
  %v3026 = vsel %vm95, %v3010, %v2813
  %v3027 = vsel %vm95, %v3011, %v2815
  %v3028 = vsel %vm95, %v3012, %v2817
  %v3029 = vsel %vm95, %v3013, %v2819
  %v3030 = vsel %vm95, %v3014, %v2821
  %v3031 = vsel %vm95, %v3015, %v2823
  %v3032 = vsel %vm986, %v3016, %v2873
  %v3033 = vsel %vm986, %v3017, %v2875
  %v3034 = vsel %vm986, %v3018, %v2877
  %v3035 = vsel %vm986, %v3019, %v2879
  %v3036 = vsel %vm986, %v3020, %v2881
  %v3037 = vsel %vm986, %v3021, %v2883
  %v3038 = vsel %vm986, %v3022, %v2885
  %v3039 = vsel %vm986, %v3023, %v2887
  %v3040 = vsel %vm986, %v3024, %v2889
  %v3041 = vsel %vm986, %v3025, %v2891
  %v3042 = vsel %vm986, %v3026, %v2893
  %v3043 = vsel %vm986, %v3027, %v2895
  %v3044 = vsel %vm986, %v3028, %v2897
  %v3045 = vsel %vm986, %v3029, %v2899
  %v3046 = vsel %vm986, %v3030, %v2901
  %v3047 = vsel %vm986, %v3031, %v2903
  %v3048 = vsel %vm1003, %v3032, %v2953
  %v3049 = vsel %vm1003, %v3033, %v2955
  %v3050 = vsel %vm1003, %v3034, %v2957
  %v3051 = vsel %vm1003, %v3035, %v2959
  %v3052 = vsel %vm1003, %v3036, %v2961
  %v3053 = vsel %vm1003, %v3037, %v2963
  %v3054 = vsel %vm1003, %v3038, %v2965
  %v3055 = vsel %vm1003, %v3039, %v2967
  %v3056 = vsel %vm1003, %v3040, %v2969
  %v3057 = vsel %vm1003, %v3041, %v2971
  %v3058 = vsel %vm1003, %v3042, %v2973
  %v3059 = vsel %vm1003, %v3043, %v2975
  %v3060 = vsel %vm1003, %v3044, %v2977
  %v3061 = vsel %vm1003, %v3045, %v2979
  %v3062 = vsel %vm1003, %v3046, %v2981
  %v3063 = vsel %vm1003, %v3047, %v2983
  %v3065 = vsel %vm1023, %v3048, 0
  %v3068 = vsel %vm1023, %v3049, 0
  %v3071 = vsel %vm1023, %v3050, 0
  %v3074 = vsel %vm1023, %v3051, 0
  %v3077 = vsel %vm1023, %v3052, 0
  %v3080 = vsel %vm1023, %v3053, 0
  %v3083 = vsel %vm1023, %v3054, 0
  %v3086 = vsel %vm1023, %v3055, 0
  %v3089 = vsel %vm1023, %v3056, 0
  %v3092 = vsel %vm1023, %v3057, 0
  %v3095 = vsel %vm1023, %v3058, 0
  %v3098 = vsel %vm1023, %v3059, 0
  %v3101 = vsel %vm1023, %v3060, 0
  %v3104 = vsel %vm1023, %v3061, 0
  %v3107 = vsel %vm1023, %v3062, 0
  %v3110 = vsel %vm1023, %v3063, 0
  %3112 = vmatpush.msra.mxu0 0.0
  %3113 = vmatpush.msra.mxu0 0.0
  %3114 = vmatpush.msra.mxu0 0.0
  %3115 = vmatpush.msra.mxu0 0.0
  %3116 = vmatpush.msra.mxu0 0.0
  %3117 = vmatpush.msra.mxu0 0.0
  %3118 = vmatpush.msra.mxu0 0.0
  %3119 = vmatpush.msra.mxu0 0.0
  %3120 = vmatpush.msra.mxu0 0.0
  %3121 = vmatpush.msra.mxu0 0.0
  %3122 = vmatpush.msra.mxu0 0.0
  %3123 = vmatpush.msra.mxu0 0.0
  %3124 = vmatpush.msra.mxu0 %v2548
  %3125 = vmatpush.msra.mxu0 %v2037
  %3126 = vmatpush.msra.mxu0 %v2036
  %3127 = vmatpush.msra.mxu0 %v2035
  %3128 = vmatmul.f32.gmra.mxu0 %v3065
  %v3129 = vpop.f32.mrf.mxu0
  %v3130 = vadd.f32 %v2497, %v3129
  %3131 = vmatmul.f32.gmra.mxu0 %v3068
  %v3132 = vpop.f32.mrf.mxu0
  %v3133 = vadd.f32 %v2497, %v3132
  %3134 = vmatmul.f32.gmra.mxu0 %v3071
  %v3135 = vpop.f32.mrf.mxu0
  %v3136 = vadd.f32 %v2497, %v3135
  %3137 = vmatmul.f32.gmra.mxu0 %v3074
  %v3138 = vpop.f32.mrf.mxu0
  %v3139 = vadd.f32 %v2497, %v3138
  %3140 = vmatmul.f32.gmra.mxu0 %v3077
  %v3141 = vpop.f32.mrf.mxu0
  %v3142 = vadd.f32 %v2497, %v3141
  %3143 = vmatmul.f32.gmra.mxu0 %v3080
  %v3144 = vpop.f32.mrf.mxu0
  %v3145 = vadd.f32 %v2497, %v3144
  %3146 = vmatmul.f32.gmra.mxu0 %v3083
  %v3147 = vpop.f32.mrf.mxu0
  %v3148 = vadd.f32 %v2497, %v3147
  %3149 = vmatmul.f32.gmra.mxu0 %v3086
  %v3150 = vpop.f32.mrf.mxu0
  %v3151 = vadd.f32 %v2497, %v3150
  %3152 = vmatmul.f32.gmra.mxu0 %v3089
  %v3153 = vpop.f32.mrf.mxu0
  %v3154 = vadd.f32 %v2497, %v3153
  %3155 = vmatmul.f32.gmra.mxu0 %v3092
  %v3156 = vpop.f32.mrf.mxu0
  %v3157 = vadd.f32 %v2497, %v3156
  %3158 = vmatmul.f32.gmra.mxu0 %v3095
  %v3159 = vpop.f32.mrf.mxu0
  %v3160 = vadd.f32 %v2497, %v3159
  %3161 = vmatmul.f32.gmra.mxu0 %v3098
  %v3162 = vpop.f32.mrf.mxu0
  %v3163 = vadd.f32 %v2497, %v3162
  %3164 = vmatmul.f32.gmra.mxu0 %v3101
  %v3165 = vpop.f32.mrf.mxu0
  %v3166 = vadd.f32 %v2497, %v3165
  %3167 = vmatmul.f32.gmra.mxu0 %v3104
  %v3168 = vpop.f32.mrf.mxu0
  %v3169 = vadd.f32 %v2497, %v3168
  %3170 = vmatmul.f32.gmra.mxu0 %v3107
  %v3171 = vpop.f32.mrf.mxu0
  %v3172 = vadd.f32 %v2497, %v3171
  %3173 = vmatmul.f32.gmra.mxu0 %v3110
  %v3174 = vpop.f32.mrf.mxu0
  %v3175 = vadd.f32 %v2497, %v3174
  %3176 = vdwg.mxu0
  %v3177 = vsel %vm953, %v2568, 0.0
  %v3178 = vsel %vm953, %v2571, 0.0
  %v3179 = vadd.f32 %v3177, %v3178
  %v3180 = vsel %vm953, %v2574, 0.0
  %v3181 = vadd.f32 %v3179, %v3180
  %v3182 = vsel %vm953, %v2577, 0.0
  %v3183 = vadd.f32 %v3181, %v3182
  %v3184 = vsel %vm953, %v2580, 0.0
  %v3185 = vadd.f32 %v3183, %v3184
  %v3186 = vsel %vm953, %v2583, 0.0
  %v3187 = vadd.f32 %v3185, %v3186
  %v3188 = vsel %vm953, %v2586, 0.0
  %v3189 = vadd.f32 %v3187, %v3188
  %v3190 = vsel %vm953, %v2589, 0.0
  %v3191 = vadd.f32 %v3189, %v3190
  %v3192 = vsel %vm953, %v2592, 0.0
  %v3193 = vadd.f32 %v3191, %v3192
  %v3194 = vsel %vm953, %v2595, 0.0
  %v3195 = vadd.f32 %v3193, %v3194
  %v3196 = vsel %vm953, %v2598, 0.0
  %v3197 = vadd.f32 %v3195, %v3196
  %v3198 = vsel %vm953, %v2601, 0.0
  %v3199 = vadd.f32 %v3197, %v3198
  %v3200 = vsel %vm953, %v2604, 0.0
  %v3201 = vadd.f32 %v3199, %v3200
  %v3202 = vsel %vm953, %v2607, 0.0
  %v3203 = vadd.f32 %v3201, %v3202
  %v3204 = vsel %vm953, %v2610, 0.0
  %v3205 = vadd.f32 %v3203, %v3204
  %v3206 = vsel %vm953, %v2613, 0.0
  %v3207 = vadd.f32 %v3205, %v3206
  %v3208 = vrot.slane %v3207, 4
  %v3209 = vadd.f32 %v3207, %v3208
  %v3210 = vrot.slane %v3209, 2
  %v3211 = vadd.f32 %v3209, %v3210
  %v3212 = vrot.slane %v3211, 1
  %v3213 = vadd.f32 %v3211, %v3212
  %v3214 = vadd.f32 %v3213, 0.0
  %v3215 = vsel %vm953, %v3130, 0.0
  %v3216 = vsel %vm953, %v3133, 0.0
  %v3217 = vadd.f32 %v3215, %v3216
  %v3218 = vsel %vm953, %v3136, 0.0
  %v3219 = vadd.f32 %v3217, %v3218
  %v3220 = vsel %vm953, %v3139, 0.0
  %v3221 = vadd.f32 %v3219, %v3220
  %v3222 = vsel %vm953, %v3142, 0.0
  %v3223 = vadd.f32 %v3221, %v3222
  %v3224 = vsel %vm953, %v3145, 0.0
  %v3225 = vadd.f32 %v3223, %v3224
  %v3226 = vsel %vm953, %v3148, 0.0
  %v3227 = vadd.f32 %v3225, %v3226
  %v3228 = vsel %vm953, %v3151, 0.0
  %v3229 = vadd.f32 %v3227, %v3228
  %v3230 = vsel %vm953, %v3154, 0.0
  %v3231 = vadd.f32 %v3229, %v3230
  %v3232 = vsel %vm953, %v3157, 0.0
  %v3233 = vadd.f32 %v3231, %v3232
  %v3234 = vsel %vm953, %v3160, 0.0
  %v3235 = vadd.f32 %v3233, %v3234
  %v3236 = vsel %vm953, %v3163, 0.0
  %v3237 = vadd.f32 %v3235, %v3236
  %v3238 = vsel %vm953, %v3166, 0.0
  %v3239 = vadd.f32 %v3237, %v3238
  %v3240 = vsel %vm953, %v3169, 0.0
  %v3241 = vadd.f32 %v3239, %v3240
  %v3242 = vsel %vm953, %v3172, 0.0
  %v3243 = vadd.f32 %v3241, %v3242
  %v3244 = vsel %vm953, %v3175, 0.0
  %v3245 = vadd.f32 %v3243, %v3244
  %v3246 = vrot.slane %v3245, 4
  %v3247 = vadd.f32 %v3245, %v3246
  %v3248 = vrot.slane %v3247, 2
  %v3249 = vadd.f32 %v3247, %v3248
  %v3250 = vrot.slane %v3249, 1
  %v3251 = vadd.f32 %v3249, %v3250
  %v3252 = vadd.f32 %v3214, %v3251
  %v3253 = vrcp.pop 256.0
  %v3254 = vmul.f32 256.0, %v3253
  %v3255 = vsub.f32 1.0, %v3254
  %v3256 = vmul.f32 %v3253, %v3255
  %v3257 = vadd.f32 %v3253, %v3256
  %vm3258 = vweird.f32 %v3253
  %v3259 = vsel %vm3258, %v3253, %v3257
  %v3260 = vmul.f32 %v3252, %v3259
  %v3261 = vsub.f32 %v2568, %v3260
  %v3262 = vsub.f32 %v2571, %v3260
  %v3263 = vsub.f32 %v2574, %v3260
  %v3264 = vsub.f32 %v2577, %v3260
  %v3265 = vsub.f32 %v2580, %v3260
  %v3266 = vsub.f32 %v2583, %v3260
  %v3267 = vsub.f32 %v2586, %v3260
  %v3268 = vsub.f32 %v2589, %v3260
  %v3269 = vsub.f32 %v2592, %v3260
  %v3270 = vsub.f32 %v2595, %v3260
  %v3271 = vsub.f32 %v2598, %v3260
  %v3272 = vsub.f32 %v2601, %v3260
  %v3273 = vsub.f32 %v2604, %v3260
  %v3274 = vsub.f32 %v2607, %v3260
  %v3275 = vsub.f32 %v2610, %v3260
  %v3276 = vsub.f32 %v2613, %v3260
  %v3277 = vmul.f32 %v3261, %v3261
  %v3278 = vmul.f32 %v3262, %v3262
  %v3279 = vmul.f32 %v3263, %v3263
  %v3280 = vmul.f32 %v3264, %v3264
  %v3281 = vmul.f32 %v3265, %v3265
  %v3282 = vmul.f32 %v3266, %v3266
  %v3283 = vmul.f32 %v3267, %v3267
  %v3284 = vmul.f32 %v3268, %v3268
  %v3285 = vmul.f32 %v3269, %v3269
  %v3286 = vmul.f32 %v3270, %v3270
  %v3287 = vmul.f32 %v3271, %v3271
  %v3288 = vmul.f32 %v3272, %v3272
  %v3289 = vmul.f32 %v3273, %v3273
  %v3290 = vmul.f32 %v3274, %v3274
  %v3291 = vmul.f32 %v3275, %v3275
  %v3292 = vmul.f32 %v3276, %v3276
  %v3293 = vsel %vm953, %v3277, 0.0
  %v3294 = vsel %vm953, %v3278, 0.0
  %v3295 = vadd.f32 %v3293, %v3294
  %v3296 = vsel %vm953, %v3279, 0.0
  %v3297 = vadd.f32 %v3295, %v3296
  %v3298 = vsel %vm953, %v3280, 0.0
  %v3299 = vadd.f32 %v3297, %v3298
  %v3300 = vsel %vm953, %v3281, 0.0
  %v3301 = vadd.f32 %v3299, %v3300
  %v3302 = vsel %vm953, %v3282, 0.0
  %v3303 = vadd.f32 %v3301, %v3302
  %v3304 = vsel %vm953, %v3283, 0.0
  %v3305 = vadd.f32 %v3303, %v3304
  %v3306 = vsel %vm953, %v3284, 0.0
  %v3307 = vadd.f32 %v3305, %v3306
  %v3308 = vsel %vm953, %v3285, 0.0
  %v3309 = vadd.f32 %v3307, %v3308
  %v3310 = vsel %vm953, %v3286, 0.0
  %v3311 = vadd.f32 %v3309, %v3310
  %v3312 = vsel %vm953, %v3287, 0.0
  %v3313 = vadd.f32 %v3311, %v3312
  %v3314 = vsel %vm953, %v3288, 0.0
  %v3315 = vadd.f32 %v3313, %v3314
  %v3316 = vsel %vm953, %v3289, 0.0
  %v3317 = vadd.f32 %v3315, %v3316
  %v3318 = vsel %vm953, %v3290, 0.0
  %v3319 = vadd.f32 %v3317, %v3318
  %v3320 = vsel %vm953, %v3291, 0.0
  %v3321 = vadd.f32 %v3319, %v3320
  %v3322 = vsel %vm953, %v3292, 0.0
  %v3323 = vadd.f32 %v3321, %v3322
  %v3324 = vrot.slane %v3323, 4
  %v3325 = vadd.f32 %v3323, %v3324
  %v3326 = vrot.slane %v3325, 2
  %v3327 = vadd.f32 %v3325, %v3326
  %v3328 = vrot.slane %v3327, 1
  %v3329 = vadd.f32 %v3327, %v3328
  %v3330 = vadd.f32 %v3329, 0.0
  %v3331 = vsub.f32 %v3130, %v3260
  %v3332 = vsub.f32 %v3133, %v3260
  %v3333 = vsub.f32 %v3136, %v3260
  %v3334 = vsub.f32 %v3139, %v3260
  %v3335 = vsub.f32 %v3142, %v3260
  %v3336 = vsub.f32 %v3145, %v3260
  %v3337 = vsub.f32 %v3148, %v3260
  %v3338 = vsub.f32 %v3151, %v3260
  %v3339 = vsub.f32 %v3154, %v3260
  %v3340 = vsub.f32 %v3157, %v3260
  %v3341 = vsub.f32 %v3160, %v3260
  %v3342 = vsub.f32 %v3163, %v3260
  %v3343 = vsub.f32 %v3166, %v3260
  %v3344 = vsub.f32 %v3169, %v3260
  %v3345 = vsub.f32 %v3172, %v3260
  %v3346 = vsub.f32 %v3175, %v3260
  %v3347 = vmul.f32 %v3331, %v3331
  %v3348 = vmul.f32 %v3332, %v3332
  %v3349 = vmul.f32 %v3333, %v3333
  %v3350 = vmul.f32 %v3334, %v3334
  %v3351 = vmul.f32 %v3335, %v3335
  %v3352 = vmul.f32 %v3336, %v3336
  %v3353 = vmul.f32 %v3337, %v3337
  %v3354 = vmul.f32 %v3338, %v3338
  %v3355 = vmul.f32 %v3339, %v3339
  %v3356 = vmul.f32 %v3340, %v3340
  %v3357 = vmul.f32 %v3341, %v3341
  %v3358 = vmul.f32 %v3342, %v3342
  %v3359 = vmul.f32 %v3343, %v3343
  %v3360 = vmul.f32 %v3344, %v3344
  %v3361 = vmul.f32 %v3345, %v3345
  %v3362 = vmul.f32 %v3346, %v3346
  %v3363 = vsel %vm953, %v3347, 0.0
  %v3364 = vsel %vm953, %v3348, 0.0
  %v3365 = vadd.f32 %v3363, %v3364
  %v3366 = vsel %vm953, %v3349, 0.0
  %v3367 = vadd.f32 %v3365, %v3366
  %v3368 = vsel %vm953, %v3350, 0.0
  %v3369 = vadd.f32 %v3367, %v3368
  %v3370 = vsel %vm953, %v3351, 0.0
  %v3371 = vadd.f32 %v3369, %v3370
  %v3372 = vsel %vm953, %v3352, 0.0
  %v3373 = vadd.f32 %v3371, %v3372
  %v3374 = vsel %vm953, %v3353, 0.0
  %v3375 = vadd.f32 %v3373, %v3374
  %v3376 = vsel %vm953, %v3354, 0.0
  %v3377 = vadd.f32 %v3375, %v3376
  %v3378 = vsel %vm953, %v3355, 0.0
  %v3379 = vadd.f32 %v3377, %v3378
  %v3380 = vsel %vm953, %v3356, 0.0
  %v3381 = vadd.f32 %v3379, %v3380
  %v3382 = vsel %vm953, %v3357, 0.0
  %v3383 = vadd.f32 %v3381, %v3382
  %v3384 = vsel %vm953, %v3358, 0.0
  %v3385 = vadd.f32 %v3383, %v3384
  %v3386 = vsel %vm953, %v3359, 0.0
  %v3387 = vadd.f32 %v3385, %v3386
  %v3388 = vsel %vm953, %v3360, 0.0
  %v3389 = vadd.f32 %v3387, %v3388
  %v3390 = vsel %vm953, %v3361, 0.0
  %v3391 = vadd.f32 %v3389, %v3390
  %v3392 = vsel %vm953, %v3362, 0.0
  %v3393 = vadd.f32 %v3391, %v3392
  %v3394 = vrot.slane %v3393, 4
  %v3395 = vadd.f32 %v3393, %v3394
  %v3396 = vrot.slane %v3395, 2
  %v3397 = vadd.f32 %v3395, %v3396
  %v3398 = vrot.slane %v3397, 1
  %v3399 = vadd.f32 %v3397, %v3398
  %v3400 = vadd.f32 %v3330, %v3399
  %v3401 = vmul.f32 %v3400, %v3259
  %v3402 = vadd.f32 %v3401, 1e-05
  %v3403 = vrsqrt.pop %v3402
  %v3404 = vmul.f32 %v3403, %v3402
  %v3405 = vmul.f32 %v3404, %v3403
  %v3406 = vmul.f32 0.5, %v3405
  %v3407 = vsub.f32 1.5, %v3406
  %v3408 = vmul.f32 %v3403, %v3407
  %vm3409 = vweird.f32 %v3402
  %vm3410 = vweird.f32 %v3403
  %vm3411 = vmor %vm3409, %vm3410
  %v3412 = vsel %vm3411, %v3403, %v3408
  %v3413 = vmul.f32 %v3412, %v2040
  %v3414 = vperm.slane %v3413, 0
  %v3415 = vmul.f32 %v3261, %v3414
  %v3416 = vmul.f32 %v3262, %v3414
  %v3417 = vmul.f32 %v3263, %v3414
  %v3418 = vmul.f32 %v3264, %v3414
  %v3419 = vmul.f32 %v3265, %v3414
  %v3420 = vmul.f32 %v3266, %v3414
  %v3421 = vmul.f32 %v3267, %v3414
  %v3422 = vmul.f32 %v3268, %v3414
  %v3423 = vmul.f32 %v3269, %v3414
  %v3424 = vmul.f32 %v3270, %v3414
  %v3425 = vmul.f32 %v3271, %v3414
  %v3426 = vmul.f32 %v3272, %v3414
  %v3427 = vmul.f32 %v3273, %v3414
  %v3428 = vmul.f32 %v3274, %v3414
  %v3429 = vmul.f32 %v3275, %v3414
  %v3430 = vmul.f32 %v3276, %v3414
  %v3432 = vperm.slane %v2041, 0
  %v3434 = vadd.f32 %v3415, %v3432
  %v3435 = vadd.f32 %v3416, %v3432
  %v3436 = vadd.f32 %v3417, %v3432
  %v3437 = vadd.f32 %v3418, %v3432
  %v3438 = vadd.f32 %v3419, %v3432
  %v3439 = vadd.f32 %v3420, %v3432
  %v3440 = vadd.f32 %v3421, %v3432
  %v3441 = vadd.f32 %v3422, %v3432
  %v3442 = vadd.f32 %v3423, %v3432
  %v3443 = vadd.f32 %v3424, %v3432
  %v3444 = vadd.f32 %v3425, %v3432
  %v3445 = vadd.f32 %v3426, %v3432
  %v3446 = vadd.f32 %v3427, %v3432
  %v3447 = vadd.f32 %v3428, %v3432
  %v3448 = vadd.f32 %v3429, %v3432
  %v3449 = vadd.f32 %v3430, %v3432
  %v3450 = vmax.f32 %v3434, 0.0
  %v3451 = vmax.f32 %v3435, 0.0
  %v3452 = vmax.f32 %v3436, 0.0
  %v3453 = vmax.f32 %v3437, 0.0
  %v3454 = vmax.f32 %v3438, 0.0
  %v3455 = vmax.f32 %v3439, 0.0
  %v3456 = vmax.f32 %v3440, 0.0
  %v3457 = vmax.f32 %v3441, 0.0
  %v3458 = vmax.f32 %v3442, 0.0
  %v3459 = vmax.f32 %v3443, 0.0
  %v3460 = vmax.f32 %v3444, 0.0
  %v3461 = vmax.f32 %v3445, 0.0
  %v3462 = vmax.f32 %v3446, 0.0
  %v3463 = vmax.f32 %v3447, 0.0
  %v3464 = vmax.f32 %v3448, 0.0
  %v3465 = vmax.f32 %v3449, 0.0
  %v3466 = vmul.f32 %v3331, %v3414
  %v3467 = vmul.f32 %v3332, %v3414
  %v3468 = vmul.f32 %v3333, %v3414
  %v3469 = vmul.f32 %v3334, %v3414
  %v3470 = vmul.f32 %v3335, %v3414
  %v3471 = vmul.f32 %v3336, %v3414
  %v3472 = vmul.f32 %v3337, %v3414
  %v3473 = vmul.f32 %v3338, %v3414
  %v3474 = vmul.f32 %v3339, %v3414
  %v3475 = vmul.f32 %v3340, %v3414
  %v3476 = vmul.f32 %v3341, %v3414
  %v3477 = vmul.f32 %v3342, %v3414
  %v3478 = vmul.f32 %v3343, %v3414
  %v3479 = vmul.f32 %v3344, %v3414
  %v3480 = vmul.f32 %v3345, %v3414
  %v3481 = vmul.f32 %v3346, %v3414
  %v3482 = vadd.f32 %v3466, %v3432
  %v3483 = vadd.f32 %v3467, %v3432
  %v3484 = vadd.f32 %v3468, %v3432
  %v3485 = vadd.f32 %v3469, %v3432
  %v3486 = vadd.f32 %v3470, %v3432
  %v3487 = vadd.f32 %v3471, %v3432
  %v3488 = vadd.f32 %v3472, %v3432
  %v3489 = vadd.f32 %v3473, %v3432
  %v3490 = vadd.f32 %v3474, %v3432
  %v3491 = vadd.f32 %v3475, %v3432
  %v3492 = vadd.f32 %v3476, %v3432
  %v3493 = vadd.f32 %v3477, %v3432
  %v3494 = vadd.f32 %v3478, %v3432
  %v3495 = vadd.f32 %v3479, %v3432
  %v3496 = vadd.f32 %v3480, %v3432
  %v3497 = vadd.f32 %v3481, %v3432
  %v3498 = vmax.f32 %v3482, 0.0
  %v3499 = vmax.f32 %v3483, 0.0
  %v3500 = vmax.f32 %v3484, 0.0
  %v3501 = vmax.f32 %v3485, 0.0
  %v3502 = vmax.f32 %v3486, 0.0
  %v3503 = vmax.f32 %v3487, 0.0
  %v3504 = vmax.f32 %v3488, 0.0
  %v3505 = vmax.f32 %v3489, 0.0
  %v3506 = vmax.f32 %v3490, 0.0
  %v3507 = vmax.f32 %v3491, 0.0
  %v3508 = vmax.f32 %v3492, 0.0
  %v3509 = vmax.f32 %v3493, 0.0
  %v3510 = vmax.f32 %v3494, 0.0
  %v3511 = vmax.f32 %v3495, 0.0
  %v3512 = vmax.f32 %v3496, 0.0
  %v3513 = vmax.f32 %v3497, 0.0
  %s3514 = sld [smem:[#allocation2]]
  %s3515 = smul.f32 %s3514, -2.0
  %v3516 = vstv %s3515
  %v3517 = vmul.f32 %v3516, 1.442695
  %v3518 = vpow.pop %v3517
  %s3519 = vtos %v3518
  %s3520 = smul.f32 %s3519, 0.5
  %s3521 = sadd.f32 %s3514, 0.9189385
  %v3522 = vld [vmem:[%s14] sm:$0x3f]
  %v3523 = vld [vmem:[%s15] sm:$0x1]
  %v3525 = vperm.slane %v3523, 0
  %v3528 = vsel %vm953, %v3450, 0
  %v3531 = vsel %vm953, %v3451, 0
  %v3534 = vsel %vm953, %v3452, 0
  %v3537 = vsel %vm953, %v3453, 0
  %v3540 = vsel %vm953, %v3454, 0
  %v3543 = vsel %vm953, %v3455, 0
  %v3546 = vsel %vm953, %v3456, 0
  %v3549 = vsel %vm953, %v3457, 0
  %v3552 = vsel %vm953, %v3458, 0
  %v3555 = vsel %vm953, %v3459, 0
  %v3558 = vsel %vm953, %v3460, 0
  %v3561 = vsel %vm953, %v3461, 0
  %v3564 = vsel %vm953, %v3462, 0
  %v3567 = vsel %vm953, %v3463, 0
  %v3570 = vsel %vm953, %v3464, 0
  %v3573 = vsel %vm953, %v3465, 0
  %v3576 = vsel %vm714, %v3522, 0
  %3578 = vmatpush.msra.mxu0 0.0
  %3579 = vmatpush.msra.mxu0 0.0
  %3580 = vmatpush.msra.mxu0 0.0
  %3581 = vmatpush.msra.mxu0 0.0
  %3582 = vmatpush.msra.mxu0 0.0
  %3583 = vmatpush.msra.mxu0 0.0
  %3584 = vmatpush.msra.mxu0 0.0
  %3585 = vmatpush.msra.mxu0 0.0
  %3586 = vmatpush.msra.mxu0 0.0
  %3587 = vmatpush.msra.mxu0 0.0
  %3588 = vmatpush.msra.mxu0 0.0
  %3589 = vmatpush.msra.mxu0 0.0
  %3590 = vmatpush.msra.mxu0 0.0
  %3591 = vmatpush.msra.mxu0 0.0
  %3592 = vmatpush.msra.mxu0 0.0
  %3593 = vmatpush.msra.mxu0 %v3576
  %3594 = vmatmul.f32.gmra.mxu0 %v3528
  %v3595 = vpop.f32.mrf.mxu0
  %v3596 = vadd.f32 %v3525, %v3595
  %3597 = vmatmul.f32.gmra.mxu0 %v3531
  %v3598 = vpop.f32.mrf.mxu0
  %v3599 = vadd.f32 %v3525, %v3598
  %3600 = vmatmul.f32.gmra.mxu0 %v3534
  %v3601 = vpop.f32.mrf.mxu0
  %v3602 = vadd.f32 %v3525, %v3601
  %3603 = vmatmul.f32.gmra.mxu0 %v3537
  %v3604 = vpop.f32.mrf.mxu0
  %v3605 = vadd.f32 %v3525, %v3604
  %3606 = vmatmul.f32.gmra.mxu0 %v3540
  %v3607 = vpop.f32.mrf.mxu0
  %v3608 = vadd.f32 %v3525, %v3607
  %3609 = vmatmul.f32.gmra.mxu0 %v3543
  %v3610 = vpop.f32.mrf.mxu0
  %v3611 = vadd.f32 %v3525, %v3610
  %3612 = vmatmul.f32.gmra.mxu0 %v3546
  %v3613 = vpop.f32.mrf.mxu0
  %v3614 = vadd.f32 %v3525, %v3613
  %3615 = vmatmul.f32.gmra.mxu0 %v3549
  %v3616 = vpop.f32.mrf.mxu0
  %v3617 = vadd.f32 %v3525, %v3616
  %3618 = vmatmul.f32.gmra.mxu0 %v3552
  %v3619 = vpop.f32.mrf.mxu0
  %v3620 = vadd.f32 %v3525, %v3619
  %3621 = vmatmul.f32.gmra.mxu0 %v3555
  %v3622 = vpop.f32.mrf.mxu0
  %v3623 = vadd.f32 %v3525, %v3622
  %3624 = vmatmul.f32.gmra.mxu0 %v3558
  %v3625 = vpop.f32.mrf.mxu0
  %v3626 = vadd.f32 %v3525, %v3625
  %3627 = vmatmul.f32.gmra.mxu0 %v3561
  %v3628 = vpop.f32.mrf.mxu0
  %v3629 = vadd.f32 %v3525, %v3628
  %3630 = vmatmul.f32.gmra.mxu0 %v3564
  %v3631 = vpop.f32.mrf.mxu0
  %v3632 = vadd.f32 %v3525, %v3631
  %3633 = vmatmul.f32.gmra.mxu0 %v3567
  %v3634 = vpop.f32.mrf.mxu0
  %v3635 = vadd.f32 %v3525, %v3634
  %3636 = vmatmul.f32.gmra.mxu0 %v3570
  %v3637 = vpop.f32.mrf.mxu0
  %v3638 = vadd.f32 %v3525, %v3637
  %3639 = vmatmul.f32.gmra.mxu0 %v3573
  %v3640 = vpop.f32.mrf.mxu0
  %v3641 = vadd.f32 %v3525, %v3640
  %3642 = vdwg.mxu0
  %3643 = vst.msk [vmem:[%s17] sm:$0xff] %vm953, %v3596
  %3644 = vst.msk [vmem:[%s17 + $0x8] sm:$0xff] %vm953, %v3599
  %3645 = vst.msk [vmem:[%s17 + $0x10] sm:$0xff] %vm953, %v3602
  %3646 = vst.msk [vmem:[%s17 + $0x18] sm:$0xff] %vm953, %v3605
  %3647 = vst.msk [vmem:[%s17 + $0x20] sm:$0xff] %vm953, %v3608
  %3648 = vst.msk [vmem:[%s17 + $0x28] sm:$0xff] %vm953, %v3611
  %3649 = vst.msk [vmem:[%s17 + $0x30] sm:$0xff] %vm953, %v3614
  %3650 = vst.msk [vmem:[%s17 + $0x38] sm:$0xff] %vm953, %v3617
  %3651 = vst.msk [vmem:[%s17 + $0x40] sm:$0xff] %vm953, %v3620
  %3652 = vst.msk [vmem:[%s17 + $0x48] sm:$0xff] %vm953, %v3623
  %3653 = vst.msk [vmem:[%s17 + $0x50] sm:$0xff] %vm953, %v3626
  %3654 = vst.msk [vmem:[%s17 + $0x58] sm:$0xff] %vm953, %v3629
  %3655 = vst.msk [vmem:[%s17 + $0x60] sm:$0xff] %vm953, %v3632
  %3656 = vst.msk [vmem:[%s17 + $0x68] sm:$0xff] %vm953, %v3635
  %3657 = vst.msk [vmem:[%s17 + $0x70] sm:$0xff] %vm953, %v3638
  %3658 = vst.msk [vmem:[%s17 + $0x78] sm:$0xff] %vm953, %v3641
  %v3659 = vld [vmem:[%s1] sm:$0xff]
  %v3660 = vld [vmem:[%s1 + $0x8] sm:$0xff]
  %v3661 = vld [vmem:[%s1 + $0x10] sm:$0xff]
  %v3662 = vld [vmem:[%s1 + $0x18] sm:$0xff]
  %v3663 = vld [vmem:[%s1 + $0x20] sm:$0xff]
  %v3664 = vld [vmem:[%s1 + $0x28] sm:$0xff]
  %v3665 = vld [vmem:[%s1 + $0x30] sm:$0xff]
  %v3666 = vld [vmem:[%s1 + $0x38] sm:$0xff]
  %v3667 = vld [vmem:[%s1 + $0x40] sm:$0xff]
  %v3668 = vld [vmem:[%s1 + $0x48] sm:$0xff]
  %v3669 = vld [vmem:[%s1 + $0x50] sm:$0xff]
  %v3670 = vld [vmem:[%s1 + $0x58] sm:$0xff]
  %v3671 = vld [vmem:[%s1 + $0x60] sm:$0xff]
  %v3672 = vld [vmem:[%s1 + $0x68] sm:$0xff]
  %v3673 = vld [vmem:[%s1 + $0x70] sm:$0xff]
  %v3674 = vld [vmem:[%s1 + $0x78] sm:$0xff]
  %v3675 = vsub.f32 %v3659, %v3596
  %v3676 = vsub.f32 %v3660, %v3599
  %v3677 = vsub.f32 %v3661, %v3602
  %v3678 = vsub.f32 %v3662, %v3605
  %v3679 = vsub.f32 %v3663, %v3608
  %v3680 = vsub.f32 %v3664, %v3611
  %v3681 = vsub.f32 %v3665, %v3614
  %v3682 = vsub.f32 %v3666, %v3617
  %v3683 = vsub.f32 %v3667, %v3620
  %v3684 = vsub.f32 %v3668, %v3623
  %v3685 = vsub.f32 %v3669, %v3626
  %v3686 = vsub.f32 %v3670, %v3629
  %v3687 = vsub.f32 %v3671, %v3632
  %v3688 = vsub.f32 %v3672, %v3635
  %v3689 = vsub.f32 %v3673, %v3638
  %v3690 = vsub.f32 %v3674, %v3641
  %v3691 = vmul.f32 %v3675, %v3675
  %v3692 = vmul.f32 %v3676, %v3676
  %v3693 = vmul.f32 %v3677, %v3677
  %v3694 = vmul.f32 %v3678, %v3678
  %v3695 = vmul.f32 %v3679, %v3679
  %v3696 = vmul.f32 %v3680, %v3680
  %v3697 = vmul.f32 %v3681, %v3681
  %v3698 = vmul.f32 %v3682, %v3682
  %v3699 = vmul.f32 %v3683, %v3683
  %v3700 = vmul.f32 %v3684, %v3684
  %v3701 = vmul.f32 %v3685, %v3685
  %v3702 = vmul.f32 %v3686, %v3686
  %v3703 = vmul.f32 %v3687, %v3687
  %v3704 = vmul.f32 %v3688, %v3688
  %v3705 = vmul.f32 %v3689, %v3689
  %v3706 = vmul.f32 %v3690, %v3690
  %v3707 = vsub.f32 0.0, %v3691
  %v3708 = vsub.f32 0.0, %v3692
  %v3709 = vsub.f32 0.0, %v3693
  %v3710 = vsub.f32 0.0, %v3694
  %v3711 = vsub.f32 0.0, %v3695
  %v3712 = vsub.f32 0.0, %v3696
  %v3713 = vsub.f32 0.0, %v3697
  %v3714 = vsub.f32 0.0, %v3698
  %v3715 = vsub.f32 0.0, %v3699
  %v3716 = vsub.f32 0.0, %v3700
  %v3717 = vsub.f32 0.0, %v3701
  %v3718 = vsub.f32 0.0, %v3702
  %v3719 = vsub.f32 0.0, %v3703
  %v3720 = vsub.f32 0.0, %v3704
  %v3721 = vsub.f32 0.0, %v3705
  %v3722 = vsub.f32 0.0, %v3706
  %v3723 = vstv %s3520
  %v3724 = vmul.f32 %v3707, %v3723
  %v3725 = vmul.f32 %v3708, %v3723
  %v3726 = vmul.f32 %v3709, %v3723
  %v3727 = vmul.f32 %v3710, %v3723
  %v3728 = vmul.f32 %v3711, %v3723
  %v3729 = vmul.f32 %v3712, %v3723
  %v3730 = vmul.f32 %v3713, %v3723
  %v3731 = vmul.f32 %v3714, %v3723
  %v3732 = vmul.f32 %v3715, %v3723
  %v3733 = vmul.f32 %v3716, %v3723
  %v3734 = vmul.f32 %v3717, %v3723
  %v3735 = vmul.f32 %v3718, %v3723
  %v3736 = vmul.f32 %v3719, %v3723
  %v3737 = vmul.f32 %v3720, %v3723
  %v3738 = vmul.f32 %v3721, %v3723
  %v3739 = vmul.f32 %v3722, %v3723
  %v3740 = vstv %s3521
  %v3741 = vsub.f32 %v3724, %v3740
  %v3742 = vsub.f32 %v3725, %v3740
  %v3743 = vsub.f32 %v3726, %v3740
  %v3744 = vsub.f32 %v3727, %v3740
  %v3745 = vsub.f32 %v3728, %v3740
  %v3746 = vsub.f32 %v3729, %v3740
  %v3747 = vsub.f32 %v3730, %v3740
  %v3748 = vsub.f32 %v3731, %v3740
  %v3749 = vsub.f32 %v3732, %v3740
  %v3750 = vsub.f32 %v3733, %v3740
  %v3751 = vsub.f32 %v3734, %v3740
  %v3752 = vsub.f32 %v3735, %v3740
  %v3753 = vsub.f32 %v3736, %v3740
  %v3754 = vsub.f32 %v3737, %v3740
  %v3755 = vsub.f32 %v3738, %v3740
  %v3756 = vsub.f32 %v3739, %v3740
  %v3757 = vsel %vm953, %v3741, 0.0
  %3758 = vadd.xlane.f32.xlu0 %v3757
  %v3759 = vpop.xlane.xlu0 %3758
  %v3760 = vsel %vm953, %v3742, 0.0
  %3761 = vadd.xlane.f32.xlu0 %v3760
  %v3762 = vpop.xlane.xlu0 %3761
  %v3763 = vsel %vm953, %v3743, 0.0
  %3764 = vadd.xlane.f32.xlu0 %v3763
  %v3765 = vpop.xlane.xlu0 %3764
  %v3766 = vsel %vm953, %v3744, 0.0
  %3767 = vadd.xlane.f32.xlu0 %v3766
  %v3768 = vpop.xlane.xlu0 %3767
  %v3769 = vsel %vm953, %v3745, 0.0
  %3770 = vadd.xlane.f32.xlu0 %v3769
  %v3771 = vpop.xlane.xlu0 %3770
  %v3772 = vsel %vm953, %v3746, 0.0
  %3773 = vadd.xlane.f32.xlu0 %v3772
  %v3774 = vpop.xlane.xlu0 %3773
  %v3775 = vsel %vm953, %v3747, 0.0
  %3776 = vadd.xlane.f32.xlu0 %v3775
  %v3777 = vpop.xlane.xlu0 %3776
  %v3778 = vsel %vm953, %v3748, 0.0
  %3779 = vadd.xlane.f32.xlu0 %v3778
  %v3780 = vpop.xlane.xlu0 %3779
  %v3781 = vsel %vm953, %v3749, 0.0
  %3782 = vadd.xlane.f32.xlu0 %v3781
  %v3783 = vpop.xlane.xlu0 %3782
  %v3784 = vsel %vm953, %v3750, 0.0
  %3785 = vadd.xlane.f32.xlu0 %v3784
  %v3786 = vpop.xlane.xlu0 %3785
  %v3787 = vsel %vm953, %v3751, 0.0
  %3788 = vadd.xlane.f32.xlu0 %v3787
  %v3789 = vpop.xlane.xlu0 %3788
  %v3790 = vsel %vm953, %v3752, 0.0
  %3791 = vadd.xlane.f32.xlu0 %v3790
  %v3792 = vpop.xlane.xlu0 %3791
  %v3793 = vsel %vm953, %v3753, 0.0
  %3794 = vadd.xlane.f32.xlu0 %v3793
  %v3795 = vpop.xlane.xlu0 %3794
  %v3796 = vsel %vm953, %v3754, 0.0
  %3797 = vadd.xlane.f32.xlu0 %v3796
  %v3798 = vpop.xlane.xlu0 %3797
  %v3799 = vsel %vm953, %v3755, 0.0
  %3800 = vadd.xlane.f32.xlu0 %v3799
  %v3801 = vpop.xlane.xlu0 %3800
  %v3802 = vsel %vm953, %v3756, 0.0
  %3803 = vadd.xlane.f32.xlu0 %v3802
  %v3804 = vpop.xlane.xlu0 %3803
  %v3805 = vadd.f32 %v3759, %v3762
  %v3806 = vadd.f32 %v3805, %v3765
  %v3807 = vadd.f32 %v3806, %v3768
  %v3808 = vadd.f32 %v3807, %v3771
  %v3809 = vadd.f32 %v3808, %v3774
  %v3810 = vadd.f32 %v3809, %v3777
  %v3811 = vadd.f32 %v3810, %v3780
  %v3812 = vadd.f32 %v3811, %v3783
  %v3813 = vadd.f32 %v3812, %v3786
  %v3814 = vadd.f32 %v3813, %v3789
  %v3815 = vadd.f32 %v3814, %v3792
  %v3816 = vadd.f32 %v3815, %v3795
  %v3817 = vadd.f32 %v3816, %v3798
  %v3818 = vadd.f32 %v3817, %v3801
  %v3819 = vadd.f32 %v3818, %v3804
  %v3820 = vrot.slane %v3819, 4
  %v3821 = vadd.f32 %v3819, %v3820
  %v3822 = vrot.slane %v3821, 2
  %v3823 = vadd.f32 %v3821, %v3822
  %v3824 = vrot.slane %v3823, 1
  %v3825 = vadd.f32 %v3823, %v3824
  %vm3826 = vcmask 0
  %3827 = vst.msk [vmem:[%s18] sm:$0x1] %vm3826, %v3825
  %v3829 = vsel %vm953, %v3498, 0
  %v3832 = vsel %vm953, %v3499, 0
  %v3835 = vsel %vm953, %v3500, 0
  %v3838 = vsel %vm953, %v3501, 0
  %v3841 = vsel %vm953, %v3502, 0
  %v3844 = vsel %vm953, %v3503, 0
  %v3847 = vsel %vm953, %v3504, 0
  %v3850 = vsel %vm953, %v3505, 0
  %v3853 = vsel %vm953, %v3506, 0
  %v3856 = vsel %vm953, %v3507, 0
  %v3859 = vsel %vm953, %v3508, 0
  %v3862 = vsel %vm953, %v3509, 0
  %v3865 = vsel %vm953, %v3510, 0
  %v3868 = vsel %vm953, %v3511, 0
  %v3871 = vsel %vm953, %v3512, 0
  %v3874 = vsel %vm953, %v3513, 0
  %3876 = vmatpush.msra.mxu0 0.0
  %3877 = vmatpush.msra.mxu0 0.0
  %3878 = vmatpush.msra.mxu0 0.0
  %3879 = vmatpush.msra.mxu0 0.0
  %3880 = vmatpush.msra.mxu0 0.0
  %3881 = vmatpush.msra.mxu0 0.0
  %3882 = vmatpush.msra.mxu0 0.0
  %3883 = vmatpush.msra.mxu0 0.0
  %3884 = vmatpush.msra.mxu0 0.0
  %3885 = vmatpush.msra.mxu0 0.0
  %3886 = vmatpush.msra.mxu0 0.0
  %3887 = vmatpush.msra.mxu0 0.0
  %3888 = vmatpush.msra.mxu0 0.0
  %3889 = vmatpush.msra.mxu0 0.0
  %3890 = vmatpush.msra.mxu0 0.0
  %3891 = vmatpush.msra.mxu0 %v3576
  %3892 = vmatmul.f32.gmra.mxu0 %v3829
  %v3893 = vpop.f32.mrf.mxu0
  %v3894 = vadd.f32 %v3525, %v3893
  %3895 = vmatmul.f32.gmra.mxu0 %v3832
  %v3896 = vpop.f32.mrf.mxu0
  %v3897 = vadd.f32 %v3525, %v3896
  %3898 = vmatmul.f32.gmra.mxu0 %v3835
  %v3899 = vpop.f32.mrf.mxu0
  %v3900 = vadd.f32 %v3525, %v3899
  %3901 = vmatmul.f32.gmra.mxu0 %v3838
  %v3902 = vpop.f32.mrf.mxu0
  %v3903 = vadd.f32 %v3525, %v3902
  %3904 = vmatmul.f32.gmra.mxu0 %v3841
  %v3905 = vpop.f32.mrf.mxu0
  %v3906 = vadd.f32 %v3525, %v3905
  %3907 = vmatmul.f32.gmra.mxu0 %v3844
  %v3908 = vpop.f32.mrf.mxu0
  %v3909 = vadd.f32 %v3525, %v3908
  %3910 = vmatmul.f32.gmra.mxu0 %v3847
  %v3911 = vpop.f32.mrf.mxu0
  %v3912 = vadd.f32 %v3525, %v3911
  %3913 = vmatmul.f32.gmra.mxu0 %v3850
  %v3914 = vpop.f32.mrf.mxu0
  %v3915 = vadd.f32 %v3525, %v3914
  %3916 = vmatmul.f32.gmra.mxu0 %v3853
  %v3917 = vpop.f32.mrf.mxu0
  %v3918 = vadd.f32 %v3525, %v3917
  %3919 = vmatmul.f32.gmra.mxu0 %v3856
  %v3920 = vpop.f32.mrf.mxu0
  %v3921 = vadd.f32 %v3525, %v3920
  %3922 = vmatmul.f32.gmra.mxu0 %v3859
  %v3923 = vpop.f32.mrf.mxu0
  %v3924 = vadd.f32 %v3525, %v3923
  %3925 = vmatmul.f32.gmra.mxu0 %v3862
  %v3926 = vpop.f32.mrf.mxu0
  %v3927 = vadd.f32 %v3525, %v3926
  %3928 = vmatmul.f32.gmra.mxu0 %v3865
  %v3929 = vpop.f32.mrf.mxu0
  %v3930 = vadd.f32 %v3525, %v3929
  %3931 = vmatmul.f32.gmra.mxu0 %v3868
  %v3932 = vpop.f32.mrf.mxu0
  %v3933 = vadd.f32 %v3525, %v3932
  %3934 = vmatmul.f32.gmra.mxu0 %v3871
  %v3935 = vpop.f32.mrf.mxu0
  %v3936 = vadd.f32 %v3525, %v3935
  %3937 = vmatmul.f32.gmra.mxu0 %v3874
  %v3938 = vpop.f32.mrf.mxu0
  %v3939 = vadd.f32 %v3525, %v3938
  %3940 = vdwg.mxu0
  %s3941 = scalar_lea.vmem %s17, 128
  %3942 = vst.msk [vmem:[%s3941] sm:$0xff] %vm953, %v3894
  %3943 = vst.msk [vmem:[%s3941 + $0x8] sm:$0xff] %vm953, %v3897
  %3944 = vst.msk [vmem:[%s3941 + $0x10] sm:$0xff] %vm953, %v3900
  %3945 = vst.msk [vmem:[%s3941 + $0x18] sm:$0xff] %vm953, %v3903
  %3946 = vst.msk [vmem:[%s3941 + $0x20] sm:$0xff] %vm953, %v3906
  %3947 = vst.msk [vmem:[%s3941 + $0x28] sm:$0xff] %vm953, %v3909
  %3948 = vst.msk [vmem:[%s3941 + $0x30] sm:$0xff] %vm953, %v3912
  %3949 = vst.msk [vmem:[%s3941 + $0x38] sm:$0xff] %vm953, %v3915
  %3950 = vst.msk [vmem:[%s3941 + $0x40] sm:$0xff] %vm953, %v3918
  %3951 = vst.msk [vmem:[%s3941 + $0x48] sm:$0xff] %vm953, %v3921
  %3952 = vst.msk [vmem:[%s3941 + $0x50] sm:$0xff] %vm953, %v3924
  %3953 = vst.msk [vmem:[%s3941 + $0x58] sm:$0xff] %vm953, %v3927
  %3954 = vst.msk [vmem:[%s3941 + $0x60] sm:$0xff] %vm953, %v3930
  %3955 = vst.msk [vmem:[%s3941 + $0x68] sm:$0xff] %vm953, %v3933
  %3956 = vst.msk [vmem:[%s3941 + $0x70] sm:$0xff] %vm953, %v3936
  %3957 = vst.msk [vmem:[%s3941 + $0x78] sm:$0xff] %vm953, %v3939
  %s3958 = scalar_lea.vmem %s1, 128
  %v3959 = vld [vmem:[%s3958] sm:$0xff]
  %v3960 = vld [vmem:[%s3958 + $0x8] sm:$0xff]
  %v3961 = vld [vmem:[%s3958 + $0x10] sm:$0xff]
  %v3962 = vld [vmem:[%s3958 + $0x18] sm:$0xff]
  %v3963 = vld [vmem:[%s3958 + $0x20] sm:$0xff]
  %v3964 = vld [vmem:[%s3958 + $0x28] sm:$0xff]
  %v3965 = vld [vmem:[%s3958 + $0x30] sm:$0xff]
  %v3966 = vld [vmem:[%s3958 + $0x38] sm:$0xff]
  %v3967 = vld [vmem:[%s3958 + $0x40] sm:$0xff]
  %v3968 = vld [vmem:[%s3958 + $0x48] sm:$0xff]
  %v3969 = vld [vmem:[%s3958 + $0x50] sm:$0xff]
  %v3970 = vld [vmem:[%s3958 + $0x58] sm:$0xff]
  %v3971 = vld [vmem:[%s3958 + $0x60] sm:$0xff]
  %v3972 = vld [vmem:[%s3958 + $0x68] sm:$0xff]
  %v3973 = vld [vmem:[%s3958 + $0x70] sm:$0xff]
  %v3974 = vld [vmem:[%s3958 + $0x78] sm:$0xff]
  %v3975 = vsub.f32 %v3959, %v3894
  %v3976 = vsub.f32 %v3960, %v3897
  %v3977 = vsub.f32 %v3961, %v3900
  %v3978 = vsub.f32 %v3962, %v3903
  %v3979 = vsub.f32 %v3963, %v3906
  %v3980 = vsub.f32 %v3964, %v3909
  %v3981 = vsub.f32 %v3965, %v3912
  %v3982 = vsub.f32 %v3966, %v3915
  %v3983 = vsub.f32 %v3967, %v3918
  %v3984 = vsub.f32 %v3968, %v3921
  %v3985 = vsub.f32 %v3969, %v3924
  %v3986 = vsub.f32 %v3970, %v3927
  %v3987 = vsub.f32 %v3971, %v3930
  %v3988 = vsub.f32 %v3972, %v3933
  %v3989 = vsub.f32 %v3973, %v3936
  %v3990 = vsub.f32 %v3974, %v3939
  %v3991 = vmul.f32 %v3975, %v3975
  %v3992 = vmul.f32 %v3976, %v3976
  %v3993 = vmul.f32 %v3977, %v3977
  %v3994 = vmul.f32 %v3978, %v3978
  %v3995 = vmul.f32 %v3979, %v3979
  %v3996 = vmul.f32 %v3980, %v3980
  %v3997 = vmul.f32 %v3981, %v3981
  %v3998 = vmul.f32 %v3982, %v3982
  %v3999 = vmul.f32 %v3983, %v3983
  %v4000 = vmul.f32 %v3984, %v3984
  %v4001 = vmul.f32 %v3985, %v3985
  %v4002 = vmul.f32 %v3986, %v3986
  %v4003 = vmul.f32 %v3987, %v3987
  %v4004 = vmul.f32 %v3988, %v3988
  %v4005 = vmul.f32 %v3989, %v3989
  %v4006 = vmul.f32 %v3990, %v3990
  %v4007 = vsub.f32 0.0, %v3991
  %v4008 = vsub.f32 0.0, %v3992
  %v4009 = vsub.f32 0.0, %v3993
  %v4010 = vsub.f32 0.0, %v3994
  %v4011 = vsub.f32 0.0, %v3995
  %v4012 = vsub.f32 0.0, %v3996
  %v4013 = vsub.f32 0.0, %v3997
  %v4014 = vsub.f32 0.0, %v3998
  %v4015 = vsub.f32 0.0, %v3999
  %v4016 = vsub.f32 0.0, %v4000
  %v4017 = vsub.f32 0.0, %v4001
  %v4018 = vsub.f32 0.0, %v4002
  %v4019 = vsub.f32 0.0, %v4003
  %v4020 = vsub.f32 0.0, %v4004
  %v4021 = vsub.f32 0.0, %v4005
  %v4022 = vsub.f32 0.0, %v4006
  %v4023 = vmul.f32 %v4007, %v3723
  %v4024 = vmul.f32 %v4008, %v3723
  %v4025 = vmul.f32 %v4009, %v3723
  %v4026 = vmul.f32 %v4010, %v3723
  %v4027 = vmul.f32 %v4011, %v3723
  %v4028 = vmul.f32 %v4012, %v3723
  %v4029 = vmul.f32 %v4013, %v3723
  %v4030 = vmul.f32 %v4014, %v3723
  %v4031 = vmul.f32 %v4015, %v3723
  %v4032 = vmul.f32 %v4016, %v3723
  %v4033 = vmul.f32 %v4017, %v3723
  %v4034 = vmul.f32 %v4018, %v3723
  %v4035 = vmul.f32 %v4019, %v3723
  %v4036 = vmul.f32 %v4020, %v3723
  %v4037 = vmul.f32 %v4021, %v3723
  %v4038 = vmul.f32 %v4022, %v3723
  %v4039 = vsub.f32 %v4023, %v3740
  %v4040 = vsub.f32 %v4024, %v3740
  %v4041 = vsub.f32 %v4025, %v3740
  %v4042 = vsub.f32 %v4026, %v3740
  %v4043 = vsub.f32 %v4027, %v3740
  %v4044 = vsub.f32 %v4028, %v3740
  %v4045 = vsub.f32 %v4029, %v3740
  %v4046 = vsub.f32 %v4030, %v3740
  %v4047 = vsub.f32 %v4031, %v3740
  %v4048 = vsub.f32 %v4032, %v3740
  %v4049 = vsub.f32 %v4033, %v3740
  %v4050 = vsub.f32 %v4034, %v3740
  %v4051 = vsub.f32 %v4035, %v3740
  %v4052 = vsub.f32 %v4036, %v3740
  %v4053 = vsub.f32 %v4037, %v3740
  %v4054 = vsub.f32 %v4038, %v3740
  %v4055 = vsel %vm953, %v4039, 0.0
  %4056 = vadd.xlane.f32.xlu0 %v4055
  %v4057 = vpop.xlane.xlu0 %4056
  %v4058 = vsel %vm953, %v4040, 0.0
  %4059 = vadd.xlane.f32.xlu0 %v4058
  %v4060 = vpop.xlane.xlu0 %4059
  %v4061 = vsel %vm953, %v4041, 0.0
  %4062 = vadd.xlane.f32.xlu0 %v4061
  %v4063 = vpop.xlane.xlu0 %4062
  %v4064 = vsel %vm953, %v4042, 0.0
  %4065 = vadd.xlane.f32.xlu0 %v4064
  %v4066 = vpop.xlane.xlu0 %4065
  %v4067 = vsel %vm953, %v4043, 0.0
  %4068 = vadd.xlane.f32.xlu0 %v4067
  %v4069 = vpop.xlane.xlu0 %4068
  %v4070 = vsel %vm953, %v4044, 0.0
  %4071 = vadd.xlane.f32.xlu0 %v4070
  %v4072 = vpop.xlane.xlu0 %4071
  %v4073 = vsel %vm953, %v4045, 0.0
  %4074 = vadd.xlane.f32.xlu0 %v4073
  %v4075 = vpop.xlane.xlu0 %4074
  %v4076 = vsel %vm953, %v4046, 0.0
  %4077 = vadd.xlane.f32.xlu0 %v4076
  %v4078 = vpop.xlane.xlu0 %4077
  %v4079 = vsel %vm953, %v4047, 0.0
  %4080 = vadd.xlane.f32.xlu0 %v4079
  %v4081 = vpop.xlane.xlu0 %4080
  %v4082 = vsel %vm953, %v4048, 0.0
  %4083 = vadd.xlane.f32.xlu0 %v4082
  %v4084 = vpop.xlane.xlu0 %4083
  %v4085 = vsel %vm953, %v4049, 0.0
  %4086 = vadd.xlane.f32.xlu0 %v4085
  %v4087 = vpop.xlane.xlu0 %4086
  %v4088 = vsel %vm953, %v4050, 0.0
  %4089 = vadd.xlane.f32.xlu0 %v4088
  %v4090 = vpop.xlane.xlu0 %4089
  %v4091 = vsel %vm953, %v4051, 0.0
  %4092 = vadd.xlane.f32.xlu0 %v4091
  %v4093 = vpop.xlane.xlu0 %4092
  %v4094 = vsel %vm953, %v4052, 0.0
  %4095 = vadd.xlane.f32.xlu0 %v4094
  %v4096 = vpop.xlane.xlu0 %4095
  %v4097 = vsel %vm953, %v4053, 0.0
  %4098 = vadd.xlane.f32.xlu0 %v4097
  %v4099 = vpop.xlane.xlu0 %4098
  %v4100 = vsel %vm953, %v4054, 0.0
  %4101 = vadd.xlane.f32.xlu0 %v4100
  %v4102 = vpop.xlane.xlu0 %4101
  %v4103 = vadd.f32 %v4057, %v4060
  %v4104 = vadd.f32 %v4103, %v4063
  %v4105 = vadd.f32 %v4104, %v4066
  %v4106 = vadd.f32 %v4105, %v4069
  %v4107 = vadd.f32 %v4106, %v4072
  %v4108 = vadd.f32 %v4107, %v4075
  %v4109 = vadd.f32 %v4108, %v4078
  %v4110 = vadd.f32 %v4109, %v4081
  %v4111 = vadd.f32 %v4110, %v4084
  %v4112 = vadd.f32 %v4111, %v4087
  %v4113 = vadd.f32 %v4112, %v4090
  %v4114 = vadd.f32 %v4113, %v4093
  %v4115 = vadd.f32 %v4114, %v4096
  %v4116 = vadd.f32 %v4115, %v4099
  %v4117 = vadd.f32 %v4116, %v4102
  %v4118 = vrot.slane %v4117, 4
  %v4119 = vadd.f32 %v4117, %v4118
  %v4120 = vrot.slane %v4119, 2
  %v4121 = vadd.f32 %v4119, %v4120
  %v4122 = vrot.slane %v4121, 1
  %v4123 = vadd.f32 %v4121, %v4122
  %4124 = vst.msk [vmem:[%s18 + $0x1] sm:$0x1] %vm3826, %v4123
  // Predicated region
  $region70: #{vae_forward.9} parent=0 // pred_check
    _
  $region71: #{vae_forward.9} parent=0 // pred_check_branch
    %4126 = sbr.rel (0) target = $region73
  $region72: #{vae_forward.9} parent=0 // pred_region
    _
  $region73: #{vae_forward.9} parent=0 // pred_fallthru
    _
  // Predicated region
  $region74: #{vae_forward.9} parent=0 // pred_check
    _
  $region75: #{vae_forward.9} parent=0 // pred_check_branch
    %4128 = sbr.rel (0) target = $region77
  $region76: #{vae_forward.9} parent=0 // pred_region
    _
  $region77: #{vae_forward.9} parent=0 // pred_fallthru
    _
  // Predicated region
  $region78: #{vae_forward.9} parent=0 // pred_check
    _
  $region79: #{vae_forward.9} parent=0 // pred_check_branch
    %4130 = sbr.rel (0) target = $region81
  $region80: #{vae_forward.9} parent=0 // pred_region
    _
  $region81: #{vae_forward.9} parent=0 // pred_fallthru
    _
  // Predicated region
  $region82: #{vae_forward.9} parent=0 // pred_check
    _
  $region83: #{vae_forward.9} parent=0 // pred_check_branch
    %4132 = sbr.rel (0) target = $region85
  $region84: #{vae_forward.9} parent=0 // pred_region
    _
  $region85: #{vae_forward.9} parent=0 // pred_fallthru
    _

</llo_original>
